<compile_context>
chip_gen: v7x
topology: tpu7x:2x2x1
jax: 0.10.0
libtpu: 0.0.40
codegen_flags: <defaults>
</compile_context>

<pallas_src>
import math

import jax
import jax.numpy as jnp
from jax.experimental import pallas as pl
from jax.experimental.pallas import tpu as pltpu


# --------------------------------------------------------------------------
# Tile-size / VMEM helpers
# --------------------------------------------------------------------------
def _pick_tn(n, rows_per_image, bytes_per_image,
             target_rows=2048, vmem_budget=40 * 1024 * 1024):
    """Largest batch-chunk with <= ~2048 output rows, >= 2 grid steps and a
    double-buffered VMEM footprint under the (v7x-safe) budget."""
    best = 1
    for tn in range(2, n + 1):
        if n % tn:
            continue
        if n // tn < 2:                       # keep >= 2 grid steps to pipeline
            continue
        if tn * rows_per_image > target_rows:
            continue
        if tn * bytes_per_image > vmem_budget:
            continue
        best = tn
    return best


def _pick_tm(m):
    for tm in (2048, 1024, 512, 256, 128, 64, 32, 16, 8):
        if m % tm == 0 and m // tm >= 2:
            return tm
    return m


def _vmem_limit(est_bytes):
    # >= the proven 32 MiB default, <= 48 MiB so double-buffering survives on
    # v7x's 64 MiB physical VMEM (v5e/v6e have 128 MiB and are always fine).
    return max(32 * 1024 * 1024, min(48 * 1024 * 1024, 2 * est_bytes))


# --------------------------------------------------------------------------
# In-kernel helpers (traced inside the Pallas kernels)
# --------------------------------------------------------------------------
def _zero_halo(p_ref, TN, H, W, C):
    """Zero only the padding halo of the (TN, H+2, W, 3C) kw-im2col scratch.
    The interior is fully overwritten every step, so this is all that is
    needed (and it is re-done every step -> megacore-safe)."""
    K = 3 * C
    zrow = jnp.zeros((TN, 1, W, K), jnp.float32)
    p_ref[:, 0:1, :, :] = zrow
    p_ref[:, H + 1:H + 2, :, :] = zrow
    zcol = jnp.zeros((TN, H, 1, C), jnp.float32)
    p_ref[:, 1:H + 1, 0:1, 0:C] = zcol
    p_ref[:, 1:H + 1, W - 1:W, 2 * C:K] = zcol


def _fill_im2col(p_ref, center, H, W, C):
    """Scatter `center` (TN, H, W, C) f32 as the kw=1 tap of the scratch; the
    kw=0 / kw=2 taps are its left/right shifted copies, read back from the
    scratch so the activation is not held live in vregs across the stores."""
    K = 3 * C
    p_ref[:, 1:H + 1, :, C:2 * C] = center
    p_ref[:, 1:H + 1, 1:W, 0:C] = p_ref[:, 1:H + 1, 0:W - 1, C:2 * C]
    p_ref[:, 1:H + 1, 0:W - 1, 2 * C:K] = p_ref[:, 1:H + 1, 1:W, C:2 * C]


def _conv3_from_scratch(p_ref, w_ref, rows, H, K):
    """3x3 conv as 3 kh-taps of (rows, K=3C) x (K, Cout) bf16 MXU matmuls with
    f32 accumulation; the first dot initializes the accumulator."""
    acc = jnp.dot(p_ref[:, 0:H, :, :].reshape(rows, K).astype(jnp.bfloat16),
                  w_ref[0], preferred_element_type=jnp.float32)
    for kh in (1, 2):
        acc = acc + jnp.dot(
            p_ref[:, kh:kh + H, :, :].reshape(rows, K).astype(jnp.bfloat16),
            w_ref[kh], preferred_element_type=jnp.float32)
    return acc


# --------------------------------------------------------------------------
# Pallas kernels
# --------------------------------------------------------------------------
def _l0_kernel(x_ref, w_ref, b_ref, o_ref):
    """(TM, 27) x (27, 64) bf16 matmul + bias + ReLU (layer0 full-im2col conv)."""
    acc = jnp.dot(x_ref[...], w_ref[...], preferred_element_type=jnp.float32)
    o_ref[...] = jnp.maximum(acc + b_ref[...], 0.0).astype(jnp.bfloat16)


def _make_block_s1_kernel(TN, H, W, C):
    """Fused stride-1 BasicBlock: conv1+BN1+ReLU -> conv2+BN2 -> +x -> ReLU.
    Both convolutions share one VMEM kw-im2col scratch; no intermediate ever
    touches HBM."""
    rows = TN * H * W
    K = 3 * C

    def kernel(x_ref, w1_ref, b1_ref, w2_ref, b2_ref, o_ref, p_ref):
        _zero_halo(p_ref, TN, H, W, C)
        # conv1 + bn1 + relu (the kw-im2col of x is built directly in VMEM).
        _fill_im2col(p_ref, x_ref[...].astype(jnp.float32), H, W, C)
        y1 = jnp.maximum(_conv3_from_scratch(p_ref, w1_ref, rows, H, K)
                         + b1_ref[...], 0.0)
        # conv2 + bn2 (intermediate activation also stays in VMEM).
        _fill_im2col(p_ref, y1.reshape(TN, H, W, C), H, W, C)
        acc2 = _conv3_from_scratch(p_ref, w2_ref, rows, H, K) + b2_ref[...]
        # identity shortcut + relu, stored as bf16 in a dense (TN, H*W, C) slab.
        sc = x_ref[...].astype(jnp.float32).reshape(rows, C)
        out = jnp.maximum(acc2 + sc, 0.0)
        o_ref[...] = out.astype(jnp.bfloat16).reshape(TN, H * W, C)

    return kernel


def _make_block_s2_kernel(TN, Ho, Wo, Cin, Cout):
    """Fused stride-2 BasicBlock (with 1x1 projection shortcut)."""
    rows = TN * Ho * Wo
    K1 = 9 * Cin
    K2 = 3 * Cout

    def kernel(xk_ref, w1_ref, b1_ref, w2_ref, b2_ref, wsc_ref, bsc_ref,
               o_ref, p_ref):
        # conv1 + bn1 + relu: stride folded into the wrapper im2col, a single
        # (rows, 9*Cin) x (9*Cin, Cout) bf16 MXU matmul with f32 accumulation.
        acc = jnp.dot(xk_ref[...].reshape(rows, K1), w1_ref[...],
                      preferred_element_type=jnp.float32)
        y1 = jnp.maximum(acc + b1_ref[...], 0.0)
        # conv2 + bn2 via the in-VMEM kw-im2col of y1.
        _zero_halo(p_ref, TN, Ho, Wo, Cout)
        _fill_im2col(p_ref, y1.reshape(TN, Ho, Wo, Cout), Ho, Wo, Cout)
        acc2 = _conv3_from_scratch(p_ref, w2_ref, rows, Ho, K2) + b2_ref[...]
        # fused 1x1 projection shortcut; its input is the centre (kh=kw=1) tap
        # of the conv1 im2col, i.e. x[:, ::2, ::2, :].
        xc = xk_ref[:, :, 4 * Cin:5 * Cin].reshape(rows, Cin)
        sc = jnp.dot(xc, wsc_ref[...], preferred_element_type=jnp.float32)
        sc = sc + bsc_ref[...]
        out = jnp.maximum(acc2 + sc, 0.0)
        o_ref[...] = out.astype(jnp.bfloat16).reshape(TN, Ho * Wo, Cout)

    return kernel


# --------------------------------------------------------------------------
# Wrappers (pallas_call + BlockSpecs)
# --------------------------------------------------------------------------
def conv3x3_im2col_bn_relu(x, w, b):
    """Layer0: 3x3 / stride-1 / pad-1 conv (Cin=3) + folded BN + ReLU as one
    (M, 27) matmul; bf16 output."""
    N, H, W, Cin = x.shape
    Cout = w.shape[-1]
    x_pad = jnp.pad(x, ((0, 0), (1, 1), (1, 1), (0, 0)))
    taps = [x_pad[:, kh:kh + H, kw:kw + W, :]
            for kh in range(3) for kw in range(3)]
    xi = jnp.concatenate(taps, axis=-1).astype(jnp.bfloat16)
    M, K = N * H * W, 9 * Cin
    xi = xi.reshape(M, K)
    TM = _pick_tm(M)
    out = pl.pallas_call(
        _l0_kernel,
        out_shape=jax.ShapeDtypeStruct((M, Cout), jnp.bfloat16),
        grid=(M // TM,),
        in_specs=[pl.BlockSpec((TM, K), lambda i: (i, 0)),
                  pl.BlockSpec((K, Cout), lambda i: (0, 0)),
                  pl.BlockSpec((1, Cout), lambda i: (0, 0))],
        out_specs=pl.BlockSpec((TM, Cout), lambda i: (i, 0)),
        compiler_params=pltpu.CompilerParams(
            dimension_semantics=("parallel",),
            vmem_limit_bytes=32 * 1024 * 1024),
    )(xi, w, b)
    return out.reshape(N, H, W, Cout)


def basic_block_fwd(x, bp, stride):
    """One fused BasicBlock (conv1/bn1/relu/conv2/bn2/shortcut/relu), bf16 I/O."""
    N, H, W, Cin = x.shape
    Cout = bp['b1'].shape[-1]
    Ho, Wo = H // stride, W // stride

    if stride == 1:
        in_bytes = H * W * Cin * 2
        scr_bytes = (H + 2) * W * 3 * Cout * 4
        w_bytes = 2 * 9 * Cout * Cout * 2
    else:
        in_bytes = Ho * Wo * 9 * Cin * 2
        scr_bytes = (Ho + 2) * Wo * 3 * Cout * 4
        w_bytes = (9 * Cin * Cout + 9 * Cout * Cout + Cin * Cout) * 2
    out_bytes = Ho * Wo * Cout * 2
    per_img = 2 * in_bytes + 2 * out_bytes + scr_bytes   # double-buffered blocks
    TN = _pick_tn(N, Ho * Wo, per_img)
    vlimit = _vmem_limit(TN * per_img + w_bytes)

    if stride == 1:
        assert Cin == Cout
        kernel = _make_block_s1_kernel(TN, H, W, Cout)
        args = (x, bp['w1'], bp['b1'], bp['w2'], bp['b2'])
        in_specs = [
            pl.BlockSpec((TN, H, W, Cin), lambda b: (b, 0, 0, 0)),
            pl.BlockSpec((3, 3 * Cin, Cout), lambda b: (0, 0, 0)),
            pl.BlockSpec((1, Cout), lambda b: (0, 0)),
            pl.BlockSpec((3, 3 * Cout, Cout), lambda b: (0, 0, 0)),
            pl.BlockSpec((1, Cout), lambda b: (0, 0)),
        ]
        scratch = pltpu.VMEM((TN, H + 2, W, 3 * Cout), jnp.float32)
    else:
        # TODO(synk): the stride-2 conv1 still uses a wrapper-side full im2col
        # (2.25x copy of this one block's input), pre-flattened so the kernel
        # does a straight (rows, 9*Cin) matmul with no 4D reshapes.
        x_pad = jnp.pad(x, ((0, 0), (1, 1), (1, 1), (0, 0)))
        taps = [x_pad[:, kh:kh + H:stride, kw:kw + W:stride, :]
                for kh in range(3) for kw in range(3)]
        xk = jnp.concatenate(taps, axis=-1).astype(jnp.bfloat16)
        xk = xk.reshape(N, Ho * Wo, 9 * Cin)
        kernel = _make_block_s2_kernel(TN, Ho, Wo, Cin, Cout)
        args = (xk, bp['w1'], bp['b1'], bp['w2'], bp['b2'],
                bp['wsc'], bp['bsc'])
        in_specs = [
            pl.BlockSpec((TN, Ho * Wo, 9 * Cin), lambda b: (b, 0, 0)),
            pl.BlockSpec((9 * Cin, Cout), lambda b: (0, 0)),
            pl.BlockSpec((1, Cout), lambda b: (0, 0)),
            pl.BlockSpec((3, 3 * Cout, Cout), lambda b: (0, 0, 0)),
            pl.BlockSpec((1, Cout), lambda b: (0, 0)),
            pl.BlockSpec((Cin, Cout), lambda b: (0, 0)),
            pl.BlockSpec((1, Cout), lambda b: (0, 0)),
        ]
        scratch = pltpu.VMEM((TN, Ho + 2, Wo, 3 * Cout), jnp.float32)

    out = pl.pallas_call(
        kernel,
        out_shape=jax.ShapeDtypeStruct((N, Ho * Wo, Cout), jnp.bfloat16),
        grid=(N // TN,),
        in_specs=in_specs,
        out_specs=pl.BlockSpec((TN, Ho * Wo, Cout), lambda b: (b, 0, 0)),
        scratch_shapes=[scratch],
        compiler_params=pltpu.CompilerParams(
            dimension_semantics=("parallel",),
            vmem_limit_bytes=vlimit),
    )(*args)
    return out.reshape(N, Ho, Wo, Cout)


# --------------------------------------------------------------------------
# Model forward (Pallas)
# --------------------------------------------------------------------------
def resnet18_extractor(x_nchw, pp):
    """Forward of ResNet18_Extractor (layer0 + layer1 + layer2)."""
    x = jnp.transpose(x_nchw, (0, 2, 3, 1)).astype(jnp.float32)   # NCHW -> NHWC
    x = conv3x3_im2col_bn_relu(x, pp['l0_w'], pp['l0_b'])         # layer0 (bf16)
    x = basic_block_fwd(x, pp['l1b1'], stride=1)                  # layer1
    x = basic_block_fwd(x, pp['l1b2'], stride=1)
    x = basic_block_fwd(x, pp['l2b1'], stride=2)                  # layer2
    x = basic_block_fwd(x, pp['l2b2'], stride=1)
    return jnp.transpose(x.astype(jnp.float32), (0, 3, 1, 2))     # NHWC -> NCHW


# --------------------------------------------------------------------------
# Parameter preprocessing: fold BN scale into weights, reshape for the kernels,
# cast matmul operands to bf16 (biases stay f32).
# --------------------------------------------------------------------------
def prepare_params(params):
    def conv3_kh3(w9, scale):        # (9, Cin, Cout) -> (3, 3*Cin, Cout) bf16
        w = (w9 * scale[None, None, :]).astype(jnp.bfloat16)
        cin, cout = w.shape[1], w.shape[2]
        return w.reshape(3, 3 * cin, cout)

    def conv3_full(w9, scale):       # (9, Cin, Cout) -> (9*Cin, Cout) bf16
        w = (w9 * scale[None, None, :]).astype(jnp.bfloat16)
        cin, cout = w.shape[1], w.shape[2]
        return w.reshape(9 * cin, cout)

    def bias(b):
        return b.reshape(1, -1).astype(jnp.float32)

    def block(p, stride):
        bp = {}
        bp['w1'] = conv3_kh3(p['w1'], p['bn1_s']) if stride == 1 \
            else conv3_full(p['w1'], p['bn1_s'])
        bp['b1'] = bias(p['bn1_b'])
        bp['w2'] = conv3_kh3(p['w2'], p['bn2_s'])
        bp['b2'] = bias(p['bn2_b'])
        if 'wsc' in p:
            bp['wsc'] = (p['wsc'] * p['bnsc_s'][None, :]).astype(jnp.bfloat16)
            bp['bsc'] = bias(p['bnsc_b'])
        return bp

    out = {}
    w0 = (params['l0_w'] * params['l0_s'][None, None, :]).astype(jnp.bfloat16)
    out['l0_w'] = w0.reshape(-1, w0.shape[-1])                     # (27, 64)
    out['l0_b'] = bias(params['l0_b'])
    out['l1b1'] = block(params['l1b1'], 1)
    out['l1b2'] = block(params['l1b2'], 1)
    out['l2b1'] = block(params['l2b1'], 2)
    out['l2b2'] = block(params['l2b2'], 1)
    return out


# --------------------------------------------------------------------------
# Deterministic parameter init (synthetic, matching PyTorch shapes)
# --------------------------------------------------------------------------
def _init_bn(key, c):
    k1, k2, k3, k4 = jax.random.split(key, 4)
    gamma = 1.0 + 0.1 * jax.random.normal(k1, (c,), jnp.float32)
    beta = 0.1 * jax.random.normal(k2, (c,), jnp.float32)
    mean = 0.1 * jax.random.normal(k3, (c,), jnp.float32)
    var = 1.0 + 0.1 * jnp.abs(jax.random.normal(k4, (c,), jnp.float32))
    scale = gamma * jax.lax.rsqrt(var + 1e-5)
    bias = beta - mean * scale
    return scale, bias


def _init_conv3(key, cin, cout):
    w = jax.random.normal(key, (cout, cin, 3, 3), jnp.float32) / math.sqrt(cin * 9)
    return jnp.transpose(w, (2, 3, 1, 0)).reshape(9, cin, cout)     # (9, Cin, Cout)


def _init_conv1(key, cin, cout):
    w = jax.random.normal(key, (cout, cin, 1, 1), jnp.float32) / math.sqrt(cin)
    return jnp.transpose(w, (2, 3, 1, 0)).reshape(cin, cout)        # (Cin, Cout)


def _init_block(key, cin, cout, stride):
    ks = jax.random.split(key, 6)
    p = {'w1': _init_conv3(ks[0], cin, cout),
         'w2': _init_conv3(ks[1], cout, cout)}
    p['bn1_s'], p['bn1_b'] = _init_bn(ks[2], cout)
    p['bn2_s'], p['bn2_b'] = _init_bn(ks[3], cout)
    if stride != 1 or cin != cout:
        p['wsc'] = _init_conv1(ks[4], cin, cout)
        p['bnsc_s'], p['bnsc_b'] = _init_bn(ks[5], cout)
    return p


def init_params(key):
    ks = jax.random.split(key, 6)
    params = {'l0_w': _init_conv3(ks[0], 3, 64)}
    params['l0_s'], params['l0_b'] = _init_bn(ks[1], 64)
    params['l1b1'] = _init_block(ks[2], 64, 64, 1)
    params['l1b2'] = _init_block(ks[3], 64, 64, 1)
    params['l2b1'] = _init_block(ks[4], 64, 128, 2)
    params['l2b2'] = _init_block(ks[5], 128, 128, 1)
    return params


# --------------------------------------------------------------------------
# Pure-JAX f32 reference (for the numerical sanity check)
# --------------------------------------------------------------------------
def _ref_conv3x3(x, w9, stride):
    cin, cout = w9.shape[1], w9.shape[2]
    w = w9.reshape(3, 3, cin, cout)
    return jax.lax.conv_general_dilated(
        x, w, (stride, stride), ((1, 1), (1, 1)),
        dimension_numbers=('NHWC', 'HWIO', 'NHWC'))


def _ref_conv1x1(x, w, stride):
    cin, cout = w.shape
    return jax.lax.conv_general_dilated(
        x, w.reshape(1, 1, cin, cout), (stride, stride), ((0, 0), (0, 0)),
        dimension_numbers=('NHWC', 'HWIO', 'NHWC'))


def _ref_block(x, p, stride):
    cin, cout = x.shape[-1], p['w1'].shape[-1]
    out = jax.nn.relu(_ref_conv3x3(x, p['w1'], stride) * p['bn1_s'] + p['bn1_b'])
    if stride != 1 or cin != cout:
        shortcut = _ref_conv1x1(x, p['wsc'], stride) * p['bnsc_s'] + p['bnsc_b']
    else:
        shortcut = x
    out = _ref_conv3x3(out, p['w2'], 1) * p['bn2_s'] + p['bn2_b'] + shortcut
    return jax.nn.relu(out)


def resnet18_extractor_ref(x_nchw, params):
    x = jnp.transpose(x_nchw, (0, 2, 3, 1)).astype(jnp.float32)
    x = jax.nn.relu(_ref_conv3x3(x, params['l0_w'], 1) * params['l0_s'] + params['l0_b'])
    x = _ref_block(x, params['l1b1'], 1)
    x = _ref_block(x, params['l1b2'], 1)
    x = _ref_block(x, params['l2b1'], 2)
    x = _ref_block(x, params['l2b2'], 1)
    return jnp.transpose(x, (0, 3, 1, 2))


# --------------------------------------------------------------------------
if __name__ == "__main__":
    key = jax.random.PRNGKey(0)
    kx, kp = jax.random.split(key)
    N, H, W = 2, 16, 16
    x = jax.random.normal(kx, (N, 3, H, W), jnp.float32)    # NCHW, like PyTorch
    params = init_params(kp)
    pp = prepare_params(params)                              # BN folded, bf16 weights

    fwd = jax.jit(resnet18_extractor)
    out = jax.block_until_ready(fwd(x, pp))

    assert out.shape == (N, 128, H // 2, W // 2), out.shape
    ref = resnet18_extractor_ref(x, params)                   # f32 reference
    err = float(jnp.max(jnp.abs(out - ref)))
    scale = float(jnp.max(jnp.abs(ref)))
    # bf16 matmul operands + bf16 inter-block activations with f32 accumulation:
    # allow a small relative tolerance.
    assert err <= 0.06 * scale + 0.1, f"max abs err {err} (ref scale {scale})"

    print("KERNEL_OK")
</pallas_src>

<mosaic_0001>
module attributes {stable_mosaic.version = 11 : i64} {
  func.func @_l0_kernel(%arg0: i32, %arg1: memref<256x27xbf16, #tpu.memory_space<vmem>>, %arg2: memref<27x64xbf16, #tpu.memory_space<vmem>>, %arg3: memref<1x64xf32, #tpu.memory_space<vmem>>, %arg4: memref<256x64xbf16, #tpu.memory_space<vmem>>) attributes {dimension_semantics = [#tpu.dimension_semantics<parallel>], iteration_bounds = array<i64: 2>, scalar_prefetch = 0 : i64, scratch_operands = 0 : i64, tpu.core_type = #tpu.core_type<tc>, window_params = [{transform_indices = @transform_0, window_bounds = array<i64: 256, 27>}, {pipeline_mode = #tpu.pipeline_mode<synchronous>, transform_indices = @transform_1, window_bounds = array<i64: 27, 64>}, {pipeline_mode = #tpu.pipeline_mode<synchronous>, transform_indices = @transform_2, window_bounds = array<i64: 1, 64>}, {transform_indices = @transform_3, window_bounds = array<i64: 256, 64>}]} {
    %c0 = arith.constant 0 : index
    %c0_0 = arith.constant 0 : index
    %0 = vector.load %arg1[%c0, %c0_0] : memref<256x27xbf16, #tpu.memory_space<vmem>>, vector<256x27xbf16>
    %c0_1 = arith.constant 0 : index
    %c0_2 = arith.constant 0 : index
    %1 = vector.load %arg2[%c0_1, %c0_2] : memref<27x64xbf16, #tpu.memory_space<vmem>>, vector<27x64xbf16>
    %cst = arith.constant dense<0.000000e+00> : vector<256x64xf32>
    %2 = tpu.matmul %0, %1, %cst {dimension_numbers = #tpu.dot_dimension_numbers<[1], [0], [0], [1], [0, 0, 1, 1], [], []>} : vector<256x27xbf16>, vector<27x64xbf16>, vector<256x64xf32> -> vector<256x64xf32>
    %c0_3 = arith.constant 0 : index
    %c0_4 = arith.constant 0 : index
    %3 = vector.load %arg3[%c0_3, %c0_4] : memref<1x64xf32, #tpu.memory_space<vmem>>, vector<1x64xf32>
    %4 = vector.broadcast %3 : vector<1x64xf32> to vector<256x64xf32>
    %5 = arith.addf %2, %4 : vector<256x64xf32>
    %cst_5 = arith.constant 0.000000e+00 : f32
    %6 = vector.broadcast %cst_5 : f32 to vector<256x64xf32>
    %7 = arith.maximumf %5, %6 : vector<256x64xf32>
    %8 = arith.truncf %7 : vector<256x64xf32> to vector<256x64xbf16>
    %c0_6 = arith.constant 0 : index
    %c0_7 = arith.constant 0 : index
    %9 = vector.load %arg4[%c0_6, %c0_7] : memref<256x64xbf16, #tpu.memory_space<vmem>>, vector<256x64xbf16>
    tpu.vector_store %arg4[%c0_6, %c0_7], %8 {strides = array<i32>} : memref<256x64xbf16, #tpu.memory_space<vmem>>, vector<256x64xbf16>,
    return
  }
  func.func @transform_0(%arg0: i32) -> (i32, i32) {
    %c0_i32 = arith.constant 0 : i32
    %c0_i32_0 = arith.constant 0 : i32
    return %arg0, %c0_i32 : i32, i32
  }
  func.func @transform_1(%arg0: i32) -> (i32, i32) {
    %c0_i32 = arith.constant 0 : i32
    %c0_i32_0 = arith.constant 0 : i32
    %c0_i32_1 = arith.constant 0 : i32
    return %c0_i32, %c0_i32_0 : i32, i32
  }
  func.func @transform_2(%arg0: i32) -> (i32, i32) {
    %c0_i32 = arith.constant 0 : i32
    %c0_i32_0 = arith.constant 0 : i32
    %c0_i32_1 = arith.constant 0 : i32
    return %c0_i32, %c0_i32_0 : i32, i32
  }
  func.func @transform_3(%arg0: i32) -> (i32, i32) {
    %c0_i32 = arith.constant 0 : i32
    %c0_i32_0 = arith.constant 0 : i32
    return %arg0, %c0_i32 : i32, i32
  }
}

module attributes {stable_mosaic.version = 11 : i64} {
  func.func @kernel(%arg0: i32, %arg1: memref<1x16x16x64xbf16, #tpu.memory_space<vmem>>, %arg2: memref<3x192x64xbf16, #tpu.memory_space<vmem>>, %arg3: memref<1x64xf32, #tpu.memory_space<vmem>>, %arg4: memref<3x192x64xbf16, #tpu.memory_space<vmem>>, %arg5: memref<1x64xf32, #tpu.memory_space<vmem>>, %arg6: memref<1x256x64xbf16, #tpu.memory_space<vmem>>, %arg7: memref<1x18x16x192xf32, #tpu.memory_space<vmem>>) attributes {dimension_semantics = [#tpu.dimension_semantics<parallel>], iteration_bounds = array<i64: 2>, scalar_prefetch = 0 : i64, scratch_operands = 1 : i64, tpu.core_type = #tpu.core_type<tc>, window_params = [{transform_indices = @transform_0, window_bounds = array<i64: 1, 16, 16, 64>}, {pipeline_mode = #tpu.pipeline_mode<synchronous>, transform_indices = @transform_1, window_bounds = array<i64: 3, 192, 64>}, {pipeline_mode = #tpu.pipeline_mode<synchronous>, transform_indices = @transform_2, window_bounds = array<i64: 1, 64>}, {pipeline_mode = #tpu.pipeline_mode<synchronous>, transform_indices = @transform_3, window_bounds = array<i64: 3, 192, 64>}, {pipeline_mode = #tpu.pipeline_mode<synchronous>, transform_indices = @transform_4, window_bounds = array<i64: 1, 64>}, {transform_indices = @transform_5, window_bounds = array<i64: 1, 256, 64>}]} {
    %cst = arith.constant 0.000000e+00 : f32
    %0 = vector.broadcast %cst : f32 to vector<1x1x16x192xf32>
    %c0 = arith.constant 0 : index
    %c0_0 = arith.constant 0 : index
    %c0_1 = arith.constant 0 : index
    %c0_2 = arith.constant 0 : index
    %1 = vector.load %arg7[%c0, %c0_0, %c0_1, %c0_2] : memref<1x18x16x192xf32, #tpu.memory_space<vmem>>, vector<1x1x16x192xf32>
    tpu.vector_store %arg7[%c0, %c0_0, %c0_1, %c0_2], %0 {strides = array<i32>} : memref<1x18x16x192xf32, #tpu.memory_space<vmem>>, vector<1x1x16x192xf32>,
    %c0_3 = arith.constant 0 : index
    %c17 = arith.constant 17 : index
    %c0_4 = arith.constant 0 : index
    %c0_5 = arith.constant 0 : index
    %2 = vector.load %arg7[%c0_3, %c17, %c0_4, %c0_5] : memref<1x18x16x192xf32, #tpu.memory_space<vmem>>, vector<1x1x16x192xf32>
    tpu.vector_store %arg7[%c0_3, %c17, %c0_4, %c0_5], %0 {strides = array<i32>} : memref<1x18x16x192xf32, #tpu.memory_space<vmem>>, vector<1x1x16x192xf32>,
    %cst_6 = arith.constant 0.000000e+00 : f32
    %3 = vector.broadcast %cst_6 : f32 to vector<1x16x1x64xf32>
    %c0_7 = arith.constant 0 : index
    %c1 = arith.constant 1 : index
    %c0_8 = arith.constant 0 : index
    %c0_9 = arith.constant 0 : index
    %4 = vector.load %arg7[%c0_7, %c1, %c0_8, %c0_9] : memref<1x18x16x192xf32, #tpu.memory_space<vmem>>, vector<1x16x1x64xf32>
    tpu.vector_store %arg7[%c0_7, %c1, %c0_8, %c0_9], %3 {strides = array<i32>} : memref<1x18x16x192xf32, #tpu.memory_space<vmem>>, vector<1x16x1x64xf32>,
    %c0_10 = arith.constant 0 : index
    %c1_11 = arith.constant 1 : index
    %c15 = arith.constant 15 : index
    %c128 = arith.constant 128 : index
    %5 = vector.load %arg7[%c0_10, %c1_11, %c15, %c128] : memref<1x18x16x192xf32, #tpu.memory_space<vmem>>, vector<1x16x1x64xf32>
    tpu.vector_store %arg7[%c0_10, %c1_11, %c15, %c128], %3 {strides = array<i32>} : memref<1x18x16x192xf32, #tpu.memory_space<vmem>>, vector<1x16x1x64xf32>,
    %c0_12 = arith.constant 0 : index
    %c0_13 = arith.constant 0 : index
    %c0_14 = arith.constant 0 : index
    %c0_15 = arith.constant 0 : index
    %6 = vector.load %arg1[%c0_12, %c0_13, %c0_14, %c0_15] : memref<1x16x16x64xbf16, #tpu.memory_space<vmem>>, vector<1x16x16x64xbf16>
    %7 = arith.extf %6 : vector<1x16x16x64xbf16> to vector<1x16x16x64xf32>
    %c0_16 = arith.constant 0 : index
    %c1_17 = arith.constant 1 : index
    %c0_18 = arith.constant 0 : index
    %c64 = arith.constant 64 : index
    %8 = vector.load %arg7[%c0_16, %c1_17, %c0_18, %c64] : memref<1x18x16x192xf32, #tpu.memory_space<vmem>>, vector<1x16x16x64xf32>
    tpu.vector_store %arg7[%c0_16, %c1_17, %c0_18, %c64], %7 {strides = array<i32>} : memref<1x18x16x192xf32, #tpu.memory_space<vmem>>, vector<1x16x16x64xf32>,
    %c0_19 = arith.constant 0 : index
    %c1_20 = arith.constant 1 : index
    %c0_21 = arith.constant 0 : index
    %c64_22 = arith.constant 64 : index
    %9 = vector.load %arg7[%c0_19, %c1_20, %c0_21, %c64_22] : memref<1x18x16x192xf32, #tpu.memory_space<vmem>>, vector<1x16x15x64xf32>
    %c0_23 = arith.constant 0 : index
    %c1_24 = arith.constant 1 : index
    %c1_25 = arith.constant 1 : index
    %c0_26 = arith.constant 0 : index
    %10 = vector.load %arg7[%c0_23, %c1_24, %c1_25, %c0_26] : memref<1x18x16x192xf32, #tpu.memory_space<vmem>>, vector<1x16x15x64xf32>
    tpu.vector_store %arg7[%c0_23, %c1_24, %c1_25, %c0_26], %9 {strides = array<i32>} : memref<1x18x16x192xf32, #tpu.memory_space<vmem>>, vector<1x16x15x64xf32>,
    %c0_27 = arith.constant 0 : index
    %c1_28 = arith.constant 1 : index
    %c1_29 = arith.constant 1 : index
    %c64_30 = arith.constant 64 : index
    %11 = vector.load %arg7[%c0_27, %c1_28, %c1_29, %c64_30] : memref<1x18x16x192xf32, #tpu.memory_space<vmem>>, vector<1x16x15x64xf32>
    %c0_31 = arith.constant 0 : index
    %c1_32 = arith.constant 1 : index
    %c0_33 = arith.constant 0 : index
    %c128_34 = arith.constant 128 : index
    %12 = vector.load %arg7[%c0_31, %c1_32, %c0_33, %c128_34] : memref<1x18x16x192xf32, #tpu.memory_space<vmem>>, vector<1x16x15x64xf32>
    tpu.vector_store %arg7[%c0_31, %c1_32, %c0_33, %c128_34], %11 {strides = array<i32>} : memref<1x18x16x192xf32, #tpu.memory_space<vmem>>, vector<1x16x15x64xf32>,
    %c0_35 = arith.constant 0 : index
    %c0_36 = arith.constant 0 : index
    %c0_37 = arith.constant 0 : index
    %c0_38 = arith.constant 0 : index
    %13 = vector.load %arg7[%c0_35, %c0_36, %c0_37, %c0_38] : memref<1x18x16x192xf32, #tpu.memory_space<vmem>>, vector<1x16x16x192xf32>
    %14 = vector.shape_cast %13 : vector<1x16x16x192xf32> to vector<256x192xf32>
    %15 = arith.truncf %14 : vector<256x192xf32> to vector<256x192xbf16>
    %c0_39 = arith.constant 0 : index
    %c0_40 = arith.constant 0 : index
    %c0_41 = arith.constant 0 : index
    %16 = vector.load %arg2[%c0_39, %c0_40, %c0_41] : memref<3x192x64xbf16, #tpu.memory_space<vmem>>, vector<1x192x64xbf16>
    %17 = vector.shape_cast %16 : vector<1x192x64xbf16> to vector<192x64xbf16>
    %cst_42 = arith.constant dense<0.000000e+00> : vector<256x64xf32>
    %18 = tpu.matmul %15, %17, %cst_42 {dimension_numbers = #tpu.dot_dimension_numbers<[1], [0], [0], [1], [0, 0, 1, 1], [], []>} : vector<256x192xbf16>, vector<192x64xbf16>, vector<256x64xf32> -> vector<256x64xf32>
    %c0_43 = arith.constant 0 : index
    %c1_44 = arith.constant 1 : index
    %c0_45 = arith.constant 0 : index
    %c0_46 = arith.constant 0 : index
    %19 = vector.load %arg7[%c0_43, %c1_44, %c0_45, %c0_46] : memref<1x18x16x192xf32, #tpu.memory_space<vmem>>, vector<1x16x16x192xf32>
    %20 = vector.shape_cast %19 : vector<1x16x16x192xf32> to vector<256x192xf32>
    %21 = arith.truncf %20 : vector<256x192xf32> to vector<256x192xbf16>
    %c1_47 = arith.constant 1 : index
    %c0_48 = arith.constant 0 : index
    %c0_49 = arith.constant 0 : index
    %22 = vector.load %arg2[%c1_47, %c0_48, %c0_49] : memref<3x192x64xbf16, #tpu.memory_space<vmem>>, vector<1x192x64xbf16>
    %23 = vector.shape_cast %22 : vector<1x192x64xbf16> to vector<192x64xbf16>
    %cst_50 = arith.constant dense<0.000000e+00> : vector<256x64xf32>
    %24 = tpu.matmul %21, %23, %cst_50 {dimension_numbers = #tpu.dot_dimension_numbers<[1], [0], [0], [1], [0, 0, 1, 1], [], []>} : vector<256x192xbf16>, vector<192x64xbf16>, vector<256x64xf32> -> vector<256x64xf32>
    %25 = arith.addf %18, %24 : vector<256x64xf32>
    %c0_51 = arith.constant 0 : index
    %c2 = arith.constant 2 : index
    %c0_52 = arith.constant 0 : index
    %c0_53 = arith.constant 0 : index
    %26 = vector.load %arg7[%c0_51, %c2, %c0_52, %c0_53] : memref<1x18x16x192xf32, #tpu.memory_space<vmem>>, vector<1x16x16x192xf32>
    %27 = vector.shape_cast %26 : vector<1x16x16x192xf32> to vector<256x192xf32>
    %28 = arith.truncf %27 : vector<256x192xf32> to vector<256x192xbf16>
    %c2_54 = arith.constant 2 : index
    %c0_55 = arith.constant 0 : index
    %c0_56 = arith.constant 0 : index
    %29 = vector.load %arg2[%c2_54, %c0_55, %c0_56] : memref<3x192x64xbf16, #tpu.memory_space<vmem>>, vector<1x192x64xbf16>
    %30 = vector.shape_cast %29 : vector<1x192x64xbf16> to vector<192x64xbf16>
    %cst_57 = arith.constant dense<0.000000e+00> : vector<256x64xf32>
    %31 = tpu.matmul %28, %30, %cst_57 {dimension_numbers = #tpu.dot_dimension_numbers<[1], [0], [0], [1], [0, 0, 1, 1], [], []>} : vector<256x192xbf16>, vector<192x64xbf16>, vector<256x64xf32> -> vector<256x64xf32>
    %32 = arith.addf %25, %31 : vector<256x64xf32>
    %c0_58 = arith.constant 0 : index
    %c0_59 = arith.constant 0 : index
    %33 = vector.load %arg3[%c0_58, %c0_59] : memref<1x64xf32, #tpu.memory_space<vmem>>, vector<1x64xf32>
    %34 = vector.broadcast %33 : vector<1x64xf32> to vector<256x64xf32>
    %35 = arith.addf %32, %34 : vector<256x64xf32>
    %cst_60 = arith.constant 0.000000e+00 : f32
    %36 = vector.broadcast %cst_60 : f32 to vector<256x64xf32>
    %37 = arith.maximumf %35, %36 : vector<256x64xf32>
    %38 = vector.shape_cast %37 : vector<256x64xf32> to vector<1x16x16x64xf32>
    %c0_61 = arith.constant 0 : index
    %c1_62 = arith.constant 1 : index
    %c0_63 = arith.constant 0 : index
    %c64_64 = arith.constant 64 : index
    %39 = vector.load %arg7[%c0_61, %c1_62, %c0_63, %c64_64] : memref<1x18x16x192xf32, #tpu.memory_space<vmem>>, vector<1x16x16x64xf32>
    tpu.vector_store %arg7[%c0_61, %c1_62, %c0_63, %c64_64], %38 {strides = array<i32>} : memref<1x18x16x192xf32, #tpu.memory_space<vmem>>, vector<1x16x16x64xf32>,
    %c0_65 = arith.constant 0 : index
    %c1_66 = arith.constant 1 : index
    %c0_67 = arith.constant 0 : index
    %c64_68 = arith.constant 64 : index
    %40 = vector.load %arg7[%c0_65, %c1_66, %c0_67, %c64_68] : memref<1x18x16x192xf32, #tpu.memory_space<vmem>>, vector<1x16x15x64xf32>
    %c0_69 = arith.constant 0 : index
    %c1_70 = arith.constant 1 : index
    %c1_71 = arith.constant 1 : index
    %c0_72 = arith.constant 0 : index
    %41 = vector.load %arg7[%c0_69, %c1_70, %c1_71, %c0_72] : memref<1x18x16x192xf32, #tpu.memory_space<vmem>>, vector<1x16x15x64xf32>
    tpu.vector_store %arg7[%c0_69, %c1_70, %c1_71, %c0_72], %40 {strides = array<i32>} : memref<1x18x16x192xf32, #tpu.memory_space<vmem>>, vector<1x16x15x64xf32>,
    %c0_73 = arith.constant 0 : index
    %c1_74 = arith.constant 1 : index
    %c1_75 = arith.constant 1 : index
    %c64_76 = arith.constant 64 : index
    %42 = vector.load %arg7[%c0_73, %c1_74, %c1_75, %c64_76] : memref<1x18x16x192xf32, #tpu.memory_space<vmem>>, vector<1x16x15x64xf32>
    %c0_77 = arith.constant 0 : index
    %c1_78 = arith.constant 1 : index
    %c0_79 = arith.constant 0 : index
    %c128_80 = arith.constant 128 : index
    %43 = vector.load %arg7[%c0_77, %c1_78, %c0_79, %c128_80] : memref<1x18x16x192xf32, #tpu.memory_space<vmem>>, vector<1x16x15x64xf32>
    tpu.vector_store %arg7[%c0_77, %c1_78, %c0_79, %c128_80], %42 {strides = array<i32>} : memref<1x18x16x192xf32, #tpu.memory_space<vmem>>, vector<1x16x15x64xf32>,
    %c0_81 = arith.constant 0 : index
    %c0_82 = arith.constant 0 : index
    %c0_83 = arith.constant 0 : index
    %c0_84 = arith.constant 0 : index
    %44 = vector.load %arg7[%c0_81, %c0_82, %c0_83, %c0_84] : memref<1x18x16x192xf32, #tpu.memory_space<vmem>>, vector<1x16x16x192xf32>
    %45 = vector.shape_cast %44 : vector<1x16x16x192xf32> to vector<256x192xf32>
    %46 = arith.truncf %45 : vector<256x192xf32> to vector<256x192xbf16>
    %c0_85 = arith.constant 0 : index
    %c0_86 = arith.constant 0 : index
    %c0_87 = arith.constant 0 : index
    %47 = vector.load %arg4[%c0_85, %c0_86, %c0_87] : memref<3x192x64xbf16, #tpu.memory_space<vmem>>, vector<1x192x64xbf16>
    %48 = vector.shape_cast %47 : vector<1x192x64xbf16> to vector<192x64xbf16>
    %cst_88 = arith.constant dense<0.000000e+00> : vector<256x64xf32>
    %49 = tpu.matmul %46, %48, %cst_88 {dimension_numbers = #tpu.dot_dimension_numbers<[1], [0], [0], [1], [0, 0, 1, 1], [], []>} : vector<256x192xbf16>, vector<192x64xbf16>, vector<256x64xf32> -> vector<256x64xf32>
    %c0_89 = arith.constant 0 : index
    %c1_90 = arith.constant 1 : index
    %c0_91 = arith.constant 0 : index
    %c0_92 = arith.constant 0 : index
    %50 = vector.load %arg7[%c0_89, %c1_90, %c0_91, %c0_92] : memref<1x18x16x192xf32, #tpu.memory_space<vmem>>, vector<1x16x16x192xf32>
    %51 = vector.shape_cast %50 : vector<1x16x16x192xf32> to vector<256x192xf32>
    %52 = arith.truncf %51 : vector<256x192xf32> to vector<256x192xbf16>
    %c1_93 = arith.constant 1 : index
    %c0_94 = arith.constant 0 : index
    %c0_95 = arith.constant 0 : index
    %53 = vector.load %arg4[%c1_93, %c0_94, %c0_95] : memref<3x192x64xbf16, #tpu.memory_space<vmem>>, vector<1x192x64xbf16>
    %54 = vector.shape_cast %53 : vector<1x192x64xbf16> to vector<192x64xbf16>
    %cst_96 = arith.constant dense<0.000000e+00> : vector<256x64xf32>
    %55 = tpu.matmul %52, %54, %cst_96 {dimension_numbers = #tpu.dot_dimension_numbers<[1], [0], [0], [1], [0, 0, 1, 1], [], []>} : vector<256x192xbf16>, vector<192x64xbf16>, vector<256x64xf32> -> vector<256x64xf32>
    %56 = arith.addf %49, %55 : vector<256x64xf32>
    %c0_97 = arith.constant 0 : index
    %c2_98 = arith.constant 2 : index
    %c0_99 = arith.constant 0 : index
    %c0_100 = arith.constant 0 : index
    %57 = vector.load %arg7[%c0_97, %c2_98, %c0_99, %c0_100] : memref<1x18x16x192xf32, #tpu.memory_space<vmem>>, vector<1x16x16x192xf32>
    %58 = vector.shape_cast %57 : vector<1x16x16x192xf32> to vector<256x192xf32>
    %59 = arith.truncf %58 : vector<256x192xf32> to vector<256x192xbf16>
    %c2_101 = arith.constant 2 : index
    %c0_102 = arith.constant 0 : index
    %c0_103 = arith.constant 0 : index
    %60 = vector.load %arg4[%c2_101, %c0_102, %c0_103] : memref<3x192x64xbf16, #tpu.memory_space<vmem>>, vector<1x192x64xbf16>
    %61 = vector.shape_cast %60 : vector<1x192x64xbf16> to vector<192x64xbf16>
    %cst_104 = arith.constant dense<0.000000e+00> : vector<256x64xf32>
    %62 = tpu.matmul %59, %61, %cst_104 {dimension_numbers = #tpu.dot_dimension_numbers<[1], [0], [0], [1], [0, 0, 1, 1], [], []>} : vector<256x192xbf16>, vector<192x64xbf16>, vector<256x64xf32> -> vector<256x64xf32>
    %63 = arith.addf %56, %62 : vector<256x64xf32>
    %c0_105 = arith.constant 0 : index
    %c0_106 = arith.constant 0 : index
    %64 = vector.load %arg5[%c0_105, %c0_106] : memref<1x64xf32, #tpu.memory_space<vmem>>, vector<1x64xf32>
    %65 = vector.broadcast %64 : vector<1x64xf32> to vector<256x64xf32>
    %66 = arith.addf %63, %65 : vector<256x64xf32>
    %c0_107 = arith.constant 0 : index
    %c0_108 = arith.constant 0 : index
    %c0_109 = arith.constant 0 : index
    %c0_110 = arith.constant 0 : index
    %67 = vector.load %arg1[%c0_107, %c0_108, %c0_109, %c0_110] : memref<1x16x16x64xbf16, #tpu.memory_space<vmem>>, vector<1x16x16x64xbf16>
    %68 = arith.extf %67 : vector<1x16x16x64xbf16> to vector<1x16x16x64xf32>
    %69 = vector.shape_cast %68 : vector<1x16x16x64xf32> to vector<256x64xf32>
    %70 = arith.addf %66, %69 : vector<256x64xf32>
    %cst_111 = arith.constant 0.000000e+00 : f32
    %71 = vector.broadcast %cst_111 : f32 to vector<256x64xf32>
    %72 = arith.maximumf %70, %71 : vector<256x64xf32>
    %73 = arith.truncf %72 : vector<256x64xf32> to vector<256x64xbf16>
    %74 = vector.shape_cast %73 : vector<256x64xbf16> to vector<1x256x64xbf16>
    %c0_112 = arith.constant 0 : index
    %c0_113 = arith.constant 0 : index
    %c0_114 = arith.constant 0 : index
    %75 = vector.load %arg6[%c0_112, %c0_113, %c0_114] : memref<1x256x64xbf16, #tpu.memory_space<vmem>>, vector<1x256x64xbf16>
    tpu.vector_store %arg6[%c0_112, %c0_113, %c0_114], %74 {strides = array<i32>} : memref<1x256x64xbf16, #tpu.memory_space<vmem>>, vector<1x256x64xbf16>,
    return
  }
  func.func @transform_0(%arg0: i32) -> (i32, i32, i32, i32) {
    %c0_i32 = arith.constant 0 : i32
    %c0_i32_0 = arith.constant 0 : i32
    %c0_i32_1 = arith.constant 0 : i32
    %c0_i32_2 = arith.constant 0 : i32
    return %arg0, %c0_i32, %c0_i32_0, %c0_i32_1 : i32, i32, i32, i32
  }
  func.func @transform_1(%arg0: i32) -> (i32, i32, i32) {
    %c0_i32 = arith.constant 0 : i32
    %c0_i32_0 = arith.constant 0 : i32
    %c0_i32_1 = arith.constant 0 : i32
    %c0_i32_2 = arith.constant 0 : i32
    return %c0_i32, %c0_i32_0, %c0_i32_1 : i32, i32, i32
  }
  func.func @transform_2(%arg0: i32) -> (i32, i32) {
    %c0_i32 = arith.constant 0 : i32
    %c0_i32_0 = arith.constant 0 : i32
    %c0_i32_1 = arith.constant 0 : i32
    return %c0_i32, %c0_i32_0 : i32, i32
  }
  func.func @transform_3(%arg0: i32) -> (i32, i32, i32) {
    %c0_i32 = arith.constant 0 : i32
    %c0_i32_0 = arith.constant 0 : i32
    %c0_i32_1 = arith.constant 0 : i32
    %c0_i32_2 = arith.constant 0 : i32
    return %c0_i32, %c0_i32_0, %c0_i32_1 : i32, i32, i32
  }
  func.func @transform_4(%arg0: i32) -> (i32, i32) {
    %c0_i32 = arith.constant 0 : i32
    %c0_i32_0 = arith.constant 0 : i32
    %c0_i32_1 = arith.constant 0 : i32
    return %c0_i32, %c0_i32_0 : i32, i32
  }
  func.func @transform_5(%arg0: i32) -> (i32, i32, i32) {
    %c0_i32 = arith.constant 0 : i32
    %c0_i32_0 = arith.constant 0 : i32
    %c0_i32_1 = arith.constant 0 : i32
    return %arg0, %c0_i32, %c0_i32_0 : i32, i32, i32
  }
}

module attributes {stable_mosaic.version = 11 : i64} {
  func.func @kernel(%arg0: i32, %arg1: memref<1x64x576xbf16, #tpu.memory_space<vmem>>, %arg2: memref<576x128xbf16, #tpu.memory_space<vmem>>, %arg3: memref<1x128xf32, #tpu.memory_space<vmem>>, %arg4: memref<3x384x128xbf16, #tpu.memory_space<vmem>>, %arg5: memref<1x128xf32, #tpu.memory_space<vmem>>, %arg6: memref<64x128xbf16, #tpu.memory_space<vmem>>, %arg7: memref<1x128xf32, #tpu.memory_space<vmem>>, %arg8: memref<1x64x128xbf16, #tpu.memory_space<vmem>>, %arg9: memref<1x10x8x384xf32, #tpu.memory_space<vmem>>) attributes {dimension_semantics = [#tpu.dimension_semantics<parallel>], iteration_bounds = array<i64: 2>, scalar_prefetch = 0 : i64, scratch_operands = 1 : i64, tpu.core_type = #tpu.core_type<tc>, window_params = [{transform_indices = @transform_0, window_bounds = array<i64: 1, 64, 576>}, {pipeline_mode = #tpu.pipeline_mode<synchronous>, transform_indices = @transform_1, window_bounds = array<i64: 576, 128>}, {pipeline_mode = #tpu.pipeline_mode<synchronous>, transform_indices = @transform_2, window_bounds = array<i64: 1, 128>}, {pipeline_mode = #tpu.pipeline_mode<synchronous>, transform_indices = @transform_3, window_bounds = array<i64: 3, 384, 128>}, {pipeline_mode = #tpu.pipeline_mode<synchronous>, transform_indices = @transform_4, window_bounds = array<i64: 1, 128>}, {pipeline_mode = #tpu.pipeline_mode<synchronous>, transform_indices = @transform_5, window_bounds = array<i64: 64, 128>}, {pipeline_mode = #tpu.pipeline_mode<synchronous>, transform_indices = @transform_6, window_bounds = array<i64: 1, 128>}, {transform_indices = @transform_7, window_bounds = array<i64: 1, 64, 128>}]} {
    %c0 = arith.constant 0 : index
    %c0_0 = arith.constant 0 : index
    %c0_1 = arith.constant 0 : index
    %0 = vector.load %arg1[%c0, %c0_0, %c0_1] : memref<1x64x576xbf16, #tpu.memory_space<vmem>>, vector<1x64x576xbf16>
    %1 = vector.shape_cast %0 : vector<1x64x576xbf16> to vector<64x576xbf16>
    %c0_2 = arith.constant 0 : index
    %c0_3 = arith.constant 0 : index
    %2 = vector.load %arg2[%c0_2, %c0_3] : memref<576x128xbf16, #tpu.memory_space<vmem>>, vector<576x128xbf16>
    %cst = arith.constant dense<0.000000e+00> : vector<64x128xf32>
    %3 = tpu.matmul %1, %2, %cst {dimension_numbers = #tpu.dot_dimension_numbers<[1], [0], [0], [1], [0, 0, 1, 1], [], []>} : vector<64x576xbf16>, vector<576x128xbf16>, vector<64x128xf32> -> vector<64x128xf32>
    %c0_4 = arith.constant 0 : index
    %c0_5 = arith.constant 0 : index
    %4 = vector.load %arg3[%c0_4, %c0_5] : memref<1x128xf32, #tpu.memory_space<vmem>>, vector<1x128xf32>
    %5 = vector.broadcast %4 : vector<1x128xf32> to vector<64x128xf32>
    %6 = arith.addf %3, %5 : vector<64x128xf32>
    %cst_6 = arith.constant 0.000000e+00 : f32
    %7 = vector.broadcast %cst_6 : f32 to vector<64x128xf32>
    %8 = arith.maximumf %6, %7 : vector<64x128xf32>
    %cst_7 = arith.constant 0.000000e+00 : f32
    %9 = vector.broadcast %cst_7 : f32 to vector<1x1x8x384xf32>
    %c0_8 = arith.constant 0 : index
    %c0_9 = arith.constant 0 : index
    %c0_10 = arith.constant 0 : index
    %c0_11 = arith.constant 0 : index
    %10 = vector.load %arg9[%c0_8, %c0_9, %c0_10, %c0_11] : memref<1x10x8x384xf32, #tpu.memory_space<vmem>>, vector<1x1x8x384xf32>
    tpu.vector_store %arg9[%c0_8, %c0_9, %c0_10, %c0_11], %9 {strides = array<i32>} : memref<1x10x8x384xf32, #tpu.memory_space<vmem>>, vector<1x1x8x384xf32>,
    %c0_12 = arith.constant 0 : index
    %c9 = arith.constant 9 : index
    %c0_13 = arith.constant 0 : index
    %c0_14 = arith.constant 0 : index
    %11 = vector.load %arg9[%c0_12, %c9, %c0_13, %c0_14] : memref<1x10x8x384xf32, #tpu.memory_space<vmem>>, vector<1x1x8x384xf32>
    tpu.vector_store %arg9[%c0_12, %c9, %c0_13, %c0_14], %9 {strides = array<i32>} : memref<1x10x8x384xf32, #tpu.memory_space<vmem>>, vector<1x1x8x384xf32>,
    %cst_15 = arith.constant 0.000000e+00 : f32
    %12 = vector.broadcast %cst_15 : f32 to vector<1x8x1x128xf32>
    %c0_16 = arith.constant 0 : index
    %c1 = arith.constant 1 : index
    %c0_17 = arith.constant 0 : index
    %c0_18 = arith.constant 0 : index
    %13 = vector.load %arg9[%c0_16, %c1, %c0_17, %c0_18] : memref<1x10x8x384xf32, #tpu.memory_space<vmem>>, vector<1x8x1x128xf32>
    tpu.vector_store %arg9[%c0_16, %c1, %c0_17, %c0_18], %12 {strides = array<i32>} : memref<1x10x8x384xf32, #tpu.memory_space<vmem>>, vector<1x8x1x128xf32>,
    %c0_19 = arith.constant 0 : index
    %c1_20 = arith.constant 1 : index
    %c7 = arith.constant 7 : index
    %c256 = arith.constant 256 : index
    %14 = vector.load %arg9[%c0_19, %c1_20, %c7, %c256] : memref<1x10x8x384xf32, #tpu.memory_space<vmem>>, vector<1x8x1x128xf32>
    tpu.vector_store %arg9[%c0_19, %c1_20, %c7, %c256], %12 {strides = array<i32>} : memref<1x10x8x384xf32, #tpu.memory_space<vmem>>, vector<1x8x1x128xf32>,
    %15 = vector.shape_cast %8 : vector<64x128xf32> to vector<1x8x8x128xf32>
    %c0_21 = arith.constant 0 : index
    %c1_22 = arith.constant 1 : index
    %c0_23 = arith.constant 0 : index
    %c128 = arith.constant 128 : index
    %16 = vector.load %arg9[%c0_21, %c1_22, %c0_23, %c128] : memref<1x10x8x384xf32, #tpu.memory_space<vmem>>, vector<1x8x8x128xf32>
    tpu.vector_store %arg9[%c0_21, %c1_22, %c0_23, %c128], %15 {strides = array<i32>} : memref<1x10x8x384xf32, #tpu.memory_space<vmem>>, vector<1x8x8x128xf32>,
    %c0_24 = arith.constant 0 : index
    %c1_25 = arith.constant 1 : index
    %c0_26 = arith.constant 0 : index
    %c128_27 = arith.constant 128 : index
    %17 = vector.load %arg9[%c0_24, %c1_25, %c0_26, %c128_27] : memref<1x10x8x384xf32, #tpu.memory_space<vmem>>, vector<1x8x7x128xf32>
    %c0_28 = arith.constant 0 : index
    %c1_29 = arith.constant 1 : index
    %c1_30 = arith.constant 1 : index
    %c0_31 = arith.constant 0 : index
    %18 = vector.load %arg9[%c0_28, %c1_29, %c1_30, %c0_31] : memref<1x10x8x384xf32, #tpu.memory_space<vmem>>, vector<1x8x7x128xf32>
    tpu.vector_store %arg9[%c0_28, %c1_29, %c1_30, %c0_31], %17 {strides = array<i32>} : memref<1x10x8x384xf32, #tpu.memory_space<vmem>>, vector<1x8x7x128xf32>,
    %c0_32 = arith.constant 0 : index
    %c1_33 = arith.constant 1 : index
    %c1_34 = arith.constant 1 : index
    %c128_35 = arith.constant 128 : index
    %19 = vector.load %arg9[%c0_32, %c1_33, %c1_34, %c128_35] : memref<1x10x8x384xf32, #tpu.memory_space<vmem>>, vector<1x8x7x128xf32>
    %c0_36 = arith.constant 0 : index
    %c1_37 = arith.constant 1 : index
    %c0_38 = arith.constant 0 : index
    %c256_39 = arith.constant 256 : index
    %20 = vector.load %arg9[%c0_36, %c1_37, %c0_38, %c256_39] : memref<1x10x8x384xf32, #tpu.memory_space<vmem>>, vector<1x8x7x128xf32>
    tpu.vector_store %arg9[%c0_36, %c1_37, %c0_38, %c256_39], %19 {strides = array<i32>} : memref<1x10x8x384xf32, #tpu.memory_space<vmem>>, vector<1x8x7x128xf32>,
    %c0_40 = arith.constant 0 : index
    %c0_41 = arith.constant 0 : index
    %c0_42 = arith.constant 0 : index
    %c0_43 = arith.constant 0 : index
    %21 = vector.load %arg9[%c0_40, %c0_41, %c0_42, %c0_43] : memref<1x10x8x384xf32, #tpu.memory_space<vmem>>, vector<1x8x8x384xf32>
    %22 = vector.shape_cast %21 : vector<1x8x8x384xf32> to vector<64x384xf32>
    %23 = arith.truncf %22 : vector<64x384xf32> to vector<64x384xbf16>
    %c0_44 = arith.constant 0 : index
    %c0_45 = arith.constant 0 : index
    %c0_46 = arith.constant 0 : index
    %24 = vector.load %arg4[%c0_44, %c0_45, %c0_46] : memref<3x384x128xbf16, #tpu.memory_space<vmem>>, vector<1x384x128xbf16>
    %25 = vector.shape_cast %24 : vector<1x384x128xbf16> to vector<384x128xbf16>
    %cst_47 = arith.constant dense<0.000000e+00> : vector<64x128xf32>
    %26 = tpu.matmul %23, %25, %cst_47 {dimension_numbers = #tpu.dot_dimension_numbers<[1], [0], [0], [1], [0, 0, 1, 1], [], []>} : vector<64x384xbf16>, vector<384x128xbf16>, vector<64x128xf32> -> vector<64x128xf32>
    %c0_48 = arith.constant 0 : index
    %c1_49 = arith.constant 1 : index
    %c0_50 = arith.constant 0 : index
    %c0_51 = arith.constant 0 : index
    %27 = vector.load %arg9[%c0_48, %c1_49, %c0_50, %c0_51] : memref<1x10x8x384xf32, #tpu.memory_space<vmem>>, vector<1x8x8x384xf32>
    %28 = vector.shape_cast %27 : vector<1x8x8x384xf32> to vector<64x384xf32>
    %29 = arith.truncf %28 : vector<64x384xf32> to vector<64x384xbf16>
    %c1_52 = arith.constant 1 : index
    %c0_53 = arith.constant 0 : index
    %c0_54 = arith.constant 0 : index
    %30 = vector.load %arg4[%c1_52, %c0_53, %c0_54] : memref<3x384x128xbf16, #tpu.memory_space<vmem>>, vector<1x384x128xbf16>
    %31 = vector.shape_cast %30 : vector<1x384x128xbf16> to vector<384x128xbf16>
    %cst_55 = arith.constant dense<0.000000e+00> : vector<64x128xf32>
    %32 = tpu.matmul %29, %31, %cst_55 {dimension_numbers = #tpu.dot_dimension_numbers<[1], [0], [0], [1], [0, 0, 1, 1], [], []>} : vector<64x384xbf16>, vector<384x128xbf16>, vector<64x128xf32> -> vector<64x128xf32>
    %33 = arith.addf %26, %32 : vector<64x128xf32>
    %c0_56 = arith.constant 0 : index
    %c2 = arith.constant 2 : index
    %c0_57 = arith.constant 0 : index
    %c0_58 = arith.constant 0 : index
    %34 = vector.load %arg9[%c0_56, %c2, %c0_57, %c0_58] : memref<1x10x8x384xf32, #tpu.memory_space<vmem>>, vector<1x8x8x384xf32>
    %35 = vector.shape_cast %34 : vector<1x8x8x384xf32> to vector<64x384xf32>
    %36 = arith.truncf %35 : vector<64x384xf32> to vector<64x384xbf16>
    %c2_59 = arith.constant 2 : index
    %c0_60 = arith.constant 0 : index
    %c0_61 = arith.constant 0 : index
    %37 = vector.load %arg4[%c2_59, %c0_60, %c0_61] : memref<3x384x128xbf16, #tpu.memory_space<vmem>>, vector<1x384x128xbf16>
    %38 = vector.shape_cast %37 : vector<1x384x128xbf16> to vector<384x128xbf16>
    %cst_62 = arith.constant dense<0.000000e+00> : vector<64x128xf32>
    %39 = tpu.matmul %36, %38, %cst_62 {dimension_numbers = #tpu.dot_dimension_numbers<[1], [0], [0], [1], [0, 0, 1, 1], [], []>} : vector<64x384xbf16>, vector<384x128xbf16>, vector<64x128xf32> -> vector<64x128xf32>
    %40 = arith.addf %33, %39 : vector<64x128xf32>
    %c0_63 = arith.constant 0 : index
    %c0_64 = arith.constant 0 : index
    %41 = vector.load %arg5[%c0_63, %c0_64] : memref<1x128xf32, #tpu.memory_space<vmem>>, vector<1x128xf32>
    %42 = vector.broadcast %41 : vector<1x128xf32> to vector<64x128xf32>
    %43 = arith.addf %40, %42 : vector<64x128xf32>
    %c0_65 = arith.constant 0 : index
    %c0_66 = arith.constant 0 : index
    %c256_67 = arith.constant 256 : index
    %44 = vector.load %arg1[%c0_65, %c0_66, %c256_67] : memref<1x64x576xbf16, #tpu.memory_space<vmem>>, vector<1x64x64xbf16>
    %45 = vector.shape_cast %44 : vector<1x64x64xbf16> to vector<64x64xbf16>
    %c0_68 = arith.constant 0 : index
    %c0_69 = arith.constant 0 : index
    %46 = vector.load %arg6[%c0_68, %c0_69] : memref<64x128xbf16, #tpu.memory_space<vmem>>, vector<64x128xbf16>
    %cst_70 = arith.constant dense<0.000000e+00> : vector<64x128xf32>
    %47 = tpu.matmul %45, %46, %cst_70 {dimension_numbers = #tpu.dot_dimension_numbers<[1], [0], [0], [1], [0, 0, 1, 1], [], []>} : vector<64x64xbf16>, vector<64x128xbf16>, vector<64x128xf32> -> vector<64x128xf32>
    %c0_71 = arith.constant 0 : index
    %c0_72 = arith.constant 0 : index
    %48 = vector.load %arg7[%c0_71, %c0_72] : memref<1x128xf32, #tpu.memory_space<vmem>>, vector<1x128xf32>
    %49 = vector.broadcast %48 : vector<1x128xf32> to vector<64x128xf32>
    %50 = arith.addf %47, %49 : vector<64x128xf32>
    %51 = arith.addf %43, %50 : vector<64x128xf32>
    %cst_73 = arith.constant 0.000000e+00 : f32
    %52 = vector.broadcast %cst_73 : f32 to vector<64x128xf32>
    %53 = arith.maximumf %51, %52 : vector<64x128xf32>
    %54 = arith.truncf %53 : vector<64x128xf32> to vector<64x128xbf16>
    %55 = vector.shape_cast %54 : vector<64x128xbf16> to vector<1x64x128xbf16>
    %c0_74 = arith.constant 0 : index
    %c0_75 = arith.constant 0 : index
    %c0_76 = arith.constant 0 : index
    %56 = vector.load %arg8[%c0_74, %c0_75, %c0_76] : memref<1x64x128xbf16, #tpu.memory_space<vmem>>, vector<1x64x128xbf16>
    tpu.vector_store %arg8[%c0_74, %c0_75, %c0_76], %55 {strides = array<i32>} : memref<1x64x128xbf16, #tpu.memory_space<vmem>>, vector<1x64x128xbf16>,
    return
  }
  func.func @transform_0(%arg0: i32) -> (i32, i32, i32) {
    %c0_i32 = arith.constant 0 : i32
    %c0_i32_0 = arith.constant 0 : i32
    %c0_i32_1 = arith.constant 0 : i32
    return %arg0, %c0_i32, %c0_i32_0 : i32, i32, i32
  }
  func.func @transform_1(%arg0: i32) -> (i32, i32) {
    %c0_i32 = arith.constant 0 : i32
    %c0_i32_0 = arith.constant 0 : i32
    %c0_i32_1 = arith.constant 0 : i32
    return %c0_i32, %c0_i32_0 : i32, i32
  }
  func.func @transform_2(%arg0: i32) -> (i32, i32) {
    %c0_i32 = arith.constant 0 : i32
    %c0_i32_0 = arith.constant 0 : i32
    %c0_i32_1 = arith.constant 0 : i32
    return %c0_i32, %c0_i32_0 : i32, i32
  }
  func.func @transform_3(%arg0: i32) -> (i32, i32, i32) {
    %c0_i32 = arith.constant 0 : i32
    %c0_i32_0 = arith.constant 0 : i32
    %c0_i32_1 = arith.constant 0 : i32
    %c0_i32_2 = arith.constant 0 : i32
    return %c0_i32, %c0_i32_0, %c0_i32_1 : i32, i32, i32
  }
  func.func @transform_4(%arg0: i32) -> (i32, i32) {
    %c0_i32 = arith.constant 0 : i32
    %c0_i32_0 = arith.constant 0 : i32
    %c0_i32_1 = arith.constant 0 : i32
    return %c0_i32, %c0_i32_0 : i32, i32
  }
  func.func @transform_5(%arg0: i32) -> (i32, i32) {
    %c0_i32 = arith.constant 0 : i32
    %c0_i32_0 = arith.constant 0 : i32
    %c0_i32_1 = arith.constant 0 : i32
    return %c0_i32, %c0_i32_0 : i32, i32
  }
  func.func @transform_6(%arg0: i32) -> (i32, i32) {
    %c0_i32 = arith.constant 0 : i32
    %c0_i32_0 = arith.constant 0 : i32
    %c0_i32_1 = arith.constant 0 : i32
    return %c0_i32, %c0_i32_0 : i32, i32
  }
  func.func @transform_7(%arg0: i32) -> (i32, i32, i32) {
    %c0_i32 = arith.constant 0 : i32
    %c0_i32_0 = arith.constant 0 : i32
    %c0_i32_1 = arith.constant 0 : i32
    return %arg0, %c0_i32, %c0_i32_0 : i32, i32, i32
  }
}

module attributes {stable_mosaic.version = 11 : i64} {
  func.func @kernel(%arg0: i32, %arg1: memref<1x8x8x128xbf16, #tpu.memory_space<vmem>>, %arg2: memref<3x384x128xbf16, #tpu.memory_space<vmem>>, %arg3: memref<1x128xf32, #tpu.memory_space<vmem>>, %arg4: memref<3x384x128xbf16, #tpu.memory_space<vmem>>, %arg5: memref<1x128xf32, #tpu.memory_space<vmem>>, %arg6: memref<1x64x128xbf16, #tpu.memory_space<vmem>>, %arg7: memref<1x10x8x384xf32, #tpu.memory_space<vmem>>) attributes {dimension_semantics = [#tpu.dimension_semantics<parallel>], iteration_bounds = array<i64: 2>, scalar_prefetch = 0 : i64, scratch_operands = 1 : i64, tpu.core_type = #tpu.core_type<tc>, window_params = [{transform_indices = @transform_0, window_bounds = array<i64: 1, 8, 8, 128>}, {pipeline_mode = #tpu.pipeline_mode<synchronous>, transform_indices = @transform_1, window_bounds = array<i64: 3, 384, 128>}, {pipeline_mode = #tpu.pipeline_mode<synchronous>, transform_indices = @transform_2, window_bounds = array<i64: 1, 128>}, {pipeline_mode = #tpu.pipeline_mode<synchronous>, transform_indices = @transform_3, window_bounds = array<i64: 3, 384, 128>}, {pipeline_mode = #tpu.pipeline_mode<synchronous>, transform_indices = @transform_4, window_bounds = array<i64: 1, 128>}, {transform_indices = @transform_5, window_bounds = array<i64: 1, 64, 128>}]} {
    %cst = arith.constant 0.000000e+00 : f32
    %0 = vector.broadcast %cst : f32 to vector<1x1x8x384xf32>
    %c0 = arith.constant 0 : index
    %c0_0 = arith.constant 0 : index
    %c0_1 = arith.constant 0 : index
    %c0_2 = arith.constant 0 : index
    %1 = vector.load %arg7[%c0, %c0_0, %c0_1, %c0_2] : memref<1x10x8x384xf32, #tpu.memory_space<vmem>>, vector<1x1x8x384xf32>
    tpu.vector_store %arg7[%c0, %c0_0, %c0_1, %c0_2], %0 {strides = array<i32>} : memref<1x10x8x384xf32, #tpu.memory_space<vmem>>, vector<1x1x8x384xf32>,
    %c0_3 = arith.constant 0 : index
    %c9 = arith.constant 9 : index
    %c0_4 = arith.constant 0 : index
    %c0_5 = arith.constant 0 : index
    %2 = vector.load %arg7[%c0_3, %c9, %c0_4, %c0_5] : memref<1x10x8x384xf32, #tpu.memory_space<vmem>>, vector<1x1x8x384xf32>
    tpu.vector_store %arg7[%c0_3, %c9, %c0_4, %c0_5], %0 {strides = array<i32>} : memref<1x10x8x384xf32, #tpu.memory_space<vmem>>, vector<1x1x8x384xf32>,
    %cst_6 = arith.constant 0.000000e+00 : f32
    %3 = vector.broadcast %cst_6 : f32 to vector<1x8x1x128xf32>
    %c0_7 = arith.constant 0 : index
    %c1 = arith.constant 1 : index
    %c0_8 = arith.constant 0 : index
    %c0_9 = arith.constant 0 : index
    %4 = vector.load %arg7[%c0_7, %c1, %c0_8, %c0_9] : memref<1x10x8x384xf32, #tpu.memory_space<vmem>>, vector<1x8x1x128xf32>
    tpu.vector_store %arg7[%c0_7, %c1, %c0_8, %c0_9], %3 {strides = array<i32>} : memref<1x10x8x384xf32, #tpu.memory_space<vmem>>, vector<1x8x1x128xf32>,
    %c0_10 = arith.constant 0 : index
    %c1_11 = arith.constant 1 : index
    %c7 = arith.constant 7 : index
    %c256 = arith.constant 256 : index
    %5 = vector.load %arg7[%c0_10, %c1_11, %c7, %c256] : memref<1x10x8x384xf32, #tpu.memory_space<vmem>>, vector<1x8x1x128xf32>
    tpu.vector_store %arg7[%c0_10, %c1_11, %c7, %c256], %3 {strides = array<i32>} : memref<1x10x8x384xf32, #tpu.memory_space<vmem>>, vector<1x8x1x128xf32>,
    %c0_12 = arith.constant 0 : index
    %c0_13 = arith.constant 0 : index
    %c0_14 = arith.constant 0 : index
    %c0_15 = arith.constant 0 : index
    %6 = vector.load %arg1[%c0_12, %c0_13, %c0_14, %c0_15] : memref<1x8x8x128xbf16, #tpu.memory_space<vmem>>, vector<1x8x8x128xbf16>
    %7 = arith.extf %6 : vector<1x8x8x128xbf16> to vector<1x8x8x128xf32>
    %c0_16 = arith.constant 0 : index
    %c1_17 = arith.constant 1 : index
    %c0_18 = arith.constant 0 : index
    %c128 = arith.constant 128 : index
    %8 = vector.load %arg7[%c0_16, %c1_17, %c0_18, %c128] : memref<1x10x8x384xf32, #tpu.memory_space<vmem>>, vector<1x8x8x128xf32>
    tpu.vector_store %arg7[%c0_16, %c1_17, %c0_18, %c128], %7 {strides = array<i32>} : memref<1x10x8x384xf32, #tpu.memory_space<vmem>>, vector<1x8x8x128xf32>,
    %c0_19 = arith.constant 0 : index
    %c1_20 = arith.constant 1 : index
    %c0_21 = arith.constant 0 : index
    %c128_22 = arith.constant 128 : index
    %9 = vector.load %arg7[%c0_19, %c1_20, %c0_21, %c128_22] : memref<1x10x8x384xf32, #tpu.memory_space<vmem>>, vector<1x8x7x128xf32>
    %c0_23 = arith.constant 0 : index
    %c1_24 = arith.constant 1 : index
    %c1_25 = arith.constant 1 : index
    %c0_26 = arith.constant 0 : index
    %10 = vector.load %arg7[%c0_23, %c1_24, %c1_25, %c0_26] : memref<1x10x8x384xf32, #tpu.memory_space<vmem>>, vector<1x8x7x128xf32>
    tpu.vector_store %arg7[%c0_23, %c1_24, %c1_25, %c0_26], %9 {strides = array<i32>} : memref<1x10x8x384xf32, #tpu.memory_space<vmem>>, vector<1x8x7x128xf32>,
    %c0_27 = arith.constant 0 : index
    %c1_28 = arith.constant 1 : index
    %c1_29 = arith.constant 1 : index
    %c128_30 = arith.constant 128 : index
    %11 = vector.load %arg7[%c0_27, %c1_28, %c1_29, %c128_30] : memref<1x10x8x384xf32, #tpu.memory_space<vmem>>, vector<1x8x7x128xf32>
    %c0_31 = arith.constant 0 : index
    %c1_32 = arith.constant 1 : index
    %c0_33 = arith.constant 0 : index
    %c256_34 = arith.constant 256 : index
    %12 = vector.load %arg7[%c0_31, %c1_32, %c0_33, %c256_34] : memref<1x10x8x384xf32, #tpu.memory_space<vmem>>, vector<1x8x7x128xf32>
    tpu.vector_store %arg7[%c0_31, %c1_32, %c0_33, %c256_34], %11 {strides = array<i32>} : memref<1x10x8x384xf32, #tpu.memory_space<vmem>>, vector<1x8x7x128xf32>,
    %c0_35 = arith.constant 0 : index
    %c0_36 = arith.constant 0 : index
    %c0_37 = arith.constant 0 : index
    %c0_38 = arith.constant 0 : index
    %13 = vector.load %arg7[%c0_35, %c0_36, %c0_37, %c0_38] : memref<1x10x8x384xf32, #tpu.memory_space<vmem>>, vector<1x8x8x384xf32>
    %14 = vector.shape_cast %13 : vector<1x8x8x384xf32> to vector<64x384xf32>
    %15 = arith.truncf %14 : vector<64x384xf32> to vector<64x384xbf16>
    %c0_39 = arith.constant 0 : index
    %c0_40 = arith.constant 0 : index
    %c0_41 = arith.constant 0 : index
    %16 = vector.load %arg2[%c0_39, %c0_40, %c0_41] : memref<3x384x128xbf16, #tpu.memory_space<vmem>>, vector<1x384x128xbf16>
    %17 = vector.shape_cast %16 : vector<1x384x128xbf16> to vector<384x128xbf16>
    %cst_42 = arith.constant dense<0.000000e+00> : vector<64x128xf32>
    %18 = tpu.matmul %15, %17, %cst_42 {dimension_numbers = #tpu.dot_dimension_numbers<[1], [0], [0], [1], [0, 0, 1, 1], [], []>} : vector<64x384xbf16>, vector<384x128xbf16>, vector<64x128xf32> -> vector<64x128xf32>
    %c0_43 = arith.constant 0 : index
    %c1_44 = arith.constant 1 : index
    %c0_45 = arith.constant 0 : index
    %c0_46 = arith.constant 0 : index
    %19 = vector.load %arg7[%c0_43, %c1_44, %c0_45, %c0_46] : memref<1x10x8x384xf32, #tpu.memory_space<vmem>>, vector<1x8x8x384xf32>
    %20 = vector.shape_cast %19 : vector<1x8x8x384xf32> to vector<64x384xf32>
    %21 = arith.truncf %20 : vector<64x384xf32> to vector<64x384xbf16>
    %c1_47 = arith.constant 1 : index
    %c0_48 = arith.constant 0 : index
    %c0_49 = arith.constant 0 : index
    %22 = vector.load %arg2[%c1_47, %c0_48, %c0_49] : memref<3x384x128xbf16, #tpu.memory_space<vmem>>, vector<1x384x128xbf16>
    %23 = vector.shape_cast %22 : vector<1x384x128xbf16> to vector<384x128xbf16>
    %cst_50 = arith.constant dense<0.000000e+00> : vector<64x128xf32>
    %24 = tpu.matmul %21, %23, %cst_50 {dimension_numbers = #tpu.dot_dimension_numbers<[1], [0], [0], [1], [0, 0, 1, 1], [], []>} : vector<64x384xbf16>, vector<384x128xbf16>, vector<64x128xf32> -> vector<64x128xf32>
    %25 = arith.addf %18, %24 : vector<64x128xf32>
    %c0_51 = arith.constant 0 : index
    %c2 = arith.constant 2 : index
    %c0_52 = arith.constant 0 : index
    %c0_53 = arith.constant 0 : index
    %26 = vector.load %arg7[%c0_51, %c2, %c0_52, %c0_53] : memref<1x10x8x384xf32, #tpu.memory_space<vmem>>, vector<1x8x8x384xf32>
    %27 = vector.shape_cast %26 : vector<1x8x8x384xf32> to vector<64x384xf32>
    %28 = arith.truncf %27 : vector<64x384xf32> to vector<64x384xbf16>
    %c2_54 = arith.constant 2 : index
    %c0_55 = arith.constant 0 : index
    %c0_56 = arith.constant 0 : index
    %29 = vector.load %arg2[%c2_54, %c0_55, %c0_56] : memref<3x384x128xbf16, #tpu.memory_space<vmem>>, vector<1x384x128xbf16>
    %30 = vector.shape_cast %29 : vector<1x384x128xbf16> to vector<384x128xbf16>
    %cst_57 = arith.constant dense<0.000000e+00> : vector<64x128xf32>
    %31 = tpu.matmul %28, %30, %cst_57 {dimension_numbers = #tpu.dot_dimension_numbers<[1], [0], [0], [1], [0, 0, 1, 1], [], []>} : vector<64x384xbf16>, vector<384x128xbf16>, vector<64x128xf32> -> vector<64x128xf32>
    %32 = arith.addf %25, %31 : vector<64x128xf32>
    %c0_58 = arith.constant 0 : index
    %c0_59 = arith.constant 0 : index
    %33 = vector.load %arg3[%c0_58, %c0_59] : memref<1x128xf32, #tpu.memory_space<vmem>>, vector<1x128xf32>
    %34 = vector.broadcast %33 : vector<1x128xf32> to vector<64x128xf32>
    %35 = arith.addf %32, %34 : vector<64x128xf32>
    %cst_60 = arith.constant 0.000000e+00 : f32
    %36 = vector.broadcast %cst_60 : f32 to vector<64x128xf32>
    %37 = arith.maximumf %35, %36 : vector<64x128xf32>
    %38 = vector.shape_cast %37 : vector<64x128xf32> to vector<1x8x8x128xf32>
    %c0_61 = arith.constant 0 : index
    %c1_62 = arith.constant 1 : index
    %c0_63 = arith.constant 0 : index
    %c128_64 = arith.constant 128 : index
    %39 = vector.load %arg7[%c0_61, %c1_62, %c0_63, %c128_64] : memref<1x10x8x384xf32, #tpu.memory_space<vmem>>, vector<1x8x8x128xf32>
    tpu.vector_store %arg7[%c0_61, %c1_62, %c0_63, %c128_64], %38 {strides = array<i32>} : memref<1x10x8x384xf32, #tpu.memory_space<vmem>>, vector<1x8x8x128xf32>,
    %c0_65 = arith.constant 0 : index
    %c1_66 = arith.constant 1 : index
    %c0_67 = arith.constant 0 : index
    %c128_68 = arith.constant 128 : index
    %40 = vector.load %arg7[%c0_65, %c1_66, %c0_67, %c128_68] : memref<1x10x8x384xf32, #tpu.memory_space<vmem>>, vector<1x8x7x128xf32>
    %c0_69 = arith.constant 0 : index
    %c1_70 = arith.constant 1 : index
    %c1_71 = arith.constant 1 : index
    %c0_72 = arith.constant 0 : index
    %41 = vector.load %arg7[%c0_69, %c1_70, %c1_71, %c0_72] : memref<1x10x8x384xf32, #tpu.memory_space<vmem>>, vector<1x8x7x128xf32>
    tpu.vector_store %arg7[%c0_69, %c1_70, %c1_71, %c0_72], %40 {strides = array<i32>} : memref<1x10x8x384xf32, #tpu.memory_space<vmem>>, vector<1x8x7x128xf32>,
    %c0_73 = arith.constant 0 : index
    %c1_74 = arith.constant 1 : index
    %c1_75 = arith.constant 1 : index
    %c128_76 = arith.constant 128 : index
    %42 = vector.load %arg7[%c0_73, %c1_74, %c1_75, %c128_76] : memref<1x10x8x384xf32, #tpu.memory_space<vmem>>, vector<1x8x7x128xf32>
    %c0_77 = arith.constant 0 : index
    %c1_78 = arith.constant 1 : index
    %c0_79 = arith.constant 0 : index
    %c256_80 = arith.constant 256 : index
    %43 = vector.load %arg7[%c0_77, %c1_78, %c0_79, %c256_80] : memref<1x10x8x384xf32, #tpu.memory_space<vmem>>, vector<1x8x7x128xf32>
    tpu.vector_store %arg7[%c0_77, %c1_78, %c0_79, %c256_80], %42 {strides = array<i32>} : memref<1x10x8x384xf32, #tpu.memory_space<vmem>>, vector<1x8x7x128xf32>,
    %c0_81 = arith.constant 0 : index
    %c0_82 = arith.constant 0 : index
    %c0_83 = arith.constant 0 : index
    %c0_84 = arith.constant 0 : index
    %44 = vector.load %arg7[%c0_81, %c0_82, %c0_83, %c0_84] : memref<1x10x8x384xf32, #tpu.memory_space<vmem>>, vector<1x8x8x384xf32>
    %45 = vector.shape_cast %44 : vector<1x8x8x384xf32> to vector<64x384xf32>
    %46 = arith.truncf %45 : vector<64x384xf32> to vector<64x384xbf16>
    %c0_85 = arith.constant 0 : index
    %c0_86 = arith.constant 0 : index
    %c0_87 = arith.constant 0 : index
    %47 = vector.load %arg4[%c0_85, %c0_86, %c0_87] : memref<3x384x128xbf16, #tpu.memory_space<vmem>>, vector<1x384x128xbf16>
    %48 = vector.shape_cast %47 : vector<1x384x128xbf16> to vector<384x128xbf16>
    %cst_88 = arith.constant dense<0.000000e+00> : vector<64x128xf32>
    %49 = tpu.matmul %46, %48, %cst_88 {dimension_numbers = #tpu.dot_dimension_numbers<[1], [0], [0], [1], [0, 0, 1, 1], [], []>} : vector<64x384xbf16>, vector<384x128xbf16>, vector<64x128xf32> -> vector<64x128xf32>
    %c0_89 = arith.constant 0 : index
    %c1_90 = arith.constant 1 : index
    %c0_91 = arith.constant 0 : index
    %c0_92 = arith.constant 0 : index
    %50 = vector.load %arg7[%c0_89, %c1_90, %c0_91, %c0_92] : memref<1x10x8x384xf32, #tpu.memory_space<vmem>>, vector<1x8x8x384xf32>
    %51 = vector.shape_cast %50 : vector<1x8x8x384xf32> to vector<64x384xf32>
    %52 = arith.truncf %51 : vector<64x384xf32> to vector<64x384xbf16>
    %c1_93 = arith.constant 1 : index
    %c0_94 = arith.constant 0 : index
    %c0_95 = arith.constant 0 : index
    %53 = vector.load %arg4[%c1_93, %c0_94, %c0_95] : memref<3x384x128xbf16, #tpu.memory_space<vmem>>, vector<1x384x128xbf16>
    %54 = vector.shape_cast %53 : vector<1x384x128xbf16> to vector<384x128xbf16>
    %cst_96 = arith.constant dense<0.000000e+00> : vector<64x128xf32>
    %55 = tpu.matmul %52, %54, %cst_96 {dimension_numbers = #tpu.dot_dimension_numbers<[1], [0], [0], [1], [0, 0, 1, 1], [], []>} : vector<64x384xbf16>, vector<384x128xbf16>, vector<64x128xf32> -> vector<64x128xf32>
    %56 = arith.addf %49, %55 : vector<64x128xf32>
    %c0_97 = arith.constant 0 : index
    %c2_98 = arith.constant 2 : index
    %c0_99 = arith.constant 0 : index
    %c0_100 = arith.constant 0 : index
    %57 = vector.load %arg7[%c0_97, %c2_98, %c0_99, %c0_100] : memref<1x10x8x384xf32, #tpu.memory_space<vmem>>, vector<1x8x8x384xf32>
    %58 = vector.shape_cast %57 : vector<1x8x8x384xf32> to vector<64x384xf32>
    %59 = arith.truncf %58 : vector<64x384xf32> to vector<64x384xbf16>
    %c2_101 = arith.constant 2 : index
    %c0_102 = arith.constant 0 : index
    %c0_103 = arith.constant 0 : index
    %60 = vector.load %arg4[%c2_101, %c0_102, %c0_103] : memref<3x384x128xbf16, #tpu.memory_space<vmem>>, vector<1x384x128xbf16>
    %61 = vector.shape_cast %60 : vector<1x384x128xbf16> to vector<384x128xbf16>
    %cst_104 = arith.constant dense<0.000000e+00> : vector<64x128xf32>
    %62 = tpu.matmul %59, %61, %cst_104 {dimension_numbers = #tpu.dot_dimension_numbers<[1], [0], [0], [1], [0, 0, 1, 1], [], []>} : vector<64x384xbf16>, vector<384x128xbf16>, vector<64x128xf32> -> vector<64x128xf32>
    %63 = arith.addf %56, %62 : vector<64x128xf32>
    %c0_105 = arith.constant 0 : index
    %c0_106 = arith.constant 0 : index
    %64 = vector.load %arg5[%c0_105, %c0_106] : memref<1x128xf32, #tpu.memory_space<vmem>>, vector<1x128xf32>
    %65 = vector.broadcast %64 : vector<1x128xf32> to vector<64x128xf32>
    %66 = arith.addf %63, %65 : vector<64x128xf32>
    %c0_107 = arith.constant 0 : index
    %c0_108 = arith.constant 0 : index
    %c0_109 = arith.constant 0 : index
    %c0_110 = arith.constant 0 : index
    %67 = vector.load %arg1[%c0_107, %c0_108, %c0_109, %c0_110] : memref<1x8x8x128xbf16, #tpu.memory_space<vmem>>, vector<1x8x8x128xbf16>
    %68 = arith.extf %67 : vector<1x8x8x128xbf16> to vector<1x8x8x128xf32>
    %69 = vector.shape_cast %68 : vector<1x8x8x128xf32> to vector<64x128xf32>
    %70 = arith.addf %66, %69 : vector<64x128xf32>
    %cst_111 = arith.constant 0.000000e+00 : f32
    %71 = vector.broadcast %cst_111 : f32 to vector<64x128xf32>
    %72 = arith.maximumf %70, %71 : vector<64x128xf32>
    %73 = arith.truncf %72 : vector<64x128xf32> to vector<64x128xbf16>
    %74 = vector.shape_cast %73 : vector<64x128xbf16> to vector<1x64x128xbf16>
    %c0_112 = arith.constant 0 : index
    %c0_113 = arith.constant 0 : index
    %c0_114 = arith.constant 0 : index
    %75 = vector.load %arg6[%c0_112, %c0_113, %c0_114] : memref<1x64x128xbf16, #tpu.memory_space<vmem>>, vector<1x64x128xbf16>
    tpu.vector_store %arg6[%c0_112, %c0_113, %c0_114], %74 {strides = array<i32>} : memref<1x64x128xbf16, #tpu.memory_space<vmem>>, vector<1x64x128xbf16>,
    return
  }
  func.func @transform_0(%arg0: i32) -> (i32, i32, i32, i32) {
    %c0_i32 = arith.constant 0 : i32
    %c0_i32_0 = arith.constant 0 : i32
    %c0_i32_1 = arith.constant 0 : i32
    %c0_i32_2 = arith.constant 0 : i32
    return %arg0, %c0_i32, %c0_i32_0, %c0_i32_1 : i32, i32, i32, i32
  }
  func.func @transform_1(%arg0: i32) -> (i32, i32, i32) {
    %c0_i32 = arith.constant 0 : i32
    %c0_i32_0 = arith.constant 0 : i32
    %c0_i32_1 = arith.constant 0 : i32
    %c0_i32_2 = arith.constant 0 : i32
    return %c0_i32, %c0_i32_0, %c0_i32_1 : i32, i32, i32
  }
  func.func @transform_2(%arg0: i32) -> (i32, i32) {
    %c0_i32 = arith.constant 0 : i32
    %c0_i32_0 = arith.constant 0 : i32
    %c0_i32_1 = arith.constant 0 : i32
    return %c0_i32, %c0_i32_0 : i32, i32
  }
  func.func @transform_3(%arg0: i32) -> (i32, i32, i32) {
    %c0_i32 = arith.constant 0 : i32
    %c0_i32_0 = arith.constant 0 : i32
    %c0_i32_1 = arith.constant 0 : i32
    %c0_i32_2 = arith.constant 0 : i32
    return %c0_i32, %c0_i32_0, %c0_i32_1 : i32, i32, i32
  }
  func.func @transform_4(%arg0: i32) -> (i32, i32) {
    %c0_i32 = arith.constant 0 : i32
    %c0_i32_0 = arith.constant 0 : i32
    %c0_i32_1 = arith.constant 0 : i32
    return %c0_i32, %c0_i32_0 : i32, i32
  }
  func.func @transform_5(%arg0: i32) -> (i32, i32, i32) {
    %c0_i32 = arith.constant 0 : i32
    %c0_i32_0 = arith.constant 0 : i32
    %c0_i32_1 = arith.constant 0 : i32
    return %arg0, %c0_i32, %c0_i32_0 : i32, i32, i32
  }
}

</mosaic_0001>

<llo_original>
// kernel: resnet18_extractor.5
$region0: #{resnet18_extractor.5}
  #allocation0 [shape = 'u32[]', space=smem, size = 0x4, offset = 0x4, fixed_abs, tag = 'smem constant byte address 0x4 - core index']
  #allocation1 [shape = 'u32[144,128]{1,0:T(1,128)}', space=vmem, size = 0x12000, scoped, tag = 'internal scratch']
  %s0 = inlined_call_operand.vmem [shape: bf16[512,27], index: 0, kind: input, shape index: {}]
  %s1 = inlined_call_operand.vmem [shape: bf16[27,64], index: 1, kind: input, shape index: {}]
  %s2 = inlined_call_operand.vmem [shape: f32[1,64], index: 2, kind: input, shape index: {}]
  %s3 = inlined_call_operand.vmem [shape: bf16[512,64], index: 3, kind: output, shape index: {}]
  %s4 = sld [smem:[#allocation0]]
  $region45: #{resnet18_extractor.5} parent=0
    _
  %s6 = ssub.s32 1, %s4
  %s7 = scalar_select 0, %s6, %s4
  loop: start=0, step=1, limit=4
  $region2: #{resnet18_extractor.5} parent=0 // loop_pre_header
    _
  $region3: #{resnet18_extractor.5} parent=0 // loop_header
    %s9 = sphi 0, %s13
    %p10 = scmp.ge.s32.totalorder %s9, 4
    %s19 = sphi 0, %s21
    %s22 = sphi 0, %s19
    %s23 = sphi 0, %s22
    %s39 = sphi 0, %s23
    %s43 = sphi 0, %s43
    %s45 = sphi 0, %s43
    %s46 = sphi 0, %s45
    %s60 = sphi 0, %s46
    %s64 = sphi 0, %s64
    %s66 = sphi 0, %s64
    %s67 = sphi 0, %s66
    %s81 = sphi 0, %s67
    %s87 = sphi 0, %s89
    %s90 = sphi 0, %s87
    %s91 = sphi 0, %s90
    %s107 = sphi 0, %s91
  $region4: #{resnet18_extractor.5} parent=0 // loop_header_branch
    %12 = sbr.rel (%p10) target = $region8
  $region5: #{resnet18_extractor.5} parent=0 // loop_body
    %s14 = ssub.s32 %s9, 1
    %s15 = ssub.s32 %s9, 2
    %s16 = sadd.s32 %s9, 1
    %s17 = ssub.s32 %s9, %s16
    %p18 = scmp.eq.s32.totalorder %s17, 0
    %s20 = sadd.s32 %s19, 1
    %s21 = scalar_select %p18, %s19, %s20
    %p24 = pneg %p18
    %p25 = scmp.eq.s32.totalorder %s9, 1
    %p26 = por %p24, %p25
    %p27 = scmp.ne.s32.totalorder %s19, %s22
    %p28 = scmp.eq.s32.totalorder %s9, 0
    %p29 = por %p27, %p28
    %p30 = scmp.ne.s32.totalorder %s19, %s22
    %p31 = scmp.eq.s32.totalorder %s14, 1
    %p32 = por %p30, %p31
    %p33 = scmp.ne.s32.totalorder %s22, %s23
    %p34 = scmp.eq.s32.totalorder %s14, 0
    %p35 = por %p33, %p34
    %p36 = scmp.ne.s32.totalorder %s22, %s23
    %p37 = scmp.eq.s32.totalorder %s15, 1
    %p38 = por %p36, %p37
    %p40 = scmp.ne.s32.totalorder %s23, %s39
    %p41 = scmp.eq.s32.totalorder %s15, 0
    %p42 = por %p40, %p41
    %s44 = sadd.s32 %s43, 1
    %p47 = scmp.eq.s32.totalorder %s9, 1
    %p48 = scmp.ne.s32.totalorder %s43, %s45
    %p49 = scmp.eq.s32.totalorder %s9, 0
    %p50 = por %p48, %p49
    %p51 = scmp.ne.s32.totalorder %s43, %s45
    %p52 = scmp.eq.s32.totalorder %s14, 1
    %p53 = por %p51, %p52
    %p54 = scmp.ne.s32.totalorder %s45, %s46
    %p55 = scmp.eq.s32.totalorder %s14, 0
    %p56 = por %p54, %p55
    %p57 = scmp.ne.s32.totalorder %s45, %s46
    %p58 = scmp.eq.s32.totalorder %s15, 1
    %p59 = por %p57, %p58
    %p61 = scmp.ne.s32.totalorder %s46, %s60
    %p62 = scmp.eq.s32.totalorder %s15, 0
    %p63 = por %p61, %p62
    %s65 = sadd.s32 %s64, 1
    %p68 = scmp.eq.s32.totalorder %s9, 1
    %p69 = scmp.ne.s32.totalorder %s64, %s66
    %p70 = scmp.eq.s32.totalorder %s9, 0
    %p71 = por %p69, %p70
    %p72 = scmp.ne.s32.totalorder %s64, %s66
    %p73 = scmp.eq.s32.totalorder %s14, 1
    %p74 = por %p72, %p73
    %p75 = scmp.ne.s32.totalorder %s66, %s67
    %p76 = scmp.eq.s32.totalorder %s14, 0
    %p77 = por %p75, %p76
    %p78 = scmp.ne.s32.totalorder %s66, %s67
    %p79 = scmp.eq.s32.totalorder %s15, 1
    %p80 = por %p78, %p79
    %p82 = scmp.ne.s32.totalorder %s67, %s81
    %p83 = scmp.eq.s32.totalorder %s15, 0
    %p84 = por %p82, %p83
    %s85 = ssub.s32 %s9, %s16
    %p86 = scmp.eq.s32.totalorder %s85, 0
    %s88 = sadd.s32 %s87, 1
    %s89 = scalar_select %p86, %s87, %s88
    %p92 = pneg %p86
    %p93 = scmp.eq.s32.totalorder %s9, 1
    %p94 = por %p92, %p93
    %p95 = scmp.ne.s32.totalorder %s87, %s90
    %p96 = scmp.eq.s32.totalorder %s9, 0
    %p97 = por %p95, %p96
    %p98 = scmp.ne.s32.totalorder %s87, %s90
    %p99 = scmp.eq.s32.totalorder %s14, 1
    %p100 = por %p98, %p99
    %p101 = scmp.ne.s32.totalorder %s90, %s91
    %p102 = scmp.eq.s32.totalorder %s14, 0
    %p103 = por %p101, %p102
    %p104 = scmp.ne.s32.totalorder %s90, %s91
    %p105 = scmp.eq.s32.totalorder %s15, 1
    %p106 = por %p104, %p105
    %p108 = scmp.ne.s32.totalorder %s91, %s107
    %p109 = scmp.eq.s32.totalorder %s15, 0
    %p110 = por %p108, %p109
    %p111 = scmp.le.s32.totalorder 1, %s9
    %p112 = scmp.lt.s32.totalorder %s9, 3
    %p113 = pnand %p111, %p112
    %p114 = pneg %p113
    // Predicated region
    $region9: #{resnet18_extractor.5} parent=5 // pred_check
      _
    $region10: #{resnet18_extractor.5} parent=5 // pred_check_branch
      %116 = sbr.rel (%p113) target = $region12
    $region11: #{resnet18_extractor.5} parent=5 // pred_region
      %s117 = ssub.s32 %s9, 1
      // Predicated region
      $region13: #{resnet18_extractor.5} parent=11 // pred_check
        %p118 = pneg %p56
      $region14: #{resnet18_extractor.5} parent=11 // pred_check_branch
        %120 = sbr.rel (%p118) target = $region16
      $region15: #{resnet18_extractor.5} parent=11 // pred_region
        _
      $region16: #{resnet18_extractor.5} parent=11 // pred_fallthru
        _
      // Predicated region
      $region17: #{resnet18_extractor.5} parent=11 // pred_check
        %p121 = pneg %p77
      $region18: #{resnet18_extractor.5} parent=11 // pred_check_branch
        %123 = sbr.rel (%p121) target = $region20
      $region19: #{resnet18_extractor.5} parent=11 // pred_region
        _
      $region20: #{resnet18_extractor.5} parent=11 // pred_fallthru
        _
    $region12: #{resnet18_extractor.5} parent=5 // pred_fallthru
      _
    %p124 = scmp.lt.s32.totalorder %s9, 2
    // Predicated region
    $region21: #{resnet18_extractor.5} parent=5 // pred_check
      %p125 = pneg %p124
    $region22: #{resnet18_extractor.5} parent=5 // pred_check_branch
      %127 = sbr.rel (%p125) target = $region24
    $region23: #{resnet18_extractor.5} parent=5 // pred_region
      // Predicated region
      $region25: #{resnet18_extractor.5} parent=23 // pred_check
        %p128 = pneg %p29
      $region26: #{resnet18_extractor.5} parent=23 // pred_check_branch
        %130 = sbr.rel (%p128) target = $region28
      $region27: #{resnet18_extractor.5} parent=23 // pred_region
        %s131 = smul.u32 32, %s9
        %p132 = scmp.lt.s32.totalorder %s131, 63
        %s133 = scalar_select %p132, %s131, 63
        %s134 = smul.addr %s133, 4
        %s135 = scalar_lea.vmem %s0, %s134
        %s136 = smul.u32 32, %s9
      $region28: #{resnet18_extractor.5} parent=23 // pred_fallthru
        _
    $region24: #{resnet18_extractor.5} parent=5 // pred_fallthru
      _
    %p137 = scmp.le.s32.totalorder 1, %s9
    %p138 = scmp.lt.s32.totalorder %s9, 3
    %p139 = pnand %p137, %p138
    %p140 = pneg %p139
    // Predicated region
    $region29: #{resnet18_extractor.5} parent=5 // pred_check
      _
    $region30: #{resnet18_extractor.5} parent=5 // pred_check_branch
      %142 = sbr.rel (%p139) target = $region32
    $region31: #{resnet18_extractor.5} parent=5 // pred_region
      %s143 = ssub.s32 %s9, 1
      %s144 = smul.u32 32, %s14
      %p145 = scmp.lt.s32.totalorder %s144, 63
      %s146 = scalar_select %p145, %s144, 63
      %s147 = smul.addr %s146, 4
      %s148 = scalar_lea.vmem %s0, %s147
      %p149 = pneg %p35
      %p150 = pneg %p32
      %p151 = pneg %p56
      %p152 = pneg %p53
      %p153 = pneg %p77
      %p154 = pneg %p74
      %p155 = pneg %p103
      %p156 = pneg %p100
      %s157 = smul.u32 32, %s14
      %p158 = scmp.lt.s32.totalorder %s157, 63
      %s159 = scalar_select %p158, %s157, 63
      %s160 = smul.addr %s159, 4
      %s161 = scalar_lea.vmem %s3, %s160
      %s162 = smul.u32 32, %s14
      %p163 = scmp.lt.s32.totalorder %s162, 63
      %s164 = scalar_select %p163, %s162, 63
      %s165 = smul.addr %s164, 4
      %s166 = scalar_lea.vmem %s0, %s165
      %s167 = smul.u32 32, %s14
      %s168 = smul.u32 32, %s14
      %p169 = scmp.lt.s32.totalorder %s168, 63
      %s170 = scalar_select %p169, %s168, 63
      %s171 = smul.addr %s170, 4
      %s172 = scalar_lea.vmem %s3, %s171
      %s173 = smul.u32 32, %s14
      %v175 = vld [vmem:[%s166] sm:$0xf]
      %v176 = vld [vmem:[%s166 + $0x4] sm:$0xf]
      %v177 = vld [vmem:[%s166 + $0x8] sm:$0xf]
      %v178 = vld [vmem:[%s166 + $0xc] sm:$0xf]
      %v179 = vld [vmem:[%s166 + $0x10] sm:$0xf]
      %v180 = vld [vmem:[%s166 + $0x14] sm:$0xf]
      %v181 = vld [vmem:[%s166 + $0x18] sm:$0xf]
      %v182 = vld [vmem:[%s166 + $0x1c] sm:$0xf]
      %v183 = vld [vmem:[%s166 + $0x20] sm:$0xf]
      %v184 = vld [vmem:[%s166 + $0x24] sm:$0xf]
      %v185 = vld [vmem:[%s166 + $0x28] sm:$0xf]
      %v186 = vld [vmem:[%s166 + $0x2c] sm:$0xf]
      %v187 = vld [vmem:[%s166 + $0x30] sm:$0xf]
      %v188 = vld [vmem:[%s166 + $0x34] sm:$0xf]
      %v189 = vld [vmem:[%s166 + $0x38] sm:$0xf]
      %v190 = vld [vmem:[%s166 + $0x3c] sm:$0xf]
      %v191 = vld [vmem:[%s166 + $0x40] sm:$0xf]
      %v192 = vld [vmem:[%s166 + $0x44] sm:$0xf]
      %v193 = vld [vmem:[%s166 + $0x48] sm:$0xf]
      %v194 = vld [vmem:[%s166 + $0x4c] sm:$0xf]
      %v195 = vld [vmem:[%s166 + $0x50] sm:$0xf]
      %v196 = vld [vmem:[%s166 + $0x54] sm:$0xf]
      %v197 = vld [vmem:[%s166 + $0x58] sm:$0xf]
      %v198 = vld [vmem:[%s166 + $0x5c] sm:$0xf]
      %v199 = vld [vmem:[%s166 + $0x60] sm:$0xf]
      %v200 = vld [vmem:[%s166 + $0x64] sm:$0xf]
      %v201 = vld [vmem:[%s166 + $0x68] sm:$0xf]
      %v202 = vld [vmem:[%s166 + $0x6c] sm:$0xf]
      %v203 = vld [vmem:[%s166 + $0x70] sm:$0xf]
      %v204 = vld [vmem:[%s166 + $0x74] sm:$0xf]
      %v205 = vld [vmem:[%s166 + $0x78] sm:$0xf]
      %v206 = vld [vmem:[%s166 + $0x7c] sm:$0xf]
      %v207 = vld [vmem:[%s1] sm:$0xf]
      %v208 = vld [vmem:[%s1 + $0x4] sm:$0xf]
      %v209 = vld [vmem:[%s1 + $0x8] sm:$0xf]
      %v210 = vld [vmem:[%s1 + $0xc] sm:$0x3]
      %v211 = vld [vmem:[%s2] sm:$0x1]
      %v213 = vlaneseq
      %v214 = vshrl.u32 %v213, 7
      %v215 = vsub.s32 0, %v214
      %v216 = vrot.slane %v211, %v215
      %v250 = vunpack.c.l.b16 %v175
      %v251 = vunpack.c.l.b16 %v176
      %v252 = vunpack.c.l.b16 %v177
      %v253 = vunpack.c.l.b16 %v178
      %v254 = vunpack.c.l.b16 %v179
      %v255 = vunpack.c.l.b16 %v180
      %v256 = vunpack.c.l.b16 %v181
      %v257 = vunpack.c.l.b16 %v182
      %v258 = vunpack.c.l.b16 %v183
      %v259 = vunpack.c.l.b16 %v184
      %v260 = vunpack.c.l.b16 %v185
      %v261 = vunpack.c.l.b16 %v186
      %v262 = vunpack.c.l.b16 %v187
      %v263 = vunpack.c.l.b16 %v188
      %v264 = vunpack.c.l.b16 %v189
      %v265 = vunpack.c.l.b16 %v190
      %v266 = vunpack.c.l.b16 %v191
      %v267 = vunpack.c.l.b16 %v192
      %v268 = vunpack.c.l.b16 %v193
      %v269 = vunpack.c.l.b16 %v194
      %v270 = vunpack.c.l.b16 %v195
      %v271 = vunpack.c.l.b16 %v196
      %v272 = vunpack.c.l.b16 %v197
      %v273 = vunpack.c.l.b16 %v198
      %v274 = vunpack.c.l.b16 %v199
      %v275 = vunpack.c.l.b16 %v200
      %v276 = vunpack.c.l.b16 %v201
      %v277 = vunpack.c.l.b16 %v202
      %v278 = vunpack.c.l.b16 %v203
      %v279 = vunpack.c.l.b16 %v204
      %v280 = vunpack.c.l.b16 %v205
      %v281 = vunpack.c.l.b16 %v206
      %v282 = vpack.c.b16 %v251, %v250
      %v283 = vpack.c.b16 %v253, %v252
      %v284 = vpack.c.b16 %v255, %v254
      %v285 = vpack.c.b16 %v257, %v256
      %v286 = vpack.c.b16 %v259, %v258
      %v287 = vpack.c.b16 %v261, %v260
      %v288 = vpack.c.b16 %v263, %v262
      %v289 = vpack.c.b16 %v265, %v264
      %v290 = vpack.c.b16 %v267, %v266
      %v291 = vpack.c.b16 %v269, %v268
      %v292 = vpack.c.b16 %v271, %v270
      %v293 = vpack.c.b16 %v273, %v272
      %v294 = vpack.c.b16 %v275, %v274
      %v295 = vpack.c.b16 %v277, %v276
      %v296 = vpack.c.b16 %v279, %v278
      %v297 = vpack.c.b16 %v281, %v280
      %v302 = vunpack.c.l.b16 %v207
      %v303 = vunpack.c.l.b16 %v208
      %v304 = vunpack.c.l.b16 %v209
      %v305 = vunpack.c.l.b16 %v210
      %v306 = vpack.c.b16 %v303, %v302
      %v307 = vpack.c.b16 %v305, %v304
      %vm309 = vcmask 220160
      %v311 = vsel %vm309, %v282, 0
      %v314 = vsel %vm309, %v283, 0
      %v317 = vsel %vm309, %v284, 0
      %v320 = vsel %vm309, %v285, 0
      %v323 = vsel %vm309, %v286, 0
      %v326 = vsel %vm309, %v287, 0
      %v329 = vsel %vm309, %v288, 0
      %v332 = vsel %vm309, %v289, 0
      %v335 = vsel %vm309, %v290, 0
      %v338 = vsel %vm309, %v291, 0
      %v341 = vsel %vm309, %v292, 0
      %v344 = vsel %vm309, %v293, 0
      %v347 = vsel %vm309, %v294, 0
      %v350 = vsel %vm309, %v295, 0
      %v353 = vsel %vm309, %v296, 0
      %v356 = vsel %vm309, %v297, 0
      %vm358 = vcmask 1044480
      %vm359 = vcmask 1045504
      %v360 = vsel %vm358, 4294967295, 65535
      %v361 = vsel %vm359, %v360, 0
      %v363 = vand.u32 %v307, %v361
      %365 = vmatprep.subr.bf16.mxu0 0
      %366 = vmatpush1.bf16.msra.mxu0 %v306
      %367 = vmatprep.subr.bf16.mxu0 0
      %368 = vmatpush1.bf16.msra.mxu0 %v363
      %369 = vmatprep.subr.bf16.mxu0 0
      %370 = vmatpush1.bf16.msra.mxu0 0
      %371 = vmatprep.subr.bf16.mxu0 0
      %372 = vmatpush1.bf16.msra.mxu0 0
      %373 = vmatprep.subr.bf16.mxu0 0
      %374 = vmatpush1.bf16.msra.mxu0 0
      %375 = vmatprep.subr.bf16.mxu0 0
      %376 = vmatpush1.bf16.msra.mxu0 0
      %377 = vmatprep.subr.bf16.mxu0 0
      %378 = vmatpush1.bf16.msra.mxu0 0
      %379 = vmatprep.subr.bf16.mxu0 0
      %380 = vmatpush1.bf16.msra.mxu0 0
      %381 = vmatprep.subr.bf16.mxu0 0
      %382 = vmatpush1.bf16.msra.mxu0 0
      %383 = vmatprep.subr.bf16.mxu0 0
      %384 = vmatpush1.bf16.msra.mxu0 0
      %385 = vmatprep.subr.bf16.mxu0 0
      %386 = vmatpush1.bf16.msra.mxu0 0
      %387 = vmatprep.subr.bf16.mxu0 0
      %388 = vmatpush1.bf16.msra.mxu0 0
      %389 = vmatprep.subr.bf16.mxu0 0
      %390 = vmatpush1.bf16.msra.mxu0 0
      %391 = vmatprep.subr.bf16.mxu0 0
      %392 = vmatpush1.bf16.msra.mxu0 0
      %393 = vmatprep.subr.bf16.mxu0 0
      %394 = vmatpush1.bf16.msra.mxu0 0
      %395 = vmatprep.subr.bf16.mxu0 0
      %396 = vmatpush1.bf16.msra.mxu0 0
      %397 = vmatprep.mubr.bf16.mxu0 0
      %398 = vmatmul.mubr.bf16.gmra.mrb[0].mxu0 %v311
      %v399 = vpop.f32.mrb[0].mxu0
      %v400 = vadd.f32 %v216, %v399
      %v401 = vpop.f32.mrb[0].mxu0
      %v402 = vpop.f32.mrb[0].mxu0
      %v403 = vadd.f32 %v216, %v402
      %v404 = vpop.f32.mrb[0].mxu0
      %405 = vmatprep.mubr.bf16.mxu0 0
      %406 = vmatmul.mubr.bf16.gmra.mrb[0].mxu0 %v314
      %v407 = vpop.f32.mrb[0].mxu0
      %v408 = vadd.f32 %v216, %v407
      %v409 = vpop.f32.mrb[0].mxu0
      %v410 = vpop.f32.mrb[0].mxu0
      %v411 = vadd.f32 %v216, %v410
      %v412 = vpop.f32.mrb[0].mxu0
      %413 = vmatprep.mubr.bf16.mxu0 0
      %414 = vmatmul.mubr.bf16.gmra.mrb[0].mxu0 %v317
      %v415 = vpop.f32.mrb[0].mxu0
      %v416 = vadd.f32 %v216, %v415
      %v417 = vpop.f32.mrb[0].mxu0
      %v418 = vpop.f32.mrb[0].mxu0
      %v419 = vadd.f32 %v216, %v418
      %v420 = vpop.f32.mrb[0].mxu0
      %421 = vmatprep.mubr.bf16.mxu0 0
      %422 = vmatmul.mubr.bf16.gmra.mrb[0].mxu0 %v320
      %v423 = vpop.f32.mrb[0].mxu0
      %v424 = vadd.f32 %v216, %v423
      %v425 = vpop.f32.mrb[0].mxu0
      %v426 = vpop.f32.mrb[0].mxu0
      %v427 = vadd.f32 %v216, %v426
      %v428 = vpop.f32.mrb[0].mxu0
      %429 = vmatprep.mubr.bf16.mxu0 0
      %430 = vmatmul.mubr.bf16.gmra.mrb[0].mxu0 %v323
      %v431 = vpop.f32.mrb[0].mxu0
      %v432 = vadd.f32 %v216, %v431
      %v433 = vpop.f32.mrb[0].mxu0
      %v434 = vpop.f32.mrb[0].mxu0
      %v435 = vadd.f32 %v216, %v434
      %v436 = vpop.f32.mrb[0].mxu0
      %437 = vmatprep.mubr.bf16.mxu0 0
      %438 = vmatmul.mubr.bf16.gmra.mrb[0].mxu0 %v326
      %v439 = vpop.f32.mrb[0].mxu0
      %v440 = vadd.f32 %v216, %v439
      %v441 = vpop.f32.mrb[0].mxu0
      %v442 = vpop.f32.mrb[0].mxu0
      %v443 = vadd.f32 %v216, %v442
      %v444 = vpop.f32.mrb[0].mxu0
      %445 = vmatprep.mubr.bf16.mxu0 0
      %446 = vmatmul.mubr.bf16.gmra.mrb[0].mxu0 %v329
      %v447 = vpop.f32.mrb[0].mxu0
      %v448 = vadd.f32 %v216, %v447
      %v449 = vpop.f32.mrb[0].mxu0
      %v450 = vpop.f32.mrb[0].mxu0
      %v451 = vadd.f32 %v216, %v450
      %v452 = vpop.f32.mrb[0].mxu0
      %453 = vmatprep.mubr.bf16.mxu0 0
      %454 = vmatmul.mubr.bf16.gmra.mrb[0].mxu0 %v332
      %v455 = vpop.f32.mrb[0].mxu0
      %v456 = vadd.f32 %v216, %v455
      %v457 = vpop.f32.mrb[0].mxu0
      %v458 = vpop.f32.mrb[0].mxu0
      %v459 = vadd.f32 %v216, %v458
      %v460 = vpop.f32.mrb[0].mxu0
      %461 = vmatprep.mubr.bf16.mxu0 0
      %462 = vmatmul.mubr.bf16.gmra.mrb[0].mxu0 %v335
      %v463 = vpop.f32.mrb[0].mxu0
      %v464 = vadd.f32 %v216, %v463
      %v465 = vpop.f32.mrb[0].mxu0
      %v466 = vpop.f32.mrb[0].mxu0
      %v467 = vadd.f32 %v216, %v466
      %v468 = vpop.f32.mrb[0].mxu0
      %469 = vmatprep.mubr.bf16.mxu0 0
      %470 = vmatmul.mubr.bf16.gmra.mrb[0].mxu0 %v338
      %v471 = vpop.f32.mrb[0].mxu0
      %v472 = vadd.f32 %v216, %v471
      %v473 = vpop.f32.mrb[0].mxu0
      %v474 = vpop.f32.mrb[0].mxu0
      %v475 = vadd.f32 %v216, %v474
      %v476 = vpop.f32.mrb[0].mxu0
      %477 = vmatprep.mubr.bf16.mxu0 0
      %478 = vmatmul.mubr.bf16.gmra.mrb[0].mxu0 %v341
      %v479 = vpop.f32.mrb[0].mxu0
      %v480 = vadd.f32 %v216, %v479
      %v481 = vpop.f32.mrb[0].mxu0
      %v482 = vpop.f32.mrb[0].mxu0
      %v483 = vadd.f32 %v216, %v482
      %v484 = vpop.f32.mrb[0].mxu0
      %485 = vmatprep.mubr.bf16.mxu0 0
      %486 = vmatmul.mubr.bf16.gmra.mrb[0].mxu0 %v344
      %v487 = vpop.f32.mrb[0].mxu0
      %v488 = vadd.f32 %v216, %v487
      %v489 = vpop.f32.mrb[0].mxu0
      %v490 = vpop.f32.mrb[0].mxu0
      %v491 = vadd.f32 %v216, %v490
      %v492 = vpop.f32.mrb[0].mxu0
      %493 = vmatprep.mubr.bf16.mxu0 0
      %494 = vmatmul.mubr.bf16.gmra.mrb[0].mxu0 %v347
      %v495 = vpop.f32.mrb[0].mxu0
      %v496 = vadd.f32 %v216, %v495
      %v497 = vpop.f32.mrb[0].mxu0
      %v498 = vpop.f32.mrb[0].mxu0
      %v499 = vadd.f32 %v216, %v498
      %v500 = vpop.f32.mrb[0].mxu0
      %501 = vmatprep.mubr.bf16.mxu0 0
      %502 = vmatmul.mubr.bf16.gmra.mrb[0].mxu0 %v350
      %v503 = vpop.f32.mrb[0].mxu0
      %v504 = vadd.f32 %v216, %v503
      %v505 = vpop.f32.mrb[0].mxu0
      %v506 = vpop.f32.mrb[0].mxu0
      %v507 = vadd.f32 %v216, %v506
      %v508 = vpop.f32.mrb[0].mxu0
      %509 = vmatprep.mubr.bf16.mxu0 0
      %510 = vmatmul.mubr.bf16.gmra.mrb[0].mxu0 %v353
      %v511 = vpop.f32.mrb[0].mxu0
      %v512 = vadd.f32 %v216, %v511
      %v513 = vpop.f32.mrb[0].mxu0
      %v514 = vpop.f32.mrb[0].mxu0
      %v515 = vadd.f32 %v216, %v514
      %v516 = vpop.f32.mrb[0].mxu0
      %517 = vmatprep.mubr.bf16.mxu0 0
      %518 = vmatmul.mubr.bf16.gmra.mrb[0].mxu0 %v356
      %v519 = vpop.f32.mrb[0].mxu0
      %v520 = vadd.f32 %v216, %v519
      %v521 = vpop.f32.mrb[0].mxu0
      %v522 = vpop.f32.mrb[0].mxu0
      %v523 = vadd.f32 %v216, %v522
      %v524 = vpop.f32.mrb[0].mxu0
      %525 = vdwg.mxu0
      %v526 = vmax.f32 %v400, 0.0
      %v527 = vmax.f32 %v403, 0.0
      %v528 = vmax.f32 %v408, 0.0
      %v529 = vmax.f32 %v411, 0.0
      %v530 = vmax.f32 %v416, 0.0
      %v531 = vmax.f32 %v419, 0.0
      %v532 = vmax.f32 %v424, 0.0
      %v533 = vmax.f32 %v427, 0.0
      %v534 = vmax.f32 %v432, 0.0
      %v535 = vmax.f32 %v435, 0.0
      %v536 = vmax.f32 %v440, 0.0
      %v537 = vmax.f32 %v443, 0.0
      %v538 = vmax.f32 %v448, 0.0
      %v539 = vmax.f32 %v451, 0.0
      %v540 = vmax.f32 %v456, 0.0
      %v541 = vmax.f32 %v459, 0.0
      %v542 = vmax.f32 %v464, 0.0
      %v543 = vmax.f32 %v467, 0.0
      %v544 = vmax.f32 %v472, 0.0
      %v545 = vmax.f32 %v475, 0.0
      %v546 = vmax.f32 %v480, 0.0
      %v547 = vmax.f32 %v483, 0.0
      %v548 = vmax.f32 %v488, 0.0
      %v549 = vmax.f32 %v491, 0.0
      %v550 = vmax.f32 %v496, 0.0
      %v551 = vmax.f32 %v499, 0.0
      %v552 = vmax.f32 %v504, 0.0
      %v553 = vmax.f32 %v507, 0.0
      %v554 = vmax.f32 %v512, 0.0
      %v555 = vmax.f32 %v515, 0.0
      %v556 = vmax.f32 %v520, 0.0
      %v557 = vmax.f32 %v523, 0.0
      %v558 = vpack.c.bf16 %v527, %v526
      %v559 = vpack.c.bf16 %v529, %v528
      %v560 = vpack.c.bf16 %v531, %v530
      %v561 = vpack.c.bf16 %v533, %v532
      %v562 = vpack.c.bf16 %v535, %v534
      %v563 = vpack.c.bf16 %v537, %v536
      %v564 = vpack.c.bf16 %v539, %v538
      %v565 = vpack.c.bf16 %v541, %v540
      %v566 = vpack.c.bf16 %v543, %v542
      %v567 = vpack.c.bf16 %v545, %v544
      %v568 = vpack.c.bf16 %v547, %v546
      %v569 = vpack.c.bf16 %v549, %v548
      %v570 = vpack.c.bf16 %v551, %v550
      %v571 = vpack.c.bf16 %v553, %v552
      %v572 = vpack.c.bf16 %v555, %v554
      %v573 = vpack.c.bf16 %v557, %v556
      %v590 = vunpack.c.l.b16 %v558
      %v591 = vunpack.c.h.b16 %v558
      %v592 = vunpack.c.l.b16 %v559
      %v593 = vunpack.c.h.b16 %v559
      %v594 = vunpack.c.l.b16 %v560
      %v595 = vunpack.c.h.b16 %v560
      %v596 = vunpack.c.l.b16 %v561
      %v597 = vunpack.c.h.b16 %v561
      %v598 = vunpack.c.l.b16 %v562
      %v599 = vunpack.c.h.b16 %v562
      %v600 = vunpack.c.l.b16 %v563
      %v601 = vunpack.c.h.b16 %v563
      %v602 = vunpack.c.l.b16 %v564
      %v603 = vunpack.c.h.b16 %v564
      %v604 = vunpack.c.l.b16 %v565
      %v605 = vunpack.c.h.b16 %v565
      %v606 = vunpack.c.l.b16 %v566
      %v607 = vunpack.c.h.b16 %v566
      %v608 = vunpack.c.l.b16 %v567
      %v609 = vunpack.c.h.b16 %v567
      %v610 = vunpack.c.l.b16 %v568
      %v611 = vunpack.c.h.b16 %v568
      %v612 = vunpack.c.l.b16 %v569
      %v613 = vunpack.c.h.b16 %v569
      %v614 = vunpack.c.l.b16 %v570
      %v615 = vunpack.c.h.b16 %v570
      %v616 = vunpack.c.l.b16 %v571
      %v617 = vunpack.c.h.b16 %v571
      %v618 = vunpack.c.l.b16 %v572
      %v619 = vunpack.c.h.b16 %v572
      %v620 = vunpack.c.l.b16 %v573
      %v621 = vunpack.c.h.b16 %v573
      %v622 = vpack.c.b16 %v590, %v590
      %v623 = vpack.c.b16 %v591, %v591
      %v624 = vpack.c.b16 %v592, %v592
      %v625 = vpack.c.b16 %v593, %v593
      %v626 = vpack.c.b16 %v594, %v594
      %v627 = vpack.c.b16 %v595, %v595
      %v628 = vpack.c.b16 %v596, %v596
      %v629 = vpack.c.b16 %v597, %v597
      %v630 = vpack.c.b16 %v598, %v598
      %v631 = vpack.c.b16 %v599, %v599
      %v632 = vpack.c.b16 %v600, %v600
      %v633 = vpack.c.b16 %v601, %v601
      %v634 = vpack.c.b16 %v602, %v602
      %v635 = vpack.c.b16 %v603, %v603
      %v636 = vpack.c.b16 %v604, %v604
      %v637 = vpack.c.b16 %v605, %v605
      %v638 = vpack.c.b16 %v606, %v606
      %v639 = vpack.c.b16 %v607, %v607
      %v640 = vpack.c.b16 %v608, %v608
      %v641 = vpack.c.b16 %v609, %v609
      %v642 = vpack.c.b16 %v610, %v610
      %v643 = vpack.c.b16 %v611, %v611
      %v644 = vpack.c.b16 %v612, %v612
      %v645 = vpack.c.b16 %v613, %v613
      %v646 = vpack.c.b16 %v614, %v614
      %v647 = vpack.c.b16 %v615, %v615
      %v648 = vpack.c.b16 %v616, %v616
      %v649 = vpack.c.b16 %v617, %v617
      %v650 = vpack.c.b16 %v618, %v618
      %v651 = vpack.c.b16 %v619, %v619
      %v652 = vpack.c.b16 %v620, %v620
      %v653 = vpack.c.b16 %v621, %v621
      %vm686 = vcmask 519168
      %687 = vst.msk [vmem:[%s172] sm:$0xf] %vm686, %v622
      %688 = vst.msk [vmem:[%s172 + $0x4] sm:$0xf] %vm686, %v623
      %689 = vst.msk [vmem:[%s172 + $0x8] sm:$0xf] %vm686, %v624
      %690 = vst.msk [vmem:[%s172 + $0xc] sm:$0xf] %vm686, %v625
      %691 = vst.msk [vmem:[%s172 + $0x10] sm:$0xf] %vm686, %v626
      %692 = vst.msk [vmem:[%s172 + $0x14] sm:$0xf] %vm686, %v627
      %693 = vst.msk [vmem:[%s172 + $0x18] sm:$0xf] %vm686, %v628
      %694 = vst.msk [vmem:[%s172 + $0x1c] sm:$0xf] %vm686, %v629
      %695 = vst.msk [vmem:[%s172 + $0x20] sm:$0xf] %vm686, %v630
      %696 = vst.msk [vmem:[%s172 + $0x24] sm:$0xf] %vm686, %v631
      %697 = vst.msk [vmem:[%s172 + $0x28] sm:$0xf] %vm686, %v632
      %698 = vst.msk [vmem:[%s172 + $0x2c] sm:$0xf] %vm686, %v633
      %699 = vst.msk [vmem:[%s172 + $0x30] sm:$0xf] %vm686, %v634
      %700 = vst.msk [vmem:[%s172 + $0x34] sm:$0xf] %vm686, %v635
      %701 = vst.msk [vmem:[%s172 + $0x38] sm:$0xf] %vm686, %v636
      %702 = vst.msk [vmem:[%s172 + $0x3c] sm:$0xf] %vm686, %v637
      %703 = vst.msk [vmem:[%s172 + $0x40] sm:$0xf] %vm686, %v638
      %704 = vst.msk [vmem:[%s172 + $0x44] sm:$0xf] %vm686, %v639
      %705 = vst.msk [vmem:[%s172 + $0x48] sm:$0xf] %vm686, %v640
      %706 = vst.msk [vmem:[%s172 + $0x4c] sm:$0xf] %vm686, %v641
      %707 = vst.msk [vmem:[%s172 + $0x50] sm:$0xf] %vm686, %v642
      %708 = vst.msk [vmem:[%s172 + $0x54] sm:$0xf] %vm686, %v643
      %709 = vst.msk [vmem:[%s172 + $0x58] sm:$0xf] %vm686, %v644
      %710 = vst.msk [vmem:[%s172 + $0x5c] sm:$0xf] %vm686, %v645
      %711 = vst.msk [vmem:[%s172 + $0x60] sm:$0xf] %vm686, %v646
      %712 = vst.msk [vmem:[%s172 + $0x64] sm:$0xf] %vm686, %v647
      %713 = vst.msk [vmem:[%s172 + $0x68] sm:$0xf] %vm686, %v648
      %714 = vst.msk [vmem:[%s172 + $0x6c] sm:$0xf] %vm686, %v649
      %715 = vst.msk [vmem:[%s172 + $0x70] sm:$0xf] %vm686, %v650
      %716 = vst.msk [vmem:[%s172 + $0x74] sm:$0xf] %vm686, %v651
      %717 = vst.msk [vmem:[%s172 + $0x78] sm:$0xf] %vm686, %v652
      %718 = vst.msk [vmem:[%s172 + $0x7c] sm:$0xf] %vm686, %v653
      %s719 = smul.u32 32, %s14
      %p720 = scmp.lt.s32.totalorder %s719, 63
      %s721 = scalar_select %p720, %s719, 63
      %s722 = smul.addr %s721, 4
      %s723 = scalar_lea.vmem %s3, %s722
      // Predicated region
      $region33: #{resnet18_extractor.5} parent=31 // pred_check
        %p724 = pneg %p100
      $region34: #{resnet18_extractor.5} parent=31 // pred_check_branch
        %726 = sbr.rel (%p724) target = $region36
      $region35: #{resnet18_extractor.5} parent=31 // pred_region
        %s727 = smul.u32 32, %s14
      $region36: #{resnet18_extractor.5} parent=31 // pred_fallthru
        _
    $region32: #{resnet18_extractor.5} parent=5 // pred_fallthru
      _
    %p728 = scmp.le.s32.totalorder 2, %s9
    // Predicated region
    $region37: #{resnet18_extractor.5} parent=5 // pred_check
      %p729 = pneg %p728
    $region38: #{resnet18_extractor.5} parent=5 // pred_check_branch
      %731 = sbr.rel (%p729) target = $region40
    $region39: #{resnet18_extractor.5} parent=5 // pred_region
      %s732 = ssub.s32 %s9, 2
      // Predicated region
      $region41: #{resnet18_extractor.5} parent=39 // pred_check
        %p733 = pneg %p106
      $region42: #{resnet18_extractor.5} parent=39 // pred_check_branch
        %735 = sbr.rel (%p733) target = $region44
      $region43: #{resnet18_extractor.5} parent=39 // pred_region
        %s736 = smul.u32 32, %s15
        %p737 = scmp.lt.s32.totalorder %s736, 63
        %s738 = scalar_select %p737, %s736, 63
        %s739 = smul.addr %s738, 4
        %s740 = scalar_lea.vmem %s3, %s739
      $region44: #{resnet18_extractor.5} parent=39 // pred_fallthru
        _
    $region40: #{resnet18_extractor.5} parent=5 // pred_fallthru
      _
  $region6: #{resnet18_extractor.5} parent=0 // loop_footer
    %s13 = sadd.s32 1, %s9
  $region7: #{resnet18_extractor.5} parent=0 // loop_footer_branch
    %8 = sbr.rel target = $region3
  $region8: #{resnet18_extractor.5} parent=0 // loop_exit
    _

// kernel: resnet18_extractor.8
$region0: #{resnet18_extractor.8}
  #allocation0 [shape = 'u32[]', space=smem, size = 0x4, offset = 0x4, fixed_abs, tag = 'smem constant byte address 0x4 - core index']
  #allocation1 [shape = 'u32[144,128]{1,0:T(1,128)}', space=vmem, size = 0x12000, scoped, tag = 'internal scratch']
  #allocation2 [shape = 'f32[1,10,8,384]{3,2,1,0:T(8,128)}', space=vmem, size = 0x1e000, scoped, tag = 'scratch operand']
  %s0 = inlined_call_operand.vmem [shape: bf16[2,64,576], index: 0, kind: input, shape index: {}]
  %s1 = inlined_call_operand.vmem [shape: bf16[576,128], index: 1, kind: input, shape index: {}]
  %s2 = inlined_call_operand.vmem [shape: f32[1,128], index: 2, kind: input, shape index: {}]
  %s3 = inlined_call_operand.vmem [shape: bf16[3,384,128], index: 3, kind: input, shape index: {}]
  %s4 = inlined_call_operand.vmem [shape: f32[1,128], index: 4, kind: input, shape index: {}]
  %s5 = inlined_call_operand.vmem [shape: bf16[64,128], index: 5, kind: input, shape index: {}]
  %s6 = inlined_call_operand.vmem [shape: f32[1,128], index: 6, kind: input, shape index: {}]
  %s7 = inlined_call_operand.vmem [shape: bf16[2,64,128], index: 7, kind: output, shape index: {}]
  %s8 = sld [smem:[#allocation0]]
  $region61: #{resnet18_extractor.8} parent=0
    _
  %s10 = ssub.s32 1, %s8
  %s11 = scalar_select 0, %s10, %s8
  loop: start=0, step=1, limit=4
  $region2: #{resnet18_extractor.8} parent=0 // loop_pre_header
    _
  $region3: #{resnet18_extractor.8} parent=0 // loop_header
    %s13 = sphi 0, %s17
    %p14 = scmp.ge.s32.totalorder %s13, 4
    %s23 = sphi 0, %s25
    %s26 = sphi 0, %s23
    %s27 = sphi 0, %s26
    %s43 = sphi 0, %s27
    %s47 = sphi 0, %s47
    %s49 = sphi 0, %s47
    %s50 = sphi 0, %s49
    %s64 = sphi 0, %s50
    %s68 = sphi 0, %s68
    %s70 = sphi 0, %s68
    %s71 = sphi 0, %s70
    %s85 = sphi 0, %s71
    %s89 = sphi 0, %s89
    %s91 = sphi 0, %s89
    %s92 = sphi 0, %s91
    %s106 = sphi 0, %s92
    %s110 = sphi 0, %s110
    %s112 = sphi 0, %s110
    %s113 = sphi 0, %s112
    %s127 = sphi 0, %s113
    %s131 = sphi 0, %s131
    %s133 = sphi 0, %s131
    %s134 = sphi 0, %s133
    %s148 = sphi 0, %s134
    %s152 = sphi 0, %s152
    %s154 = sphi 0, %s152
    %s155 = sphi 0, %s154
    %s169 = sphi 0, %s155
    %s175 = sphi 0, %s177
    %s178 = sphi 0, %s175
    %s179 = sphi 0, %s178
    %s195 = sphi 0, %s179
  $region4: #{resnet18_extractor.8} parent=0 // loop_header_branch
    %16 = sbr.rel (%p14) target = $region8
  $region5: #{resnet18_extractor.8} parent=0 // loop_body
    %s18 = ssub.s32 %s13, 1
    %s19 = ssub.s32 %s13, 2
    %s20 = sadd.s32 %s13, 1
    %s21 = ssub.s32 %s13, %s20
    %p22 = scmp.eq.s32.totalorder %s21, 0
    %s24 = sadd.s32 %s23, 1
    %s25 = scalar_select %p22, %s23, %s24
    %p28 = pneg %p22
    %p29 = scmp.eq.s32.totalorder %s13, 1
    %p30 = por %p28, %p29
    %p31 = scmp.ne.s32.totalorder %s23, %s26
    %p32 = scmp.eq.s32.totalorder %s13, 0
    %p33 = por %p31, %p32
    %p34 = scmp.ne.s32.totalorder %s23, %s26
    %p35 = scmp.eq.s32.totalorder %s18, 1
    %p36 = por %p34, %p35
    %p37 = scmp.ne.s32.totalorder %s26, %s27
    %p38 = scmp.eq.s32.totalorder %s18, 0
    %p39 = por %p37, %p38
    %p40 = scmp.ne.s32.totalorder %s26, %s27
    %p41 = scmp.eq.s32.totalorder %s19, 1
    %p42 = por %p40, %p41
    %p44 = scmp.ne.s32.totalorder %s27, %s43
    %p45 = scmp.eq.s32.totalorder %s19, 0
    %p46 = por %p44, %p45
    %s48 = sadd.s32 %s47, 1
    %p51 = scmp.eq.s32.totalorder %s13, 1
    %p52 = scmp.ne.s32.totalorder %s47, %s49
    %p53 = scmp.eq.s32.totalorder %s13, 0
    %p54 = por %p52, %p53
    %p55 = scmp.ne.s32.totalorder %s47, %s49
    %p56 = scmp.eq.s32.totalorder %s18, 1
    %p57 = por %p55, %p56
    %p58 = scmp.ne.s32.totalorder %s49, %s50
    %p59 = scmp.eq.s32.totalorder %s18, 0
    %p60 = por %p58, %p59
    %p61 = scmp.ne.s32.totalorder %s49, %s50
    %p62 = scmp.eq.s32.totalorder %s19, 1
    %p63 = por %p61, %p62
    %p65 = scmp.ne.s32.totalorder %s50, %s64
    %p66 = scmp.eq.s32.totalorder %s19, 0
    %p67 = por %p65, %p66
    %s69 = sadd.s32 %s68, 1
    %p72 = scmp.eq.s32.totalorder %s13, 1
    %p73 = scmp.ne.s32.totalorder %s68, %s70
    %p74 = scmp.eq.s32.totalorder %s13, 0
    %p75 = por %p73, %p74
    %p76 = scmp.ne.s32.totalorder %s68, %s70
    %p77 = scmp.eq.s32.totalorder %s18, 1
    %p78 = por %p76, %p77
    %p79 = scmp.ne.s32.totalorder %s70, %s71
    %p80 = scmp.eq.s32.totalorder %s18, 0
    %p81 = por %p79, %p80
    %p82 = scmp.ne.s32.totalorder %s70, %s71
    %p83 = scmp.eq.s32.totalorder %s19, 1
    %p84 = por %p82, %p83
    %p86 = scmp.ne.s32.totalorder %s71, %s85
    %p87 = scmp.eq.s32.totalorder %s19, 0
    %p88 = por %p86, %p87
    %s90 = sadd.s32 %s89, 1
    %p93 = scmp.eq.s32.totalorder %s13, 1
    %p94 = scmp.ne.s32.totalorder %s89, %s91
    %p95 = scmp.eq.s32.totalorder %s13, 0
    %p96 = por %p94, %p95
    %p97 = scmp.ne.s32.totalorder %s89, %s91
    %p98 = scmp.eq.s32.totalorder %s18, 1
    %p99 = por %p97, %p98
    %p100 = scmp.ne.s32.totalorder %s91, %s92
    %p101 = scmp.eq.s32.totalorder %s18, 0
    %p102 = por %p100, %p101
    %p103 = scmp.ne.s32.totalorder %s91, %s92
    %p104 = scmp.eq.s32.totalorder %s19, 1
    %p105 = por %p103, %p104
    %p107 = scmp.ne.s32.totalorder %s92, %s106
    %p108 = scmp.eq.s32.totalorder %s19, 0
    %p109 = por %p107, %p108
    %s111 = sadd.s32 %s110, 1
    %p114 = scmp.eq.s32.totalorder %s13, 1
    %p115 = scmp.ne.s32.totalorder %s110, %s112
    %p116 = scmp.eq.s32.totalorder %s13, 0
    %p117 = por %p115, %p116
    %p118 = scmp.ne.s32.totalorder %s110, %s112
    %p119 = scmp.eq.s32.totalorder %s18, 1
    %p120 = por %p118, %p119
    %p121 = scmp.ne.s32.totalorder %s112, %s113
    %p122 = scmp.eq.s32.totalorder %s18, 0
    %p123 = por %p121, %p122
    %p124 = scmp.ne.s32.totalorder %s112, %s113
    %p125 = scmp.eq.s32.totalorder %s19, 1
    %p126 = por %p124, %p125
    %p128 = scmp.ne.s32.totalorder %s113, %s127
    %p129 = scmp.eq.s32.totalorder %s19, 0
    %p130 = por %p128, %p129
    %s132 = sadd.s32 %s131, 1
    %p135 = scmp.eq.s32.totalorder %s13, 1
    %p136 = scmp.ne.s32.totalorder %s131, %s133
    %p137 = scmp.eq.s32.totalorder %s13, 0
    %p138 = por %p136, %p137
    %p139 = scmp.ne.s32.totalorder %s131, %s133
    %p140 = scmp.eq.s32.totalorder %s18, 1
    %p141 = por %p139, %p140
    %p142 = scmp.ne.s32.totalorder %s133, %s134
    %p143 = scmp.eq.s32.totalorder %s18, 0
    %p144 = por %p142, %p143
    %p145 = scmp.ne.s32.totalorder %s133, %s134
    %p146 = scmp.eq.s32.totalorder %s19, 1
    %p147 = por %p145, %p146
    %p149 = scmp.ne.s32.totalorder %s134, %s148
    %p150 = scmp.eq.s32.totalorder %s19, 0
    %p151 = por %p149, %p150
    %s153 = sadd.s32 %s152, 1
    %p156 = scmp.eq.s32.totalorder %s13, 1
    %p157 = scmp.ne.s32.totalorder %s152, %s154
    %p158 = scmp.eq.s32.totalorder %s13, 0
    %p159 = por %p157, %p158
    %p160 = scmp.ne.s32.totalorder %s152, %s154
    %p161 = scmp.eq.s32.totalorder %s18, 1
    %p162 = por %p160, %p161
    %p163 = scmp.ne.s32.totalorder %s154, %s155
    %p164 = scmp.eq.s32.totalorder %s18, 0
    %p165 = por %p163, %p164
    %p166 = scmp.ne.s32.totalorder %s154, %s155
    %p167 = scmp.eq.s32.totalorder %s19, 1
    %p168 = por %p166, %p167
    %p170 = scmp.ne.s32.totalorder %s155, %s169
    %p171 = scmp.eq.s32.totalorder %s19, 0
    %p172 = por %p170, %p171
    %s173 = ssub.s32 %s13, %s20
    %p174 = scmp.eq.s32.totalorder %s173, 0
    %s176 = sadd.s32 %s175, 1
    %s177 = scalar_select %p174, %s175, %s176
    %p180 = pneg %p174
    %p181 = scmp.eq.s32.totalorder %s13, 1
    %p182 = por %p180, %p181
    %p183 = scmp.ne.s32.totalorder %s175, %s178
    %p184 = scmp.eq.s32.totalorder %s13, 0
    %p185 = por %p183, %p184
    %p186 = scmp.ne.s32.totalorder %s175, %s178
    %p187 = scmp.eq.s32.totalorder %s18, 1
    %p188 = por %p186, %p187
    %p189 = scmp.ne.s32.totalorder %s178, %s179
    %p190 = scmp.eq.s32.totalorder %s18, 0
    %p191 = por %p189, %p190
    %p192 = scmp.ne.s32.totalorder %s178, %s179
    %p193 = scmp.eq.s32.totalorder %s19, 1
    %p194 = por %p192, %p193
    %p196 = scmp.ne.s32.totalorder %s179, %s195
    %p197 = scmp.eq.s32.totalorder %s19, 0
    %p198 = por %p196, %p197
    %p199 = scmp.le.s32.totalorder 1, %s13
    %p200 = scmp.lt.s32.totalorder %s13, 3
    %p201 = pnand %p199, %p200
    %p202 = pneg %p201
    // Predicated region
    $region9: #{resnet18_extractor.8} parent=5 // pred_check
      _
    $region10: #{resnet18_extractor.8} parent=5 // pred_check_branch
      %204 = sbr.rel (%p201) target = $region12
    $region11: #{resnet18_extractor.8} parent=5 // pred_region
      %s205 = ssub.s32 %s13, 1
      // Predicated region
      $region13: #{resnet18_extractor.8} parent=11 // pred_check
        %p206 = pneg %p60
      $region14: #{resnet18_extractor.8} parent=11 // pred_check_branch
        %208 = sbr.rel (%p206) target = $region16
      $region15: #{resnet18_extractor.8} parent=11 // pred_region
        _
      $region16: #{resnet18_extractor.8} parent=11 // pred_fallthru
        _
      // Predicated region
      $region17: #{resnet18_extractor.8} parent=11 // pred_check
        %p209 = pneg %p81
      $region18: #{resnet18_extractor.8} parent=11 // pred_check_branch
        %211 = sbr.rel (%p209) target = $region20
      $region19: #{resnet18_extractor.8} parent=11 // pred_region
        _
      $region20: #{resnet18_extractor.8} parent=11 // pred_fallthru
        _
      // Predicated region
      $region21: #{resnet18_extractor.8} parent=11 // pred_check
        %p212 = pneg %p102
      $region22: #{resnet18_extractor.8} parent=11 // pred_check_branch
        %214 = sbr.rel (%p212) target = $region24
      $region23: #{resnet18_extractor.8} parent=11 // pred_region
        _
      $region24: #{resnet18_extractor.8} parent=11 // pred_fallthru
        _
      // Predicated region
      $region25: #{resnet18_extractor.8} parent=11 // pred_check
        %p215 = pneg %p123
      $region26: #{resnet18_extractor.8} parent=11 // pred_check_branch
        %217 = sbr.rel (%p215) target = $region28
      $region27: #{resnet18_extractor.8} parent=11 // pred_region
        _
      $region28: #{resnet18_extractor.8} parent=11 // pred_fallthru
        _
      // Predicated region
      $region29: #{resnet18_extractor.8} parent=11 // pred_check
        %p218 = pneg %p144
      $region30: #{resnet18_extractor.8} parent=11 // pred_check_branch
        %220 = sbr.rel (%p218) target = $region32
      $region31: #{resnet18_extractor.8} parent=11 // pred_region
        _
      $region32: #{resnet18_extractor.8} parent=11 // pred_fallthru
        _
      // Predicated region
      $region33: #{resnet18_extractor.8} parent=11 // pred_check
        %p221 = pneg %p165
      $region34: #{resnet18_extractor.8} parent=11 // pred_check_branch
        %223 = sbr.rel (%p221) target = $region36
      $region35: #{resnet18_extractor.8} parent=11 // pred_region
        _
      $region36: #{resnet18_extractor.8} parent=11 // pred_fallthru
        _
    $region12: #{resnet18_extractor.8} parent=5 // pred_fallthru
      _
    %p224 = scmp.lt.s32.totalorder %s13, 2
    // Predicated region
    $region37: #{resnet18_extractor.8} parent=5 // pred_check
      %p225 = pneg %p224
    $region38: #{resnet18_extractor.8} parent=5 // pred_check_branch
      %227 = sbr.rel (%p225) target = $region40
    $region39: #{resnet18_extractor.8} parent=5 // pred_region
      // Predicated region
      $region41: #{resnet18_extractor.8} parent=39 // pred_check
        %p228 = pneg %p33
      $region42: #{resnet18_extractor.8} parent=39 // pred_check_branch
        %230 = sbr.rel (%p228) target = $region44
      $region43: #{resnet18_extractor.8} parent=39 // pred_region
        %p231 = scmp.lt.s32.totalorder %s13, 1
        %s232 = scalar_select %p231, %s13, 1
        %s233 = smul.addr %s232, 40
        %s234 = smul.addr %s233, 4
        %s235 = scalar_lea.vmem %s0, %s234
      $region44: #{resnet18_extractor.8} parent=39 // pred_fallthru
        _
    $region40: #{resnet18_extractor.8} parent=5 // pred_fallthru
      _
    %p236 = scmp.le.s32.totalorder 1, %s13
    %p237 = scmp.lt.s32.totalorder %s13, 3
    %p238 = pnand %p236, %p237
    %p239 = pneg %p238
    // Predicated region
    $region45: #{resnet18_extractor.8} parent=5 // pred_check
      _
    $region46: #{resnet18_extractor.8} parent=5 // pred_check_branch
      %241 = sbr.rel (%p238) target = $region48
    $region47: #{resnet18_extractor.8} parent=5 // pred_region
      %s242 = ssub.s32 %s13, 1
      %p243 = scmp.lt.s32.totalorder %s18, 1
      %s244 = scalar_select %p243, %s18, 1
      %s245 = smul.addr %s244, 40
      %s246 = smul.addr %s245, 4
      %s247 = scalar_lea.vmem %s0, %s246
      %p248 = pneg %p39
      %p249 = pneg %p36
      %p250 = pneg %p60
      %p251 = pneg %p57
      %p252 = pneg %p81
      %p253 = pneg %p78
      %p254 = pneg %p102
      %p255 = pneg %p99
      %p256 = pneg %p123
      %p257 = pneg %p120
      %p258 = pneg %p144
      %p259 = pneg %p141
      %p260 = pneg %p165
      %p261 = pneg %p162
      %p262 = pneg %p191
      %p263 = pneg %p188
      %p264 = scmp.lt.s32.totalorder %s18, 1
      %s265 = scalar_select %p264, %s18, 1
      %s266 = smul.addr %s265, 8
      %s267 = smul.addr %s266, 4
      %s268 = scalar_lea.vmem %s7, %s267
      %p269 = scmp.lt.s32.totalorder %s18, 1
      %s270 = scalar_select %p269, %s18, 1
      %s271 = smul.addr %s270, 40
      %s272 = smul.addr %s271, 4
      %s273 = scalar_lea.vmem %s0, %s272
      %p274 = scmp.lt.s32.totalorder %s18, 1
      %s275 = scalar_select %p274, %s18, 1
      %s276 = smul.addr %s275, 8
      %s277 = smul.addr %s276, 4
      %s278 = scalar_lea.vmem %s7, %s277
      %v280 = vld [vmem:[%s273] sm:$0xff]
      %v281 = vld [vmem:[%s273 + $0x8] sm:$0xff]
      %v282 = vld [vmem:[%s273 + $0x10] sm:$0xf]
      %v283 = vld [vmem:[%s273 + $0x14] sm:$0xff]
      %v284 = vld [vmem:[%s273 + $0x1c] sm:$0xff]
      %v285 = vld [vmem:[%s273 + $0x24] sm:$0xf]
      %v286 = vld [vmem:[%s273 + $0x28] sm:$0xff]
      %v287 = vld [vmem:[%s273 + $0x30] sm:$0xff]
      %v288 = vld [vmem:[%s273 + $0x38] sm:$0xf]
      %v289 = vld [vmem:[%s273 + $0x3c] sm:$0xff]
      %v290 = vld [vmem:[%s273 + $0x44] sm:$0xff]
      %v291 = vld [vmem:[%s273 + $0x4c] sm:$0xf]
      %v292 = vld [vmem:[%s273 + $0x50] sm:$0xff]
      %v293 = vld [vmem:[%s273 + $0x58] sm:$0xff]
      %v294 = vld [vmem:[%s273 + $0x60] sm:$0xf]
      %v295 = vld [vmem:[%s273 + $0x64] sm:$0xff]
      %v296 = vld [vmem:[%s273 + $0x6c] sm:$0xff]
      %v297 = vld [vmem:[%s273 + $0x74] sm:$0xf]
      %v298 = vld [vmem:[%s273 + $0x78] sm:$0xff]
      %v299 = vld [vmem:[%s273 + $0x80] sm:$0xff]
      %v300 = vld [vmem:[%s273 + $0x88] sm:$0xf]
      %v301 = vld [vmem:[%s273 + $0x8c] sm:$0xff]
      %v302 = vld [vmem:[%s273 + $0x94] sm:$0xff]
      %v303 = vld [vmem:[%s273 + $0x9c] sm:$0xf]
      %v304 = vld [vmem:[%s1] sm:$0xf]
      %v305 = vld [vmem:[%s1 + $0x4] sm:$0xf]
      %v306 = vld [vmem:[%s1 + $0x8] sm:$0xf]
      %v307 = vld [vmem:[%s1 + $0xc] sm:$0xf]
      %v308 = vld [vmem:[%s1 + $0x10] sm:$0xf]
      %v309 = vld [vmem:[%s1 + $0x14] sm:$0xf]
      %v310 = vld [vmem:[%s1 + $0x18] sm:$0xf]
      %v311 = vld [vmem:[%s1 + $0x1c] sm:$0xf]
      %v312 = vld [vmem:[%s1 + $0x20] sm:$0xf]
      %v313 = vld [vmem:[%s1 + $0x24] sm:$0xf]
      %v314 = vld [vmem:[%s1 + $0x28] sm:$0xf]
      %v315 = vld [vmem:[%s1 + $0x2c] sm:$0xf]
      %v316 = vld [vmem:[%s1 + $0x30] sm:$0xf]
      %v317 = vld [vmem:[%s1 + $0x34] sm:$0xf]
      %v318 = vld [vmem:[%s1 + $0x38] sm:$0xf]
      %v319 = vld [vmem:[%s1 + $0x3c] sm:$0xf]
      %v320 = vld [vmem:[%s1 + $0x40] sm:$0xf]
      %v321 = vld [vmem:[%s1 + $0x44] sm:$0xf]
      %v322 = vld [vmem:[%s1 + $0x48] sm:$0xf]
      %v323 = vld [vmem:[%s1 + $0x4c] sm:$0xf]
      %v324 = vld [vmem:[%s1 + $0x50] sm:$0xf]
      %v325 = vld [vmem:[%s1 + $0x54] sm:$0xf]
      %v326 = vld [vmem:[%s1 + $0x58] sm:$0xf]
      %v327 = vld [vmem:[%s1 + $0x5c] sm:$0xf]
      %v328 = vld [vmem:[%s1 + $0x60] sm:$0xf]
      %v329 = vld [vmem:[%s1 + $0x64] sm:$0xf]
      %v330 = vld [vmem:[%s1 + $0x68] sm:$0xf]
      %v331 = vld [vmem:[%s1 + $0x6c] sm:$0xf]
      %v332 = vld [vmem:[%s1 + $0x70] sm:$0xf]
      %v333 = vld [vmem:[%s1 + $0x74] sm:$0xf]
      %v334 = vld [vmem:[%s1 + $0x78] sm:$0xf]
      %v335 = vld [vmem:[%s1 + $0x7c] sm:$0xf]
      %v336 = vld [vmem:[%s1 + $0x80] sm:$0xf]
      %v337 = vld [vmem:[%s1 + $0x84] sm:$0xf]
      %v338 = vld [vmem:[%s1 + $0x88] sm:$0xf]
      %v339 = vld [vmem:[%s1 + $0x8c] sm:$0xf]
      %v340 = vld [vmem:[%s1 + $0x90] sm:$0xf]
      %v341 = vld [vmem:[%s1 + $0x94] sm:$0xf]
      %v342 = vld [vmem:[%s1 + $0x98] sm:$0xf]
      %v343 = vld [vmem:[%s1 + $0x9c] sm:$0xf]
      %v344 = vld [vmem:[%s1 + $0xa0] sm:$0xf]
      %v345 = vld [vmem:[%s1 + $0xa4] sm:$0xf]
      %v346 = vld [vmem:[%s1 + $0xa8] sm:$0xf]
      %v347 = vld [vmem:[%s1 + $0xac] sm:$0xf]
      %v348 = vld [vmem:[%s1 + $0xb0] sm:$0xf]
      %v349 = vld [vmem:[%s1 + $0xb4] sm:$0xf]
      %v350 = vld [vmem:[%s1 + $0xb8] sm:$0xf]
      %v351 = vld [vmem:[%s1 + $0xbc] sm:$0xf]
      %v352 = vld [vmem:[%s1 + $0xc0] sm:$0xf]
      %v353 = vld [vmem:[%s1 + $0xc4] sm:$0xf]
      %v354 = vld [vmem:[%s1 + $0xc8] sm:$0xf]
      %v355 = vld [vmem:[%s1 + $0xcc] sm:$0xf]
      %v356 = vld [vmem:[%s1 + $0xd0] sm:$0xf]
      %v357 = vld [vmem:[%s1 + $0xd4] sm:$0xf]
      %v358 = vld [vmem:[%s1 + $0xd8] sm:$0xf]
      %v359 = vld [vmem:[%s1 + $0xdc] sm:$0xf]
      %v360 = vld [vmem:[%s1 + $0xe0] sm:$0xf]
      %v361 = vld [vmem:[%s1 + $0xe4] sm:$0xf]
      %v362 = vld [vmem:[%s1 + $0xe8] sm:$0xf]
      %v363 = vld [vmem:[%s1 + $0xec] sm:$0xf]
      %v364 = vld [vmem:[%s1 + $0xf0] sm:$0xf]
      %v365 = vld [vmem:[%s1 + $0xf4] sm:$0xf]
      %v366 = vld [vmem:[%s1 + $0xf8] sm:$0xf]
      %v367 = vld [vmem:[%s1 + $0xfc] sm:$0xf]
      %v368 = vld [vmem:[%s1 + $0x100] sm:$0xf]
      %v369 = vld [vmem:[%s1 + $0x104] sm:$0xf]
      %v370 = vld [vmem:[%s1 + $0x108] sm:$0xf]
      %v371 = vld [vmem:[%s1 + $0x10c] sm:$0xf]
      %v372 = vld [vmem:[%s1 + $0x110] sm:$0xf]
      %v373 = vld [vmem:[%s1 + $0x114] sm:$0xf]
      %v374 = vld [vmem:[%s1 + $0x118] sm:$0xf]
      %v375 = vld [vmem:[%s1 + $0x11c] sm:$0xf]
      %v376 = vld [vmem:[%s2] sm:$0x1]
      %v378 = vlaneseq
      %v379 = vshrl.u32 %v378, 7
      %v380 = vsub.s32 0, %v379
      %v381 = vrot.slane %v376, %v380
      %v407 = vunpack.c.l.b16 %v280
      %v408 = vunpack.c.h.b16 %v280
      %v409 = vunpack.c.l.b16 %v281
      %v410 = vunpack.c.h.b16 %v281
      %v411 = vunpack.c.l.b16 %v282
      %v412 = vunpack.c.l.b16 %v283
      %v413 = vunpack.c.h.b16 %v283
      %v414 = vunpack.c.l.b16 %v284
      %v415 = vunpack.c.h.b16 %v284
      %v416 = vunpack.c.l.b16 %v285
      %v417 = vunpack.c.l.b16 %v286
      %v418 = vunpack.c.h.b16 %v286
      %v419 = vunpack.c.l.b16 %v287
      %v420 = vunpack.c.h.b16 %v287
      %v421 = vunpack.c.l.b16 %v288
      %v422 = vunpack.c.l.b16 %v289
      %v423 = vunpack.c.h.b16 %v289
      %v424 = vunpack.c.l.b16 %v290
      %v425 = vunpack.c.h.b16 %v290
      %v426 = vunpack.c.l.b16 %v291
      %v427 = vunpack.c.l.b16 %v292
      %v428 = vunpack.c.h.b16 %v292
      %v429 = vunpack.c.l.b16 %v293
      %v430 = vunpack.c.h.b16 %v293
      %v431 = vunpack.c.l.b16 %v294
      %v432 = vunpack.c.l.b16 %v295
      %v433 = vunpack.c.h.b16 %v295
      %v434 = vunpack.c.l.b16 %v296
      %v435 = vunpack.c.h.b16 %v296
      %v436 = vunpack.c.l.b16 %v297
      %v437 = vunpack.c.l.b16 %v298
      %v438 = vunpack.c.h.b16 %v298
      %v439 = vunpack.c.l.b16 %v299
      %v440 = vunpack.c.h.b16 %v299
      %v441 = vunpack.c.l.b16 %v300
      %v442 = vunpack.c.l.b16 %v301
      %v443 = vunpack.c.h.b16 %v301
      %v444 = vunpack.c.l.b16 %v302
      %v445 = vunpack.c.h.b16 %v302
      %v446 = vunpack.c.l.b16 %v303
      %v447 = vpack.c.b16 %v412, %v407
      %v448 = vpack.c.b16 %v413, %v408
      %v449 = vpack.c.b16 %v414, %v409
      %v450 = vpack.c.b16 %v415, %v410
      %v451 = vpack.c.b16 %v416, %v411
      %v452 = vpack.c.b16 %v422, %v417
      %v453 = vpack.c.b16 %v423, %v418
      %v454 = vpack.c.b16 %v424, %v419
      %v455 = vpack.c.b16 %v425, %v420
      %v456 = vpack.c.b16 %v426, %v421
      %v457 = vpack.c.b16 %v432, %v427
      %v458 = vpack.c.b16 %v433, %v428
      %v459 = vpack.c.b16 %v434, %v429
      %v460 = vpack.c.b16 %v435, %v430
      %v461 = vpack.c.b16 %v436, %v431
      %v462 = vpack.c.b16 %v442, %v437
      %v463 = vpack.c.b16 %v443, %v438
      %v464 = vpack.c.b16 %v444, %v439
      %v465 = vpack.c.b16 %v445, %v440
      %v466 = vpack.c.b16 %v446, %v441
      %v555 = vunpack.c.l.b16 %v304
      %v556 = vunpack.c.l.b16 %v305
      %v557 = vunpack.c.l.b16 %v306
      %v558 = vunpack.c.l.b16 %v307
      %v559 = vunpack.c.l.b16 %v308
      %v560 = vunpack.c.l.b16 %v309
      %v561 = vunpack.c.l.b16 %v310
      %v562 = vunpack.c.l.b16 %v311
      %v563 = vunpack.c.l.b16 %v312
      %v564 = vunpack.c.l.b16 %v313
      %v565 = vunpack.c.l.b16 %v314
      %v566 = vunpack.c.l.b16 %v315
      %v567 = vunpack.c.l.b16 %v316
      %v568 = vunpack.c.l.b16 %v317
      %v569 = vunpack.c.l.b16 %v318
      %v570 = vunpack.c.l.b16 %v319
      %v571 = vunpack.c.l.b16 %v320
      %v572 = vunpack.c.l.b16 %v321
      %v573 = vunpack.c.l.b16 %v322
      %v574 = vunpack.c.l.b16 %v323
      %v575 = vunpack.c.l.b16 %v324
      %v576 = vunpack.c.l.b16 %v325
      %v577 = vunpack.c.l.b16 %v326
      %v578 = vunpack.c.l.b16 %v327
      %v579 = vunpack.c.l.b16 %v328
      %v580 = vunpack.c.l.b16 %v329
      %v581 = vunpack.c.l.b16 %v330
      %v582 = vunpack.c.l.b16 %v331
      %v583 = vunpack.c.l.b16 %v332
      %v584 = vunpack.c.l.b16 %v333
      %v585 = vunpack.c.l.b16 %v334
      %v586 = vunpack.c.l.b16 %v335
      %v587 = vunpack.c.l.b16 %v336
      %v588 = vunpack.c.l.b16 %v337
      %v589 = vunpack.c.l.b16 %v338
      %v590 = vunpack.c.l.b16 %v339
      %v591 = vunpack.c.l.b16 %v340
      %v592 = vunpack.c.l.b16 %v341
      %v593 = vunpack.c.l.b16 %v342
      %v594 = vunpack.c.l.b16 %v343
      %v595 = vunpack.c.l.b16 %v344
      %v596 = vunpack.c.l.b16 %v345
      %v597 = vunpack.c.l.b16 %v346
      %v598 = vunpack.c.l.b16 %v347
      %v599 = vunpack.c.l.b16 %v348
      %v600 = vunpack.c.l.b16 %v349
      %v601 = vunpack.c.l.b16 %v350
      %v602 = vunpack.c.l.b16 %v351
      %v603 = vunpack.c.l.b16 %v352
      %v604 = vunpack.c.l.b16 %v353
      %v605 = vunpack.c.l.b16 %v354
      %v606 = vunpack.c.l.b16 %v355
      %v607 = vunpack.c.l.b16 %v356
      %v608 = vunpack.c.l.b16 %v357
      %v609 = vunpack.c.l.b16 %v358
      %v610 = vunpack.c.l.b16 %v359
      %v611 = vunpack.c.l.b16 %v360
      %v612 = vunpack.c.l.b16 %v361
      %v613 = vunpack.c.l.b16 %v362
      %v614 = vunpack.c.l.b16 %v363
      %v615 = vunpack.c.l.b16 %v364
      %v616 = vunpack.c.l.b16 %v365
      %v617 = vunpack.c.l.b16 %v366
      %v618 = vunpack.c.l.b16 %v367
      %v619 = vunpack.c.l.b16 %v368
      %v620 = vunpack.c.l.b16 %v369
      %v621 = vunpack.c.l.b16 %v370
      %v622 = vunpack.c.l.b16 %v371
      %v623 = vunpack.c.l.b16 %v372
      %v624 = vunpack.c.l.b16 %v373
      %v625 = vunpack.c.l.b16 %v374
      %v626 = vunpack.c.l.b16 %v375
      %v627 = vpack.c.b16 %v556, %v555
      %v628 = vpack.c.b16 %v558, %v557
      %v629 = vpack.c.b16 %v560, %v559
      %v630 = vpack.c.b16 %v562, %v561
      %v631 = vpack.c.b16 %v564, %v563
      %v632 = vpack.c.b16 %v566, %v565
      %v633 = vpack.c.b16 %v568, %v567
      %v634 = vpack.c.b16 %v570, %v569
      %v635 = vpack.c.b16 %v572, %v571
      %v636 = vpack.c.b16 %v574, %v573
      %v637 = vpack.c.b16 %v576, %v575
      %v638 = vpack.c.b16 %v578, %v577
      %v639 = vpack.c.b16 %v580, %v579
      %v640 = vpack.c.b16 %v582, %v581
      %v641 = vpack.c.b16 %v584, %v583
      %v642 = vpack.c.b16 %v586, %v585
      %v643 = vpack.c.b16 %v588, %v587
      %v644 = vpack.c.b16 %v590, %v589
      %v645 = vpack.c.b16 %v592, %v591
      %v646 = vpack.c.b16 %v594, %v593
      %v647 = vpack.c.b16 %v596, %v595
      %v648 = vpack.c.b16 %v598, %v597
      %v649 = vpack.c.b16 %v600, %v599
      %v650 = vpack.c.b16 %v602, %v601
      %v651 = vpack.c.b16 %v604, %v603
      %v652 = vpack.c.b16 %v606, %v605
      %v653 = vpack.c.b16 %v608, %v607
      %v654 = vpack.c.b16 %v610, %v609
      %v655 = vpack.c.b16 %v612, %v611
      %v656 = vpack.c.b16 %v614, %v613
      %v657 = vpack.c.b16 %v616, %v615
      %v658 = vpack.c.b16 %v618, %v617
      %v659 = vpack.c.b16 %v620, %v619
      %v660 = vpack.c.b16 %v622, %v621
      %v661 = vpack.c.b16 %v624, %v623
      %v662 = vpack.c.b16 %v626, %v625
      %vm699 = vcmask 523264
      %v701 = vsel %vm699, %v451, 0
      %v704 = vsel %vm699, %v456, 0
      %v707 = vsel %vm699, %v461, 0
      %v710 = vsel %vm699, %v466, 0
      %712 = vmatprep.subr.bf16.mxu0 0
      %713 = vmatpush1.bf16.msra.mxu0 %v627
      %714 = vmatprep.subr.bf16.mxu0 0
      %715 = vmatpush1.bf16.msra.mxu0 %v628
      %716 = vmatprep.subr.bf16.mxu0 0
      %717 = vmatpush1.bf16.msra.mxu0 %v629
      %718 = vmatprep.subr.bf16.mxu0 0
      %719 = vmatpush1.bf16.msra.mxu0 %v630
      %720 = vmatprep.subr.bf16.mxu0 0
      %721 = vmatpush1.bf16.msra.mxu0 %v631
      %722 = vmatprep.subr.bf16.mxu0 0
      %723 = vmatpush1.bf16.msra.mxu0 %v632
      %724 = vmatprep.subr.bf16.mxu0 0
      %725 = vmatpush1.bf16.msra.mxu0 %v633
      %726 = vmatprep.subr.bf16.mxu0 0
      %727 = vmatpush1.bf16.msra.mxu0 %v634
      %728 = vmatprep.subr.bf16.mxu0 0
      %729 = vmatpush1.bf16.msra.mxu0 %v635
      %730 = vmatprep.subr.bf16.mxu0 0
      %731 = vmatpush1.bf16.msra.mxu0 %v636
      %732 = vmatprep.subr.bf16.mxu0 0
      %733 = vmatpush1.bf16.msra.mxu0 %v637
      %734 = vmatprep.subr.bf16.mxu0 0
      %735 = vmatpush1.bf16.msra.mxu0 %v638
      %736 = vmatprep.subr.bf16.mxu0 0
      %737 = vmatpush1.bf16.msra.mxu0 %v639
      %738 = vmatprep.subr.bf16.mxu0 0
      %739 = vmatpush1.bf16.msra.mxu0 %v640
      %740 = vmatprep.subr.bf16.mxu0 0
      %741 = vmatpush1.bf16.msra.mxu0 %v641
      %742 = vmatprep.subr.bf16.mxu0 0
      %743 = vmatpush1.bf16.msra.mxu0 %v642
      %744 = vmatprep.mubr.bf16.mxu0 %v448
      %745 = vmatmul.mubr.bf16.gmra.mrb[0].mxu0 %v447
      %v746 = vpop.f32.mrb[0].mxu0
      %v747 = vadd.f32 %v381, %v746
      %v748 = vpop.f32.mrb[0].mxu0
      %v749 = vpop.f32.mrb[0].mxu0
      %v750 = vadd.f32 %v381, %v749
      %v751 = vpop.f32.mrb[0].mxu0
      %752 = vmatprep.mubr.bf16.mxu0 %v453
      %753 = vmatmul.mubr.bf16.gmra.mrb[0].mxu0 %v452
      %v754 = vpop.f32.mrb[0].mxu0
      %v755 = vadd.f32 %v381, %v754
      %v756 = vpop.f32.mrb[0].mxu0
      %v757 = vpop.f32.mrb[0].mxu0
      %v758 = vadd.f32 %v381, %v757
      %v759 = vpop.f32.mrb[0].mxu0
      %760 = vmatprep.mubr.bf16.mxu0 %v458
      %761 = vmatmul.mubr.bf16.gmra.mrb[0].mxu0 %v457
      %v762 = vpop.f32.mrb[0].mxu0
      %v763 = vadd.f32 %v381, %v762
      %v764 = vpop.f32.mrb[0].mxu0
      %v765 = vpop.f32.mrb[0].mxu0
      %v766 = vadd.f32 %v381, %v765
      %v767 = vpop.f32.mrb[0].mxu0
      %768 = vmatprep.mubr.bf16.mxu0 %v463
      %769 = vmatmul.mubr.bf16.gmra.mrb[0].mxu0 %v462
      %v770 = vpop.f32.mrb[0].mxu0
      %v771 = vadd.f32 %v381, %v770
      %v772 = vpop.f32.mrb[0].mxu0
      %v773 = vpop.f32.mrb[0].mxu0
      %v774 = vadd.f32 %v381, %v773
      %v775 = vpop.f32.mrb[0].mxu0
      %776 = vdwg.mxu0
      %777 = vmatprep.subr.bf16.mxu0 0
      %778 = vmatpush1.bf16.msra.mxu0 %v643
      %779 = vmatprep.subr.bf16.mxu0 0
      %780 = vmatpush1.bf16.msra.mxu0 %v644
      %781 = vmatprep.subr.bf16.mxu0 0
      %782 = vmatpush1.bf16.msra.mxu0 %v645
      %783 = vmatprep.subr.bf16.mxu0 0
      %784 = vmatpush1.bf16.msra.mxu0 %v646
      %785 = vmatprep.subr.bf16.mxu0 0
      %786 = vmatpush1.bf16.msra.mxu0 %v647
      %787 = vmatprep.subr.bf16.mxu0 0
      %788 = vmatpush1.bf16.msra.mxu0 %v648
      %789 = vmatprep.subr.bf16.mxu0 0
      %790 = vmatpush1.bf16.msra.mxu0 %v649
      %791 = vmatprep.subr.bf16.mxu0 0
      %792 = vmatpush1.bf16.msra.mxu0 %v650
      %793 = vmatprep.subr.bf16.mxu0 0
      %794 = vmatpush1.bf16.msra.mxu0 %v651
      %795 = vmatprep.subr.bf16.mxu0 0
      %796 = vmatpush1.bf16.msra.mxu0 %v652
      %797 = vmatprep.subr.bf16.mxu0 0
      %798 = vmatpush1.bf16.msra.mxu0 %v653
      %799 = vmatprep.subr.bf16.mxu0 0
      %800 = vmatpush1.bf16.msra.mxu0 %v654
      %801 = vmatprep.subr.bf16.mxu0 0
      %802 = vmatpush1.bf16.msra.mxu0 %v655
      %803 = vmatprep.subr.bf16.mxu0 0
      %804 = vmatpush1.bf16.msra.mxu0 %v656
      %805 = vmatprep.subr.bf16.mxu0 0
      %806 = vmatpush1.bf16.msra.mxu0 %v657
      %807 = vmatprep.subr.bf16.mxu0 0
      %808 = vmatpush1.bf16.msra.mxu0 %v658
      %809 = vmatprep.mubr.bf16.mxu0 %v450
      %810 = vmatmul.mubr.bf16.gmra.mrb[0].mxu0 %v449
      %v811 = vpop.f32.mrb[0].mxu0
      %v812 = vadd.f32 %v747, %v811
      %v813 = vpop.f32.mrb[0].mxu0
      %v814 = vpop.f32.mrb[0].mxu0
      %v815 = vadd.f32 %v750, %v814
      %v816 = vpop.f32.mrb[0].mxu0
      %817 = vmatprep.mubr.bf16.mxu0 %v455
      %818 = vmatmul.mubr.bf16.gmra.mrb[0].mxu0 %v454
      %v819 = vpop.f32.mrb[0].mxu0
      %v820 = vadd.f32 %v755, %v819
      %v821 = vpop.f32.mrb[0].mxu0
      %v822 = vpop.f32.mrb[0].mxu0
      %v823 = vadd.f32 %v758, %v822
      %v824 = vpop.f32.mrb[0].mxu0
      %825 = vmatprep.mubr.bf16.mxu0 %v460
      %826 = vmatmul.mubr.bf16.gmra.mrb[0].mxu0 %v459
      %v827 = vpop.f32.mrb[0].mxu0
      %v828 = vadd.f32 %v763, %v827
      %v829 = vpop.f32.mrb[0].mxu0
      %v830 = vpop.f32.mrb[0].mxu0
      %v831 = vadd.f32 %v766, %v830
      %v832 = vpop.f32.mrb[0].mxu0
      %833 = vmatprep.mubr.bf16.mxu0 %v465
      %834 = vmatmul.mubr.bf16.gmra.mrb[0].mxu0 %v464
      %v835 = vpop.f32.mrb[0].mxu0
      %v836 = vadd.f32 %v771, %v835
      %v837 = vpop.f32.mrb[0].mxu0
      %v838 = vpop.f32.mrb[0].mxu0
      %v839 = vadd.f32 %v774, %v838
      %v840 = vpop.f32.mrb[0].mxu0
      %841 = vdwg.mxu0
      %842 = vmatprep.subr.bf16.mxu0 0
      %843 = vmatpush1.bf16.msra.mxu0 %v659
      %844 = vmatprep.subr.bf16.mxu0 0
      %845 = vmatpush1.bf16.msra.mxu0 %v660
      %846 = vmatprep.subr.bf16.mxu0 0
      %847 = vmatpush1.bf16.msra.mxu0 %v661
      %848 = vmatprep.subr.bf16.mxu0 0
      %849 = vmatpush1.bf16.msra.mxu0 %v662
      %850 = vmatprep.subr.bf16.mxu0 0
      %851 = vmatpush1.bf16.msra.mxu0 0
      %852 = vmatprep.subr.bf16.mxu0 0
      %853 = vmatpush1.bf16.msra.mxu0 0
      %854 = vmatprep.subr.bf16.mxu0 0
      %855 = vmatpush1.bf16.msra.mxu0 0
      %856 = vmatprep.subr.bf16.mxu0 0
      %857 = vmatpush1.bf16.msra.mxu0 0
      %858 = vmatprep.subr.bf16.mxu0 0
      %859 = vmatpush1.bf16.msra.mxu0 0
      %860 = vmatprep.subr.bf16.mxu0 0
      %861 = vmatpush1.bf16.msra.mxu0 0
      %862 = vmatprep.subr.bf16.mxu0 0
      %863 = vmatpush1.bf16.msra.mxu0 0
      %864 = vmatprep.subr.bf16.mxu0 0
      %865 = vmatpush1.bf16.msra.mxu0 0
      %866 = vmatprep.subr.bf16.mxu0 0
      %867 = vmatpush1.bf16.msra.mxu0 0
      %868 = vmatprep.subr.bf16.mxu0 0
      %869 = vmatpush1.bf16.msra.mxu0 0
      %870 = vmatprep.subr.bf16.mxu0 0
      %871 = vmatpush1.bf16.msra.mxu0 0
      %872 = vmatprep.subr.bf16.mxu0 0
      %873 = vmatpush1.bf16.msra.mxu0 0
      %874 = vmatprep.mubr.bf16.mxu0 0
      %875 = vmatmul.mubr.bf16.gmra.mrb[0].mxu0 %v701
      %v876 = vpop.f32.mrb[0].mxu0
      %v877 = vadd.f32 %v812, %v876
      %v878 = vpop.f32.mrb[0].mxu0
      %v879 = vpop.f32.mrb[0].mxu0
      %v880 = vadd.f32 %v815, %v879
      %v881 = vpop.f32.mrb[0].mxu0
      %882 = vmatprep.mubr.bf16.mxu0 0
      %883 = vmatmul.mubr.bf16.gmra.mrb[0].mxu0 %v704
      %v884 = vpop.f32.mrb[0].mxu0
      %v885 = vadd.f32 %v820, %v884
      %v886 = vpop.f32.mrb[0].mxu0
      %v887 = vpop.f32.mrb[0].mxu0
      %v888 = vadd.f32 %v823, %v887
      %v889 = vpop.f32.mrb[0].mxu0
      %890 = vmatprep.mubr.bf16.mxu0 0
      %891 = vmatmul.mubr.bf16.gmra.mrb[0].mxu0 %v707
      %v892 = vpop.f32.mrb[0].mxu0
      %v893 = vadd.f32 %v828, %v892
      %v894 = vpop.f32.mrb[0].mxu0
      %v895 = vpop.f32.mrb[0].mxu0
      %v896 = vadd.f32 %v831, %v895
      %v897 = vpop.f32.mrb[0].mxu0
      %898 = vmatprep.mubr.bf16.mxu0 0
      %899 = vmatmul.mubr.bf16.gmra.mrb[0].mxu0 %v710
      %v900 = vpop.f32.mrb[0].mxu0
      %v901 = vadd.f32 %v836, %v900
      %v902 = vpop.f32.mrb[0].mxu0
      %v903 = vpop.f32.mrb[0].mxu0
      %v904 = vadd.f32 %v839, %v903
      %v905 = vpop.f32.mrb[0].mxu0
      %906 = vdwg.mxu0
      %v907 = vmax.f32 %v877, 0.0
      %v908 = vmax.f32 %v880, 0.0
      %v909 = vmax.f32 %v885, 0.0
      %v910 = vmax.f32 %v888, 0.0
      %v911 = vmax.f32 %v893, 0.0
      %v912 = vmax.f32 %v896, 0.0
      %v913 = vmax.f32 %v901, 0.0
      %v914 = vmax.f32 %v904, 0.0
      %915 = vst [vmem:[#allocation2] sm:$0xff] 0.0
      %916 = vst [vmem:[#allocation2 + $0x8] sm:$0xff] 0.0
      %917 = vst [vmem:[#allocation2 + $0x10] sm:$0xff] 0.0
      %s918 = scalar_lea.vmem [#allocation2], 216
      %919 = vst [vmem:[%s918] sm:$0xff] 0.0
      %920 = vst [vmem:[%s918 + $0x8] sm:$0xff] 0.0
      %921 = vst [vmem:[%s918 + $0x10] sm:$0xff] 0.0
      %s922 = scalar_lea.vmem [#allocation2], 24
      %923 = vst [vmem:[%s922] sm:$0x1] 0.0
      %924 = vst [vmem:[%s922 + $0x18] sm:$0x1] 0.0
      %925 = vst [vmem:[%s922 + $0x30] sm:$0x1] 0.0
      %926 = vst [vmem:[%s922 + $0x48] sm:$0x1] 0.0
      %927 = vst [vmem:[%s922 + $0x60] sm:$0x1] 0.0
      %928 = vst [vmem:[%s922 + $0x78] sm:$0x1] 0.0
      %929 = vst [vmem:[%s922 + $0x90] sm:$0x1] 0.0
      %930 = vst [vmem:[%s922 + $0xa8] sm:$0x1] 0.0
      %931 = vst [vmem:[%s922 + $0x17] sm:$0x1] 0.0
      %932 = vst [vmem:[%s922 + $0x2f] sm:$0x1] 0.0
      %933 = vst [vmem:[%s922 + $0x47] sm:$0x1] 0.0
      %934 = vst [vmem:[%s922 + $0x5f] sm:$0x1] 0.0
      %935 = vst [vmem:[%s922 + $0x77] sm:$0x1] 0.0
      %936 = vst [vmem:[%s922 + $0x8f] sm:$0x1] 0.0
      %937 = vst [vmem:[%s922 + $0xa7] sm:$0x1] 0.0
      %938 = vst [vmem:[%s922 + $0xbf] sm:$0x1] 0.0
      %939 = vst [vmem:[%s922 + $0x8] sm:$0xff] %v907
      %940 = vst [vmem:[%s922 + $0x20] sm:$0xff] %v908
      %941 = vst [vmem:[%s922 + $0x38] sm:$0xff] %v909
      %942 = vst [vmem:[%s922 + $0x50] sm:$0xff] %v910
      %943 = vst [vmem:[%s922 + $0x68] sm:$0xff] %v911
      %944 = vst [vmem:[%s922 + $0x80] sm:$0xff] %v912
      %945 = vst [vmem:[%s922 + $0x98] sm:$0xff] %v913
      %946 = vst [vmem:[%s922 + $0xb0] sm:$0xff] %v914
      %v947 = vld [vmem:[%s922 + $0x8] sm:$0x7f]
      %v948 = vld [vmem:[%s922 + $0x20] sm:$0x7f]
      %v949 = vld [vmem:[%s922 + $0x38] sm:$0x7f]
      %v950 = vld [vmem:[%s922 + $0x50] sm:$0x7f]
      %v951 = vld [vmem:[%s922 + $0x68] sm:$0x7f]
      %v952 = vld [vmem:[%s922 + $0x80] sm:$0x7f]
      %v953 = vld [vmem:[%s922 + $0x98] sm:$0x7f]
      %v954 = vld [vmem:[%s922 + $0xb0] sm:$0x7f]
      %v963 = vrot.slane %v947, 7
      %v964 = vrot.slane %v948, 7
      %v965 = vrot.slane %v949, 7
      %v966 = vrot.slane %v950, 7
      %v967 = vrot.slane %v951, 7
      %v968 = vrot.slane %v952, 7
      %v969 = vrot.slane %v953, 7
      %v970 = vrot.slane %v954, 7
      %979 = vst [vmem:[%s922] sm:$0xfe] %v963
      %980 = vst [vmem:[%s922 + $0x18] sm:$0xfe] %v964
      %981 = vst [vmem:[%s922 + $0x30] sm:$0xfe] %v965
      %982 = vst [vmem:[%s922 + $0x48] sm:$0xfe] %v966
      %983 = vst [vmem:[%s922 + $0x60] sm:$0xfe] %v967
      %984 = vst [vmem:[%s922 + $0x78] sm:$0xfe] %v968
      %985 = vst [vmem:[%s922 + $0x90] sm:$0xfe] %v969
      %986 = vst [vmem:[%s922 + $0xa8] sm:$0xfe] %v970
      %v987 = vld [vmem:[%s922 + $0x8] sm:$0xfe]
      %v988 = vld [vmem:[%s922 + $0x20] sm:$0xfe]
      %v989 = vld [vmem:[%s922 + $0x38] sm:$0xfe]
      %v990 = vld [vmem:[%s922 + $0x50] sm:$0xfe]
      %v991 = vld [vmem:[%s922 + $0x68] sm:$0xfe]
      %v992 = vld [vmem:[%s922 + $0x80] sm:$0xfe]
      %v993 = vld [vmem:[%s922 + $0x98] sm:$0xfe]
      %v994 = vld [vmem:[%s922 + $0xb0] sm:$0xfe]
      %v1003 = vrot.slane %v987, 1
      %v1004 = vrot.slane %v988, 1
      %v1005 = vrot.slane %v989, 1
      %v1006 = vrot.slane %v990, 1
      %v1007 = vrot.slane %v991, 1
      %v1008 = vrot.slane %v992, 1
      %v1009 = vrot.slane %v993, 1
      %v1010 = vrot.slane %v994, 1
      %1019 = vst [vmem:[%s922 + $0x10] sm:$0x7f] %v1003
      %1020 = vst [vmem:[%s922 + $0x28] sm:$0x7f] %v1004
      %1021 = vst [vmem:[%s922 + $0x40] sm:$0x7f] %v1005
      %1022 = vst [vmem:[%s922 + $0x58] sm:$0x7f] %v1006
      %1023 = vst [vmem:[%s922 + $0x70] sm:$0x7f] %v1007
      %1024 = vst [vmem:[%s922 + $0x88] sm:$0x7f] %v1008
      %1025 = vst [vmem:[%s922 + $0xa0] sm:$0x7f] %v1009
      %1026 = vst [vmem:[%s922 + $0xb8] sm:$0x7f] %v1010
      %v1027 = vld [vmem:[#allocation2] sm:$0xff]
      %v1028 = vld [vmem:[#allocation2 + $0x8] sm:$0xff]
      %v1029 = vld [vmem:[#allocation2 + $0x10] sm:$0xff]
      %v1030 = vld [vmem:[#allocation2 + $0x18] sm:$0xff]
      %v1031 = vld [vmem:[#allocation2 + $0x20] sm:$0xff]
      %v1032 = vld [vmem:[#allocation2 + $0x28] sm:$0xff]
      %v1033 = vld [vmem:[#allocation2 + $0x30] sm:$0xff]
      %v1034 = vld [vmem:[#allocation2 + $0x38] sm:$0xff]
      %v1035 = vld [vmem:[#allocation2 + $0x40] sm:$0xff]
      %v1036 = vld [vmem:[#allocation2 + $0x48] sm:$0xff]
      %v1037 = vld [vmem:[#allocation2 + $0x50] sm:$0xff]
      %v1038 = vld [vmem:[#allocation2 + $0x58] sm:$0xff]
      %v1039 = vld [vmem:[#allocation2 + $0x60] sm:$0xff]
      %v1040 = vld [vmem:[#allocation2 + $0x68] sm:$0xff]
      %v1041 = vld [vmem:[#allocation2 + $0x70] sm:$0xff]
      %v1042 = vld [vmem:[#allocation2 + $0x78] sm:$0xff]
      %v1043 = vld [vmem:[#allocation2 + $0x80] sm:$0xff]
      %v1044 = vld [vmem:[#allocation2 + $0x88] sm:$0xff]
      %v1045 = vld [vmem:[#allocation2 + $0x90] sm:$0xff]
      %v1046 = vld [vmem:[#allocation2 + $0x98] sm:$0xff]
      %v1047 = vld [vmem:[#allocation2 + $0xa0] sm:$0xff]
      %v1048 = vld [vmem:[#allocation2 + $0xa8] sm:$0xff]
      %v1049 = vld [vmem:[#allocation2 + $0xb0] sm:$0xff]
      %v1050 = vld [vmem:[#allocation2 + $0xb8] sm:$0xff]
      %v1051 = vpack.c.bf16 %v1030, %v1027
      %v1052 = vpack.c.bf16 %v1031, %v1028
      %v1053 = vpack.c.bf16 %v1032, %v1029
      %v1054 = vpack.c.bf16 %v1036, %v1033
      %v1055 = vpack.c.bf16 %v1037, %v1034
      %v1056 = vpack.c.bf16 %v1038, %v1035
      %v1057 = vpack.c.bf16 %v1042, %v1039
      %v1058 = vpack.c.bf16 %v1043, %v1040
      %v1059 = vpack.c.bf16 %v1044, %v1041
      %v1060 = vpack.c.bf16 %v1048, %v1045
      %v1061 = vpack.c.bf16 %v1049, %v1046
      %v1062 = vpack.c.bf16 %v1050, %v1047
      %v1063 = vld [vmem:[%s3] sm:$0xf]
      %v1064 = vld [vmem:[%s3 + $0x4] sm:$0xf]
      %v1065 = vld [vmem:[%s3 + $0x8] sm:$0xf]
      %v1066 = vld [vmem:[%s3 + $0xc] sm:$0xf]
      %v1067 = vld [vmem:[%s3 + $0x10] sm:$0xf]
      %v1068 = vld [vmem:[%s3 + $0x14] sm:$0xf]
      %v1069 = vld [vmem:[%s3 + $0x18] sm:$0xf]
      %v1070 = vld [vmem:[%s3 + $0x1c] sm:$0xf]
      %v1071 = vld [vmem:[%s3 + $0x20] sm:$0xf]
      %v1072 = vld [vmem:[%s3 + $0x24] sm:$0xf]
      %v1073 = vld [vmem:[%s3 + $0x28] sm:$0xf]
      %v1074 = vld [vmem:[%s3 + $0x2c] sm:$0xf]
      %v1075 = vld [vmem:[%s3 + $0x30] sm:$0xf]
      %v1076 = vld [vmem:[%s3 + $0x34] sm:$0xf]
      %v1077 = vld [vmem:[%s3 + $0x38] sm:$0xf]
      %v1078 = vld [vmem:[%s3 + $0x3c] sm:$0xf]
      %v1079 = vld [vmem:[%s3 + $0x40] sm:$0xf]
      %v1080 = vld [vmem:[%s3 + $0x44] sm:$0xf]
      %v1081 = vld [vmem:[%s3 + $0x48] sm:$0xf]
      %v1082 = vld [vmem:[%s3 + $0x4c] sm:$0xf]
      %v1083 = vld [vmem:[%s3 + $0x50] sm:$0xf]
      %v1084 = vld [vmem:[%s3 + $0x54] sm:$0xf]
      %v1085 = vld [vmem:[%s3 + $0x58] sm:$0xf]
      %v1086 = vld [vmem:[%s3 + $0x5c] sm:$0xf]
      %v1087 = vld [vmem:[%s3 + $0x60] sm:$0xf]
      %v1088 = vld [vmem:[%s3 + $0x64] sm:$0xf]
      %v1089 = vld [vmem:[%s3 + $0x68] sm:$0xf]
      %v1090 = vld [vmem:[%s3 + $0x6c] sm:$0xf]
      %v1091 = vld [vmem:[%s3 + $0x70] sm:$0xf]
      %v1092 = vld [vmem:[%s3 + $0x74] sm:$0xf]
      %v1093 = vld [vmem:[%s3 + $0x78] sm:$0xf]
      %v1094 = vld [vmem:[%s3 + $0x7c] sm:$0xf]
      %v1095 = vld [vmem:[%s3 + $0x80] sm:$0xf]
      %v1096 = vld [vmem:[%s3 + $0x84] sm:$0xf]
      %v1097 = vld [vmem:[%s3 + $0x88] sm:$0xf]
      %v1098 = vld [vmem:[%s3 + $0x8c] sm:$0xf]
      %v1099 = vld [vmem:[%s3 + $0x90] sm:$0xf]
      %v1100 = vld [vmem:[%s3 + $0x94] sm:$0xf]
      %v1101 = vld [vmem:[%s3 + $0x98] sm:$0xf]
      %v1102 = vld [vmem:[%s3 + $0x9c] sm:$0xf]
      %v1103 = vld [vmem:[%s3 + $0xa0] sm:$0xf]
      %v1104 = vld [vmem:[%s3 + $0xa4] sm:$0xf]
      %v1105 = vld [vmem:[%s3 + $0xa8] sm:$0xf]
      %v1106 = vld [vmem:[%s3 + $0xac] sm:$0xf]
      %v1107 = vld [vmem:[%s3 + $0xb0] sm:$0xf]
      %v1108 = vld [vmem:[%s3 + $0xb4] sm:$0xf]
      %v1109 = vld [vmem:[%s3 + $0xb8] sm:$0xf]
      %v1110 = vld [vmem:[%s3 + $0xbc] sm:$0xf]
      %v1111 = vld [vmem:[%s922] sm:$0xff]
      %v1112 = vld [vmem:[%s922 + $0x8] sm:$0xff]
      %v1113 = vld [vmem:[%s922 + $0x10] sm:$0xff]
      %v1114 = vld [vmem:[%s922 + $0x18] sm:$0xff]
      %v1115 = vld [vmem:[%s922 + $0x20] sm:$0xff]
      %v1116 = vld [vmem:[%s922 + $0x28] sm:$0xff]
      %v1117 = vld [vmem:[%s922 + $0x30] sm:$0xff]
      %v1118 = vld [vmem:[%s922 + $0x38] sm:$0xff]
      %v1119 = vld [vmem:[%s922 + $0x40] sm:$0xff]
      %v1120 = vld [vmem:[%s922 + $0x48] sm:$0xff]
      %v1121 = vld [vmem:[%s922 + $0x50] sm:$0xff]
      %v1122 = vld [vmem:[%s922 + $0x58] sm:$0xff]
      %v1123 = vld [vmem:[%s922 + $0x60] sm:$0xff]
      %v1124 = vld [vmem:[%s922 + $0x68] sm:$0xff]
      %v1125 = vld [vmem:[%s922 + $0x70] sm:$0xff]
      %v1126 = vld [vmem:[%s922 + $0x78] sm:$0xff]
      %v1127 = vld [vmem:[%s922 + $0x80] sm:$0xff]
      %v1128 = vld [vmem:[%s922 + $0x88] sm:$0xff]
      %v1129 = vld [vmem:[%s922 + $0x90] sm:$0xff]
      %v1130 = vld [vmem:[%s922 + $0x98] sm:$0xff]
      %v1131 = vld [vmem:[%s922 + $0xa0] sm:$0xff]
      %v1132 = vld [vmem:[%s922 + $0xa8] sm:$0xff]
      %v1133 = vld [vmem:[%s922 + $0xb0] sm:$0xff]
      %v1134 = vld [vmem:[%s922 + $0xb8] sm:$0xff]
      %v1135 = vpack.c.bf16 %v1114, %v1111
      %v1136 = vpack.c.bf16 %v1115, %v1112
      %v1137 = vpack.c.bf16 %v1116, %v1113
      %v1138 = vpack.c.bf16 %v1120, %v1117
      %v1139 = vpack.c.bf16 %v1121, %v1118
      %v1140 = vpack.c.bf16 %v1122, %v1119
      %v1141 = vpack.c.bf16 %v1126, %v1123
      %v1142 = vpack.c.bf16 %v1127, %v1124
      %v1143 = vpack.c.bf16 %v1128, %v1125
      %v1144 = vpack.c.bf16 %v1132, %v1129
      %v1145 = vpack.c.bf16 %v1133, %v1130
      %v1146 = vpack.c.bf16 %v1134, %v1131
      %s1147 = scalar_lea.vmem %s3, 192
      %v1148 = vld [vmem:[%s1147] sm:$0xf]
      %v1149 = vld [vmem:[%s1147 + $0x4] sm:$0xf]
      %v1150 = vld [vmem:[%s1147 + $0x8] sm:$0xf]
      %v1151 = vld [vmem:[%s1147 + $0xc] sm:$0xf]
      %v1152 = vld [vmem:[%s1147 + $0x10] sm:$0xf]
      %v1153 = vld [vmem:[%s1147 + $0x14] sm:$0xf]
      %v1154 = vld [vmem:[%s1147 + $0x18] sm:$0xf]
      %v1155 = vld [vmem:[%s1147 + $0x1c] sm:$0xf]
      %v1156 = vld [vmem:[%s1147 + $0x20] sm:$0xf]
      %v1157 = vld [vmem:[%s1147 + $0x24] sm:$0xf]
      %v1158 = vld [vmem:[%s1147 + $0x28] sm:$0xf]
      %v1159 = vld [vmem:[%s1147 + $0x2c] sm:$0xf]
      %v1160 = vld [vmem:[%s1147 + $0x30] sm:$0xf]
      %v1161 = vld [vmem:[%s1147 + $0x34] sm:$0xf]
      %v1162 = vld [vmem:[%s1147 + $0x38] sm:$0xf]
      %v1163 = vld [vmem:[%s1147 + $0x3c] sm:$0xf]
      %v1164 = vld [vmem:[%s1147 + $0x40] sm:$0xf]
      %v1165 = vld [vmem:[%s1147 + $0x44] sm:$0xf]
      %v1166 = vld [vmem:[%s1147 + $0x48] sm:$0xf]
      %v1167 = vld [vmem:[%s1147 + $0x4c] sm:$0xf]
      %v1168 = vld [vmem:[%s1147 + $0x50] sm:$0xf]
      %v1169 = vld [vmem:[%s1147 + $0x54] sm:$0xf]
      %v1170 = vld [vmem:[%s1147 + $0x58] sm:$0xf]
      %v1171 = vld [vmem:[%s1147 + $0x5c] sm:$0xf]
      %v1172 = vld [vmem:[%s1147 + $0x60] sm:$0xf]
      %v1173 = vld [vmem:[%s1147 + $0x64] sm:$0xf]
      %v1174 = vld [vmem:[%s1147 + $0x68] sm:$0xf]
      %v1175 = vld [vmem:[%s1147 + $0x6c] sm:$0xf]
      %v1176 = vld [vmem:[%s1147 + $0x70] sm:$0xf]
      %v1177 = vld [vmem:[%s1147 + $0x74] sm:$0xf]
      %v1178 = vld [vmem:[%s1147 + $0x78] sm:$0xf]
      %v1179 = vld [vmem:[%s1147 + $0x7c] sm:$0xf]
      %v1180 = vld [vmem:[%s1147 + $0x80] sm:$0xf]
      %v1181 = vld [vmem:[%s1147 + $0x84] sm:$0xf]
      %v1182 = vld [vmem:[%s1147 + $0x88] sm:$0xf]
      %v1183 = vld [vmem:[%s1147 + $0x8c] sm:$0xf]
      %v1184 = vld [vmem:[%s1147 + $0x90] sm:$0xf]
      %v1185 = vld [vmem:[%s1147 + $0x94] sm:$0xf]
      %v1186 = vld [vmem:[%s1147 + $0x98] sm:$0xf]
      %v1187 = vld [vmem:[%s1147 + $0x9c] sm:$0xf]
      %v1188 = vld [vmem:[%s1147 + $0xa0] sm:$0xf]
      %v1189 = vld [vmem:[%s1147 + $0xa4] sm:$0xf]
      %v1190 = vld [vmem:[%s1147 + $0xa8] sm:$0xf]
      %v1191 = vld [vmem:[%s1147 + $0xac] sm:$0xf]
      %v1192 = vld [vmem:[%s1147 + $0xb0] sm:$0xf]
      %v1193 = vld [vmem:[%s1147 + $0xb4] sm:$0xf]
      %v1194 = vld [vmem:[%s1147 + $0xb8] sm:$0xf]
      %v1195 = vld [vmem:[%s1147 + $0xbc] sm:$0xf]
      %v1244 = vunpack.c.l.b16 %v1148
      %v1245 = vunpack.c.l.b16 %v1149
      %v1246 = vunpack.c.l.b16 %v1150
      %v1247 = vunpack.c.l.b16 %v1151
      %v1248 = vunpack.c.l.b16 %v1152
      %v1249 = vunpack.c.l.b16 %v1153
      %v1250 = vunpack.c.l.b16 %v1154
      %v1251 = vunpack.c.l.b16 %v1155
      %v1252 = vunpack.c.l.b16 %v1156
      %v1253 = vunpack.c.l.b16 %v1157
      %v1254 = vunpack.c.l.b16 %v1158
      %v1255 = vunpack.c.l.b16 %v1159
      %v1256 = vunpack.c.l.b16 %v1160
      %v1257 = vunpack.c.l.b16 %v1161
      %v1258 = vunpack.c.l.b16 %v1162
      %v1259 = vunpack.c.l.b16 %v1163
      %v1260 = vunpack.c.l.b16 %v1164
      %v1261 = vunpack.c.l.b16 %v1165
      %v1262 = vunpack.c.l.b16 %v1166
      %v1263 = vunpack.c.l.b16 %v1167
      %v1264 = vunpack.c.l.b16 %v1168
      %v1265 = vunpack.c.l.b16 %v1169
      %v1266 = vunpack.c.l.b16 %v1170
      %v1267 = vunpack.c.l.b16 %v1171
      %v1268 = vunpack.c.l.b16 %v1172
      %v1269 = vunpack.c.l.b16 %v1173
      %v1270 = vunpack.c.l.b16 %v1174
      %v1271 = vunpack.c.l.b16 %v1175
      %v1272 = vunpack.c.l.b16 %v1176
      %v1273 = vunpack.c.l.b16 %v1177
      %v1274 = vunpack.c.l.b16 %v1178
      %v1275 = vunpack.c.l.b16 %v1179
      %v1276 = vunpack.c.l.b16 %v1180
      %v1277 = vunpack.c.l.b16 %v1181
      %v1278 = vunpack.c.l.b16 %v1182
      %v1279 = vunpack.c.l.b16 %v1183
      %v1280 = vunpack.c.l.b16 %v1184
      %v1281 = vunpack.c.l.b16 %v1185
      %v1282 = vunpack.c.l.b16 %v1186
      %v1283 = vunpack.c.l.b16 %v1187
      %v1284 = vunpack.c.l.b16 %v1188
      %v1285 = vunpack.c.l.b16 %v1189
      %v1286 = vunpack.c.l.b16 %v1190
      %v1287 = vunpack.c.l.b16 %v1191
      %v1288 = vunpack.c.l.b16 %v1192
      %v1289 = vunpack.c.l.b16 %v1193
      %v1290 = vunpack.c.l.b16 %v1194
      %v1291 = vunpack.c.l.b16 %v1195
      %v1292 = vpack.c.b16 %v1245, %v1244
      %v1293 = vpack.c.b16 %v1247, %v1246
      %v1294 = vpack.c.b16 %v1249, %v1248
      %v1295 = vpack.c.b16 %v1251, %v1250
      %v1296 = vpack.c.b16 %v1253, %v1252
      %v1297 = vpack.c.b16 %v1255, %v1254
      %v1298 = vpack.c.b16 %v1257, %v1256
      %v1299 = vpack.c.b16 %v1259, %v1258
      %v1300 = vpack.c.b16 %v1261, %v1260
      %v1301 = vpack.c.b16 %v1263, %v1262
      %v1302 = vpack.c.b16 %v1265, %v1264
      %v1303 = vpack.c.b16 %v1267, %v1266
      %v1304 = vpack.c.b16 %v1269, %v1268
      %v1305 = vpack.c.b16 %v1271, %v1270
      %v1306 = vpack.c.b16 %v1273, %v1272
      %v1307 = vpack.c.b16 %v1275, %v1274
      %v1308 = vpack.c.b16 %v1277, %v1276
      %v1309 = vpack.c.b16 %v1279, %v1278
      %v1310 = vpack.c.b16 %v1281, %v1280
      %v1311 = vpack.c.b16 %v1283, %v1282
      %v1312 = vpack.c.b16 %v1285, %v1284
      %v1313 = vpack.c.b16 %v1287, %v1286
      %v1314 = vpack.c.b16 %v1289, %v1288
      %v1315 = vpack.c.b16 %v1291, %v1290
      %1340 = vmatprep.subr.bf16.mxu0 0
      %1341 = vmatpush1.bf16.msra.mxu0 %v1292
      %1342 = vmatprep.subr.bf16.mxu0 0
      %1343 = vmatpush1.bf16.msra.mxu0 %v1293
      %1344 = vmatprep.subr.bf16.mxu0 0
      %1345 = vmatpush1.bf16.msra.mxu0 %v1294
      %1346 = vmatprep.subr.bf16.mxu0 0
      %1347 = vmatpush1.bf16.msra.mxu0 %v1295
      %1348 = vmatprep.subr.bf16.mxu0 0
      %1349 = vmatpush1.bf16.msra.mxu0 %v1296
      %1350 = vmatprep.subr.bf16.mxu0 0
      %1351 = vmatpush1.bf16.msra.mxu0 %v1297
      %1352 = vmatprep.subr.bf16.mxu0 0
      %1353 = vmatpush1.bf16.msra.mxu0 %v1298
      %1354 = vmatprep.subr.bf16.mxu0 0
      %1355 = vmatpush1.bf16.msra.mxu0 %v1299
      %1356 = vmatprep.subr.bf16.mxu0 0
      %1357 = vmatpush1.bf16.msra.mxu0 %v1300
      %1358 = vmatprep.subr.bf16.mxu0 0
      %1359 = vmatpush1.bf16.msra.mxu0 %v1301
      %1360 = vmatprep.subr.bf16.mxu0 0
      %1361 = vmatpush1.bf16.msra.mxu0 %v1302
      %1362 = vmatprep.subr.bf16.mxu0 0
      %1363 = vmatpush1.bf16.msra.mxu0 %v1303
      %1364 = vmatprep.subr.bf16.mxu0 0
      %1365 = vmatpush1.bf16.msra.mxu0 %v1304
      %1366 = vmatprep.subr.bf16.mxu0 0
      %1367 = vmatpush1.bf16.msra.mxu0 %v1305
      %1368 = vmatprep.subr.bf16.mxu0 0
      %1369 = vmatpush1.bf16.msra.mxu0 %v1306
      %1370 = vmatprep.subr.bf16.mxu0 0
      %1371 = vmatpush1.bf16.msra.mxu0 %v1307
      %1372 = vmatprep.mubr.bf16.mxu0 %v1136
      %1373 = vmatmul.mubr.bf16.gmra.mrb[0].mxu0 %v1135
      %v1374 = vpop.f32.mrb[0].mxu0
      %v1375 = vadd.f32 0.0, %v1374
      %v1376 = vpop.f32.mrb[0].mxu0
      %v1377 = vpop.f32.mrb[0].mxu0
      %v1378 = vadd.f32 0.0, %v1377
      %v1379 = vpop.f32.mrb[0].mxu0
      %1380 = vmatprep.mubr.bf16.mxu0 %v1139
      %1381 = vmatmul.mubr.bf16.gmra.mrb[0].mxu0 %v1138
      %v1382 = vpop.f32.mrb[0].mxu0
      %v1383 = vadd.f32 0.0, %v1382
      %v1384 = vpop.f32.mrb[0].mxu0
      %v1385 = vpop.f32.mrb[0].mxu0
      %v1386 = vadd.f32 0.0, %v1385
      %v1387 = vpop.f32.mrb[0].mxu0
      %1388 = vmatprep.mubr.bf16.mxu0 %v1142
      %1389 = vmatmul.mubr.bf16.gmra.mrb[0].mxu0 %v1141
      %v1390 = vpop.f32.mrb[0].mxu0
      %v1391 = vadd.f32 0.0, %v1390
      %v1392 = vpop.f32.mrb[0].mxu0
      %v1393 = vpop.f32.mrb[0].mxu0
      %v1394 = vadd.f32 0.0, %v1393
      %v1395 = vpop.f32.mrb[0].mxu0
      %1396 = vmatprep.mubr.bf16.mxu0 %v1145
      %1397 = vmatmul.mubr.bf16.gmra.mrb[0].mxu0 %v1144
      %v1398 = vpop.f32.mrb[0].mxu0
      %v1399 = vadd.f32 0.0, %v1398
      %v1400 = vpop.f32.mrb[0].mxu0
      %v1401 = vpop.f32.mrb[0].mxu0
      %v1402 = vadd.f32 0.0, %v1401
      %v1403 = vpop.f32.mrb[0].mxu0
      %1404 = vdwg.mxu0
      %1405 = vmatprep.subr.bf16.mxu0 0
      %1406 = vmatpush1.bf16.msra.mxu0 %v1308
      %1407 = vmatprep.subr.bf16.mxu0 0
      %1408 = vmatpush1.bf16.msra.mxu0 %v1309
      %1409 = vmatprep.subr.bf16.mxu0 0
      %1410 = vmatpush1.bf16.msra.mxu0 %v1310
      %1411 = vmatprep.subr.bf16.mxu0 0
      %1412 = vmatpush1.bf16.msra.mxu0 %v1311
      %1413 = vmatprep.subr.bf16.mxu0 0
      %1414 = vmatpush1.bf16.msra.mxu0 %v1312
      %1415 = vmatprep.subr.bf16.mxu0 0
      %1416 = vmatpush1.bf16.msra.mxu0 %v1313
      %1417 = vmatprep.subr.bf16.mxu0 0
      %1418 = vmatpush1.bf16.msra.mxu0 %v1314
      %1419 = vmatprep.subr.bf16.mxu0 0
      %1420 = vmatpush1.bf16.msra.mxu0 %v1315
      %1421 = vmatprep.subr.bf16.mxu0 0
      %1422 = vmatpush1.bf16.msra.mxu0 0
      %1423 = vmatprep.subr.bf16.mxu0 0
      %1424 = vmatpush1.bf16.msra.mxu0 0
      %1425 = vmatprep.subr.bf16.mxu0 0
      %1426 = vmatpush1.bf16.msra.mxu0 0
      %1427 = vmatprep.subr.bf16.mxu0 0
      %1428 = vmatpush1.bf16.msra.mxu0 0
      %1429 = vmatprep.subr.bf16.mxu0 0
      %1430 = vmatpush1.bf16.msra.mxu0 0
      %1431 = vmatprep.subr.bf16.mxu0 0
      %1432 = vmatpush1.bf16.msra.mxu0 0
      %1433 = vmatprep.subr.bf16.mxu0 0
      %1434 = vmatpush1.bf16.msra.mxu0 0
      %1435 = vmatprep.subr.bf16.mxu0 0
      %1436 = vmatpush1.bf16.msra.mxu0 0
      %1437 = vmatprep.mubr.bf16.mxu0 0
      %1438 = vmatmul.mubr.bf16.gmra.mrb[0].mxu0 %v1137
      %v1439 = vpop.f32.mrb[0].mxu0
      %v1440 = vadd.f32 %v1375, %v1439
      %v1441 = vpop.f32.mrb[0].mxu0
      %v1442 = vpop.f32.mrb[0].mxu0
      %v1443 = vadd.f32 %v1378, %v1442
      %v1444 = vpop.f32.mrb[0].mxu0
      %1445 = vmatprep.mubr.bf16.mxu0 0
      %1446 = vmatmul.mubr.bf16.gmra.mrb[0].mxu0 %v1140
      %v1447 = vpop.f32.mrb[0].mxu0
      %v1448 = vadd.f32 %v1383, %v1447
      %v1449 = vpop.f32.mrb[0].mxu0
      %v1450 = vpop.f32.mrb[0].mxu0
      %v1451 = vadd.f32 %v1386, %v1450
      %v1452 = vpop.f32.mrb[0].mxu0
      %1453 = vmatprep.mubr.bf16.mxu0 0
      %1454 = vmatmul.mubr.bf16.gmra.mrb[0].mxu0 %v1143
      %v1455 = vpop.f32.mrb[0].mxu0
      %v1456 = vadd.f32 %v1391, %v1455
      %v1457 = vpop.f32.mrb[0].mxu0
      %v1458 = vpop.f32.mrb[0].mxu0
      %v1459 = vadd.f32 %v1394, %v1458
      %v1460 = vpop.f32.mrb[0].mxu0
      %1461 = vmatprep.mubr.bf16.mxu0 0
      %1462 = vmatmul.mubr.bf16.gmra.mrb[0].mxu0 %v1146
      %v1463 = vpop.f32.mrb[0].mxu0
      %v1464 = vadd.f32 %v1399, %v1463
      %v1465 = vpop.f32.mrb[0].mxu0
      %v1466 = vpop.f32.mrb[0].mxu0
      %v1467 = vadd.f32 %v1402, %v1466
      %v1468 = vpop.f32.mrb[0].mxu0
      %1469 = vdwg.mxu0
      %v1518 = vunpack.c.l.b16 %v1063
      %v1519 = vunpack.c.l.b16 %v1064
      %v1520 = vunpack.c.l.b16 %v1065
      %v1521 = vunpack.c.l.b16 %v1066
      %v1522 = vunpack.c.l.b16 %v1067
      %v1523 = vunpack.c.l.b16 %v1068
      %v1524 = vunpack.c.l.b16 %v1069
      %v1525 = vunpack.c.l.b16 %v1070
      %v1526 = vunpack.c.l.b16 %v1071
      %v1527 = vunpack.c.l.b16 %v1072
      %v1528 = vunpack.c.l.b16 %v1073
      %v1529 = vunpack.c.l.b16 %v1074
      %v1530 = vunpack.c.l.b16 %v1075
      %v1531 = vunpack.c.l.b16 %v1076
      %v1532 = vunpack.c.l.b16 %v1077
      %v1533 = vunpack.c.l.b16 %v1078
      %v1534 = vunpack.c.l.b16 %v1079
      %v1535 = vunpack.c.l.b16 %v1080
      %v1536 = vunpack.c.l.b16 %v1081
      %v1537 = vunpack.c.l.b16 %v1082
      %v1538 = vunpack.c.l.b16 %v1083
      %v1539 = vunpack.c.l.b16 %v1084
      %v1540 = vunpack.c.l.b16 %v1085
      %v1541 = vunpack.c.l.b16 %v1086
      %v1542 = vunpack.c.l.b16 %v1087
      %v1543 = vunpack.c.l.b16 %v1088
      %v1544 = vunpack.c.l.b16 %v1089
      %v1545 = vunpack.c.l.b16 %v1090
      %v1546 = vunpack.c.l.b16 %v1091
      %v1547 = vunpack.c.l.b16 %v1092
      %v1548 = vunpack.c.l.b16 %v1093
      %v1549 = vunpack.c.l.b16 %v1094
      %v1550 = vunpack.c.l.b16 %v1095
      %v1551 = vunpack.c.l.b16 %v1096
      %v1552 = vunpack.c.l.b16 %v1097
      %v1553 = vunpack.c.l.b16 %v1098
      %v1554 = vunpack.c.l.b16 %v1099
      %v1555 = vunpack.c.l.b16 %v1100
      %v1556 = vunpack.c.l.b16 %v1101
      %v1557 = vunpack.c.l.b16 %v1102
      %v1558 = vunpack.c.l.b16 %v1103
      %v1559 = vunpack.c.l.b16 %v1104
      %v1560 = vunpack.c.l.b16 %v1105
      %v1561 = vunpack.c.l.b16 %v1106
      %v1562 = vunpack.c.l.b16 %v1107
      %v1563 = vunpack.c.l.b16 %v1108
      %v1564 = vunpack.c.l.b16 %v1109
      %v1565 = vunpack.c.l.b16 %v1110
      %v1566 = vpack.c.b16 %v1519, %v1518
      %v1567 = vpack.c.b16 %v1521, %v1520
      %v1568 = vpack.c.b16 %v1523, %v1522
      %v1569 = vpack.c.b16 %v1525, %v1524
      %v1570 = vpack.c.b16 %v1527, %v1526
      %v1571 = vpack.c.b16 %v1529, %v1528
      %v1572 = vpack.c.b16 %v1531, %v1530
      %v1573 = vpack.c.b16 %v1533, %v1532
      %v1574 = vpack.c.b16 %v1535, %v1534
      %v1575 = vpack.c.b16 %v1537, %v1536
      %v1576 = vpack.c.b16 %v1539, %v1538
      %v1577 = vpack.c.b16 %v1541, %v1540
      %v1578 = vpack.c.b16 %v1543, %v1542
      %v1579 = vpack.c.b16 %v1545, %v1544
      %v1580 = vpack.c.b16 %v1547, %v1546
      %v1581 = vpack.c.b16 %v1549, %v1548
      %v1582 = vpack.c.b16 %v1551, %v1550
      %v1583 = vpack.c.b16 %v1553, %v1552
      %v1584 = vpack.c.b16 %v1555, %v1554
      %v1585 = vpack.c.b16 %v1557, %v1556
      %v1586 = vpack.c.b16 %v1559, %v1558
      %v1587 = vpack.c.b16 %v1561, %v1560
      %v1588 = vpack.c.b16 %v1563, %v1562
      %v1589 = vpack.c.b16 %v1565, %v1564
      %1614 = vmatprep.subr.bf16.mxu0 0
      %1615 = vmatpush1.bf16.msra.mxu0 %v1566
      %1616 = vmatprep.subr.bf16.mxu0 0
      %1617 = vmatpush1.bf16.msra.mxu0 %v1567
      %1618 = vmatprep.subr.bf16.mxu0 0
      %1619 = vmatpush1.bf16.msra.mxu0 %v1568
      %1620 = vmatprep.subr.bf16.mxu0 0
      %1621 = vmatpush1.bf16.msra.mxu0 %v1569
      %1622 = vmatprep.subr.bf16.mxu0 0
      %1623 = vmatpush1.bf16.msra.mxu0 %v1570
      %1624 = vmatprep.subr.bf16.mxu0 0
      %1625 = vmatpush1.bf16.msra.mxu0 %v1571
      %1626 = vmatprep.subr.bf16.mxu0 0
      %1627 = vmatpush1.bf16.msra.mxu0 %v1572
      %1628 = vmatprep.subr.bf16.mxu0 0
      %1629 = vmatpush1.bf16.msra.mxu0 %v1573
      %1630 = vmatprep.subr.bf16.mxu0 0
      %1631 = vmatpush1.bf16.msra.mxu0 %v1574
      %1632 = vmatprep.subr.bf16.mxu0 0
      %1633 = vmatpush1.bf16.msra.mxu0 %v1575
      %1634 = vmatprep.subr.bf16.mxu0 0
      %1635 = vmatpush1.bf16.msra.mxu0 %v1576
      %1636 = vmatprep.subr.bf16.mxu0 0
      %1637 = vmatpush1.bf16.msra.mxu0 %v1577
      %1638 = vmatprep.subr.bf16.mxu0 0
      %1639 = vmatpush1.bf16.msra.mxu0 %v1578
      %1640 = vmatprep.subr.bf16.mxu0 0
      %1641 = vmatpush1.bf16.msra.mxu0 %v1579
      %1642 = vmatprep.subr.bf16.mxu0 0
      %1643 = vmatpush1.bf16.msra.mxu0 %v1580
      %1644 = vmatprep.subr.bf16.mxu0 0
      %1645 = vmatpush1.bf16.msra.mxu0 %v1581
      %1646 = vmatprep.mubr.bf16.mxu0 %v1052
      %1647 = vmatmul.mubr.bf16.gmra.mrb[0].mxu0 %v1051
      %v1648 = vpop.f32.mrb[0].mxu0
      %v1649 = vadd.f32 %v1440, %v1648
      %v1650 = vpop.f32.mrb[0].mxu0
      %v1651 = vpop.f32.mrb[0].mxu0
      %v1652 = vadd.f32 %v1443, %v1651
      %v1653 = vpop.f32.mrb[0].mxu0
      %1654 = vmatprep.mubr.bf16.mxu0 %v1055
      %1655 = vmatmul.mubr.bf16.gmra.mrb[0].mxu0 %v1054
      %v1656 = vpop.f32.mrb[0].mxu0
      %v1657 = vadd.f32 %v1448, %v1656
      %v1658 = vpop.f32.mrb[0].mxu0
      %v1659 = vpop.f32.mrb[0].mxu0
      %v1660 = vadd.f32 %v1451, %v1659
      %v1661 = vpop.f32.mrb[0].mxu0
      %1662 = vmatprep.mubr.bf16.mxu0 %v1058
      %1663 = vmatmul.mubr.bf16.gmra.mrb[0].mxu0 %v1057
      %v1664 = vpop.f32.mrb[0].mxu0
      %v1665 = vadd.f32 %v1456, %v1664
      %v1666 = vpop.f32.mrb[0].mxu0
      %v1667 = vpop.f32.mrb[0].mxu0
      %v1668 = vadd.f32 %v1459, %v1667
      %v1669 = vpop.f32.mrb[0].mxu0
      %1670 = vmatprep.mubr.bf16.mxu0 %v1061
      %1671 = vmatmul.mubr.bf16.gmra.mrb[0].mxu0 %v1060
      %v1672 = vpop.f32.mrb[0].mxu0
      %v1673 = vadd.f32 %v1464, %v1672
      %v1674 = vpop.f32.mrb[0].mxu0
      %v1675 = vpop.f32.mrb[0].mxu0
      %v1676 = vadd.f32 %v1467, %v1675
      %v1677 = vpop.f32.mrb[0].mxu0
      %1678 = vdwg.mxu0
      %1679 = vmatprep.subr.bf16.mxu0 0
      %1680 = vmatpush1.bf16.msra.mxu0 %v1582
      %1681 = vmatprep.subr.bf16.mxu0 0
      %1682 = vmatpush1.bf16.msra.mxu0 %v1583
      %1683 = vmatprep.subr.bf16.mxu0 0
      %1684 = vmatpush1.bf16.msra.mxu0 %v1584
      %1685 = vmatprep.subr.bf16.mxu0 0
      %1686 = vmatpush1.bf16.msra.mxu0 %v1585
      %1687 = vmatprep.subr.bf16.mxu0 0
      %1688 = vmatpush1.bf16.msra.mxu0 %v1586
      %1689 = vmatprep.subr.bf16.mxu0 0
      %1690 = vmatpush1.bf16.msra.mxu0 %v1587
      %1691 = vmatprep.subr.bf16.mxu0 0
      %1692 = vmatpush1.bf16.msra.mxu0 %v1588
      %1693 = vmatprep.subr.bf16.mxu0 0
      %1694 = vmatpush1.bf16.msra.mxu0 %v1589
      %1695 = vmatprep.subr.bf16.mxu0 0
      %1696 = vmatpush1.bf16.msra.mxu0 0
      %1697 = vmatprep.subr.bf16.mxu0 0
      %1698 = vmatpush1.bf16.msra.mxu0 0
      %1699 = vmatprep.subr.bf16.mxu0 0
      %1700 = vmatpush1.bf16.msra.mxu0 0
      %1701 = vmatprep.subr.bf16.mxu0 0
      %1702 = vmatpush1.bf16.msra.mxu0 0
      %1703 = vmatprep.subr.bf16.mxu0 0
      %1704 = vmatpush1.bf16.msra.mxu0 0
      %1705 = vmatprep.subr.bf16.mxu0 0
      %1706 = vmatpush1.bf16.msra.mxu0 0
      %1707 = vmatprep.subr.bf16.mxu0 0
      %1708 = vmatpush1.bf16.msra.mxu0 0
      %1709 = vmatprep.subr.bf16.mxu0 0
      %1710 = vmatpush1.bf16.msra.mxu0 0
      %1711 = vmatprep.mubr.bf16.mxu0 0
      %1712 = vmatmul.mubr.bf16.gmra.mrb[0].mxu0 %v1053
      %v1713 = vpop.f32.mrb[0].mxu0
      %v1714 = vadd.f32 %v1649, %v1713
      %v1715 = vpop.f32.mrb[0].mxu0
      %v1716 = vpop.f32.mrb[0].mxu0
      %v1717 = vadd.f32 %v1652, %v1716
      %v1718 = vpop.f32.mrb[0].mxu0
      %1719 = vmatprep.mubr.bf16.mxu0 0
      %1720 = vmatmul.mubr.bf16.gmra.mrb[0].mxu0 %v1056
      %v1721 = vpop.f32.mrb[0].mxu0
      %v1722 = vadd.f32 %v1657, %v1721
      %v1723 = vpop.f32.mrb[0].mxu0
      %v1724 = vpop.f32.mrb[0].mxu0
      %v1725 = vadd.f32 %v1660, %v1724
      %v1726 = vpop.f32.mrb[0].mxu0
      %1727 = vmatprep.mubr.bf16.mxu0 0
      %1728 = vmatmul.mubr.bf16.gmra.mrb[0].mxu0 %v1059
      %v1729 = vpop.f32.mrb[0].mxu0
      %v1730 = vadd.f32 %v1665, %v1729
      %v1731 = vpop.f32.mrb[0].mxu0
      %v1732 = vpop.f32.mrb[0].mxu0
      %v1733 = vadd.f32 %v1668, %v1732
      %v1734 = vpop.f32.mrb[0].mxu0
      %1735 = vmatprep.mubr.bf16.mxu0 0
      %1736 = vmatmul.mubr.bf16.gmra.mrb[0].mxu0 %v1062
      %v1737 = vpop.f32.mrb[0].mxu0
      %v1738 = vadd.f32 %v1673, %v1737
      %v1739 = vpop.f32.mrb[0].mxu0
      %v1740 = vpop.f32.mrb[0].mxu0
      %v1741 = vadd.f32 %v1676, %v1740
      %v1742 = vpop.f32.mrb[0].mxu0
      %1743 = vdwg.mxu0
      %s1744 = scalar_lea.vmem [#allocation2], 48
      %v1745 = vld [vmem:[%s1744] sm:$0xff]
      %v1746 = vld [vmem:[%s1744 + $0x8] sm:$0xff]
      %v1747 = vld [vmem:[%s1744 + $0x10] sm:$0xff]
      %v1748 = vld [vmem:[%s1744 + $0x18] sm:$0xff]
      %v1749 = vld [vmem:[%s1744 + $0x20] sm:$0xff]
      %v1750 = vld [vmem:[%s1744 + $0x28] sm:$0xff]
      %v1751 = vld [vmem:[%s1744 + $0x30] sm:$0xff]
      %v1752 = vld [vmem:[%s1744 + $0x38] sm:$0xff]
      %v1753 = vld [vmem:[%s1744 + $0x40] sm:$0xff]
      %v1754 = vld [vmem:[%s1744 + $0x48] sm:$0xff]
      %v1755 = vld [vmem:[%s1744 + $0x50] sm:$0xff]
      %v1756 = vld [vmem:[%s1744 + $0x58] sm:$0xff]
      %v1757 = vld [vmem:[%s1744 + $0x60] sm:$0xff]
      %v1758 = vld [vmem:[%s1744 + $0x68] sm:$0xff]
      %v1759 = vld [vmem:[%s1744 + $0x70] sm:$0xff]
      %v1760 = vld [vmem:[%s1744 + $0x78] sm:$0xff]
      %v1761 = vld [vmem:[%s1744 + $0x80] sm:$0xff]
      %v1762 = vld [vmem:[%s1744 + $0x88] sm:$0xff]
      %v1763 = vld [vmem:[%s1744 + $0x90] sm:$0xff]
      %v1764 = vld [vmem:[%s1744 + $0x98] sm:$0xff]
      %v1765 = vld [vmem:[%s1744 + $0xa0] sm:$0xff]
      %v1766 = vld [vmem:[%s1744 + $0xa8] sm:$0xff]
      %v1767 = vld [vmem:[%s1744 + $0xb0] sm:$0xff]
      %v1768 = vld [vmem:[%s1744 + $0xb8] sm:$0xff]
      %v1769 = vpack.c.bf16 %v1748, %v1745
      %v1770 = vpack.c.bf16 %v1749, %v1746
      %v1771 = vpack.c.bf16 %v1750, %v1747
      %v1772 = vpack.c.bf16 %v1754, %v1751
      %v1773 = vpack.c.bf16 %v1755, %v1752
      %v1774 = vpack.c.bf16 %v1756, %v1753
      %v1775 = vpack.c.bf16 %v1760, %v1757
      %v1776 = vpack.c.bf16 %v1761, %v1758
      %v1777 = vpack.c.bf16 %v1762, %v1759
      %v1778 = vpack.c.bf16 %v1766, %v1763
      %v1779 = vpack.c.bf16 %v1767, %v1764
      %v1780 = vpack.c.bf16 %v1768, %v1765
      %s1781 = scalar_lea.vmem %s3, 384
      %v1782 = vld [vmem:[%s1781] sm:$0xf]
      %v1783 = vld [vmem:[%s1781 + $0x4] sm:$0xf]
      %v1784 = vld [vmem:[%s1781 + $0x8] sm:$0xf]
      %v1785 = vld [vmem:[%s1781 + $0xc] sm:$0xf]
      %v1786 = vld [vmem:[%s1781 + $0x10] sm:$0xf]
      %v1787 = vld [vmem:[%s1781 + $0x14] sm:$0xf]
      %v1788 = vld [vmem:[%s1781 + $0x18] sm:$0xf]
      %v1789 = vld [vmem:[%s1781 + $0x1c] sm:$0xf]
      %v1790 = vld [vmem:[%s1781 + $0x20] sm:$0xf]
      %v1791 = vld [vmem:[%s1781 + $0x24] sm:$0xf]
      %v1792 = vld [vmem:[%s1781 + $0x28] sm:$0xf]
      %v1793 = vld [vmem:[%s1781 + $0x2c] sm:$0xf]
      %v1794 = vld [vmem:[%s1781 + $0x30] sm:$0xf]
      %v1795 = vld [vmem:[%s1781 + $0x34] sm:$0xf]
      %v1796 = vld [vmem:[%s1781 + $0x38] sm:$0xf]
      %v1797 = vld [vmem:[%s1781 + $0x3c] sm:$0xf]
      %v1798 = vld [vmem:[%s1781 + $0x40] sm:$0xf]
      %v1799 = vld [vmem:[%s1781 + $0x44] sm:$0xf]
      %v1800 = vld [vmem:[%s1781 + $0x48] sm:$0xf]
      %v1801 = vld [vmem:[%s1781 + $0x4c] sm:$0xf]
      %v1802 = vld [vmem:[%s1781 + $0x50] sm:$0xf]
      %v1803 = vld [vmem:[%s1781 + $0x54] sm:$0xf]
      %v1804 = vld [vmem:[%s1781 + $0x58] sm:$0xf]
      %v1805 = vld [vmem:[%s1781 + $0x5c] sm:$0xf]
      %v1806 = vld [vmem:[%s1781 + $0x60] sm:$0xf]
      %v1807 = vld [vmem:[%s1781 + $0x64] sm:$0xf]
      %v1808 = vld [vmem:[%s1781 + $0x68] sm:$0xf]
      %v1809 = vld [vmem:[%s1781 + $0x6c] sm:$0xf]
      %v1810 = vld [vmem:[%s1781 + $0x70] sm:$0xf]
      %v1811 = vld [vmem:[%s1781 + $0x74] sm:$0xf]
      %v1812 = vld [vmem:[%s1781 + $0x78] sm:$0xf]
      %v1813 = vld [vmem:[%s1781 + $0x7c] sm:$0xf]
      %v1814 = vld [vmem:[%s1781 + $0x80] sm:$0xf]
      %v1815 = vld [vmem:[%s1781 + $0x84] sm:$0xf]
      %v1816 = vld [vmem:[%s1781 + $0x88] sm:$0xf]
      %v1817 = vld [vmem:[%s1781 + $0x8c] sm:$0xf]
      %v1818 = vld [vmem:[%s1781 + $0x90] sm:$0xf]
      %v1819 = vld [vmem:[%s1781 + $0x94] sm:$0xf]
      %v1820 = vld [vmem:[%s1781 + $0x98] sm:$0xf]
      %v1821 = vld [vmem:[%s1781 + $0x9c] sm:$0xf]
      %v1822 = vld [vmem:[%s1781 + $0xa0] sm:$0xf]
      %v1823 = vld [vmem:[%s1781 + $0xa4] sm:$0xf]
      %v1824 = vld [vmem:[%s1781 + $0xa8] sm:$0xf]
      %v1825 = vld [vmem:[%s1781 + $0xac] sm:$0xf]
      %v1826 = vld [vmem:[%s1781 + $0xb0] sm:$0xf]
      %v1827 = vld [vmem:[%s1781 + $0xb4] sm:$0xf]
      %v1828 = vld [vmem:[%s1781 + $0xb8] sm:$0xf]
      %v1829 = vld [vmem:[%s1781 + $0xbc] sm:$0xf]
      %v1878 = vunpack.c.l.b16 %v1782
      %v1879 = vunpack.c.l.b16 %v1783
      %v1880 = vunpack.c.l.b16 %v1784
      %v1881 = vunpack.c.l.b16 %v1785
      %v1882 = vunpack.c.l.b16 %v1786
      %v1883 = vunpack.c.l.b16 %v1787
      %v1884 = vunpack.c.l.b16 %v1788
      %v1885 = vunpack.c.l.b16 %v1789
      %v1886 = vunpack.c.l.b16 %v1790
      %v1887 = vunpack.c.l.b16 %v1791
      %v1888 = vunpack.c.l.b16 %v1792
      %v1889 = vunpack.c.l.b16 %v1793
      %v1890 = vunpack.c.l.b16 %v1794
      %v1891 = vunpack.c.l.b16 %v1795
      %v1892 = vunpack.c.l.b16 %v1796
      %v1893 = vunpack.c.l.b16 %v1797
      %v1894 = vunpack.c.l.b16 %v1798
      %v1895 = vunpack.c.l.b16 %v1799
      %v1896 = vunpack.c.l.b16 %v1800
      %v1897 = vunpack.c.l.b16 %v1801
      %v1898 = vunpack.c.l.b16 %v1802
      %v1899 = vunpack.c.l.b16 %v1803
      %v1900 = vunpack.c.l.b16 %v1804
      %v1901 = vunpack.c.l.b16 %v1805
      %v1902 = vunpack.c.l.b16 %v1806
      %v1903 = vunpack.c.l.b16 %v1807
      %v1904 = vunpack.c.l.b16 %v1808
      %v1905 = vunpack.c.l.b16 %v1809
      %v1906 = vunpack.c.l.b16 %v1810
      %v1907 = vunpack.c.l.b16 %v1811
      %v1908 = vunpack.c.l.b16 %v1812
      %v1909 = vunpack.c.l.b16 %v1813
      %v1910 = vunpack.c.l.b16 %v1814
      %v1911 = vunpack.c.l.b16 %v1815
      %v1912 = vunpack.c.l.b16 %v1816
      %v1913 = vunpack.c.l.b16 %v1817
      %v1914 = vunpack.c.l.b16 %v1818
      %v1915 = vunpack.c.l.b16 %v1819
      %v1916 = vunpack.c.l.b16 %v1820
      %v1917 = vunpack.c.l.b16 %v1821
      %v1918 = vunpack.c.l.b16 %v1822
      %v1919 = vunpack.c.l.b16 %v1823
      %v1920 = vunpack.c.l.b16 %v1824
      %v1921 = vunpack.c.l.b16 %v1825
      %v1922 = vunpack.c.l.b16 %v1826
      %v1923 = vunpack.c.l.b16 %v1827
      %v1924 = vunpack.c.l.b16 %v1828
      %v1925 = vunpack.c.l.b16 %v1829
      %v1926 = vpack.c.b16 %v1879, %v1878
      %v1927 = vpack.c.b16 %v1881, %v1880
      %v1928 = vpack.c.b16 %v1883, %v1882
      %v1929 = vpack.c.b16 %v1885, %v1884
      %v1930 = vpack.c.b16 %v1887, %v1886
      %v1931 = vpack.c.b16 %v1889, %v1888
      %v1932 = vpack.c.b16 %v1891, %v1890
      %v1933 = vpack.c.b16 %v1893, %v1892
      %v1934 = vpack.c.b16 %v1895, %v1894
      %v1935 = vpack.c.b16 %v1897, %v1896
      %v1936 = vpack.c.b16 %v1899, %v1898
      %v1937 = vpack.c.b16 %v1901, %v1900
      %v1938 = vpack.c.b16 %v1903, %v1902
      %v1939 = vpack.c.b16 %v1905, %v1904
      %v1940 = vpack.c.b16 %v1907, %v1906
      %v1941 = vpack.c.b16 %v1909, %v1908
      %v1942 = vpack.c.b16 %v1911, %v1910
      %v1943 = vpack.c.b16 %v1913, %v1912
      %v1944 = vpack.c.b16 %v1915, %v1914
      %v1945 = vpack.c.b16 %v1917, %v1916
      %v1946 = vpack.c.b16 %v1919, %v1918
      %v1947 = vpack.c.b16 %v1921, %v1920
      %v1948 = vpack.c.b16 %v1923, %v1922
      %v1949 = vpack.c.b16 %v1925, %v1924
      %1974 = vmatprep.subr.bf16.mxu0 0
      %1975 = vmatpush1.bf16.msra.mxu0 %v1926
      %1976 = vmatprep.subr.bf16.mxu0 0
      %1977 = vmatpush1.bf16.msra.mxu0 %v1927
      %1978 = vmatprep.subr.bf16.mxu0 0
      %1979 = vmatpush1.bf16.msra.mxu0 %v1928
      %1980 = vmatprep.subr.bf16.mxu0 0
      %1981 = vmatpush1.bf16.msra.mxu0 %v1929
      %1982 = vmatprep.subr.bf16.mxu0 0
      %1983 = vmatpush1.bf16.msra.mxu0 %v1930
      %1984 = vmatprep.subr.bf16.mxu0 0
      %1985 = vmatpush1.bf16.msra.mxu0 %v1931
      %1986 = vmatprep.subr.bf16.mxu0 0
      %1987 = vmatpush1.bf16.msra.mxu0 %v1932
      %1988 = vmatprep.subr.bf16.mxu0 0
      %1989 = vmatpush1.bf16.msra.mxu0 %v1933
      %1990 = vmatprep.subr.bf16.mxu0 0
      %1991 = vmatpush1.bf16.msra.mxu0 %v1934
      %1992 = vmatprep.subr.bf16.mxu0 0
      %1993 = vmatpush1.bf16.msra.mxu0 %v1935
      %1994 = vmatprep.subr.bf16.mxu0 0
      %1995 = vmatpush1.bf16.msra.mxu0 %v1936
      %1996 = vmatprep.subr.bf16.mxu0 0
      %1997 = vmatpush1.bf16.msra.mxu0 %v1937
      %1998 = vmatprep.subr.bf16.mxu0 0
      %1999 = vmatpush1.bf16.msra.mxu0 %v1938
      %2000 = vmatprep.subr.bf16.mxu0 0
      %2001 = vmatpush1.bf16.msra.mxu0 %v1939
      %2002 = vmatprep.subr.bf16.mxu0 0
      %2003 = vmatpush1.bf16.msra.mxu0 %v1940
      %2004 = vmatprep.subr.bf16.mxu0 0
      %2005 = vmatpush1.bf16.msra.mxu0 %v1941
      %2006 = vmatprep.mubr.bf16.mxu0 %v1770
      %2007 = vmatmul.mubr.bf16.gmra.mrb[0].mxu0 %v1769
      %v2008 = vpop.f32.mrb[0].mxu0
      %v2009 = vadd.f32 0.0, %v2008
      %v2010 = vpop.f32.mrb[0].mxu0
      %v2011 = vpop.f32.mrb[0].mxu0
      %v2012 = vadd.f32 0.0, %v2011
      %v2013 = vpop.f32.mrb[0].mxu0
      %2014 = vmatprep.mubr.bf16.mxu0 %v1773
      %2015 = vmatmul.mubr.bf16.gmra.mrb[0].mxu0 %v1772
      %v2016 = vpop.f32.mrb[0].mxu0
      %v2017 = vadd.f32 0.0, %v2016
      %v2018 = vpop.f32.mrb[0].mxu0
      %v2019 = vpop.f32.mrb[0].mxu0
      %v2020 = vadd.f32 0.0, %v2019
      %v2021 = vpop.f32.mrb[0].mxu0
      %2022 = vmatprep.mubr.bf16.mxu0 %v1776
      %2023 = vmatmul.mubr.bf16.gmra.mrb[0].mxu0 %v1775
      %v2024 = vpop.f32.mrb[0].mxu0
      %v2025 = vadd.f32 0.0, %v2024
      %v2026 = vpop.f32.mrb[0].mxu0
      %v2027 = vpop.f32.mrb[0].mxu0
      %v2028 = vadd.f32 0.0, %v2027
      %v2029 = vpop.f32.mrb[0].mxu0
      %2030 = vmatprep.mubr.bf16.mxu0 %v1779
      %2031 = vmatmul.mubr.bf16.gmra.mrb[0].mxu0 %v1778
      %v2032 = vpop.f32.mrb[0].mxu0
      %v2033 = vadd.f32 0.0, %v2032
      %v2034 = vpop.f32.mrb[0].mxu0
      %v2035 = vpop.f32.mrb[0].mxu0
      %v2036 = vadd.f32 0.0, %v2035
      %v2037 = vpop.f32.mrb[0].mxu0
      %2038 = vdwg.mxu0
      %2039 = vmatprep.subr.bf16.mxu0 0
      %2040 = vmatpush1.bf16.msra.mxu0 %v1942
      %2041 = vmatprep.subr.bf16.mxu0 0
      %2042 = vmatpush1.bf16.msra.mxu0 %v1943
      %2043 = vmatprep.subr.bf16.mxu0 0
      %2044 = vmatpush1.bf16.msra.mxu0 %v1944
      %2045 = vmatprep.subr.bf16.mxu0 0
      %2046 = vmatpush1.bf16.msra.mxu0 %v1945
      %2047 = vmatprep.subr.bf16.mxu0 0
      %2048 = vmatpush1.bf16.msra.mxu0 %v1946
      %2049 = vmatprep.subr.bf16.mxu0 0
      %2050 = vmatpush1.bf16.msra.mxu0 %v1947
      %2051 = vmatprep.subr.bf16.mxu0 0
      %2052 = vmatpush1.bf16.msra.mxu0 %v1948
      %2053 = vmatprep.subr.bf16.mxu0 0
      %2054 = vmatpush1.bf16.msra.mxu0 %v1949
      %2055 = vmatprep.subr.bf16.mxu0 0
      %2056 = vmatpush1.bf16.msra.mxu0 0
      %2057 = vmatprep.subr.bf16.mxu0 0
      %2058 = vmatpush1.bf16.msra.mxu0 0
      %2059 = vmatprep.subr.bf16.mxu0 0
      %2060 = vmatpush1.bf16.msra.mxu0 0
      %2061 = vmatprep.subr.bf16.mxu0 0
      %2062 = vmatpush1.bf16.msra.mxu0 0
      %2063 = vmatprep.subr.bf16.mxu0 0
      %2064 = vmatpush1.bf16.msra.mxu0 0
      %2065 = vmatprep.subr.bf16.mxu0 0
      %2066 = vmatpush1.bf16.msra.mxu0 0
      %2067 = vmatprep.subr.bf16.mxu0 0
      %2068 = vmatpush1.bf16.msra.mxu0 0
      %2069 = vmatprep.subr.bf16.mxu0 0
      %2070 = vmatpush1.bf16.msra.mxu0 0
      %2071 = vmatprep.mubr.bf16.mxu0 0
      %2072 = vmatmul.mubr.bf16.gmra.mrb[0].mxu0 %v1771
      %v2073 = vpop.f32.mrb[0].mxu0
      %v2074 = vadd.f32 %v2009, %v2073
      %v2075 = vpop.f32.mrb[0].mxu0
      %v2076 = vpop.f32.mrb[0].mxu0
      %v2077 = vadd.f32 %v2012, %v2076
      %v2078 = vpop.f32.mrb[0].mxu0
      %2079 = vmatprep.mubr.bf16.mxu0 0
      %2080 = vmatmul.mubr.bf16.gmra.mrb[0].mxu0 %v1774
      %v2081 = vpop.f32.mrb[0].mxu0
      %v2082 = vadd.f32 %v2017, %v2081
      %v2083 = vpop.f32.mrb[0].mxu0
      %v2084 = vpop.f32.mrb[0].mxu0
      %v2085 = vadd.f32 %v2020, %v2084
      %v2086 = vpop.f32.mrb[0].mxu0
      %2087 = vmatprep.mubr.bf16.mxu0 0
      %2088 = vmatmul.mubr.bf16.gmra.mrb[0].mxu0 %v1777
      %v2089 = vpop.f32.mrb[0].mxu0
      %v2090 = vadd.f32 %v2025, %v2089
      %v2091 = vpop.f32.mrb[0].mxu0
      %v2092 = vpop.f32.mrb[0].mxu0
      %v2093 = vadd.f32 %v2028, %v2092
      %v2094 = vpop.f32.mrb[0].mxu0
      %2095 = vmatprep.mubr.bf16.mxu0 0
      %2096 = vmatmul.mubr.bf16.gmra.mrb[0].mxu0 %v1780
      %v2097 = vpop.f32.mrb[0].mxu0
      %v2098 = vadd.f32 %v2033, %v2097
      %v2099 = vpop.f32.mrb[0].mxu0
      %v2100 = vpop.f32.mrb[0].mxu0
      %v2101 = vadd.f32 %v2036, %v2100
      %v2102 = vpop.f32.mrb[0].mxu0
      %2103 = vdwg.mxu0
      %v2104 = vadd.f32 %v1714, %v2074
      %v2105 = vadd.f32 %v1717, %v2077
      %v2106 = vadd.f32 %v1722, %v2082
      %v2107 = vadd.f32 %v1725, %v2085
      %v2108 = vadd.f32 %v1730, %v2090
      %v2109 = vadd.f32 %v1733, %v2093
      %v2110 = vadd.f32 %v1738, %v2098
      %v2111 = vadd.f32 %v1741, %v2101
      %v2112 = vld [vmem:[%s4] sm:$0x1]
      %v2114 = vlaneseq
      %v2115 = vshrl.u32 %v2114, 7
      %v2116 = vsub.s32 0, %v2115
      %v2117 = vrot.slane %v2112, %v2116
      %v2119 = vadd.f32 %v2104, %v2117
      %v2120 = vadd.f32 %v2105, %v2117
      %v2121 = vadd.f32 %v2106, %v2117
      %v2122 = vadd.f32 %v2107, %v2117
      %v2123 = vadd.f32 %v2108, %v2117
      %v2124 = vadd.f32 %v2109, %v2117
      %v2125 = vadd.f32 %v2110, %v2117
      %v2126 = vadd.f32 %v2111, %v2117
      %v2127 = vld [vmem:[%s273 + $0x8] sm:$0xf]
      %v2128 = vld [vmem:[%s273 + $0x1c] sm:$0xf]
      %v2129 = vld [vmem:[%s273 + $0x30] sm:$0xf]
      %v2130 = vld [vmem:[%s273 + $0x44] sm:$0xf]
      %v2131 = vld [vmem:[%s273 + $0x58] sm:$0xf]
      %v2132 = vld [vmem:[%s273 + $0x6c] sm:$0xf]
      %v2133 = vld [vmem:[%s273 + $0x80] sm:$0xf]
      %v2134 = vld [vmem:[%s273 + $0x94] sm:$0xf]
      %v2135 = vld [vmem:[%s5] sm:$0xf]
      %v2136 = vld [vmem:[%s5 + $0x4] sm:$0xf]
      %v2137 = vld [vmem:[%s5 + $0x8] sm:$0xf]
      %v2138 = vld [vmem:[%s5 + $0xc] sm:$0xf]
      %v2139 = vld [vmem:[%s5 + $0x10] sm:$0xf]
      %v2140 = vld [vmem:[%s5 + $0x14] sm:$0xf]
      %v2141 = vld [vmem:[%s5 + $0x18] sm:$0xf]
      %v2142 = vld [vmem:[%s5 + $0x1c] sm:$0xf]
      %v2143 = vld [vmem:[%s6] sm:$0x1]
      %v2145 = vlaneseq
      %v2146 = vshrl.u32 %v2145, 7
      %v2147 = vsub.s32 0, %v2146
      %v2148 = vrot.slane %v2143, %v2147
      %v2158 = vunpack.c.l.b16 %v2127
      %v2159 = vunpack.c.l.b16 %v2128
      %v2160 = vunpack.c.l.b16 %v2129
      %v2161 = vunpack.c.l.b16 %v2130
      %v2162 = vunpack.c.l.b16 %v2131
      %v2163 = vunpack.c.l.b16 %v2132
      %v2164 = vunpack.c.l.b16 %v2133
      %v2165 = vunpack.c.l.b16 %v2134
      %v2166 = vpack.c.b16 %v2159, %v2158
      %v2167 = vpack.c.b16 %v2161, %v2160
      %v2168 = vpack.c.b16 %v2163, %v2162
      %v2169 = vpack.c.b16 %v2165, %v2164
      %v2178 = vunpack.c.l.b16 %v2135
      %v2179 = vunpack.c.l.b16 %v2136
      %v2180 = vunpack.c.l.b16 %v2137
      %v2181 = vunpack.c.l.b16 %v2138
      %v2182 = vunpack.c.l.b16 %v2139
      %v2183 = vunpack.c.l.b16 %v2140
      %v2184 = vunpack.c.l.b16 %v2141
      %v2185 = vunpack.c.l.b16 %v2142
      %v2186 = vpack.c.b16 %v2179, %v2178
      %v2187 = vpack.c.b16 %v2181, %v2180
      %v2188 = vpack.c.b16 %v2183, %v2182
      %v2189 = vpack.c.b16 %v2185, %v2184
      %v2195 = vsel %vm699, %v2166, 0
      %v2198 = vsel %vm699, %v2167, 0
      %v2201 = vsel %vm699, %v2168, 0
      %v2204 = vsel %vm699, %v2169, 0
      %2206 = vmatprep.subr.bf16.mxu0 0
      %2207 = vmatpush1.bf16.msra.mxu0 %v2186
      %2208 = vmatprep.subr.bf16.mxu0 0
      %2209 = vmatpush1.bf16.msra.mxu0 %v2187
      %2210 = vmatprep.subr.bf16.mxu0 0
      %2211 = vmatpush1.bf16.msra.mxu0 %v2188
      %2212 = vmatprep.subr.bf16.mxu0 0
      %2213 = vmatpush1.bf16.msra.mxu0 %v2189
      %2214 = vmatprep.subr.bf16.mxu0 0
      %2215 = vmatpush1.bf16.msra.mxu0 0
      %2216 = vmatprep.subr.bf16.mxu0 0
      %2217 = vmatpush1.bf16.msra.mxu0 0
      %2218 = vmatprep.subr.bf16.mxu0 0
      %2219 = vmatpush1.bf16.msra.mxu0 0
      %2220 = vmatprep.subr.bf16.mxu0 0
      %2221 = vmatpush1.bf16.msra.mxu0 0
      %2222 = vmatprep.subr.bf16.mxu0 0
      %2223 = vmatpush1.bf16.msra.mxu0 0
      %2224 = vmatprep.subr.bf16.mxu0 0
      %2225 = vmatpush1.bf16.msra.mxu0 0
      %2226 = vmatprep.subr.bf16.mxu0 0
      %2227 = vmatpush1.bf16.msra.mxu0 0
      %2228 = vmatprep.subr.bf16.mxu0 0
      %2229 = vmatpush1.bf16.msra.mxu0 0
      %2230 = vmatprep.subr.bf16.mxu0 0
      %2231 = vmatpush1.bf16.msra.mxu0 0
      %2232 = vmatprep.subr.bf16.mxu0 0
      %2233 = vmatpush1.bf16.msra.mxu0 0
      %2234 = vmatprep.subr.bf16.mxu0 0
      %2235 = vmatpush1.bf16.msra.mxu0 0
      %2236 = vmatprep.subr.bf16.mxu0 0
      %2237 = vmatpush1.bf16.msra.mxu0 0
      %2238 = vmatprep.mubr.bf16.mxu0 0
      %2239 = vmatmul.mubr.bf16.gmra.mrb[0].mxu0 %v2195
      %v2240 = vpop.f32.mrb[0].mxu0
      %v2241 = vadd.f32 %v2148, %v2240
      %v2242 = vpop.f32.mrb[0].mxu0
      %v2243 = vpop.f32.mrb[0].mxu0
      %v2244 = vadd.f32 %v2148, %v2243
      %v2245 = vpop.f32.mrb[0].mxu0
      %2246 = vmatprep.mubr.bf16.mxu0 0
      %2247 = vmatmul.mubr.bf16.gmra.mrb[0].mxu0 %v2198
      %v2248 = vpop.f32.mrb[0].mxu0
      %v2249 = vadd.f32 %v2148, %v2248
      %v2250 = vpop.f32.mrb[0].mxu0
      %v2251 = vpop.f32.mrb[0].mxu0
      %v2252 = vadd.f32 %v2148, %v2251
      %v2253 = vpop.f32.mrb[0].mxu0
      %2254 = vmatprep.mubr.bf16.mxu0 0
      %2255 = vmatmul.mubr.bf16.gmra.mrb[0].mxu0 %v2201
      %v2256 = vpop.f32.mrb[0].mxu0
      %v2257 = vadd.f32 %v2148, %v2256
      %v2258 = vpop.f32.mrb[0].mxu0
      %v2259 = vpop.f32.mrb[0].mxu0
      %v2260 = vadd.f32 %v2148, %v2259
      %v2261 = vpop.f32.mrb[0].mxu0
      %2262 = vmatprep.mubr.bf16.mxu0 0
      %2263 = vmatmul.mubr.bf16.gmra.mrb[0].mxu0 %v2204
      %v2264 = vpop.f32.mrb[0].mxu0
      %v2265 = vadd.f32 %v2148, %v2264
      %v2266 = vpop.f32.mrb[0].mxu0
      %v2267 = vpop.f32.mrb[0].mxu0
      %v2268 = vadd.f32 %v2148, %v2267
      %v2269 = vpop.f32.mrb[0].mxu0
      %2270 = vdwg.mxu0
      %v2271 = vadd.f32 %v2119, %v2241
      %v2272 = vadd.f32 %v2120, %v2244
      %v2273 = vadd.f32 %v2121, %v2249
      %v2274 = vadd.f32 %v2122, %v2252
      %v2275 = vadd.f32 %v2123, %v2257
      %v2276 = vadd.f32 %v2124, %v2260
      %v2277 = vadd.f32 %v2125, %v2265
      %v2278 = vadd.f32 %v2126, %v2268
      %v2279 = vmax.f32 %v2271, 0.0
      %v2280 = vmax.f32 %v2272, 0.0
      %v2281 = vmax.f32 %v2273, 0.0
      %v2282 = vmax.f32 %v2274, 0.0
      %v2283 = vmax.f32 %v2275, 0.0
      %v2284 = vmax.f32 %v2276, 0.0
      %v2285 = vmax.f32 %v2277, 0.0
      %v2286 = vmax.f32 %v2278, 0.0
      %v2287 = vpack.c.bf16 %v2280, %v2279
      %v2288 = vpack.c.bf16 %v2282, %v2281
      %v2289 = vpack.c.bf16 %v2284, %v2283
      %v2290 = vpack.c.bf16 %v2286, %v2285
      %v2295 = vunpack.c.l.b16 %v2287
      %v2296 = vunpack.c.h.b16 %v2287
      %v2297 = vunpack.c.l.b16 %v2288
      %v2298 = vunpack.c.h.b16 %v2288
      %v2299 = vunpack.c.l.b16 %v2289
      %v2300 = vunpack.c.h.b16 %v2289
      %v2301 = vunpack.c.l.b16 %v2290
      %v2302 = vunpack.c.h.b16 %v2290
      %v2303 = vpack.c.b16 %v2295, %v2295
      %v2304 = vpack.c.b16 %v2296, %v2296
      %v2305 = vpack.c.b16 %v2297, %v2297
      %v2306 = vpack.c.b16 %v2298, %v2298
      %v2307 = vpack.c.b16 %v2299, %v2299
      %v2308 = vpack.c.b16 %v2300, %v2300
      %v2309 = vpack.c.b16 %v2301, %v2301
      %v2310 = vpack.c.b16 %v2302, %v2302
      %2319 = vst [vmem:[%s278] sm:$0xf] %v2303
      %2320 = vst [vmem:[%s278 + $0x4] sm:$0xf] %v2304
      %2321 = vst [vmem:[%s278 + $0x8] sm:$0xf] %v2305
      %2322 = vst [vmem:[%s278 + $0xc] sm:$0xf] %v2306
      %2323 = vst [vmem:[%s278 + $0x10] sm:$0xf] %v2307
      %2324 = vst [vmem:[%s278 + $0x14] sm:$0xf] %v2308
      %2325 = vst [vmem:[%s278 + $0x18] sm:$0xf] %v2309
      %2326 = vst [vmem:[%s278 + $0x1c] sm:$0xf] %v2310
      %p2327 = scmp.lt.s32.totalorder %s18, 1
      %s2328 = scalar_select %p2327, %s18, 1
      %s2329 = smul.addr %s2328, 8
      %s2330 = smul.addr %s2329, 4
      %s2331 = scalar_lea.vmem %s7, %s2330
      // Predicated region
      $region49: #{resnet18_extractor.8} parent=47 // pred_check
        %p2332 = pneg %p188
      $region50: #{resnet18_extractor.8} parent=47 // pred_check_branch
        %2334 = sbr.rel (%p2332) target = $region52
      $region51: #{resnet18_extractor.8} parent=47 // pred_region
        _
      $region52: #{resnet18_extractor.8} parent=47 // pred_fallthru
        _
    $region48: #{resnet18_extractor.8} parent=5 // pred_fallthru
      _
    %p2335 = scmp.le.s32.totalorder 2, %s13
    // Predicated region
    $region53: #{resnet18_extractor.8} parent=5 // pred_check
      %p2336 = pneg %p2335
    $region54: #{resnet18_extractor.8} parent=5 // pred_check_branch
      %2338 = sbr.rel (%p2336) target = $region56
    $region55: #{resnet18_extractor.8} parent=5 // pred_region
      %s2339 = ssub.s32 %s13, 2
      // Predicated region
      $region57: #{resnet18_extractor.8} parent=55 // pred_check
        %p2340 = pneg %p194
      $region58: #{resnet18_extractor.8} parent=55 // pred_check_branch
        %2342 = sbr.rel (%p2340) target = $region60
      $region59: #{resnet18_extractor.8} parent=55 // pred_region
        %p2343 = scmp.lt.s32.totalorder %s19, 1
        %s2344 = scalar_select %p2343, %s19, 1
        %s2345 = smul.addr %s2344, 8
        %s2346 = smul.addr %s2345, 4
        %s2347 = scalar_lea.vmem %s7, %s2346
      $region60: #{resnet18_extractor.8} parent=55 // pred_fallthru
        _
    $region56: #{resnet18_extractor.8} parent=5 // pred_fallthru
      _
  $region6: #{resnet18_extractor.8} parent=0 // loop_footer
    %s17 = sadd.s32 1, %s13
  $region7: #{resnet18_extractor.8} parent=0 // loop_footer_branch
    %12 = sbr.rel target = $region3
  $region8: #{resnet18_extractor.8} parent=0 // loop_exit
    _

// kernel: resnet18_extractor.6
$region0: #{resnet18_extractor.6}
  #allocation0 [shape = 'u32[]', space=smem, size = 0x4, offset = 0x4, fixed_abs, tag = 'smem constant byte address 0x4 - core index']
  #allocation1 [shape = 'u32[144,128]{1,0:T(1,128)}', space=vmem, size = 0x12000, scoped, tag = 'internal scratch']
  #allocation2 [shape = 'f32[1,18,16,192]{3,2,1,0:T(8,128)}', space=vmem, size = 0x48000, scoped, tag = 'scratch operand']
  %s0 = inlined_call_operand.vmem [shape: bf16[2,16,16,64], index: 0, kind: input, shape index: {}]
  %s1 = inlined_call_operand.vmem [shape: bf16[3,192,64], index: 1, kind: input, shape index: {}]
  %s2 = inlined_call_operand.vmem [shape: f32[1,64], index: 2, kind: input, shape index: {}]
  %s3 = inlined_call_operand.vmem [shape: bf16[3,192,64], index: 3, kind: input, shape index: {}]
  %s4 = inlined_call_operand.vmem [shape: f32[1,64], index: 4, kind: input, shape index: {}]
  %s5 = inlined_call_operand.vmem [shape: bf16[2,256,64], index: 5, kind: output, shape index: {}]
  %s6 = sld [smem:[#allocation0]]
  $region53: #{resnet18_extractor.6} parent=0
    _
  %s8 = ssub.s32 1, %s6
  %s9 = scalar_select 0, %s8, %s6
  loop: start=0, step=1, limit=4
  $region2: #{resnet18_extractor.6} parent=0 // loop_pre_header
    _
  $region3: #{resnet18_extractor.6} parent=0 // loop_header
    %s11 = sphi 0, %s15
    %p12 = scmp.ge.s32.totalorder %s11, 4
    %s21 = sphi 0, %s23
    %s24 = sphi 0, %s21
    %s25 = sphi 0, %s24
    %s41 = sphi 0, %s25
    %s45 = sphi 0, %s45
    %s47 = sphi 0, %s45
    %s48 = sphi 0, %s47
    %s62 = sphi 0, %s48
    %s66 = sphi 0, %s66
    %s68 = sphi 0, %s66
    %s69 = sphi 0, %s68
    %s83 = sphi 0, %s69
    %s87 = sphi 0, %s87
    %s89 = sphi 0, %s87
    %s90 = sphi 0, %s89
    %s104 = sphi 0, %s90
    %s108 = sphi 0, %s108
    %s110 = sphi 0, %s108
    %s111 = sphi 0, %s110
    %s125 = sphi 0, %s111
    %s131 = sphi 0, %s133
    %s134 = sphi 0, %s131
    %s135 = sphi 0, %s134
    %s151 = sphi 0, %s135
  $region4: #{resnet18_extractor.6} parent=0 // loop_header_branch
    %14 = sbr.rel (%p12) target = $region8
  $region5: #{resnet18_extractor.6} parent=0 // loop_body
    %s16 = ssub.s32 %s11, 1
    %s17 = ssub.s32 %s11, 2
    %s18 = sadd.s32 %s11, 1
    %s19 = ssub.s32 %s11, %s18
    %p20 = scmp.eq.s32.totalorder %s19, 0
    %s22 = sadd.s32 %s21, 1
    %s23 = scalar_select %p20, %s21, %s22
    %p26 = pneg %p20
    %p27 = scmp.eq.s32.totalorder %s11, 1
    %p28 = por %p26, %p27
    %p29 = scmp.ne.s32.totalorder %s21, %s24
    %p30 = scmp.eq.s32.totalorder %s11, 0
    %p31 = por %p29, %p30
    %p32 = scmp.ne.s32.totalorder %s21, %s24
    %p33 = scmp.eq.s32.totalorder %s16, 1
    %p34 = por %p32, %p33
    %p35 = scmp.ne.s32.totalorder %s24, %s25
    %p36 = scmp.eq.s32.totalorder %s16, 0
    %p37 = por %p35, %p36
    %p38 = scmp.ne.s32.totalorder %s24, %s25
    %p39 = scmp.eq.s32.totalorder %s17, 1
    %p40 = por %p38, %p39
    %p42 = scmp.ne.s32.totalorder %s25, %s41
    %p43 = scmp.eq.s32.totalorder %s17, 0
    %p44 = por %p42, %p43
    %s46 = sadd.s32 %s45, 1
    %p49 = scmp.eq.s32.totalorder %s11, 1
    %p50 = scmp.ne.s32.totalorder %s45, %s47
    %p51 = scmp.eq.s32.totalorder %s11, 0
    %p52 = por %p50, %p51
    %p53 = scmp.ne.s32.totalorder %s45, %s47
    %p54 = scmp.eq.s32.totalorder %s16, 1
    %p55 = por %p53, %p54
    %p56 = scmp.ne.s32.totalorder %s47, %s48
    %p57 = scmp.eq.s32.totalorder %s16, 0
    %p58 = por %p56, %p57
    %p59 = scmp.ne.s32.totalorder %s47, %s48
    %p60 = scmp.eq.s32.totalorder %s17, 1
    %p61 = por %p59, %p60
    %p63 = scmp.ne.s32.totalorder %s48, %s62
    %p64 = scmp.eq.s32.totalorder %s17, 0
    %p65 = por %p63, %p64
    %s67 = sadd.s32 %s66, 1
    %p70 = scmp.eq.s32.totalorder %s11, 1
    %p71 = scmp.ne.s32.totalorder %s66, %s68
    %p72 = scmp.eq.s32.totalorder %s11, 0
    %p73 = por %p71, %p72
    %p74 = scmp.ne.s32.totalorder %s66, %s68
    %p75 = scmp.eq.s32.totalorder %s16, 1
    %p76 = por %p74, %p75
    %p77 = scmp.ne.s32.totalorder %s68, %s69
    %p78 = scmp.eq.s32.totalorder %s16, 0
    %p79 = por %p77, %p78
    %p80 = scmp.ne.s32.totalorder %s68, %s69
    %p81 = scmp.eq.s32.totalorder %s17, 1
    %p82 = por %p80, %p81
    %p84 = scmp.ne.s32.totalorder %s69, %s83
    %p85 = scmp.eq.s32.totalorder %s17, 0
    %p86 = por %p84, %p85
    %s88 = sadd.s32 %s87, 1
    %p91 = scmp.eq.s32.totalorder %s11, 1
    %p92 = scmp.ne.s32.totalorder %s87, %s89
    %p93 = scmp.eq.s32.totalorder %s11, 0
    %p94 = por %p92, %p93
    %p95 = scmp.ne.s32.totalorder %s87, %s89
    %p96 = scmp.eq.s32.totalorder %s16, 1
    %p97 = por %p95, %p96
    %p98 = scmp.ne.s32.totalorder %s89, %s90
    %p99 = scmp.eq.s32.totalorder %s16, 0
    %p100 = por %p98, %p99
    %p101 = scmp.ne.s32.totalorder %s89, %s90
    %p102 = scmp.eq.s32.totalorder %s17, 1
    %p103 = por %p101, %p102
    %p105 = scmp.ne.s32.totalorder %s90, %s104
    %p106 = scmp.eq.s32.totalorder %s17, 0
    %p107 = por %p105, %p106
    %s109 = sadd.s32 %s108, 1
    %p112 = scmp.eq.s32.totalorder %s11, 1
    %p113 = scmp.ne.s32.totalorder %s108, %s110
    %p114 = scmp.eq.s32.totalorder %s11, 0
    %p115 = por %p113, %p114
    %p116 = scmp.ne.s32.totalorder %s108, %s110
    %p117 = scmp.eq.s32.totalorder %s16, 1
    %p118 = por %p116, %p117
    %p119 = scmp.ne.s32.totalorder %s110, %s111
    %p120 = scmp.eq.s32.totalorder %s16, 0
    %p121 = por %p119, %p120
    %p122 = scmp.ne.s32.totalorder %s110, %s111
    %p123 = scmp.eq.s32.totalorder %s17, 1
    %p124 = por %p122, %p123
    %p126 = scmp.ne.s32.totalorder %s111, %s125
    %p127 = scmp.eq.s32.totalorder %s17, 0
    %p128 = por %p126, %p127
    %s129 = ssub.s32 %s11, %s18
    %p130 = scmp.eq.s32.totalorder %s129, 0
    %s132 = sadd.s32 %s131, 1
    %s133 = scalar_select %p130, %s131, %s132
    %p136 = pneg %p130
    %p137 = scmp.eq.s32.totalorder %s11, 1
    %p138 = por %p136, %p137
    %p139 = scmp.ne.s32.totalorder %s131, %s134
    %p140 = scmp.eq.s32.totalorder %s11, 0
    %p141 = por %p139, %p140
    %p142 = scmp.ne.s32.totalorder %s131, %s134
    %p143 = scmp.eq.s32.totalorder %s16, 1
    %p144 = por %p142, %p143
    %p145 = scmp.ne.s32.totalorder %s134, %s135
    %p146 = scmp.eq.s32.totalorder %s16, 0
    %p147 = por %p145, %p146
    %p148 = scmp.ne.s32.totalorder %s134, %s135
    %p149 = scmp.eq.s32.totalorder %s17, 1
    %p150 = por %p148, %p149
    %p152 = scmp.ne.s32.totalorder %s135, %s151
    %p153 = scmp.eq.s32.totalorder %s17, 0
    %p154 = por %p152, %p153
    %p155 = scmp.le.s32.totalorder 1, %s11
    %p156 = scmp.lt.s32.totalorder %s11, 3
    %p157 = pnand %p155, %p156
    %p158 = pneg %p157
    // Predicated region
    $region9: #{resnet18_extractor.6} parent=5 // pred_check
      _
    $region10: #{resnet18_extractor.6} parent=5 // pred_check_branch
      %160 = sbr.rel (%p157) target = $region12
    $region11: #{resnet18_extractor.6} parent=5 // pred_region
      %s161 = ssub.s32 %s11, 1
      // Predicated region
      $region13: #{resnet18_extractor.6} parent=11 // pred_check
        %p162 = pneg %p58
      $region14: #{resnet18_extractor.6} parent=11 // pred_check_branch
        %164 = sbr.rel (%p162) target = $region16
      $region15: #{resnet18_extractor.6} parent=11 // pred_region
        _
      $region16: #{resnet18_extractor.6} parent=11 // pred_fallthru
        _
      // Predicated region
      $region17: #{resnet18_extractor.6} parent=11 // pred_check
        %p165 = pneg %p79
      $region18: #{resnet18_extractor.6} parent=11 // pred_check_branch
        %167 = sbr.rel (%p165) target = $region20
      $region19: #{resnet18_extractor.6} parent=11 // pred_region
        _
      $region20: #{resnet18_extractor.6} parent=11 // pred_fallthru
        _
      // Predicated region
      $region21: #{resnet18_extractor.6} parent=11 // pred_check
        %p168 = pneg %p100
      $region22: #{resnet18_extractor.6} parent=11 // pred_check_branch
        %170 = sbr.rel (%p168) target = $region24
      $region23: #{resnet18_extractor.6} parent=11 // pred_region
        _
      $region24: #{resnet18_extractor.6} parent=11 // pred_fallthru
        _
      // Predicated region
      $region25: #{resnet18_extractor.6} parent=11 // pred_check
        %p171 = pneg %p121
      $region26: #{resnet18_extractor.6} parent=11 // pred_check_branch
        %173 = sbr.rel (%p171) target = $region28
      $region27: #{resnet18_extractor.6} parent=11 // pred_region
        _
      $region28: #{resnet18_extractor.6} parent=11 // pred_fallthru
        _
    $region12: #{resnet18_extractor.6} parent=5 // pred_fallthru
      _
    %p174 = scmp.lt.s32.totalorder %s11, 2
    // Predicated region
    $region29: #{resnet18_extractor.6} parent=5 // pred_check
      %p175 = pneg %p174
    $region30: #{resnet18_extractor.6} parent=5 // pred_check_branch
      %177 = sbr.rel (%p175) target = $region32
    $region31: #{resnet18_extractor.6} parent=5 // pred_region
      // Predicated region
      $region33: #{resnet18_extractor.6} parent=31 // pred_check
        %p178 = pneg %p31
      $region34: #{resnet18_extractor.6} parent=31 // pred_check_branch
        %180 = sbr.rel (%p178) target = $region36
      $region35: #{resnet18_extractor.6} parent=31 // pred_region
        %p181 = scmp.lt.s32.totalorder %s11, 1
        %s182 = scalar_select %p181, %s11, 1
        %s183 = smul.addr %s182, 32
        %s184 = smul.addr %s183, 4
        %s185 = scalar_lea.vmem %s0, %s184
      $region36: #{resnet18_extractor.6} parent=31 // pred_fallthru
        _
    $region32: #{resnet18_extractor.6} parent=5 // pred_fallthru
      _
    %p186 = scmp.le.s32.totalorder 1, %s11
    %p187 = scmp.lt.s32.totalorder %s11, 3
    %p188 = pnand %p186, %p187
    %p189 = pneg %p188
    // Predicated region
    $region37: #{resnet18_extractor.6} parent=5 // pred_check
      _
    $region38: #{resnet18_extractor.6} parent=5 // pred_check_branch
      %191 = sbr.rel (%p188) target = $region40
    $region39: #{resnet18_extractor.6} parent=5 // pred_region
      %s192 = ssub.s32 %s11, 1
      %p193 = scmp.lt.s32.totalorder %s16, 1
      %s194 = scalar_select %p193, %s16, 1
      %s195 = smul.addr %s194, 32
      %s196 = smul.addr %s195, 4
      %s197 = scalar_lea.vmem %s0, %s196
      %p198 = pneg %p37
      %p199 = pneg %p34
      %p200 = pneg %p58
      %p201 = pneg %p55
      %p202 = pneg %p79
      %p203 = pneg %p76
      %p204 = pneg %p100
      %p205 = pneg %p97
      %p206 = pneg %p121
      %p207 = pneg %p118
      %p208 = pneg %p147
      %p209 = pneg %p144
      %p210 = scmp.lt.s32.totalorder %s16, 1
      %s211 = scalar_select %p210, %s16, 1
      %s212 = smul.addr %s211, 32
      %s213 = smul.addr %s212, 4
      %s214 = scalar_lea.vmem %s5, %s213
      %p215 = scmp.lt.s32.totalorder %s16, 1
      %s216 = scalar_select %p215, %s16, 1
      %s217 = smul.addr %s216, 32
      %s218 = smul.addr %s217, 4
      %s219 = scalar_lea.vmem %s0, %s218
      %p220 = scmp.lt.s32.totalorder %s16, 1
      %s221 = scalar_select %p220, %s16, 1
      %s222 = smul.addr %s221, 32
      %s223 = smul.addr %s222, 4
      %s224 = scalar_lea.vmem %s5, %s223
      %226 = vst [vmem:[#allocation2] sm:$0xff] 0.0
      %vm227 = vcmask 523264
      %228 = vst.msk [vmem:[#allocation2 + $0x8] sm:$0xff] %vm227, 0.0
      %229 = vst [vmem:[#allocation2 + $0x10] sm:$0xff] 0.0
      %230 = vst.msk [vmem:[#allocation2 + $0x18] sm:$0xff] %vm227, 0.0
      %s231 = scalar_lea.vmem [#allocation2], 544
      %232 = vst [vmem:[%s231] sm:$0xff] 0.0
      %233 = vst.msk [vmem:[%s231 + $0x8] sm:$0xff] %vm227, 0.0
      %234 = vst [vmem:[%s231 + $0x10] sm:$0xff] 0.0
      %235 = vst.msk [vmem:[%s231 + $0x18] sm:$0xff] %vm227, 0.0
      %s236 = scalar_lea.vmem [#allocation2], 32
      %vm237 = vcmask 516096
      %238 = vst.msk [vmem:[%s236] sm:$0x1] %vm237, 0.0
      %239 = vst.msk [vmem:[%s236 + $0x20] sm:$0x1] %vm237, 0.0
      %240 = vst.msk [vmem:[%s236 + $0x40] sm:$0x1] %vm237, 0.0
      %241 = vst.msk [vmem:[%s236 + $0x60] sm:$0x1] %vm237, 0.0
      %242 = vst.msk [vmem:[%s236 + $0x80] sm:$0x1] %vm237, 0.0
      %243 = vst.msk [vmem:[%s236 + $0xa0] sm:$0x1] %vm237, 0.0
      %244 = vst.msk [vmem:[%s236 + $0xc0] sm:$0x1] %vm237, 0.0
      %245 = vst.msk [vmem:[%s236 + $0xe0] sm:$0x1] %vm237, 0.0
      %246 = vst.msk [vmem:[%s236 + $0x100] sm:$0x1] %vm237, 0.0
      %247 = vst.msk [vmem:[%s236 + $0x120] sm:$0x1] %vm237, 0.0
      %248 = vst.msk [vmem:[%s236 + $0x140] sm:$0x1] %vm237, 0.0
      %249 = vst.msk [vmem:[%s236 + $0x160] sm:$0x1] %vm237, 0.0
      %250 = vst.msk [vmem:[%s236 + $0x180] sm:$0x1] %vm237, 0.0
      %251 = vst.msk [vmem:[%s236 + $0x1a0] sm:$0x1] %vm237, 0.0
      %252 = vst.msk [vmem:[%s236 + $0x1c0] sm:$0x1] %vm237, 0.0
      %253 = vst.msk [vmem:[%s236 + $0x1e0] sm:$0x1] %vm237, 0.0
      %254 = vst.msk [vmem:[%s236 + $0x1f] sm:$0x1] %vm237, 0.0
      %255 = vst.msk [vmem:[%s236 + $0x3f] sm:$0x1] %vm237, 0.0
      %256 = vst.msk [vmem:[%s236 + $0x5f] sm:$0x1] %vm237, 0.0
      %257 = vst.msk [vmem:[%s236 + $0x7f] sm:$0x1] %vm237, 0.0
      %258 = vst.msk [vmem:[%s236 + $0x9f] sm:$0x1] %vm237, 0.0
      %259 = vst.msk [vmem:[%s236 + $0xbf] sm:$0x1] %vm237, 0.0
      %260 = vst.msk [vmem:[%s236 + $0xdf] sm:$0x1] %vm237, 0.0
      %261 = vst.msk [vmem:[%s236 + $0xff] sm:$0x1] %vm237, 0.0
      %262 = vst.msk [vmem:[%s236 + $0x11f] sm:$0x1] %vm237, 0.0
      %263 = vst.msk [vmem:[%s236 + $0x13f] sm:$0x1] %vm237, 0.0
      %264 = vst.msk [vmem:[%s236 + $0x15f] sm:$0x1] %vm237, 0.0
      %265 = vst.msk [vmem:[%s236 + $0x17f] sm:$0x1] %vm237, 0.0
      %266 = vst.msk [vmem:[%s236 + $0x19f] sm:$0x1] %vm237, 0.0
      %267 = vst.msk [vmem:[%s236 + $0x1bf] sm:$0x1] %vm237, 0.0
      %268 = vst.msk [vmem:[%s236 + $0x1df] sm:$0x1] %vm237, 0.0
      %269 = vst.msk [vmem:[%s236 + $0x1ff] sm:$0x1] %vm237, 0.0
      %v270 = vld [vmem:[%s219] sm:$0xf]
      %v271 = vld [vmem:[%s219 + $0x4] sm:$0xf]
      %v272 = vld [vmem:[%s219 + $0x8] sm:$0xf]
      %v273 = vld [vmem:[%s219 + $0xc] sm:$0xf]
      %v274 = vld [vmem:[%s219 + $0x10] sm:$0xf]
      %v275 = vld [vmem:[%s219 + $0x14] sm:$0xf]
      %v276 = vld [vmem:[%s219 + $0x18] sm:$0xf]
      %v277 = vld [vmem:[%s219 + $0x1c] sm:$0xf]
      %v278 = vld [vmem:[%s219 + $0x20] sm:$0xf]
      %v279 = vld [vmem:[%s219 + $0x24] sm:$0xf]
      %v280 = vld [vmem:[%s219 + $0x28] sm:$0xf]
      %v281 = vld [vmem:[%s219 + $0x2c] sm:$0xf]
      %v282 = vld [vmem:[%s219 + $0x30] sm:$0xf]
      %v283 = vld [vmem:[%s219 + $0x34] sm:$0xf]
      %v284 = vld [vmem:[%s219 + $0x38] sm:$0xf]
      %v285 = vld [vmem:[%s219 + $0x3c] sm:$0xf]
      %v286 = vld [vmem:[%s219 + $0x40] sm:$0xf]
      %v287 = vld [vmem:[%s219 + $0x44] sm:$0xf]
      %v288 = vld [vmem:[%s219 + $0x48] sm:$0xf]
      %v289 = vld [vmem:[%s219 + $0x4c] sm:$0xf]
      %v290 = vld [vmem:[%s219 + $0x50] sm:$0xf]
      %v291 = vld [vmem:[%s219 + $0x54] sm:$0xf]
      %v292 = vld [vmem:[%s219 + $0x58] sm:$0xf]
      %v293 = vld [vmem:[%s219 + $0x5c] sm:$0xf]
      %v294 = vld [vmem:[%s219 + $0x60] sm:$0xf]
      %v295 = vld [vmem:[%s219 + $0x64] sm:$0xf]
      %v296 = vld [vmem:[%s219 + $0x68] sm:$0xf]
      %v297 = vld [vmem:[%s219 + $0x6c] sm:$0xf]
      %v298 = vld [vmem:[%s219 + $0x70] sm:$0xf]
      %v299 = vld [vmem:[%s219 + $0x74] sm:$0xf]
      %v300 = vld [vmem:[%s219 + $0x78] sm:$0xf]
      %v301 = vld [vmem:[%s219 + $0x7c] sm:$0xf]
      %v302 = vunpack.c.l.bf16 %v270
      %v303 = vunpack.c.l.bf16 %v271
      %v304 = vunpack.c.l.bf16 %v272
      %v305 = vunpack.c.l.bf16 %v273
      %v306 = vunpack.c.l.bf16 %v274
      %v307 = vunpack.c.l.bf16 %v275
      %v308 = vunpack.c.l.bf16 %v276
      %v309 = vunpack.c.l.bf16 %v277
      %v310 = vunpack.c.l.bf16 %v278
      %v311 = vunpack.c.l.bf16 %v279
      %v312 = vunpack.c.l.bf16 %v280
      %v313 = vunpack.c.l.bf16 %v281
      %v314 = vunpack.c.l.bf16 %v282
      %v315 = vunpack.c.l.bf16 %v283
      %v316 = vunpack.c.l.bf16 %v284
      %v317 = vunpack.c.l.bf16 %v285
      %v318 = vunpack.c.l.bf16 %v286
      %v319 = vunpack.c.l.bf16 %v287
      %v320 = vunpack.c.l.bf16 %v288
      %v321 = vunpack.c.l.bf16 %v289
      %v322 = vunpack.c.l.bf16 %v290
      %v323 = vunpack.c.l.bf16 %v291
      %v324 = vunpack.c.l.bf16 %v292
      %v325 = vunpack.c.l.bf16 %v293
      %v326 = vunpack.c.l.bf16 %v294
      %v327 = vunpack.c.l.bf16 %v295
      %v328 = vunpack.c.l.bf16 %v296
      %v329 = vunpack.c.l.bf16 %v297
      %v330 = vunpack.c.l.bf16 %v298
      %v331 = vunpack.c.l.bf16 %v299
      %v332 = vunpack.c.l.bf16 %v300
      %v333 = vunpack.c.l.bf16 %v301
      %366 = vrot.lane.b32.xlu0 %v302, 64
      %v367 = vpop.permute.xlu0 %366
      %368 = vrot.lane.b32.xlu0 %v303, 64
      %v369 = vpop.permute.xlu0 %368
      %370 = vrot.lane.b32.xlu0 %v304, 64
      %v371 = vpop.permute.xlu0 %370
      %372 = vrot.lane.b32.xlu0 %v305, 64
      %v373 = vpop.permute.xlu0 %372
      %374 = vrot.lane.b32.xlu0 %v306, 64
      %v375 = vpop.permute.xlu0 %374
      %376 = vrot.lane.b32.xlu0 %v307, 64
      %v377 = vpop.permute.xlu0 %376
      %378 = vrot.lane.b32.xlu0 %v308, 64
      %v379 = vpop.permute.xlu0 %378
      %380 = vrot.lane.b32.xlu0 %v309, 64
      %v381 = vpop.permute.xlu0 %380
      %382 = vrot.lane.b32.xlu0 %v310, 64
      %v383 = vpop.permute.xlu0 %382
      %384 = vrot.lane.b32.xlu0 %v311, 64
      %v385 = vpop.permute.xlu0 %384
      %386 = vrot.lane.b32.xlu0 %v312, 64
      %v387 = vpop.permute.xlu0 %386
      %388 = vrot.lane.b32.xlu0 %v313, 64
      %v389 = vpop.permute.xlu0 %388
      %390 = vrot.lane.b32.xlu0 %v314, 64
      %v391 = vpop.permute.xlu0 %390
      %392 = vrot.lane.b32.xlu0 %v315, 64
      %v393 = vpop.permute.xlu0 %392
      %394 = vrot.lane.b32.xlu0 %v316, 64
      %v395 = vpop.permute.xlu0 %394
      %396 = vrot.lane.b32.xlu0 %v317, 64
      %v397 = vpop.permute.xlu0 %396
      %398 = vrot.lane.b32.xlu0 %v318, 64
      %v399 = vpop.permute.xlu0 %398
      %400 = vrot.lane.b32.xlu0 %v319, 64
      %v401 = vpop.permute.xlu0 %400
      %402 = vrot.lane.b32.xlu0 %v320, 64
      %v403 = vpop.permute.xlu0 %402
      %404 = vrot.lane.b32.xlu0 %v321, 64
      %v405 = vpop.permute.xlu0 %404
      %406 = vrot.lane.b32.xlu0 %v322, 64
      %v407 = vpop.permute.xlu0 %406
      %408 = vrot.lane.b32.xlu0 %v323, 64
      %v409 = vpop.permute.xlu0 %408
      %410 = vrot.lane.b32.xlu0 %v324, 64
      %v411 = vpop.permute.xlu0 %410
      %412 = vrot.lane.b32.xlu0 %v325, 64
      %v413 = vpop.permute.xlu0 %412
      %414 = vrot.lane.b32.xlu0 %v326, 64
      %v415 = vpop.permute.xlu0 %414
      %416 = vrot.lane.b32.xlu0 %v327, 64
      %v417 = vpop.permute.xlu0 %416
      %418 = vrot.lane.b32.xlu0 %v328, 64
      %v419 = vpop.permute.xlu0 %418
      %420 = vrot.lane.b32.xlu0 %v329, 64
      %v421 = vpop.permute.xlu0 %420
      %422 = vrot.lane.b32.xlu0 %v330, 64
      %v423 = vpop.permute.xlu0 %422
      %424 = vrot.lane.b32.xlu0 %v331, 64
      %v425 = vpop.permute.xlu0 %424
      %426 = vrot.lane.b32.xlu0 %v332, 64
      %v427 = vpop.permute.xlu0 %426
      %428 = vrot.lane.b32.xlu0 %v333, 64
      %v429 = vpop.permute.xlu0 %428
      %vm462 = vcmask 1048064
      %463 = vst.msk [vmem:[%s236] sm:$0xff] %vm462, %v367
      %464 = vst.msk [vmem:[%s236 + $0x10] sm:$0xff] %vm462, %v369
      %465 = vst.msk [vmem:[%s236 + $0x20] sm:$0xff] %vm462, %v371
      %466 = vst.msk [vmem:[%s236 + $0x30] sm:$0xff] %vm462, %v373
      %467 = vst.msk [vmem:[%s236 + $0x40] sm:$0xff] %vm462, %v375
      %468 = vst.msk [vmem:[%s236 + $0x50] sm:$0xff] %vm462, %v377
      %469 = vst.msk [vmem:[%s236 + $0x60] sm:$0xff] %vm462, %v379
      %470 = vst.msk [vmem:[%s236 + $0x70] sm:$0xff] %vm462, %v381
      %471 = vst.msk [vmem:[%s236 + $0x80] sm:$0xff] %vm462, %v383
      %472 = vst.msk [vmem:[%s236 + $0x90] sm:$0xff] %vm462, %v385
      %473 = vst.msk [vmem:[%s236 + $0xa0] sm:$0xff] %vm462, %v387
      %474 = vst.msk [vmem:[%s236 + $0xb0] sm:$0xff] %vm462, %v389
      %475 = vst.msk [vmem:[%s236 + $0xc0] sm:$0xff] %vm462, %v391
      %476 = vst.msk [vmem:[%s236 + $0xd0] sm:$0xff] %vm462, %v393
      %477 = vst.msk [vmem:[%s236 + $0xe0] sm:$0xff] %vm462, %v395
      %478 = vst.msk [vmem:[%s236 + $0xf0] sm:$0xff] %vm462, %v397
      %479 = vst.msk [vmem:[%s236 + $0x100] sm:$0xff] %vm462, %v399
      %480 = vst.msk [vmem:[%s236 + $0x110] sm:$0xff] %vm462, %v401
      %481 = vst.msk [vmem:[%s236 + $0x120] sm:$0xff] %vm462, %v403
      %482 = vst.msk [vmem:[%s236 + $0x130] sm:$0xff] %vm462, %v405
      %483 = vst.msk [vmem:[%s236 + $0x140] sm:$0xff] %vm462, %v407
      %484 = vst.msk [vmem:[%s236 + $0x150] sm:$0xff] %vm462, %v409
      %485 = vst.msk [vmem:[%s236 + $0x160] sm:$0xff] %vm462, %v411
      %486 = vst.msk [vmem:[%s236 + $0x170] sm:$0xff] %vm462, %v413
      %487 = vst.msk [vmem:[%s236 + $0x180] sm:$0xff] %vm462, %v415
      %488 = vst.msk [vmem:[%s236 + $0x190] sm:$0xff] %vm462, %v417
      %489 = vst.msk [vmem:[%s236 + $0x1a0] sm:$0xff] %vm462, %v419
      %490 = vst.msk [vmem:[%s236 + $0x1b0] sm:$0xff] %vm462, %v421
      %491 = vst.msk [vmem:[%s236 + $0x1c0] sm:$0xff] %vm462, %v423
      %492 = vst.msk [vmem:[%s236 + $0x1d0] sm:$0xff] %vm462, %v425
      %493 = vst.msk [vmem:[%s236 + $0x1e0] sm:$0xff] %vm462, %v427
      %494 = vst.msk [vmem:[%s236 + $0x1f0] sm:$0xff] %vm462, %v429
      %v495 = vld [vmem:[%s236] sm:$0xff]
      %v496 = vld [vmem:[%s236 + $0x10] sm:$0x7f]
      %v497 = vld [vmem:[%s236 + $0x20] sm:$0xff]
      %v498 = vld [vmem:[%s236 + $0x30] sm:$0x7f]
      %v499 = vld [vmem:[%s236 + $0x40] sm:$0xff]
      %v500 = vld [vmem:[%s236 + $0x50] sm:$0x7f]
      %v501 = vld [vmem:[%s236 + $0x60] sm:$0xff]
      %v502 = vld [vmem:[%s236 + $0x70] sm:$0x7f]
      %v503 = vld [vmem:[%s236 + $0x80] sm:$0xff]
      %v504 = vld [vmem:[%s236 + $0x90] sm:$0x7f]
      %v505 = vld [vmem:[%s236 + $0xa0] sm:$0xff]
      %v506 = vld [vmem:[%s236 + $0xb0] sm:$0x7f]
      %v507 = vld [vmem:[%s236 + $0xc0] sm:$0xff]
      %v508 = vld [vmem:[%s236 + $0xd0] sm:$0x7f]
      %v509 = vld [vmem:[%s236 + $0xe0] sm:$0xff]
      %v510 = vld [vmem:[%s236 + $0xf0] sm:$0x7f]
      %v511 = vld [vmem:[%s236 + $0x100] sm:$0xff]
      %v512 = vld [vmem:[%s236 + $0x110] sm:$0x7f]
      %v513 = vld [vmem:[%s236 + $0x120] sm:$0xff]
      %v514 = vld [vmem:[%s236 + $0x130] sm:$0x7f]
      %v515 = vld [vmem:[%s236 + $0x140] sm:$0xff]
      %v516 = vld [vmem:[%s236 + $0x150] sm:$0x7f]
      %v517 = vld [vmem:[%s236 + $0x160] sm:$0xff]
      %v518 = vld [vmem:[%s236 + $0x170] sm:$0x7f]
      %v519 = vld [vmem:[%s236 + $0x180] sm:$0xff]
      %v520 = vld [vmem:[%s236 + $0x190] sm:$0x7f]
      %v521 = vld [vmem:[%s236 + $0x1a0] sm:$0xff]
      %v522 = vld [vmem:[%s236 + $0x1b0] sm:$0x7f]
      %v523 = vld [vmem:[%s236 + $0x1c0] sm:$0xff]
      %v524 = vld [vmem:[%s236 + $0x1d0] sm:$0x7f]
      %v525 = vld [vmem:[%s236 + $0x1e0] sm:$0xff]
      %v526 = vld [vmem:[%s236 + $0x1f0] sm:$0x7f]
      %vm559 = vcmask 1040384
      %v560 = vrot.slane %v495, 7
      %v561 = vrot.slane %v496, 7
      %v562 = vsel %vm559, %v560, %v561
      %v563 = vrot.slane %v497, 7
      %v564 = vrot.slane %v498, 7
      %v565 = vsel %vm559, %v563, %v564
      %v566 = vrot.slane %v499, 7
      %v567 = vrot.slane %v500, 7
      %v568 = vsel %vm559, %v566, %v567
      %v569 = vrot.slane %v501, 7
      %v570 = vrot.slane %v502, 7
      %v571 = vsel %vm559, %v569, %v570
      %v572 = vrot.slane %v503, 7
      %v573 = vrot.slane %v504, 7
      %v574 = vsel %vm559, %v572, %v573
      %v575 = vrot.slane %v505, 7
      %v576 = vrot.slane %v506, 7
      %v577 = vsel %vm559, %v575, %v576
      %v578 = vrot.slane %v507, 7
      %v579 = vrot.slane %v508, 7
      %v580 = vsel %vm559, %v578, %v579
      %v581 = vrot.slane %v509, 7
      %v582 = vrot.slane %v510, 7
      %v583 = vsel %vm559, %v581, %v582
      %v584 = vrot.slane %v511, 7
      %v585 = vrot.slane %v512, 7
      %v586 = vsel %vm559, %v584, %v585
      %v587 = vrot.slane %v513, 7
      %v588 = vrot.slane %v514, 7
      %v589 = vsel %vm559, %v587, %v588
      %v590 = vrot.slane %v515, 7
      %v591 = vrot.slane %v516, 7
      %v592 = vsel %vm559, %v590, %v591
      %v593 = vrot.slane %v517, 7
      %v594 = vrot.slane %v518, 7
      %v595 = vsel %vm559, %v593, %v594
      %v596 = vrot.slane %v519, 7
      %v597 = vrot.slane %v520, 7
      %v598 = vsel %vm559, %v596, %v597
      %v599 = vrot.slane %v521, 7
      %v600 = vrot.slane %v522, 7
      %v601 = vsel %vm559, %v599, %v600
      %v602 = vrot.slane %v523, 7
      %v603 = vrot.slane %v524, 7
      %v604 = vsel %vm559, %v602, %v603
      %v605 = vrot.slane %v525, 7
      %v606 = vrot.slane %v526, 7
      %v607 = vsel %vm559, %v605, %v606
      %608 = vrot.lane.b32.xlu0 %v560, 64
      %v609 = vpop.permute.xlu0 %608
      %610 = vrot.lane.b32.xlu0 %v562, 64
      %v611 = vpop.permute.xlu0 %610
      %612 = vrot.lane.b32.xlu0 %v563, 64
      %v613 = vpop.permute.xlu0 %612
      %614 = vrot.lane.b32.xlu0 %v565, 64
      %v615 = vpop.permute.xlu0 %614
      %616 = vrot.lane.b32.xlu0 %v566, 64
      %v617 = vpop.permute.xlu0 %616
      %618 = vrot.lane.b32.xlu0 %v568, 64
      %v619 = vpop.permute.xlu0 %618
      %620 = vrot.lane.b32.xlu0 %v569, 64
      %v621 = vpop.permute.xlu0 %620
      %622 = vrot.lane.b32.xlu0 %v571, 64
      %v623 = vpop.permute.xlu0 %622
      %624 = vrot.lane.b32.xlu0 %v572, 64
      %v625 = vpop.permute.xlu0 %624
      %626 = vrot.lane.b32.xlu0 %v574, 64
      %v627 = vpop.permute.xlu0 %626
      %628 = vrot.lane.b32.xlu0 %v575, 64
      %v629 = vpop.permute.xlu0 %628
      %630 = vrot.lane.b32.xlu0 %v577, 64
      %v631 = vpop.permute.xlu0 %630
      %632 = vrot.lane.b32.xlu0 %v578, 64
      %v633 = vpop.permute.xlu0 %632
      %634 = vrot.lane.b32.xlu0 %v580, 64
      %v635 = vpop.permute.xlu0 %634
      %636 = vrot.lane.b32.xlu0 %v581, 64
      %v637 = vpop.permute.xlu0 %636
      %638 = vrot.lane.b32.xlu0 %v583, 64
      %v639 = vpop.permute.xlu0 %638
      %640 = vrot.lane.b32.xlu0 %v584, 64
      %v641 = vpop.permute.xlu0 %640
      %642 = vrot.lane.b32.xlu0 %v586, 64
      %v643 = vpop.permute.xlu0 %642
      %644 = vrot.lane.b32.xlu0 %v587, 64
      %v645 = vpop.permute.xlu0 %644
      %646 = vrot.lane.b32.xlu0 %v589, 64
      %v647 = vpop.permute.xlu0 %646
      %648 = vrot.lane.b32.xlu0 %v590, 64
      %v649 = vpop.permute.xlu0 %648
      %650 = vrot.lane.b32.xlu0 %v592, 64
      %v651 = vpop.permute.xlu0 %650
      %652 = vrot.lane.b32.xlu0 %v593, 64
      %v653 = vpop.permute.xlu0 %652
      %654 = vrot.lane.b32.xlu0 %v595, 64
      %v655 = vpop.permute.xlu0 %654
      %656 = vrot.lane.b32.xlu0 %v596, 64
      %v657 = vpop.permute.xlu0 %656
      %658 = vrot.lane.b32.xlu0 %v598, 64
      %v659 = vpop.permute.xlu0 %658
      %660 = vrot.lane.b32.xlu0 %v599, 64
      %v661 = vpop.permute.xlu0 %660
      %662 = vrot.lane.b32.xlu0 %v601, 64
      %v663 = vpop.permute.xlu0 %662
      %664 = vrot.lane.b32.xlu0 %v602, 64
      %v665 = vpop.permute.xlu0 %664
      %666 = vrot.lane.b32.xlu0 %v604, 64
      %v667 = vpop.permute.xlu0 %666
      %668 = vrot.lane.b32.xlu0 %v605, 64
      %v669 = vpop.permute.xlu0 %668
      %670 = vrot.lane.b32.xlu0 %v607, 64
      %v671 = vpop.permute.xlu0 %670
      %vm704 = vcmask 523265
      %705 = vst.msk [vmem:[%s236] sm:$0xfe] %vm704, %v609
      %706 = vst.msk [vmem:[%s236 + $0x10] sm:$0xff] %vm227, %v611
      %707 = vst.msk [vmem:[%s236 + $0x20] sm:$0xfe] %vm704, %v613
      %708 = vst.msk [vmem:[%s236 + $0x30] sm:$0xff] %vm227, %v615
      %709 = vst.msk [vmem:[%s236 + $0x40] sm:$0xfe] %vm704, %v617
      %710 = vst.msk [vmem:[%s236 + $0x50] sm:$0xff] %vm227, %v619
      %711 = vst.msk [vmem:[%s236 + $0x60] sm:$0xfe] %vm704, %v621
      %712 = vst.msk [vmem:[%s236 + $0x70] sm:$0xff] %vm227, %v623
      %713 = vst.msk [vmem:[%s236 + $0x80] sm:$0xfe] %vm704, %v625
      %714 = vst.msk [vmem:[%s236 + $0x90] sm:$0xff] %vm227, %v627
      %715 = vst.msk [vmem:[%s236 + $0xa0] sm:$0xfe] %vm704, %v629
      %716 = vst.msk [vmem:[%s236 + $0xb0] sm:$0xff] %vm227, %v631
      %717 = vst.msk [vmem:[%s236 + $0xc0] sm:$0xfe] %vm704, %v633
      %718 = vst.msk [vmem:[%s236 + $0xd0] sm:$0xff] %vm227, %v635
      %719 = vst.msk [vmem:[%s236 + $0xe0] sm:$0xfe] %vm704, %v637
      %720 = vst.msk [vmem:[%s236 + $0xf0] sm:$0xff] %vm227, %v639
      %721 = vst.msk [vmem:[%s236 + $0x100] sm:$0xfe] %vm704, %v641
      %722 = vst.msk [vmem:[%s236 + $0x110] sm:$0xff] %vm227, %v643
      %723 = vst.msk [vmem:[%s236 + $0x120] sm:$0xfe] %vm704, %v645
      %724 = vst.msk [vmem:[%s236 + $0x130] sm:$0xff] %vm227, %v647
      %725 = vst.msk [vmem:[%s236 + $0x140] sm:$0xfe] %vm704, %v649
      %726 = vst.msk [vmem:[%s236 + $0x150] sm:$0xff] %vm227, %v651
      %727 = vst.msk [vmem:[%s236 + $0x160] sm:$0xfe] %vm704, %v653
      %728 = vst.msk [vmem:[%s236 + $0x170] sm:$0xff] %vm227, %v655
      %729 = vst.msk [vmem:[%s236 + $0x180] sm:$0xfe] %vm704, %v657
      %730 = vst.msk [vmem:[%s236 + $0x190] sm:$0xff] %vm227, %v659
      %731 = vst.msk [vmem:[%s236 + $0x1a0] sm:$0xfe] %vm704, %v661
      %732 = vst.msk [vmem:[%s236 + $0x1b0] sm:$0xff] %vm227, %v663
      %733 = vst.msk [vmem:[%s236 + $0x1c0] sm:$0xfe] %vm704, %v665
      %734 = vst.msk [vmem:[%s236 + $0x1d0] sm:$0xff] %vm227, %v667
      %735 = vst.msk [vmem:[%s236 + $0x1e0] sm:$0xfe] %vm704, %v669
      %736 = vst.msk [vmem:[%s236 + $0x1f0] sm:$0xff] %vm227, %v671
      %v737 = vld [vmem:[%s236] sm:$0xfe]
      %v738 = vld [vmem:[%s236 + $0x10] sm:$0xff]
      %v739 = vld [vmem:[%s236 + $0x20] sm:$0xfe]
      %v740 = vld [vmem:[%s236 + $0x30] sm:$0xff]
      %v741 = vld [vmem:[%s236 + $0x40] sm:$0xfe]
      %v742 = vld [vmem:[%s236 + $0x50] sm:$0xff]
      %v743 = vld [vmem:[%s236 + $0x60] sm:$0xfe]
      %v744 = vld [vmem:[%s236 + $0x70] sm:$0xff]
      %v745 = vld [vmem:[%s236 + $0x80] sm:$0xfe]
      %v746 = vld [vmem:[%s236 + $0x90] sm:$0xff]
      %v747 = vld [vmem:[%s236 + $0xa0] sm:$0xfe]
      %v748 = vld [vmem:[%s236 + $0xb0] sm:$0xff]
      %v749 = vld [vmem:[%s236 + $0xc0] sm:$0xfe]
      %v750 = vld [vmem:[%s236 + $0xd0] sm:$0xff]
      %v751 = vld [vmem:[%s236 + $0xe0] sm:$0xfe]
      %v752 = vld [vmem:[%s236 + $0xf0] sm:$0xff]
      %v753 = vld [vmem:[%s236 + $0x100] sm:$0xfe]
      %v754 = vld [vmem:[%s236 + $0x110] sm:$0xff]
      %v755 = vld [vmem:[%s236 + $0x120] sm:$0xfe]
      %v756 = vld [vmem:[%s236 + $0x130] sm:$0xff]
      %v757 = vld [vmem:[%s236 + $0x140] sm:$0xfe]
      %v758 = vld [vmem:[%s236 + $0x150] sm:$0xff]
      %v759 = vld [vmem:[%s236 + $0x160] sm:$0xfe]
      %v760 = vld [vmem:[%s236 + $0x170] sm:$0xff]
      %v761 = vld [vmem:[%s236 + $0x180] sm:$0xfe]
      %v762 = vld [vmem:[%s236 + $0x190] sm:$0xff]
      %v763 = vld [vmem:[%s236 + $0x1a0] sm:$0xfe]
      %v764 = vld [vmem:[%s236 + $0x1b0] sm:$0xff]
      %v765 = vld [vmem:[%s236 + $0x1c0] sm:$0xfe]
      %v766 = vld [vmem:[%s236 + $0x1d0] sm:$0xff]
      %v767 = vld [vmem:[%s236 + $0x1e0] sm:$0xfe]
      %v768 = vld [vmem:[%s236 + $0x1f0] sm:$0xff]
      %vm801 = vcmask 1046528
      %v802 = vrot.slane %v737, 1
      %v803 = vrot.slane %v738, 1
      %v804 = vsel %vm801, %v802, %v803
      %v805 = vrot.slane %v739, 1
      %v806 = vrot.slane %v740, 1
      %v807 = vsel %vm801, %v805, %v806
      %v808 = vrot.slane %v741, 1
      %v809 = vrot.slane %v742, 1
      %v810 = vsel %vm801, %v808, %v809
      %v811 = vrot.slane %v743, 1
      %v812 = vrot.slane %v744, 1
      %v813 = vsel %vm801, %v811, %v812
      %v814 = vrot.slane %v745, 1
      %v815 = vrot.slane %v746, 1
      %v816 = vsel %vm801, %v814, %v815
      %v817 = vrot.slane %v747, 1
      %v818 = vrot.slane %v748, 1
      %v819 = vsel %vm801, %v817, %v818
      %v820 = vrot.slane %v749, 1
      %v821 = vrot.slane %v750, 1
      %v822 = vsel %vm801, %v820, %v821
      %v823 = vrot.slane %v751, 1
      %v824 = vrot.slane %v752, 1
      %v825 = vsel %vm801, %v823, %v824
      %v826 = vrot.slane %v753, 1
      %v827 = vrot.slane %v754, 1
      %v828 = vsel %vm801, %v826, %v827
      %v829 = vrot.slane %v755, 1
      %v830 = vrot.slane %v756, 1
      %v831 = vsel %vm801, %v829, %v830
      %v832 = vrot.slane %v757, 1
      %v833 = vrot.slane %v758, 1
      %v834 = vsel %vm801, %v832, %v833
      %v835 = vrot.slane %v759, 1
      %v836 = vrot.slane %v760, 1
      %v837 = vsel %vm801, %v835, %v836
      %v838 = vrot.slane %v761, 1
      %v839 = vrot.slane %v762, 1
      %v840 = vsel %vm801, %v838, %v839
      %v841 = vrot.slane %v763, 1
      %v842 = vrot.slane %v764, 1
      %v843 = vsel %vm801, %v841, %v842
      %v844 = vrot.slane %v765, 1
      %v845 = vrot.slane %v766, 1
      %v846 = vsel %vm801, %v844, %v845
      %v847 = vrot.slane %v767, 1
      %v848 = vrot.slane %v768, 1
      %v849 = vsel %vm801, %v847, %v848
      %850 = vrot.lane.b32.xlu0 %v804, 64
      %v851 = vpop.permute.xlu0 %850
      %852 = vrot.lane.b32.xlu0 %v803, 64
      %v853 = vpop.permute.xlu0 %852
      %854 = vrot.lane.b32.xlu0 %v807, 64
      %v855 = vpop.permute.xlu0 %854
      %856 = vrot.lane.b32.xlu0 %v806, 64
      %v857 = vpop.permute.xlu0 %856
      %858 = vrot.lane.b32.xlu0 %v810, 64
      %v859 = vpop.permute.xlu0 %858
      %860 = vrot.lane.b32.xlu0 %v809, 64
      %v861 = vpop.permute.xlu0 %860
      %862 = vrot.lane.b32.xlu0 %v813, 64
      %v863 = vpop.permute.xlu0 %862
      %864 = vrot.lane.b32.xlu0 %v812, 64
      %v865 = vpop.permute.xlu0 %864
      %866 = vrot.lane.b32.xlu0 %v816, 64
      %v867 = vpop.permute.xlu0 %866
      %868 = vrot.lane.b32.xlu0 %v815, 64
      %v869 = vpop.permute.xlu0 %868
      %870 = vrot.lane.b32.xlu0 %v819, 64
      %v871 = vpop.permute.xlu0 %870
      %872 = vrot.lane.b32.xlu0 %v818, 64
      %v873 = vpop.permute.xlu0 %872
      %874 = vrot.lane.b32.xlu0 %v822, 64
      %v875 = vpop.permute.xlu0 %874
      %876 = vrot.lane.b32.xlu0 %v821, 64
      %v877 = vpop.permute.xlu0 %876
      %878 = vrot.lane.b32.xlu0 %v825, 64
      %v879 = vpop.permute.xlu0 %878
      %880 = vrot.lane.b32.xlu0 %v824, 64
      %v881 = vpop.permute.xlu0 %880
      %882 = vrot.lane.b32.xlu0 %v828, 64
      %v883 = vpop.permute.xlu0 %882
      %884 = vrot.lane.b32.xlu0 %v827, 64
      %v885 = vpop.permute.xlu0 %884
      %886 = vrot.lane.b32.xlu0 %v831, 64
      %v887 = vpop.permute.xlu0 %886
      %888 = vrot.lane.b32.xlu0 %v830, 64
      %v889 = vpop.permute.xlu0 %888
      %890 = vrot.lane.b32.xlu0 %v834, 64
      %v891 = vpop.permute.xlu0 %890
      %892 = vrot.lane.b32.xlu0 %v833, 64
      %v893 = vpop.permute.xlu0 %892
      %894 = vrot.lane.b32.xlu0 %v837, 64
      %v895 = vpop.permute.xlu0 %894
      %896 = vrot.lane.b32.xlu0 %v836, 64
      %v897 = vpop.permute.xlu0 %896
      %898 = vrot.lane.b32.xlu0 %v840, 64
      %v899 = vpop.permute.xlu0 %898
      %900 = vrot.lane.b32.xlu0 %v839, 64
      %v901 = vpop.permute.xlu0 %900
      %902 = vrot.lane.b32.xlu0 %v843, 64
      %v903 = vpop.permute.xlu0 %902
      %904 = vrot.lane.b32.xlu0 %v842, 64
      %v905 = vpop.permute.xlu0 %904
      %906 = vrot.lane.b32.xlu0 %v846, 64
      %v907 = vpop.permute.xlu0 %906
      %908 = vrot.lane.b32.xlu0 %v845, 64
      %v909 = vpop.permute.xlu0 %908
      %910 = vrot.lane.b32.xlu0 %v849, 64
      %v911 = vpop.permute.xlu0 %910
      %912 = vrot.lane.b32.xlu0 %v848, 64
      %v913 = vpop.permute.xlu0 %912
      %946 = vst.msk [vmem:[%s236 + $0x8] sm:$0xff] %vm227, %v851
      %vm947 = vcmask 522240
      %948 = vst.msk [vmem:[%s236 + $0x18] sm:$0x7f] %vm947, %v853
      %949 = vst.msk [vmem:[%s236 + $0x28] sm:$0xff] %vm227, %v855
      %950 = vst.msk [vmem:[%s236 + $0x38] sm:$0x7f] %vm947, %v857
      %951 = vst.msk [vmem:[%s236 + $0x48] sm:$0xff] %vm227, %v859
      %952 = vst.msk [vmem:[%s236 + $0x58] sm:$0x7f] %vm947, %v861
      %953 = vst.msk [vmem:[%s236 + $0x68] sm:$0xff] %vm227, %v863
      %954 = vst.msk [vmem:[%s236 + $0x78] sm:$0x7f] %vm947, %v865
      %955 = vst.msk [vmem:[%s236 + $0x88] sm:$0xff] %vm227, %v867
      %956 = vst.msk [vmem:[%s236 + $0x98] sm:$0x7f] %vm947, %v869
      %957 = vst.msk [vmem:[%s236 + $0xa8] sm:$0xff] %vm227, %v871
      %958 = vst.msk [vmem:[%s236 + $0xb8] sm:$0x7f] %vm947, %v873
      %959 = vst.msk [vmem:[%s236 + $0xc8] sm:$0xff] %vm227, %v875
      %960 = vst.msk [vmem:[%s236 + $0xd8] sm:$0x7f] %vm947, %v877
      %961 = vst.msk [vmem:[%s236 + $0xe8] sm:$0xff] %vm227, %v879
      %962 = vst.msk [vmem:[%s236 + $0xf8] sm:$0x7f] %vm947, %v881
      %963 = vst.msk [vmem:[%s236 + $0x108] sm:$0xff] %vm227, %v883
      %964 = vst.msk [vmem:[%s236 + $0x118] sm:$0x7f] %vm947, %v885
      %965 = vst.msk [vmem:[%s236 + $0x128] sm:$0xff] %vm227, %v887
      %966 = vst.msk [vmem:[%s236 + $0x138] sm:$0x7f] %vm947, %v889
      %967 = vst.msk [vmem:[%s236 + $0x148] sm:$0xff] %vm227, %v891
      %968 = vst.msk [vmem:[%s236 + $0x158] sm:$0x7f] %vm947, %v893
      %969 = vst.msk [vmem:[%s236 + $0x168] sm:$0xff] %vm227, %v895
      %970 = vst.msk [vmem:[%s236 + $0x178] sm:$0x7f] %vm947, %v897
      %971 = vst.msk [vmem:[%s236 + $0x188] sm:$0xff] %vm227, %v899
      %972 = vst.msk [vmem:[%s236 + $0x198] sm:$0x7f] %vm947, %v901
      %973 = vst.msk [vmem:[%s236 + $0x1a8] sm:$0xff] %vm227, %v903
      %974 = vst.msk [vmem:[%s236 + $0x1b8] sm:$0x7f] %vm947, %v905
      %975 = vst.msk [vmem:[%s236 + $0x1c8] sm:$0xff] %vm227, %v907
      %976 = vst.msk [vmem:[%s236 + $0x1d8] sm:$0x7f] %vm947, %v909
      %977 = vst.msk [vmem:[%s236 + $0x1e8] sm:$0xff] %vm227, %v911
      %978 = vst.msk [vmem:[%s236 + $0x1f8] sm:$0x7f] %vm947, %v913
      %v979 = vld [vmem:[#allocation2] sm:$0xff]
      %v980 = vld [vmem:[#allocation2 + $0x8] sm:$0xff]
      %v981 = vld [vmem:[#allocation2 + $0x10] sm:$0xff]
      %v982 = vld [vmem:[#allocation2 + $0x18] sm:$0xff]
      %v983 = vld [vmem:[#allocation2 + $0x20] sm:$0xff]
      %v984 = vld [vmem:[#allocation2 + $0x28] sm:$0xff]
      %v985 = vld [vmem:[#allocation2 + $0x30] sm:$0xff]
      %v986 = vld [vmem:[#allocation2 + $0x38] sm:$0xff]
      %v987 = vld [vmem:[#allocation2 + $0x40] sm:$0xff]
      %v988 = vld [vmem:[#allocation2 + $0x48] sm:$0xff]
      %v989 = vld [vmem:[#allocation2 + $0x50] sm:$0xff]
      %v990 = vld [vmem:[#allocation2 + $0x58] sm:$0xff]
      %v991 = vld [vmem:[#allocation2 + $0x60] sm:$0xff]
      %v992 = vld [vmem:[#allocation2 + $0x68] sm:$0xff]
      %v993 = vld [vmem:[#allocation2 + $0x70] sm:$0xff]
      %v994 = vld [vmem:[#allocation2 + $0x78] sm:$0xff]
      %v995 = vld [vmem:[#allocation2 + $0x80] sm:$0xff]
      %v996 = vld [vmem:[#allocation2 + $0x88] sm:$0xff]
      %v997 = vld [vmem:[#allocation2 + $0x90] sm:$0xff]
      %v998 = vld [vmem:[#allocation2 + $0x98] sm:$0xff]
      %v999 = vld [vmem:[#allocation2 + $0xa0] sm:$0xff]
      %v1000 = vld [vmem:[#allocation2 + $0xa8] sm:$0xff]
      %v1001 = vld [vmem:[#allocation2 + $0xb0] sm:$0xff]
      %v1002 = vld [vmem:[#allocation2 + $0xb8] sm:$0xff]
      %v1003 = vld [vmem:[#allocation2 + $0xc0] sm:$0xff]
      %v1004 = vld [vmem:[#allocation2 + $0xc8] sm:$0xff]
      %v1005 = vld [vmem:[#allocation2 + $0xd0] sm:$0xff]
      %v1006 = vld [vmem:[#allocation2 + $0xd8] sm:$0xff]
      %v1007 = vld [vmem:[#allocation2 + $0xe0] sm:$0xff]
      %v1008 = vld [vmem:[#allocation2 + $0xe8] sm:$0xff]
      %v1009 = vld [vmem:[#allocation2 + $0xf0] sm:$0xff]
      %v1010 = vld [vmem:[#allocation2 + $0xf8] sm:$0xff]
      %v1011 = vld [vmem:[#allocation2 + $0x100] sm:$0xff]
      %v1012 = vld [vmem:[#allocation2 + $0x108] sm:$0xff]
      %v1013 = vld [vmem:[#allocation2 + $0x110] sm:$0xff]
      %v1014 = vld [vmem:[#allocation2 + $0x118] sm:$0xff]
      %v1015 = vld [vmem:[#allocation2 + $0x120] sm:$0xff]
      %v1016 = vld [vmem:[#allocation2 + $0x128] sm:$0xff]
      %v1017 = vld [vmem:[#allocation2 + $0x130] sm:$0xff]
      %v1018 = vld [vmem:[#allocation2 + $0x138] sm:$0xff]
      %v1019 = vld [vmem:[#allocation2 + $0x140] sm:$0xff]
      %v1020 = vld [vmem:[#allocation2 + $0x148] sm:$0xff]
      %v1021 = vld [vmem:[#allocation2 + $0x150] sm:$0xff]
      %v1022 = vld [vmem:[#allocation2 + $0x158] sm:$0xff]
      %v1023 = vld [vmem:[#allocation2 + $0x160] sm:$0xff]
      %v1024 = vld [vmem:[#allocation2 + $0x168] sm:$0xff]
      %v1025 = vld [vmem:[#allocation2 + $0x170] sm:$0xff]
      %v1026 = vld [vmem:[#allocation2 + $0x178] sm:$0xff]
      %v1027 = vld [vmem:[#allocation2 + $0x180] sm:$0xff]
      %v1028 = vld [vmem:[#allocation2 + $0x188] sm:$0xff]
      %v1029 = vld [vmem:[#allocation2 + $0x190] sm:$0xff]
      %v1030 = vld [vmem:[#allocation2 + $0x198] sm:$0xff]
      %v1031 = vld [vmem:[#allocation2 + $0x1a0] sm:$0xff]
      %v1032 = vld [vmem:[#allocation2 + $0x1a8] sm:$0xff]
      %v1033 = vld [vmem:[#allocation2 + $0x1b0] sm:$0xff]
      %v1034 = vld [vmem:[#allocation2 + $0x1b8] sm:$0xff]
      %v1035 = vld [vmem:[#allocation2 + $0x1c0] sm:$0xff]
      %v1036 = vld [vmem:[#allocation2 + $0x1c8] sm:$0xff]
      %v1037 = vld [vmem:[#allocation2 + $0x1d0] sm:$0xff]
      %v1038 = vld [vmem:[#allocation2 + $0x1d8] sm:$0xff]
      %v1039 = vld [vmem:[#allocation2 + $0x1e0] sm:$0xff]
      %v1040 = vld [vmem:[#allocation2 + $0x1e8] sm:$0xff]
      %v1041 = vld [vmem:[#allocation2 + $0x1f0] sm:$0xff]
      %v1042 = vld [vmem:[#allocation2 + $0x1f8] sm:$0xff]
      %v1043 = vpack.c.bf16 %v981, %v979
      %v1044 = vpack.c.bf16 %v982, %v980
      %v1045 = vpack.c.bf16 %v985, %v983
      %v1046 = vpack.c.bf16 %v986, %v984
      %v1047 = vpack.c.bf16 %v989, %v987
      %v1048 = vpack.c.bf16 %v990, %v988
      %v1049 = vpack.c.bf16 %v993, %v991
      %v1050 = vpack.c.bf16 %v994, %v992
      %v1051 = vpack.c.bf16 %v997, %v995
      %v1052 = vpack.c.bf16 %v998, %v996
      %v1053 = vpack.c.bf16 %v1001, %v999
      %v1054 = vpack.c.bf16 %v1002, %v1000
      %v1055 = vpack.c.bf16 %v1005, %v1003
      %v1056 = vpack.c.bf16 %v1006, %v1004
      %v1057 = vpack.c.bf16 %v1009, %v1007
      %v1058 = vpack.c.bf16 %v1010, %v1008
      %v1059 = vpack.c.bf16 %v1013, %v1011
      %v1060 = vpack.c.bf16 %v1014, %v1012
      %v1061 = vpack.c.bf16 %v1017, %v1015
      %v1062 = vpack.c.bf16 %v1018, %v1016
      %v1063 = vpack.c.bf16 %v1021, %v1019
      %v1064 = vpack.c.bf16 %v1022, %v1020
      %v1065 = vpack.c.bf16 %v1025, %v1023
      %v1066 = vpack.c.bf16 %v1026, %v1024
      %v1067 = vpack.c.bf16 %v1029, %v1027
      %v1068 = vpack.c.bf16 %v1030, %v1028
      %v1069 = vpack.c.bf16 %v1033, %v1031
      %v1070 = vpack.c.bf16 %v1034, %v1032
      %v1071 = vpack.c.bf16 %v1037, %v1035
      %v1072 = vpack.c.bf16 %v1038, %v1036
      %v1073 = vpack.c.bf16 %v1041, %v1039
      %v1074 = vpack.c.bf16 %v1042, %v1040
      %v1075 = vld [vmem:[%s1] sm:$0xf]
      %v1076 = vld [vmem:[%s1 + $0x4] sm:$0xf]
      %v1077 = vld [vmem:[%s1 + $0x8] sm:$0xf]
      %v1078 = vld [vmem:[%s1 + $0xc] sm:$0xf]
      %v1079 = vld [vmem:[%s1 + $0x10] sm:$0xf]
      %v1080 = vld [vmem:[%s1 + $0x14] sm:$0xf]
      %v1081 = vld [vmem:[%s1 + $0x18] sm:$0xf]
      %v1082 = vld [vmem:[%s1 + $0x1c] sm:$0xf]
      %v1083 = vld [vmem:[%s1 + $0x20] sm:$0xf]
      %v1084 = vld [vmem:[%s1 + $0x24] sm:$0xf]
      %v1085 = vld [vmem:[%s1 + $0x28] sm:$0xf]
      %v1086 = vld [vmem:[%s1 + $0x2c] sm:$0xf]
      %v1087 = vld [vmem:[%s1 + $0x30] sm:$0xf]
      %v1088 = vld [vmem:[%s1 + $0x34] sm:$0xf]
      %v1089 = vld [vmem:[%s1 + $0x38] sm:$0xf]
      %v1090 = vld [vmem:[%s1 + $0x3c] sm:$0xf]
      %v1091 = vld [vmem:[%s1 + $0x40] sm:$0xf]
      %v1092 = vld [vmem:[%s1 + $0x44] sm:$0xf]
      %v1093 = vld [vmem:[%s1 + $0x48] sm:$0xf]
      %v1094 = vld [vmem:[%s1 + $0x4c] sm:$0xf]
      %v1095 = vld [vmem:[%s1 + $0x50] sm:$0xf]
      %v1096 = vld [vmem:[%s1 + $0x54] sm:$0xf]
      %v1097 = vld [vmem:[%s1 + $0x58] sm:$0xf]
      %v1098 = vld [vmem:[%s1 + $0x5c] sm:$0xf]
      %v1099 = vld [vmem:[%s236] sm:$0xff]
      %v1100 = vld [vmem:[%s236 + $0x8] sm:$0xff]
      %v1101 = vld [vmem:[%s236 + $0x10] sm:$0xff]
      %v1102 = vld [vmem:[%s236 + $0x18] sm:$0xff]
      %v1103 = vld [vmem:[%s236 + $0x20] sm:$0xff]
      %v1104 = vld [vmem:[%s236 + $0x28] sm:$0xff]
      %v1105 = vld [vmem:[%s236 + $0x30] sm:$0xff]
      %v1106 = vld [vmem:[%s236 + $0x38] sm:$0xff]
      %v1107 = vld [vmem:[%s236 + $0x40] sm:$0xff]
      %v1108 = vld [vmem:[%s236 + $0x48] sm:$0xff]
      %v1109 = vld [vmem:[%s236 + $0x50] sm:$0xff]
      %v1110 = vld [vmem:[%s236 + $0x58] sm:$0xff]
      %v1111 = vld [vmem:[%s236 + $0x60] sm:$0xff]
      %v1112 = vld [vmem:[%s236 + $0x68] sm:$0xff]
      %v1113 = vld [vmem:[%s236 + $0x70] sm:$0xff]
      %v1114 = vld [vmem:[%s236 + $0x78] sm:$0xff]
      %v1115 = vld [vmem:[%s236 + $0x80] sm:$0xff]
      %v1116 = vld [vmem:[%s236 + $0x88] sm:$0xff]
      %v1117 = vld [vmem:[%s236 + $0x90] sm:$0xff]
      %v1118 = vld [vmem:[%s236 + $0x98] sm:$0xff]
      %v1119 = vld [vmem:[%s236 + $0xa0] sm:$0xff]
      %v1120 = vld [vmem:[%s236 + $0xa8] sm:$0xff]
      %v1121 = vld [vmem:[%s236 + $0xb0] sm:$0xff]
      %v1122 = vld [vmem:[%s236 + $0xb8] sm:$0xff]
      %v1123 = vld [vmem:[%s236 + $0xc0] sm:$0xff]
      %v1124 = vld [vmem:[%s236 + $0xc8] sm:$0xff]
      %v1125 = vld [vmem:[%s236 + $0xd0] sm:$0xff]
      %v1126 = vld [vmem:[%s236 + $0xd8] sm:$0xff]
      %v1127 = vld [vmem:[%s236 + $0xe0] sm:$0xff]
      %v1128 = vld [vmem:[%s236 + $0xe8] sm:$0xff]
      %v1129 = vld [vmem:[%s236 + $0xf0] sm:$0xff]
      %v1130 = vld [vmem:[%s236 + $0xf8] sm:$0xff]
      %v1131 = vld [vmem:[%s236 + $0x100] sm:$0xff]
      %v1132 = vld [vmem:[%s236 + $0x108] sm:$0xff]
      %v1133 = vld [vmem:[%s236 + $0x110] sm:$0xff]
      %v1134 = vld [vmem:[%s236 + $0x118] sm:$0xff]
      %v1135 = vld [vmem:[%s236 + $0x120] sm:$0xff]
      %v1136 = vld [vmem:[%s236 + $0x128] sm:$0xff]
      %v1137 = vld [vmem:[%s236 + $0x130] sm:$0xff]
      %v1138 = vld [vmem:[%s236 + $0x138] sm:$0xff]
      %v1139 = vld [vmem:[%s236 + $0x140] sm:$0xff]
      %v1140 = vld [vmem:[%s236 + $0x148] sm:$0xff]
      %v1141 = vld [vmem:[%s236 + $0x150] sm:$0xff]
      %v1142 = vld [vmem:[%s236 + $0x158] sm:$0xff]
      %v1143 = vld [vmem:[%s236 + $0x160] sm:$0xff]
      %v1144 = vld [vmem:[%s236 + $0x168] sm:$0xff]
      %v1145 = vld [vmem:[%s236 + $0x170] sm:$0xff]
      %v1146 = vld [vmem:[%s236 + $0x178] sm:$0xff]
      %v1147 = vld [vmem:[%s236 + $0x180] sm:$0xff]
      %v1148 = vld [vmem:[%s236 + $0x188] sm:$0xff]
      %v1149 = vld [vmem:[%s236 + $0x190] sm:$0xff]
      %v1150 = vld [vmem:[%s236 + $0x198] sm:$0xff]
      %v1151 = vld [vmem:[%s236 + $0x1a0] sm:$0xff]
      %v1152 = vld [vmem:[%s236 + $0x1a8] sm:$0xff]
      %v1153 = vld [vmem:[%s236 + $0x1b0] sm:$0xff]
      %v1154 = vld [vmem:[%s236 + $0x1b8] sm:$0xff]
      %v1155 = vld [vmem:[%s236 + $0x1c0] sm:$0xff]
      %v1156 = vld [vmem:[%s236 + $0x1c8] sm:$0xff]
      %v1157 = vld [vmem:[%s236 + $0x1d0] sm:$0xff]
      %v1158 = vld [vmem:[%s236 + $0x1d8] sm:$0xff]
      %v1159 = vld [vmem:[%s236 + $0x1e0] sm:$0xff]
      %v1160 = vld [vmem:[%s236 + $0x1e8] sm:$0xff]
      %v1161 = vld [vmem:[%s236 + $0x1f0] sm:$0xff]
      %v1162 = vld [vmem:[%s236 + $0x1f8] sm:$0xff]
      %v1163 = vpack.c.bf16 %v1101, %v1099
      %v1164 = vpack.c.bf16 %v1102, %v1100
      %v1165 = vpack.c.bf16 %v1105, %v1103
      %v1166 = vpack.c.bf16 %v1106, %v1104
      %v1167 = vpack.c.bf16 %v1109, %v1107
      %v1168 = vpack.c.bf16 %v1110, %v1108
      %v1169 = vpack.c.bf16 %v1113, %v1111
      %v1170 = vpack.c.bf16 %v1114, %v1112
      %v1171 = vpack.c.bf16 %v1117, %v1115
      %v1172 = vpack.c.bf16 %v1118, %v1116
      %v1173 = vpack.c.bf16 %v1121, %v1119
      %v1174 = vpack.c.bf16 %v1122, %v1120
      %v1175 = vpack.c.bf16 %v1125, %v1123
      %v1176 = vpack.c.bf16 %v1126, %v1124
      %v1177 = vpack.c.bf16 %v1129, %v1127
      %v1178 = vpack.c.bf16 %v1130, %v1128
      %v1179 = vpack.c.bf16 %v1133, %v1131
      %v1180 = vpack.c.bf16 %v1134, %v1132
      %v1181 = vpack.c.bf16 %v1137, %v1135
      %v1182 = vpack.c.bf16 %v1138, %v1136
      %v1183 = vpack.c.bf16 %v1141, %v1139
      %v1184 = vpack.c.bf16 %v1142, %v1140
      %v1185 = vpack.c.bf16 %v1145, %v1143
      %v1186 = vpack.c.bf16 %v1146, %v1144
      %v1187 = vpack.c.bf16 %v1149, %v1147
      %v1188 = vpack.c.bf16 %v1150, %v1148
      %v1189 = vpack.c.bf16 %v1153, %v1151
      %v1190 = vpack.c.bf16 %v1154, %v1152
      %v1191 = vpack.c.bf16 %v1157, %v1155
      %v1192 = vpack.c.bf16 %v1158, %v1156
      %v1193 = vpack.c.bf16 %v1161, %v1159
      %v1194 = vpack.c.bf16 %v1162, %v1160
      %s1195 = scalar_lea.vmem %s1, 96
      %v1196 = vld [vmem:[%s1195] sm:$0xf]
      %v1197 = vld [vmem:[%s1195 + $0x4] sm:$0xf]
      %v1198 = vld [vmem:[%s1195 + $0x8] sm:$0xf]
      %v1199 = vld [vmem:[%s1195 + $0xc] sm:$0xf]
      %v1200 = vld [vmem:[%s1195 + $0x10] sm:$0xf]
      %v1201 = vld [vmem:[%s1195 + $0x14] sm:$0xf]
      %v1202 = vld [vmem:[%s1195 + $0x18] sm:$0xf]
      %v1203 = vld [vmem:[%s1195 + $0x1c] sm:$0xf]
      %v1204 = vld [vmem:[%s1195 + $0x20] sm:$0xf]
      %v1205 = vld [vmem:[%s1195 + $0x24] sm:$0xf]
      %v1206 = vld [vmem:[%s1195 + $0x28] sm:$0xf]
      %v1207 = vld [vmem:[%s1195 + $0x2c] sm:$0xf]
      %v1208 = vld [vmem:[%s1195 + $0x30] sm:$0xf]
      %v1209 = vld [vmem:[%s1195 + $0x34] sm:$0xf]
      %v1210 = vld [vmem:[%s1195 + $0x38] sm:$0xf]
      %v1211 = vld [vmem:[%s1195 + $0x3c] sm:$0xf]
      %v1212 = vld [vmem:[%s1195 + $0x40] sm:$0xf]
      %v1213 = vld [vmem:[%s1195 + $0x44] sm:$0xf]
      %v1214 = vld [vmem:[%s1195 + $0x48] sm:$0xf]
      %v1215 = vld [vmem:[%s1195 + $0x4c] sm:$0xf]
      %v1216 = vld [vmem:[%s1195 + $0x50] sm:$0xf]
      %v1217 = vld [vmem:[%s1195 + $0x54] sm:$0xf]
      %v1218 = vld [vmem:[%s1195 + $0x58] sm:$0xf]
      %v1219 = vld [vmem:[%s1195 + $0x5c] sm:$0xf]
      %v1244 = vunpack.c.l.b16 %v1196
      %v1245 = vunpack.c.l.b16 %v1197
      %v1246 = vunpack.c.l.b16 %v1198
      %v1247 = vunpack.c.l.b16 %v1199
      %v1248 = vunpack.c.l.b16 %v1200
      %v1249 = vunpack.c.l.b16 %v1201
      %v1250 = vunpack.c.l.b16 %v1202
      %v1251 = vunpack.c.l.b16 %v1203
      %v1252 = vunpack.c.l.b16 %v1204
      %v1253 = vunpack.c.l.b16 %v1205
      %v1254 = vunpack.c.l.b16 %v1206
      %v1255 = vunpack.c.l.b16 %v1207
      %v1256 = vunpack.c.l.b16 %v1208
      %v1257 = vunpack.c.l.b16 %v1209
      %v1258 = vunpack.c.l.b16 %v1210
      %v1259 = vunpack.c.l.b16 %v1211
      %v1260 = vunpack.c.l.b16 %v1212
      %v1261 = vunpack.c.l.b16 %v1213
      %v1262 = vunpack.c.l.b16 %v1214
      %v1263 = vunpack.c.l.b16 %v1215
      %v1264 = vunpack.c.l.b16 %v1216
      %v1265 = vunpack.c.l.b16 %v1217
      %v1266 = vunpack.c.l.b16 %v1218
      %v1267 = vunpack.c.l.b16 %v1219
      %v1268 = vpack.c.b16 %v1245, %v1244
      %v1269 = vpack.c.b16 %v1247, %v1246
      %v1270 = vpack.c.b16 %v1249, %v1248
      %v1271 = vpack.c.b16 %v1251, %v1250
      %v1272 = vpack.c.b16 %v1253, %v1252
      %v1273 = vpack.c.b16 %v1255, %v1254
      %v1274 = vpack.c.b16 %v1257, %v1256
      %v1275 = vpack.c.b16 %v1259, %v1258
      %v1276 = vpack.c.b16 %v1261, %v1260
      %v1277 = vpack.c.b16 %v1263, %v1262
      %v1278 = vpack.c.b16 %v1265, %v1264
      %v1279 = vpack.c.b16 %v1267, %v1266
      %v1293 = vsel %vm227, %v1164, 0
      %v1296 = vsel %vm227, %v1166, 0
      %v1299 = vsel %vm227, %v1168, 0
      %v1302 = vsel %vm227, %v1170, 0
      %v1305 = vsel %vm227, %v1172, 0
      %v1308 = vsel %vm227, %v1174, 0
      %v1311 = vsel %vm227, %v1176, 0
      %v1314 = vsel %vm227, %v1178, 0
      %v1317 = vsel %vm227, %v1180, 0
      %v1320 = vsel %vm227, %v1182, 0
      %v1323 = vsel %vm227, %v1184, 0
      %v1326 = vsel %vm227, %v1186, 0
      %v1329 = vsel %vm227, %v1188, 0
      %v1332 = vsel %vm227, %v1190, 0
      %v1335 = vsel %vm227, %v1192, 0
      %v1338 = vsel %vm227, %v1194, 0
      %1340 = vmatprep.subr.bf16.mxu0 0
      %1341 = vmatpush1.bf16.msra.mxu0 %v1268
      %1342 = vmatprep.subr.bf16.mxu0 0
      %1343 = vmatpush1.bf16.msra.mxu0 %v1269
      %1344 = vmatprep.subr.bf16.mxu0 0
      %1345 = vmatpush1.bf16.msra.mxu0 %v1270
      %1346 = vmatprep.subr.bf16.mxu0 0
      %1347 = vmatpush1.bf16.msra.mxu0 %v1271
      %1348 = vmatprep.subr.bf16.mxu0 0
      %1349 = vmatpush1.bf16.msra.mxu0 %v1272
      %1350 = vmatprep.subr.bf16.mxu0 0
      %1351 = vmatpush1.bf16.msra.mxu0 %v1273
      %1352 = vmatprep.subr.bf16.mxu0 0
      %1353 = vmatpush1.bf16.msra.mxu0 %v1274
      %1354 = vmatprep.subr.bf16.mxu0 0
      %1355 = vmatpush1.bf16.msra.mxu0 %v1275
      %1356 = vmatprep.subr.bf16.mxu0 0
      %1357 = vmatpush1.bf16.msra.mxu0 %v1276
      %1358 = vmatprep.subr.bf16.mxu0 0
      %1359 = vmatpush1.bf16.msra.mxu0 %v1277
      %1360 = vmatprep.subr.bf16.mxu0 0
      %1361 = vmatpush1.bf16.msra.mxu0 %v1278
      %1362 = vmatprep.subr.bf16.mxu0 0
      %1363 = vmatpush1.bf16.msra.mxu0 %v1279
      %1364 = vmatprep.subr.bf16.mxu0 0
      %1365 = vmatpush1.bf16.msra.mxu0 0
      %1366 = vmatprep.subr.bf16.mxu0 0
      %1367 = vmatpush1.bf16.msra.mxu0 0
      %1368 = vmatprep.subr.bf16.mxu0 0
      %1369 = vmatpush1.bf16.msra.mxu0 0
      %1370 = vmatprep.subr.bf16.mxu0 0
      %1371 = vmatpush1.bf16.msra.mxu0 0
      %1372 = vmatprep.mubr.bf16.mxu0 %v1293
      %1373 = vmatmul.mubr.bf16.gmra.mrb[0].mxu0 %v1163
      %v1374 = vpop.f32.mrb[0].mxu0
      %v1375 = vadd.f32 0.0, %v1374
      %v1376 = vpop.f32.mrb[0].mxu0
      %v1377 = vpop.f32.mrb[0].mxu0
      %v1378 = vadd.f32 0.0, %v1377
      %v1379 = vpop.f32.mrb[0].mxu0
      %1380 = vmatprep.mubr.bf16.mxu0 %v1296
      %1381 = vmatmul.mubr.bf16.gmra.mrb[0].mxu0 %v1165
      %v1382 = vpop.f32.mrb[0].mxu0
      %v1383 = vadd.f32 0.0, %v1382
      %v1384 = vpop.f32.mrb[0].mxu0
      %v1385 = vpop.f32.mrb[0].mxu0
      %v1386 = vadd.f32 0.0, %v1385
      %v1387 = vpop.f32.mrb[0].mxu0
      %1388 = vmatprep.mubr.bf16.mxu0 %v1299
      %1389 = vmatmul.mubr.bf16.gmra.mrb[0].mxu0 %v1167
      %v1390 = vpop.f32.mrb[0].mxu0
      %v1391 = vadd.f32 0.0, %v1390
      %v1392 = vpop.f32.mrb[0].mxu0
      %v1393 = vpop.f32.mrb[0].mxu0
      %v1394 = vadd.f32 0.0, %v1393
      %v1395 = vpop.f32.mrb[0].mxu0
      %1396 = vmatprep.mubr.bf16.mxu0 %v1302
      %1397 = vmatmul.mubr.bf16.gmra.mrb[0].mxu0 %v1169
      %v1398 = vpop.f32.mrb[0].mxu0
      %v1399 = vadd.f32 0.0, %v1398
      %v1400 = vpop.f32.mrb[0].mxu0
      %v1401 = vpop.f32.mrb[0].mxu0
      %v1402 = vadd.f32 0.0, %v1401
      %v1403 = vpop.f32.mrb[0].mxu0
      %1404 = vmatprep.mubr.bf16.mxu0 %v1305
      %1405 = vmatmul.mubr.bf16.gmra.mrb[0].mxu0 %v1171
      %v1406 = vpop.f32.mrb[0].mxu0
      %v1407 = vadd.f32 0.0, %v1406
      %v1408 = vpop.f32.mrb[0].mxu0
      %v1409 = vpop.f32.mrb[0].mxu0
      %v1410 = vadd.f32 0.0, %v1409
      %v1411 = vpop.f32.mrb[0].mxu0
      %1412 = vmatprep.mubr.bf16.mxu0 %v1308
      %1413 = vmatmul.mubr.bf16.gmra.mrb[0].mxu0 %v1173
      %v1414 = vpop.f32.mrb[0].mxu0
      %v1415 = vadd.f32 0.0, %v1414
      %v1416 = vpop.f32.mrb[0].mxu0
      %v1417 = vpop.f32.mrb[0].mxu0
      %v1418 = vadd.f32 0.0, %v1417
      %v1419 = vpop.f32.mrb[0].mxu0
      %1420 = vmatprep.mubr.bf16.mxu0 %v1311
      %1421 = vmatmul.mubr.bf16.gmra.mrb[0].mxu0 %v1175
      %v1422 = vpop.f32.mrb[0].mxu0
      %v1423 = vadd.f32 0.0, %v1422
      %v1424 = vpop.f32.mrb[0].mxu0
      %v1425 = vpop.f32.mrb[0].mxu0
      %v1426 = vadd.f32 0.0, %v1425
      %v1427 = vpop.f32.mrb[0].mxu0
      %1428 = vmatprep.mubr.bf16.mxu0 %v1314
      %1429 = vmatmul.mubr.bf16.gmra.mrb[0].mxu0 %v1177
      %v1430 = vpop.f32.mrb[0].mxu0
      %v1431 = vadd.f32 0.0, %v1430
      %v1432 = vpop.f32.mrb[0].mxu0
      %v1433 = vpop.f32.mrb[0].mxu0
      %v1434 = vadd.f32 0.0, %v1433
      %v1435 = vpop.f32.mrb[0].mxu0
      %1436 = vmatprep.mubr.bf16.mxu0 %v1317
      %1437 = vmatmul.mubr.bf16.gmra.mrb[0].mxu0 %v1179
      %v1438 = vpop.f32.mrb[0].mxu0
      %v1439 = vadd.f32 0.0, %v1438
      %v1440 = vpop.f32.mrb[0].mxu0
      %v1441 = vpop.f32.mrb[0].mxu0
      %v1442 = vadd.f32 0.0, %v1441
      %v1443 = vpop.f32.mrb[0].mxu0
      %1444 = vmatprep.mubr.bf16.mxu0 %v1320
      %1445 = vmatmul.mubr.bf16.gmra.mrb[0].mxu0 %v1181
      %v1446 = vpop.f32.mrb[0].mxu0
      %v1447 = vadd.f32 0.0, %v1446
      %v1448 = vpop.f32.mrb[0].mxu0
      %v1449 = vpop.f32.mrb[0].mxu0
      %v1450 = vadd.f32 0.0, %v1449
      %v1451 = vpop.f32.mrb[0].mxu0
      %1452 = vmatprep.mubr.bf16.mxu0 %v1323
      %1453 = vmatmul.mubr.bf16.gmra.mrb[0].mxu0 %v1183
      %v1454 = vpop.f32.mrb[0].mxu0
      %v1455 = vadd.f32 0.0, %v1454
      %v1456 = vpop.f32.mrb[0].mxu0
      %v1457 = vpop.f32.mrb[0].mxu0
      %v1458 = vadd.f32 0.0, %v1457
      %v1459 = vpop.f32.mrb[0].mxu0
      %1460 = vmatprep.mubr.bf16.mxu0 %v1326
      %1461 = vmatmul.mubr.bf16.gmra.mrb[0].mxu0 %v1185
      %v1462 = vpop.f32.mrb[0].mxu0
      %v1463 = vadd.f32 0.0, %v1462
      %v1464 = vpop.f32.mrb[0].mxu0
      %v1465 = vpop.f32.mrb[0].mxu0
      %v1466 = vadd.f32 0.0, %v1465
      %v1467 = vpop.f32.mrb[0].mxu0
      %1468 = vmatprep.mubr.bf16.mxu0 %v1329
      %1469 = vmatmul.mubr.bf16.gmra.mrb[0].mxu0 %v1187
      %v1470 = vpop.f32.mrb[0].mxu0
      %v1471 = vadd.f32 0.0, %v1470
      %v1472 = vpop.f32.mrb[0].mxu0
      %v1473 = vpop.f32.mrb[0].mxu0
      %v1474 = vadd.f32 0.0, %v1473
      %v1475 = vpop.f32.mrb[0].mxu0
      %1476 = vmatprep.mubr.bf16.mxu0 %v1332
      %1477 = vmatmul.mubr.bf16.gmra.mrb[0].mxu0 %v1189
      %v1478 = vpop.f32.mrb[0].mxu0
      %v1479 = vadd.f32 0.0, %v1478
      %v1480 = vpop.f32.mrb[0].mxu0
      %v1481 = vpop.f32.mrb[0].mxu0
      %v1482 = vadd.f32 0.0, %v1481
      %v1483 = vpop.f32.mrb[0].mxu0
      %1484 = vmatprep.mubr.bf16.mxu0 %v1335
      %1485 = vmatmul.mubr.bf16.gmra.mrb[0].mxu0 %v1191
      %v1486 = vpop.f32.mrb[0].mxu0
      %v1487 = vadd.f32 0.0, %v1486
      %v1488 = vpop.f32.mrb[0].mxu0
      %v1489 = vpop.f32.mrb[0].mxu0
      %v1490 = vadd.f32 0.0, %v1489
      %v1491 = vpop.f32.mrb[0].mxu0
      %1492 = vmatprep.mubr.bf16.mxu0 %v1338
      %1493 = vmatmul.mubr.bf16.gmra.mrb[0].mxu0 %v1193
      %v1494 = vpop.f32.mrb[0].mxu0
      %v1495 = vadd.f32 0.0, %v1494
      %v1496 = vpop.f32.mrb[0].mxu0
      %v1497 = vpop.f32.mrb[0].mxu0
      %v1498 = vadd.f32 0.0, %v1497
      %v1499 = vpop.f32.mrb[0].mxu0
      %1500 = vdwg.mxu0
      %v1525 = vunpack.c.l.b16 %v1075
      %v1526 = vunpack.c.l.b16 %v1076
      %v1527 = vunpack.c.l.b16 %v1077
      %v1528 = vunpack.c.l.b16 %v1078
      %v1529 = vunpack.c.l.b16 %v1079
      %v1530 = vunpack.c.l.b16 %v1080
      %v1531 = vunpack.c.l.b16 %v1081
      %v1532 = vunpack.c.l.b16 %v1082
      %v1533 = vunpack.c.l.b16 %v1083
      %v1534 = vunpack.c.l.b16 %v1084
      %v1535 = vunpack.c.l.b16 %v1085
      %v1536 = vunpack.c.l.b16 %v1086
      %v1537 = vunpack.c.l.b16 %v1087
      %v1538 = vunpack.c.l.b16 %v1088
      %v1539 = vunpack.c.l.b16 %v1089
      %v1540 = vunpack.c.l.b16 %v1090
      %v1541 = vunpack.c.l.b16 %v1091
      %v1542 = vunpack.c.l.b16 %v1092
      %v1543 = vunpack.c.l.b16 %v1093
      %v1544 = vunpack.c.l.b16 %v1094
      %v1545 = vunpack.c.l.b16 %v1095
      %v1546 = vunpack.c.l.b16 %v1096
      %v1547 = vunpack.c.l.b16 %v1097
      %v1548 = vunpack.c.l.b16 %v1098
      %v1549 = vpack.c.b16 %v1526, %v1525
      %v1550 = vpack.c.b16 %v1528, %v1527
      %v1551 = vpack.c.b16 %v1530, %v1529
      %v1552 = vpack.c.b16 %v1532, %v1531
      %v1553 = vpack.c.b16 %v1534, %v1533
      %v1554 = vpack.c.b16 %v1536, %v1535
      %v1555 = vpack.c.b16 %v1538, %v1537
      %v1556 = vpack.c.b16 %v1540, %v1539
      %v1557 = vpack.c.b16 %v1542, %v1541
      %v1558 = vpack.c.b16 %v1544, %v1543
      %v1559 = vpack.c.b16 %v1546, %v1545
      %v1560 = vpack.c.b16 %v1548, %v1547
      %v1574 = vsel %vm227, %v1044, 0
      %v1577 = vsel %vm227, %v1046, 0
      %v1580 = vsel %vm227, %v1048, 0
      %v1583 = vsel %vm227, %v1050, 0
      %v1586 = vsel %vm227, %v1052, 0
      %v1589 = vsel %vm227, %v1054, 0
      %v1592 = vsel %vm227, %v1056, 0
      %v1595 = vsel %vm227, %v1058, 0
      %v1598 = vsel %vm227, %v1060, 0
      %v1601 = vsel %vm227, %v1062, 0
      %v1604 = vsel %vm227, %v1064, 0
      %v1607 = vsel %vm227, %v1066, 0
      %v1610 = vsel %vm227, %v1068, 0
      %v1613 = vsel %vm227, %v1070, 0
      %v1616 = vsel %vm227, %v1072, 0
      %v1619 = vsel %vm227, %v1074, 0
      %1621 = vmatprep.subr.bf16.mxu0 0
      %1622 = vmatpush1.bf16.msra.mxu0 %v1549
      %1623 = vmatprep.subr.bf16.mxu0 0
      %1624 = vmatpush1.bf16.msra.mxu0 %v1550
      %1625 = vmatprep.subr.bf16.mxu0 0
      %1626 = vmatpush1.bf16.msra.mxu0 %v1551
      %1627 = vmatprep.subr.bf16.mxu0 0
      %1628 = vmatpush1.bf16.msra.mxu0 %v1552
      %1629 = vmatprep.subr.bf16.mxu0 0
      %1630 = vmatpush1.bf16.msra.mxu0 %v1553
      %1631 = vmatprep.subr.bf16.mxu0 0
      %1632 = vmatpush1.bf16.msra.mxu0 %v1554
      %1633 = vmatprep.subr.bf16.mxu0 0
      %1634 = vmatpush1.bf16.msra.mxu0 %v1555
      %1635 = vmatprep.subr.bf16.mxu0 0
      %1636 = vmatpush1.bf16.msra.mxu0 %v1556
      %1637 = vmatprep.subr.bf16.mxu0 0
      %1638 = vmatpush1.bf16.msra.mxu0 %v1557
      %1639 = vmatprep.subr.bf16.mxu0 0
      %1640 = vmatpush1.bf16.msra.mxu0 %v1558
      %1641 = vmatprep.subr.bf16.mxu0 0
      %1642 = vmatpush1.bf16.msra.mxu0 %v1559
      %1643 = vmatprep.subr.bf16.mxu0 0
      %1644 = vmatpush1.bf16.msra.mxu0 %v1560
      %1645 = vmatprep.subr.bf16.mxu0 0
      %1646 = vmatpush1.bf16.msra.mxu0 0
      %1647 = vmatprep.subr.bf16.mxu0 0
      %1648 = vmatpush1.bf16.msra.mxu0 0
      %1649 = vmatprep.subr.bf16.mxu0 0
      %1650 = vmatpush1.bf16.msra.mxu0 0
      %1651 = vmatprep.subr.bf16.mxu0 0
      %1652 = vmatpush1.bf16.msra.mxu0 0
      %1653 = vmatprep.mubr.bf16.mxu0 %v1574
      %1654 = vmatmul.mubr.bf16.gmra.mrb[0].mxu0 %v1043
      %v1655 = vpop.f32.mrb[0].mxu0
      %v1656 = vadd.f32 %v1375, %v1655
      %v1657 = vpop.f32.mrb[0].mxu0
      %v1658 = vpop.f32.mrb[0].mxu0
      %v1659 = vadd.f32 %v1378, %v1658
      %v1660 = vpop.f32.mrb[0].mxu0
      %1661 = vmatprep.mubr.bf16.mxu0 %v1577
      %1662 = vmatmul.mubr.bf16.gmra.mrb[0].mxu0 %v1045
      %v1663 = vpop.f32.mrb[0].mxu0
      %v1664 = vadd.f32 %v1383, %v1663
      %v1665 = vpop.f32.mrb[0].mxu0
      %v1666 = vpop.f32.mrb[0].mxu0
      %v1667 = vadd.f32 %v1386, %v1666
      %v1668 = vpop.f32.mrb[0].mxu0
      %1669 = vmatprep.mubr.bf16.mxu0 %v1580
      %1670 = vmatmul.mubr.bf16.gmra.mrb[0].mxu0 %v1047
      %v1671 = vpop.f32.mrb[0].mxu0
      %v1672 = vadd.f32 %v1391, %v1671
      %v1673 = vpop.f32.mrb[0].mxu0
      %v1674 = vpop.f32.mrb[0].mxu0
      %v1675 = vadd.f32 %v1394, %v1674
      %v1676 = vpop.f32.mrb[0].mxu0
      %1677 = vmatprep.mubr.bf16.mxu0 %v1583
      %1678 = vmatmul.mubr.bf16.gmra.mrb[0].mxu0 %v1049
      %v1679 = vpop.f32.mrb[0].mxu0
      %v1680 = vadd.f32 %v1399, %v1679
      %v1681 = vpop.f32.mrb[0].mxu0
      %v1682 = vpop.f32.mrb[0].mxu0
      %v1683 = vadd.f32 %v1402, %v1682
      %v1684 = vpop.f32.mrb[0].mxu0
      %1685 = vmatprep.mubr.bf16.mxu0 %v1586
      %1686 = vmatmul.mubr.bf16.gmra.mrb[0].mxu0 %v1051
      %v1687 = vpop.f32.mrb[0].mxu0
      %v1688 = vadd.f32 %v1407, %v1687
      %v1689 = vpop.f32.mrb[0].mxu0
      %v1690 = vpop.f32.mrb[0].mxu0
      %v1691 = vadd.f32 %v1410, %v1690
      %v1692 = vpop.f32.mrb[0].mxu0
      %1693 = vmatprep.mubr.bf16.mxu0 %v1589
      %1694 = vmatmul.mubr.bf16.gmra.mrb[0].mxu0 %v1053
      %v1695 = vpop.f32.mrb[0].mxu0
      %v1696 = vadd.f32 %v1415, %v1695
      %v1697 = vpop.f32.mrb[0].mxu0
      %v1698 = vpop.f32.mrb[0].mxu0
      %v1699 = vadd.f32 %v1418, %v1698
      %v1700 = vpop.f32.mrb[0].mxu0
      %1701 = vmatprep.mubr.bf16.mxu0 %v1592
      %1702 = vmatmul.mubr.bf16.gmra.mrb[0].mxu0 %v1055
      %v1703 = vpop.f32.mrb[0].mxu0
      %v1704 = vadd.f32 %v1423, %v1703
      %v1705 = vpop.f32.mrb[0].mxu0
      %v1706 = vpop.f32.mrb[0].mxu0
      %v1707 = vadd.f32 %v1426, %v1706
      %v1708 = vpop.f32.mrb[0].mxu0
      %1709 = vmatprep.mubr.bf16.mxu0 %v1595
      %1710 = vmatmul.mubr.bf16.gmra.mrb[0].mxu0 %v1057
      %v1711 = vpop.f32.mrb[0].mxu0
      %v1712 = vadd.f32 %v1431, %v1711
      %v1713 = vpop.f32.mrb[0].mxu0
      %v1714 = vpop.f32.mrb[0].mxu0
      %v1715 = vadd.f32 %v1434, %v1714
      %v1716 = vpop.f32.mrb[0].mxu0
      %1717 = vmatprep.mubr.bf16.mxu0 %v1598
      %1718 = vmatmul.mubr.bf16.gmra.mrb[0].mxu0 %v1059
      %v1719 = vpop.f32.mrb[0].mxu0
      %v1720 = vadd.f32 %v1439, %v1719
      %v1721 = vpop.f32.mrb[0].mxu0
      %v1722 = vpop.f32.mrb[0].mxu0
      %v1723 = vadd.f32 %v1442, %v1722
      %v1724 = vpop.f32.mrb[0].mxu0
      %1725 = vmatprep.mubr.bf16.mxu0 %v1601
      %1726 = vmatmul.mubr.bf16.gmra.mrb[0].mxu0 %v1061
      %v1727 = vpop.f32.mrb[0].mxu0
      %v1728 = vadd.f32 %v1447, %v1727
      %v1729 = vpop.f32.mrb[0].mxu0
      %v1730 = vpop.f32.mrb[0].mxu0
      %v1731 = vadd.f32 %v1450, %v1730
      %v1732 = vpop.f32.mrb[0].mxu0
      %1733 = vmatprep.mubr.bf16.mxu0 %v1604
      %1734 = vmatmul.mubr.bf16.gmra.mrb[0].mxu0 %v1063
      %v1735 = vpop.f32.mrb[0].mxu0
      %v1736 = vadd.f32 %v1455, %v1735
      %v1737 = vpop.f32.mrb[0].mxu0
      %v1738 = vpop.f32.mrb[0].mxu0
      %v1739 = vadd.f32 %v1458, %v1738
      %v1740 = vpop.f32.mrb[0].mxu0
      %1741 = vmatprep.mubr.bf16.mxu0 %v1607
      %1742 = vmatmul.mubr.bf16.gmra.mrb[0].mxu0 %v1065
      %v1743 = vpop.f32.mrb[0].mxu0
      %v1744 = vadd.f32 %v1463, %v1743
      %v1745 = vpop.f32.mrb[0].mxu0
      %v1746 = vpop.f32.mrb[0].mxu0
      %v1747 = vadd.f32 %v1466, %v1746
      %v1748 = vpop.f32.mrb[0].mxu0
      %1749 = vmatprep.mubr.bf16.mxu0 %v1610
      %1750 = vmatmul.mubr.bf16.gmra.mrb[0].mxu0 %v1067
      %v1751 = vpop.f32.mrb[0].mxu0
      %v1752 = vadd.f32 %v1471, %v1751
      %v1753 = vpop.f32.mrb[0].mxu0
      %v1754 = vpop.f32.mrb[0].mxu0
      %v1755 = vadd.f32 %v1474, %v1754
      %v1756 = vpop.f32.mrb[0].mxu0
      %1757 = vmatprep.mubr.bf16.mxu0 %v1613
      %1758 = vmatmul.mubr.bf16.gmra.mrb[0].mxu0 %v1069
      %v1759 = vpop.f32.mrb[0].mxu0
      %v1760 = vadd.f32 %v1479, %v1759
      %v1761 = vpop.f32.mrb[0].mxu0
      %v1762 = vpop.f32.mrb[0].mxu0
      %v1763 = vadd.f32 %v1482, %v1762
      %v1764 = vpop.f32.mrb[0].mxu0
      %1765 = vmatprep.mubr.bf16.mxu0 %v1616
      %1766 = vmatmul.mubr.bf16.gmra.mrb[0].mxu0 %v1071
      %v1767 = vpop.f32.mrb[0].mxu0
      %v1768 = vadd.f32 %v1487, %v1767
      %v1769 = vpop.f32.mrb[0].mxu0
      %v1770 = vpop.f32.mrb[0].mxu0
      %v1771 = vadd.f32 %v1490, %v1770
      %v1772 = vpop.f32.mrb[0].mxu0
      %1773 = vmatprep.mubr.bf16.mxu0 %v1619
      %1774 = vmatmul.mubr.bf16.gmra.mrb[0].mxu0 %v1073
      %v1775 = vpop.f32.mrb[0].mxu0
      %v1776 = vadd.f32 %v1495, %v1775
      %v1777 = vpop.f32.mrb[0].mxu0
      %v1778 = vpop.f32.mrb[0].mxu0
      %v1779 = vadd.f32 %v1498, %v1778
      %v1780 = vpop.f32.mrb[0].mxu0
      %1781 = vdwg.mxu0
      %s1782 = scalar_lea.vmem [#allocation2], 64
      %v1783 = vld [vmem:[%s1782] sm:$0xff]
      %v1784 = vld [vmem:[%s1782 + $0x8] sm:$0xff]
      %v1785 = vld [vmem:[%s1782 + $0x10] sm:$0xff]
      %v1786 = vld [vmem:[%s1782 + $0x18] sm:$0xff]
      %v1787 = vld [vmem:[%s1782 + $0x20] sm:$0xff]
      %v1788 = vld [vmem:[%s1782 + $0x28] sm:$0xff]
      %v1789 = vld [vmem:[%s1782 + $0x30] sm:$0xff]
      %v1790 = vld [vmem:[%s1782 + $0x38] sm:$0xff]
      %v1791 = vld [vmem:[%s1782 + $0x40] sm:$0xff]
      %v1792 = vld [vmem:[%s1782 + $0x48] sm:$0xff]
      %v1793 = vld [vmem:[%s1782 + $0x50] sm:$0xff]
      %v1794 = vld [vmem:[%s1782 + $0x58] sm:$0xff]
      %v1795 = vld [vmem:[%s1782 + $0x60] sm:$0xff]
      %v1796 = vld [vmem:[%s1782 + $0x68] sm:$0xff]
      %v1797 = vld [vmem:[%s1782 + $0x70] sm:$0xff]
      %v1798 = vld [vmem:[%s1782 + $0x78] sm:$0xff]
      %v1799 = vld [vmem:[%s1782 + $0x80] sm:$0xff]
      %v1800 = vld [vmem:[%s1782 + $0x88] sm:$0xff]
      %v1801 = vld [vmem:[%s1782 + $0x90] sm:$0xff]
      %v1802 = vld [vmem:[%s1782 + $0x98] sm:$0xff]
      %v1803 = vld [vmem:[%s1782 + $0xa0] sm:$0xff]
      %v1804 = vld [vmem:[%s1782 + $0xa8] sm:$0xff]
      %v1805 = vld [vmem:[%s1782 + $0xb0] sm:$0xff]
      %v1806 = vld [vmem:[%s1782 + $0xb8] sm:$0xff]
      %v1807 = vld [vmem:[%s1782 + $0xc0] sm:$0xff]
      %v1808 = vld [vmem:[%s1782 + $0xc8] sm:$0xff]
      %v1809 = vld [vmem:[%s1782 + $0xd0] sm:$0xff]
      %v1810 = vld [vmem:[%s1782 + $0xd8] sm:$0xff]
      %v1811 = vld [vmem:[%s1782 + $0xe0] sm:$0xff]
      %v1812 = vld [vmem:[%s1782 + $0xe8] sm:$0xff]
      %v1813 = vld [vmem:[%s1782 + $0xf0] sm:$0xff]
      %v1814 = vld [vmem:[%s1782 + $0xf8] sm:$0xff]
      %v1815 = vld [vmem:[%s1782 + $0x100] sm:$0xff]
      %v1816 = vld [vmem:[%s1782 + $0x108] sm:$0xff]
      %v1817 = vld [vmem:[%s1782 + $0x110] sm:$0xff]
      %v1818 = vld [vmem:[%s1782 + $0x118] sm:$0xff]
      %v1819 = vld [vmem:[%s1782 + $0x120] sm:$0xff]
      %v1820 = vld [vmem:[%s1782 + $0x128] sm:$0xff]
      %v1821 = vld [vmem:[%s1782 + $0x130] sm:$0xff]
      %v1822 = vld [vmem:[%s1782 + $0x138] sm:$0xff]
      %v1823 = vld [vmem:[%s1782 + $0x140] sm:$0xff]
      %v1824 = vld [vmem:[%s1782 + $0x148] sm:$0xff]
      %v1825 = vld [vmem:[%s1782 + $0x150] sm:$0xff]
      %v1826 = vld [vmem:[%s1782 + $0x158] sm:$0xff]
      %v1827 = vld [vmem:[%s1782 + $0x160] sm:$0xff]
      %v1828 = vld [vmem:[%s1782 + $0x168] sm:$0xff]
      %v1829 = vld [vmem:[%s1782 + $0x170] sm:$0xff]
      %v1830 = vld [vmem:[%s1782 + $0x178] sm:$0xff]
      %v1831 = vld [vmem:[%s1782 + $0x180] sm:$0xff]
      %v1832 = vld [vmem:[%s1782 + $0x188] sm:$0xff]
      %v1833 = vld [vmem:[%s1782 + $0x190] sm:$0xff]
      %v1834 = vld [vmem:[%s1782 + $0x198] sm:$0xff]
      %v1835 = vld [vmem:[%s1782 + $0x1a0] sm:$0xff]
      %v1836 = vld [vmem:[%s1782 + $0x1a8] sm:$0xff]
      %v1837 = vld [vmem:[%s1782 + $0x1b0] sm:$0xff]
      %v1838 = vld [vmem:[%s1782 + $0x1b8] sm:$0xff]
      %v1839 = vld [vmem:[%s1782 + $0x1c0] sm:$0xff]
      %v1840 = vld [vmem:[%s1782 + $0x1c8] sm:$0xff]
      %v1841 = vld [vmem:[%s1782 + $0x1d0] sm:$0xff]
      %v1842 = vld [vmem:[%s1782 + $0x1d8] sm:$0xff]
      %v1843 = vld [vmem:[%s1782 + $0x1e0] sm:$0xff]
      %v1844 = vld [vmem:[%s1782 + $0x1e8] sm:$0xff]
      %v1845 = vld [vmem:[%s1782 + $0x1f0] sm:$0xff]
      %v1846 = vld [vmem:[%s1782 + $0x1f8] sm:$0xff]
      %v1847 = vpack.c.bf16 %v1785, %v1783
      %v1848 = vpack.c.bf16 %v1786, %v1784
      %v1849 = vpack.c.bf16 %v1789, %v1787
      %v1850 = vpack.c.bf16 %v1790, %v1788
      %v1851 = vpack.c.bf16 %v1793, %v1791
      %v1852 = vpack.c.bf16 %v1794, %v1792
      %v1853 = vpack.c.bf16 %v1797, %v1795
      %v1854 = vpack.c.bf16 %v1798, %v1796
      %v1855 = vpack.c.bf16 %v1801, %v1799
      %v1856 = vpack.c.bf16 %v1802, %v1800
      %v1857 = vpack.c.bf16 %v1805, %v1803
      %v1858 = vpack.c.bf16 %v1806, %v1804
      %v1859 = vpack.c.bf16 %v1809, %v1807
      %v1860 = vpack.c.bf16 %v1810, %v1808
      %v1861 = vpack.c.bf16 %v1813, %v1811
      %v1862 = vpack.c.bf16 %v1814, %v1812
      %v1863 = vpack.c.bf16 %v1817, %v1815
      %v1864 = vpack.c.bf16 %v1818, %v1816
      %v1865 = vpack.c.bf16 %v1821, %v1819
      %v1866 = vpack.c.bf16 %v1822, %v1820
      %v1867 = vpack.c.bf16 %v1825, %v1823
      %v1868 = vpack.c.bf16 %v1826, %v1824
      %v1869 = vpack.c.bf16 %v1829, %v1827
      %v1870 = vpack.c.bf16 %v1830, %v1828
      %v1871 = vpack.c.bf16 %v1833, %v1831
      %v1872 = vpack.c.bf16 %v1834, %v1832
      %v1873 = vpack.c.bf16 %v1837, %v1835
      %v1874 = vpack.c.bf16 %v1838, %v1836
      %v1875 = vpack.c.bf16 %v1841, %v1839
      %v1876 = vpack.c.bf16 %v1842, %v1840
      %v1877 = vpack.c.bf16 %v1845, %v1843
      %v1878 = vpack.c.bf16 %v1846, %v1844
      %s1879 = scalar_lea.vmem %s1, 192
      %v1880 = vld [vmem:[%s1879] sm:$0xf]
      %v1881 = vld [vmem:[%s1879 + $0x4] sm:$0xf]
      %v1882 = vld [vmem:[%s1879 + $0x8] sm:$0xf]
      %v1883 = vld [vmem:[%s1879 + $0xc] sm:$0xf]
      %v1884 = vld [vmem:[%s1879 + $0x10] sm:$0xf]
      %v1885 = vld [vmem:[%s1879 + $0x14] sm:$0xf]
      %v1886 = vld [vmem:[%s1879 + $0x18] sm:$0xf]
      %v1887 = vld [vmem:[%s1879 + $0x1c] sm:$0xf]
      %v1888 = vld [vmem:[%s1879 + $0x20] sm:$0xf]
      %v1889 = vld [vmem:[%s1879 + $0x24] sm:$0xf]
      %v1890 = vld [vmem:[%s1879 + $0x28] sm:$0xf]
      %v1891 = vld [vmem:[%s1879 + $0x2c] sm:$0xf]
      %v1892 = vld [vmem:[%s1879 + $0x30] sm:$0xf]
      %v1893 = vld [vmem:[%s1879 + $0x34] sm:$0xf]
      %v1894 = vld [vmem:[%s1879 + $0x38] sm:$0xf]
      %v1895 = vld [vmem:[%s1879 + $0x3c] sm:$0xf]
      %v1896 = vld [vmem:[%s1879 + $0x40] sm:$0xf]
      %v1897 = vld [vmem:[%s1879 + $0x44] sm:$0xf]
      %v1898 = vld [vmem:[%s1879 + $0x48] sm:$0xf]
      %v1899 = vld [vmem:[%s1879 + $0x4c] sm:$0xf]
      %v1900 = vld [vmem:[%s1879 + $0x50] sm:$0xf]
      %v1901 = vld [vmem:[%s1879 + $0x54] sm:$0xf]
      %v1902 = vld [vmem:[%s1879 + $0x58] sm:$0xf]
      %v1903 = vld [vmem:[%s1879 + $0x5c] sm:$0xf]
      %v1928 = vunpack.c.l.b16 %v1880
      %v1929 = vunpack.c.l.b16 %v1881
      %v1930 = vunpack.c.l.b16 %v1882
      %v1931 = vunpack.c.l.b16 %v1883
      %v1932 = vunpack.c.l.b16 %v1884
      %v1933 = vunpack.c.l.b16 %v1885
      %v1934 = vunpack.c.l.b16 %v1886
      %v1935 = vunpack.c.l.b16 %v1887
      %v1936 = vunpack.c.l.b16 %v1888
      %v1937 = vunpack.c.l.b16 %v1889
      %v1938 = vunpack.c.l.b16 %v1890
      %v1939 = vunpack.c.l.b16 %v1891
      %v1940 = vunpack.c.l.b16 %v1892
      %v1941 = vunpack.c.l.b16 %v1893
      %v1942 = vunpack.c.l.b16 %v1894
      %v1943 = vunpack.c.l.b16 %v1895
      %v1944 = vunpack.c.l.b16 %v1896
      %v1945 = vunpack.c.l.b16 %v1897
      %v1946 = vunpack.c.l.b16 %v1898
      %v1947 = vunpack.c.l.b16 %v1899
      %v1948 = vunpack.c.l.b16 %v1900
      %v1949 = vunpack.c.l.b16 %v1901
      %v1950 = vunpack.c.l.b16 %v1902
      %v1951 = vunpack.c.l.b16 %v1903
      %v1952 = vpack.c.b16 %v1929, %v1928
      %v1953 = vpack.c.b16 %v1931, %v1930
      %v1954 = vpack.c.b16 %v1933, %v1932
      %v1955 = vpack.c.b16 %v1935, %v1934
      %v1956 = vpack.c.b16 %v1937, %v1936
      %v1957 = vpack.c.b16 %v1939, %v1938
      %v1958 = vpack.c.b16 %v1941, %v1940
      %v1959 = vpack.c.b16 %v1943, %v1942
      %v1960 = vpack.c.b16 %v1945, %v1944
      %v1961 = vpack.c.b16 %v1947, %v1946
      %v1962 = vpack.c.b16 %v1949, %v1948
      %v1963 = vpack.c.b16 %v1951, %v1950
      %v1977 = vsel %vm227, %v1848, 0
      %v1980 = vsel %vm227, %v1850, 0
      %v1983 = vsel %vm227, %v1852, 0
      %v1986 = vsel %vm227, %v1854, 0
      %v1989 = vsel %vm227, %v1856, 0
      %v1992 = vsel %vm227, %v1858, 0
      %v1995 = vsel %vm227, %v1860, 0
      %v1998 = vsel %vm227, %v1862, 0
      %v2001 = vsel %vm227, %v1864, 0
      %v2004 = vsel %vm227, %v1866, 0
      %v2007 = vsel %vm227, %v1868, 0
      %v2010 = vsel %vm227, %v1870, 0
      %v2013 = vsel %vm227, %v1872, 0
      %v2016 = vsel %vm227, %v1874, 0
      %v2019 = vsel %vm227, %v1876, 0
      %v2022 = vsel %vm227, %v1878, 0
      %2024 = vmatprep.subr.bf16.mxu0 0
      %2025 = vmatpush1.bf16.msra.mxu0 %v1952
      %2026 = vmatprep.subr.bf16.mxu0 0
      %2027 = vmatpush1.bf16.msra.mxu0 %v1953
      %2028 = vmatprep.subr.bf16.mxu0 0
      %2029 = vmatpush1.bf16.msra.mxu0 %v1954
      %2030 = vmatprep.subr.bf16.mxu0 0
      %2031 = vmatpush1.bf16.msra.mxu0 %v1955
      %2032 = vmatprep.subr.bf16.mxu0 0
      %2033 = vmatpush1.bf16.msra.mxu0 %v1956
      %2034 = vmatprep.subr.bf16.mxu0 0
      %2035 = vmatpush1.bf16.msra.mxu0 %v1957
      %2036 = vmatprep.subr.bf16.mxu0 0
      %2037 = vmatpush1.bf16.msra.mxu0 %v1958
      %2038 = vmatprep.subr.bf16.mxu0 0
      %2039 = vmatpush1.bf16.msra.mxu0 %v1959
      %2040 = vmatprep.subr.bf16.mxu0 0
      %2041 = vmatpush1.bf16.msra.mxu0 %v1960
      %2042 = vmatprep.subr.bf16.mxu0 0
      %2043 = vmatpush1.bf16.msra.mxu0 %v1961
      %2044 = vmatprep.subr.bf16.mxu0 0
      %2045 = vmatpush1.bf16.msra.mxu0 %v1962
      %2046 = vmatprep.subr.bf16.mxu0 0
      %2047 = vmatpush1.bf16.msra.mxu0 %v1963
      %2048 = vmatprep.subr.bf16.mxu0 0
      %2049 = vmatpush1.bf16.msra.mxu0 0
      %2050 = vmatprep.subr.bf16.mxu0 0
      %2051 = vmatpush1.bf16.msra.mxu0 0
      %2052 = vmatprep.subr.bf16.mxu0 0
      %2053 = vmatpush1.bf16.msra.mxu0 0
      %2054 = vmatprep.subr.bf16.mxu0 0
      %2055 = vmatpush1.bf16.msra.mxu0 0
      %2056 = vmatprep.mubr.bf16.mxu0 %v1977
      %2057 = vmatmul.mubr.bf16.gmra.mrb[0].mxu0 %v1847
      %v2058 = vpop.f32.mrb[0].mxu0
      %v2059 = vadd.f32 0.0, %v2058
      %v2060 = vpop.f32.mrb[0].mxu0
      %v2061 = vpop.f32.mrb[0].mxu0
      %v2062 = vadd.f32 0.0, %v2061
      %v2063 = vpop.f32.mrb[0].mxu0
      %2064 = vmatprep.mubr.bf16.mxu0 %v1980
      %2065 = vmatmul.mubr.bf16.gmra.mrb[0].mxu0 %v1849
      %v2066 = vpop.f32.mrb[0].mxu0
      %v2067 = vadd.f32 0.0, %v2066
      %v2068 = vpop.f32.mrb[0].mxu0
      %v2069 = vpop.f32.mrb[0].mxu0
      %v2070 = vadd.f32 0.0, %v2069
      %v2071 = vpop.f32.mrb[0].mxu0
      %2072 = vmatprep.mubr.bf16.mxu0 %v1983
      %2073 = vmatmul.mubr.bf16.gmra.mrb[0].mxu0 %v1851
      %v2074 = vpop.f32.mrb[0].mxu0
      %v2075 = vadd.f32 0.0, %v2074
      %v2076 = vpop.f32.mrb[0].mxu0
      %v2077 = vpop.f32.mrb[0].mxu0
      %v2078 = vadd.f32 0.0, %v2077
      %v2079 = vpop.f32.mrb[0].mxu0
      %2080 = vmatprep.mubr.bf16.mxu0 %v1986
      %2081 = vmatmul.mubr.bf16.gmra.mrb[0].mxu0 %v1853
      %v2082 = vpop.f32.mrb[0].mxu0
      %v2083 = vadd.f32 0.0, %v2082
      %v2084 = vpop.f32.mrb[0].mxu0
      %v2085 = vpop.f32.mrb[0].mxu0
      %v2086 = vadd.f32 0.0, %v2085
      %v2087 = vpop.f32.mrb[0].mxu0
      %2088 = vmatprep.mubr.bf16.mxu0 %v1989
      %2089 = vmatmul.mubr.bf16.gmra.mrb[0].mxu0 %v1855
      %v2090 = vpop.f32.mrb[0].mxu0
      %v2091 = vadd.f32 0.0, %v2090
      %v2092 = vpop.f32.mrb[0].mxu0
      %v2093 = vpop.f32.mrb[0].mxu0
      %v2094 = vadd.f32 0.0, %v2093
      %v2095 = vpop.f32.mrb[0].mxu0
      %2096 = vmatprep.mubr.bf16.mxu0 %v1992
      %2097 = vmatmul.mubr.bf16.gmra.mrb[0].mxu0 %v1857
      %v2098 = vpop.f32.mrb[0].mxu0
      %v2099 = vadd.f32 0.0, %v2098
      %v2100 = vpop.f32.mrb[0].mxu0
      %v2101 = vpop.f32.mrb[0].mxu0
      %v2102 = vadd.f32 0.0, %v2101
      %v2103 = vpop.f32.mrb[0].mxu0
      %2104 = vmatprep.mubr.bf16.mxu0 %v1995
      %2105 = vmatmul.mubr.bf16.gmra.mrb[0].mxu0 %v1859
      %v2106 = vpop.f32.mrb[0].mxu0
      %v2107 = vadd.f32 0.0, %v2106
      %v2108 = vpop.f32.mrb[0].mxu0
      %v2109 = vpop.f32.mrb[0].mxu0
      %v2110 = vadd.f32 0.0, %v2109
      %v2111 = vpop.f32.mrb[0].mxu0
      %2112 = vmatprep.mubr.bf16.mxu0 %v1998
      %2113 = vmatmul.mubr.bf16.gmra.mrb[0].mxu0 %v1861
      %v2114 = vpop.f32.mrb[0].mxu0
      %v2115 = vadd.f32 0.0, %v2114
      %v2116 = vpop.f32.mrb[0].mxu0
      %v2117 = vpop.f32.mrb[0].mxu0
      %v2118 = vadd.f32 0.0, %v2117
      %v2119 = vpop.f32.mrb[0].mxu0
      %2120 = vmatprep.mubr.bf16.mxu0 %v2001
      %2121 = vmatmul.mubr.bf16.gmra.mrb[0].mxu0 %v1863
      %v2122 = vpop.f32.mrb[0].mxu0
      %v2123 = vadd.f32 0.0, %v2122
      %v2124 = vpop.f32.mrb[0].mxu0
      %v2125 = vpop.f32.mrb[0].mxu0
      %v2126 = vadd.f32 0.0, %v2125
      %v2127 = vpop.f32.mrb[0].mxu0
      %2128 = vmatprep.mubr.bf16.mxu0 %v2004
      %2129 = vmatmul.mubr.bf16.gmra.mrb[0].mxu0 %v1865
      %v2130 = vpop.f32.mrb[0].mxu0
      %v2131 = vadd.f32 0.0, %v2130
      %v2132 = vpop.f32.mrb[0].mxu0
      %v2133 = vpop.f32.mrb[0].mxu0
      %v2134 = vadd.f32 0.0, %v2133
      %v2135 = vpop.f32.mrb[0].mxu0
      %2136 = vmatprep.mubr.bf16.mxu0 %v2007
      %2137 = vmatmul.mubr.bf16.gmra.mrb[0].mxu0 %v1867
      %v2138 = vpop.f32.mrb[0].mxu0
      %v2139 = vadd.f32 0.0, %v2138
      %v2140 = vpop.f32.mrb[0].mxu0
      %v2141 = vpop.f32.mrb[0].mxu0
      %v2142 = vadd.f32 0.0, %v2141
      %v2143 = vpop.f32.mrb[0].mxu0
      %2144 = vmatprep.mubr.bf16.mxu0 %v2010
      %2145 = vmatmul.mubr.bf16.gmra.mrb[0].mxu0 %v1869
      %v2146 = vpop.f32.mrb[0].mxu0
      %v2147 = vadd.f32 0.0, %v2146
      %v2148 = vpop.f32.mrb[0].mxu0
      %v2149 = vpop.f32.mrb[0].mxu0
      %v2150 = vadd.f32 0.0, %v2149
      %v2151 = vpop.f32.mrb[0].mxu0
      %2152 = vmatprep.mubr.bf16.mxu0 %v2013
      %2153 = vmatmul.mubr.bf16.gmra.mrb[0].mxu0 %v1871
      %v2154 = vpop.f32.mrb[0].mxu0
      %v2155 = vadd.f32 0.0, %v2154
      %v2156 = vpop.f32.mrb[0].mxu0
      %v2157 = vpop.f32.mrb[0].mxu0
      %v2158 = vadd.f32 0.0, %v2157
      %v2159 = vpop.f32.mrb[0].mxu0
      %2160 = vmatprep.mubr.bf16.mxu0 %v2016
      %2161 = vmatmul.mubr.bf16.gmra.mrb[0].mxu0 %v1873
      %v2162 = vpop.f32.mrb[0].mxu0
      %v2163 = vadd.f32 0.0, %v2162
      %v2164 = vpop.f32.mrb[0].mxu0
      %v2165 = vpop.f32.mrb[0].mxu0
      %v2166 = vadd.f32 0.0, %v2165
      %v2167 = vpop.f32.mrb[0].mxu0
      %2168 = vmatprep.mubr.bf16.mxu0 %v2019
      %2169 = vmatmul.mubr.bf16.gmra.mrb[0].mxu0 %v1875
      %v2170 = vpop.f32.mrb[0].mxu0
      %v2171 = vadd.f32 0.0, %v2170
      %v2172 = vpop.f32.mrb[0].mxu0
      %v2173 = vpop.f32.mrb[0].mxu0
      %v2174 = vadd.f32 0.0, %v2173
      %v2175 = vpop.f32.mrb[0].mxu0
      %2176 = vmatprep.mubr.bf16.mxu0 %v2022
      %2177 = vmatmul.mubr.bf16.gmra.mrb[0].mxu0 %v1877
      %v2178 = vpop.f32.mrb[0].mxu0
      %v2179 = vadd.f32 0.0, %v2178
      %v2180 = vpop.f32.mrb[0].mxu0
      %v2181 = vpop.f32.mrb[0].mxu0
      %v2182 = vadd.f32 0.0, %v2181
      %v2183 = vpop.f32.mrb[0].mxu0
      %2184 = vdwg.mxu0
      %v2185 = vadd.f32 %v1656, %v2059
      %v2186 = vadd.f32 %v1659, %v2062
      %v2187 = vadd.f32 %v1664, %v2067
      %v2188 = vadd.f32 %v1667, %v2070
      %v2189 = vadd.f32 %v1672, %v2075
      %v2190 = vadd.f32 %v1675, %v2078
      %v2191 = vadd.f32 %v1680, %v2083
      %v2192 = vadd.f32 %v1683, %v2086
      %v2193 = vadd.f32 %v1688, %v2091
      %v2194 = vadd.f32 %v1691, %v2094
      %v2195 = vadd.f32 %v1696, %v2099
      %v2196 = vadd.f32 %v1699, %v2102
      %v2197 = vadd.f32 %v1704, %v2107
      %v2198 = vadd.f32 %v1707, %v2110
      %v2199 = vadd.f32 %v1712, %v2115
      %v2200 = vadd.f32 %v1715, %v2118
      %v2201 = vadd.f32 %v1720, %v2123
      %v2202 = vadd.f32 %v1723, %v2126
      %v2203 = vadd.f32 %v1728, %v2131
      %v2204 = vadd.f32 %v1731, %v2134
      %v2205 = vadd.f32 %v1736, %v2139
      %v2206 = vadd.f32 %v1739, %v2142
      %v2207 = vadd.f32 %v1744, %v2147
      %v2208 = vadd.f32 %v1747, %v2150
      %v2209 = vadd.f32 %v1752, %v2155
      %v2210 = vadd.f32 %v1755, %v2158
      %v2211 = vadd.f32 %v1760, %v2163
      %v2212 = vadd.f32 %v1763, %v2166
      %v2213 = vadd.f32 %v1768, %v2171
      %v2214 = vadd.f32 %v1771, %v2174
      %v2215 = vadd.f32 %v1776, %v2179
      %v2216 = vadd.f32 %v1779, %v2182
      %v2217 = vld [vmem:[%s2] sm:$0x1]
      %v2219 = vlaneseq
      %v2220 = vshrl.u32 %v2219, 7
      %v2221 = vsub.s32 0, %v2220
      %v2222 = vrot.slane %v2217, %v2221
      %v2224 = vadd.f32 %v2185, %v2222
      %v2225 = vadd.f32 %v2186, %v2222
      %v2226 = vadd.f32 %v2187, %v2222
      %v2227 = vadd.f32 %v2188, %v2222
      %v2228 = vadd.f32 %v2189, %v2222
      %v2229 = vadd.f32 %v2190, %v2222
      %v2230 = vadd.f32 %v2191, %v2222
      %v2231 = vadd.f32 %v2192, %v2222
      %v2232 = vadd.f32 %v2193, %v2222
      %v2233 = vadd.f32 %v2194, %v2222
      %v2234 = vadd.f32 %v2195, %v2222
      %v2235 = vadd.f32 %v2196, %v2222
      %v2236 = vadd.f32 %v2197, %v2222
      %v2237 = vadd.f32 %v2198, %v2222
      %v2238 = vadd.f32 %v2199, %v2222
      %v2239 = vadd.f32 %v2200, %v2222
      %v2240 = vadd.f32 %v2201, %v2222
      %v2241 = vadd.f32 %v2202, %v2222
      %v2242 = vadd.f32 %v2203, %v2222
      %v2243 = vadd.f32 %v2204, %v2222
      %v2244 = vadd.f32 %v2205, %v2222
      %v2245 = vadd.f32 %v2206, %v2222
      %v2246 = vadd.f32 %v2207, %v2222
      %v2247 = vadd.f32 %v2208, %v2222
      %v2248 = vadd.f32 %v2209, %v2222
      %v2249 = vadd.f32 %v2210, %v2222
      %v2250 = vadd.f32 %v2211, %v2222
      %v2251 = vadd.f32 %v2212, %v2222
      %v2252 = vadd.f32 %v2213, %v2222
      %v2253 = vadd.f32 %v2214, %v2222
      %v2254 = vadd.f32 %v2215, %v2222
      %v2255 = vadd.f32 %v2216, %v2222
      %v2256 = vmax.f32 %v2224, 0.0
      %v2257 = vmax.f32 %v2225, 0.0
      %v2258 = vmax.f32 %v2226, 0.0
      %v2259 = vmax.f32 %v2227, 0.0
      %v2260 = vmax.f32 %v2228, 0.0
      %v2261 = vmax.f32 %v2229, 0.0
      %v2262 = vmax.f32 %v2230, 0.0
      %v2263 = vmax.f32 %v2231, 0.0
      %v2264 = vmax.f32 %v2232, 0.0
      %v2265 = vmax.f32 %v2233, 0.0
      %v2266 = vmax.f32 %v2234, 0.0
      %v2267 = vmax.f32 %v2235, 0.0
      %v2268 = vmax.f32 %v2236, 0.0
      %v2269 = vmax.f32 %v2237, 0.0
      %v2270 = vmax.f32 %v2238, 0.0
      %v2271 = vmax.f32 %v2239, 0.0
      %v2272 = vmax.f32 %v2240, 0.0
      %v2273 = vmax.f32 %v2241, 0.0
      %v2274 = vmax.f32 %v2242, 0.0
      %v2275 = vmax.f32 %v2243, 0.0
      %v2276 = vmax.f32 %v2244, 0.0
      %v2277 = vmax.f32 %v2245, 0.0
      %v2278 = vmax.f32 %v2246, 0.0
      %v2279 = vmax.f32 %v2247, 0.0
      %v2280 = vmax.f32 %v2248, 0.0
      %v2281 = vmax.f32 %v2249, 0.0
      %v2282 = vmax.f32 %v2250, 0.0
      %v2283 = vmax.f32 %v2251, 0.0
      %v2284 = vmax.f32 %v2252, 0.0
      %v2285 = vmax.f32 %v2253, 0.0
      %v2286 = vmax.f32 %v2254, 0.0
      %v2287 = vmax.f32 %v2255, 0.0
      %2320 = vrot.lane.b32.xlu0 %v2256, 64
      %v2321 = vpop.permute.xlu0 %2320
      %2322 = vrot.lane.b32.xlu0 %v2257, 64
      %v2323 = vpop.permute.xlu0 %2322
      %2324 = vrot.lane.b32.xlu0 %v2258, 64
      %v2325 = vpop.permute.xlu0 %2324
      %2326 = vrot.lane.b32.xlu0 %v2259, 64
      %v2327 = vpop.permute.xlu0 %2326
      %2328 = vrot.lane.b32.xlu0 %v2260, 64
      %v2329 = vpop.permute.xlu0 %2328
      %2330 = vrot.lane.b32.xlu0 %v2261, 64
      %v2331 = vpop.permute.xlu0 %2330
      %2332 = vrot.lane.b32.xlu0 %v2262, 64
      %v2333 = vpop.permute.xlu0 %2332
      %2334 = vrot.lane.b32.xlu0 %v2263, 64
      %v2335 = vpop.permute.xlu0 %2334
      %2336 = vrot.lane.b32.xlu0 %v2264, 64
      %v2337 = vpop.permute.xlu0 %2336
      %2338 = vrot.lane.b32.xlu0 %v2265, 64
      %v2339 = vpop.permute.xlu0 %2338
      %2340 = vrot.lane.b32.xlu0 %v2266, 64
      %v2341 = vpop.permute.xlu0 %2340
      %2342 = vrot.lane.b32.xlu0 %v2267, 64
      %v2343 = vpop.permute.xlu0 %2342
      %2344 = vrot.lane.b32.xlu0 %v2268, 64
      %v2345 = vpop.permute.xlu0 %2344
      %2346 = vrot.lane.b32.xlu0 %v2269, 64
      %v2347 = vpop.permute.xlu0 %2346
      %2348 = vrot.lane.b32.xlu0 %v2270, 64
      %v2349 = vpop.permute.xlu0 %2348
      %2350 = vrot.lane.b32.xlu0 %v2271, 64
      %v2351 = vpop.permute.xlu0 %2350
      %2352 = vrot.lane.b32.xlu0 %v2272, 64
      %v2353 = vpop.permute.xlu0 %2352
      %2354 = vrot.lane.b32.xlu0 %v2273, 64
      %v2355 = vpop.permute.xlu0 %2354
      %2356 = vrot.lane.b32.xlu0 %v2274, 64
      %v2357 = vpop.permute.xlu0 %2356
      %2358 = vrot.lane.b32.xlu0 %v2275, 64
      %v2359 = vpop.permute.xlu0 %2358
      %2360 = vrot.lane.b32.xlu0 %v2276, 64
      %v2361 = vpop.permute.xlu0 %2360
      %2362 = vrot.lane.b32.xlu0 %v2277, 64
      %v2363 = vpop.permute.xlu0 %2362
      %2364 = vrot.lane.b32.xlu0 %v2278, 64
      %v2365 = vpop.permute.xlu0 %2364
      %2366 = vrot.lane.b32.xlu0 %v2279, 64
      %v2367 = vpop.permute.xlu0 %2366
      %2368 = vrot.lane.b32.xlu0 %v2280, 64
      %v2369 = vpop.permute.xlu0 %2368
      %2370 = vrot.lane.b32.xlu0 %v2281, 64
      %v2371 = vpop.permute.xlu0 %2370
      %2372 = vrot.lane.b32.xlu0 %v2282, 64
      %v2373 = vpop.permute.xlu0 %2372
      %2374 = vrot.lane.b32.xlu0 %v2283, 64
      %v2375 = vpop.permute.xlu0 %2374
      %2376 = vrot.lane.b32.xlu0 %v2284, 64
      %v2377 = vpop.permute.xlu0 %2376
      %2378 = vrot.lane.b32.xlu0 %v2285, 64
      %v2379 = vpop.permute.xlu0 %2378
      %2380 = vrot.lane.b32.xlu0 %v2286, 64
      %v2381 = vpop.permute.xlu0 %2380
      %2382 = vrot.lane.b32.xlu0 %v2287, 64
      %v2383 = vpop.permute.xlu0 %2382
      %2416 = vst.msk [vmem:[%s236] sm:$0xff] %vm462, %v2321
      %2417 = vst.msk [vmem:[%s236 + $0x10] sm:$0xff] %vm462, %v2323
      %2418 = vst.msk [vmem:[%s236 + $0x20] sm:$0xff] %vm462, %v2325
      %2419 = vst.msk [vmem:[%s236 + $0x30] sm:$0xff] %vm462, %v2327
      %2420 = vst.msk [vmem:[%s236 + $0x40] sm:$0xff] %vm462, %v2329
      %2421 = vst.msk [vmem:[%s236 + $0x50] sm:$0xff] %vm462, %v2331
      %2422 = vst.msk [vmem:[%s236 + $0x60] sm:$0xff] %vm462, %v2333
      %2423 = vst.msk [vmem:[%s236 + $0x70] sm:$0xff] %vm462, %v2335
      %2424 = vst.msk [vmem:[%s236 + $0x80] sm:$0xff] %vm462, %v2337
      %2425 = vst.msk [vmem:[%s236 + $0x90] sm:$0xff] %vm462, %v2339
      %2426 = vst.msk [vmem:[%s236 + $0xa0] sm:$0xff] %vm462, %v2341
      %2427 = vst.msk [vmem:[%s236 + $0xb0] sm:$0xff] %vm462, %v2343
      %2428 = vst.msk [vmem:[%s236 + $0xc0] sm:$0xff] %vm462, %v2345
      %2429 = vst.msk [vmem:[%s236 + $0xd0] sm:$0xff] %vm462, %v2347
      %2430 = vst.msk [vmem:[%s236 + $0xe0] sm:$0xff] %vm462, %v2349
      %2431 = vst.msk [vmem:[%s236 + $0xf0] sm:$0xff] %vm462, %v2351
      %2432 = vst.msk [vmem:[%s236 + $0x100] sm:$0xff] %vm462, %v2353
      %2433 = vst.msk [vmem:[%s236 + $0x110] sm:$0xff] %vm462, %v2355
      %2434 = vst.msk [vmem:[%s236 + $0x120] sm:$0xff] %vm462, %v2357
      %2435 = vst.msk [vmem:[%s236 + $0x130] sm:$0xff] %vm462, %v2359
      %2436 = vst.msk [vmem:[%s236 + $0x140] sm:$0xff] %vm462, %v2361
      %2437 = vst.msk [vmem:[%s236 + $0x150] sm:$0xff] %vm462, %v2363
      %2438 = vst.msk [vmem:[%s236 + $0x160] sm:$0xff] %vm462, %v2365
      %2439 = vst.msk [vmem:[%s236 + $0x170] sm:$0xff] %vm462, %v2367
      %2440 = vst.msk [vmem:[%s236 + $0x180] sm:$0xff] %vm462, %v2369
      %2441 = vst.msk [vmem:[%s236 + $0x190] sm:$0xff] %vm462, %v2371
      %2442 = vst.msk [vmem:[%s236 + $0x1a0] sm:$0xff] %vm462, %v2373
      %2443 = vst.msk [vmem:[%s236 + $0x1b0] sm:$0xff] %vm462, %v2375
      %2444 = vst.msk [vmem:[%s236 + $0x1c0] sm:$0xff] %vm462, %v2377
      %2445 = vst.msk [vmem:[%s236 + $0x1d0] sm:$0xff] %vm462, %v2379
      %2446 = vst.msk [vmem:[%s236 + $0x1e0] sm:$0xff] %vm462, %v2381
      %2447 = vst.msk [vmem:[%s236 + $0x1f0] sm:$0xff] %vm462, %v2383
      %v2448 = vld [vmem:[%s236] sm:$0xff]
      %v2449 = vld [vmem:[%s236 + $0x10] sm:$0x7f]
      %v2450 = vld [vmem:[%s236 + $0x20] sm:$0xff]
      %v2451 = vld [vmem:[%s236 + $0x30] sm:$0x7f]
      %v2452 = vld [vmem:[%s236 + $0x40] sm:$0xff]
      %v2453 = vld [vmem:[%s236 + $0x50] sm:$0x7f]
      %v2454 = vld [vmem:[%s236 + $0x60] sm:$0xff]
      %v2455 = vld [vmem:[%s236 + $0x70] sm:$0x7f]
      %v2456 = vld [vmem:[%s236 + $0x80] sm:$0xff]
      %v2457 = vld [vmem:[%s236 + $0x90] sm:$0x7f]
      %v2458 = vld [vmem:[%s236 + $0xa0] sm:$0xff]
      %v2459 = vld [vmem:[%s236 + $0xb0] sm:$0x7f]
      %v2460 = vld [vmem:[%s236 + $0xc0] sm:$0xff]
      %v2461 = vld [vmem:[%s236 + $0xd0] sm:$0x7f]
      %v2462 = vld [vmem:[%s236 + $0xe0] sm:$0xff]
      %v2463 = vld [vmem:[%s236 + $0xf0] sm:$0x7f]
      %v2464 = vld [vmem:[%s236 + $0x100] sm:$0xff]
      %v2465 = vld [vmem:[%s236 + $0x110] sm:$0x7f]
      %v2466 = vld [vmem:[%s236 + $0x120] sm:$0xff]
      %v2467 = vld [vmem:[%s236 + $0x130] sm:$0x7f]
      %v2468 = vld [vmem:[%s236 + $0x140] sm:$0xff]
      %v2469 = vld [vmem:[%s236 + $0x150] sm:$0x7f]
      %v2470 = vld [vmem:[%s236 + $0x160] sm:$0xff]
      %v2471 = vld [vmem:[%s236 + $0x170] sm:$0x7f]
      %v2472 = vld [vmem:[%s236 + $0x180] sm:$0xff]
      %v2473 = vld [vmem:[%s236 + $0x190] sm:$0x7f]
      %v2474 = vld [vmem:[%s236 + $0x1a0] sm:$0xff]
      %v2475 = vld [vmem:[%s236 + $0x1b0] sm:$0x7f]
      %v2476 = vld [vmem:[%s236 + $0x1c0] sm:$0xff]
      %v2477 = vld [vmem:[%s236 + $0x1d0] sm:$0x7f]
      %v2478 = vld [vmem:[%s236 + $0x1e0] sm:$0xff]
      %v2479 = vld [vmem:[%s236 + $0x1f0] sm:$0x7f]
      %v2512 = vrot.slane %v2448, 7
      %v2513 = vrot.slane %v2449, 7
      %v2514 = vsel %vm559, %v2512, %v2513
      %v2515 = vrot.slane %v2450, 7
      %v2516 = vrot.slane %v2451, 7
      %v2517 = vsel %vm559, %v2515, %v2516
      %v2518 = vrot.slane %v2452, 7
      %v2519 = vrot.slane %v2453, 7
      %v2520 = vsel %vm559, %v2518, %v2519
      %v2521 = vrot.slane %v2454, 7
      %v2522 = vrot.slane %v2455, 7
      %v2523 = vsel %vm559, %v2521, %v2522
      %v2524 = vrot.slane %v2456, 7
      %v2525 = vrot.slane %v2457, 7
      %v2526 = vsel %vm559, %v2524, %v2525
      %v2527 = vrot.slane %v2458, 7
      %v2528 = vrot.slane %v2459, 7
      %v2529 = vsel %vm559, %v2527, %v2528
      %v2530 = vrot.slane %v2460, 7
      %v2531 = vrot.slane %v2461, 7
      %v2532 = vsel %vm559, %v2530, %v2531
      %v2533 = vrot.slane %v2462, 7
      %v2534 = vrot.slane %v2463, 7
      %v2535 = vsel %vm559, %v2533, %v2534
      %v2536 = vrot.slane %v2464, 7
      %v2537 = vrot.slane %v2465, 7
      %v2538 = vsel %vm559, %v2536, %v2537
      %v2539 = vrot.slane %v2466, 7
      %v2540 = vrot.slane %v2467, 7
      %v2541 = vsel %vm559, %v2539, %v2540
      %v2542 = vrot.slane %v2468, 7
      %v2543 = vrot.slane %v2469, 7
      %v2544 = vsel %vm559, %v2542, %v2543
      %v2545 = vrot.slane %v2470, 7
      %v2546 = vrot.slane %v2471, 7
      %v2547 = vsel %vm559, %v2545, %v2546
      %v2548 = vrot.slane %v2472, 7
      %v2549 = vrot.slane %v2473, 7
      %v2550 = vsel %vm559, %v2548, %v2549
      %v2551 = vrot.slane %v2474, 7
      %v2552 = vrot.slane %v2475, 7
      %v2553 = vsel %vm559, %v2551, %v2552
      %v2554 = vrot.slane %v2476, 7
      %v2555 = vrot.slane %v2477, 7
      %v2556 = vsel %vm559, %v2554, %v2555
      %v2557 = vrot.slane %v2478, 7
      %v2558 = vrot.slane %v2479, 7
      %v2559 = vsel %vm559, %v2557, %v2558
      %2560 = vrot.lane.b32.xlu0 %v2512, 64
      %v2561 = vpop.permute.xlu0 %2560
      %2562 = vrot.lane.b32.xlu0 %v2514, 64
      %v2563 = vpop.permute.xlu0 %2562
      %2564 = vrot.lane.b32.xlu0 %v2515, 64
      %v2565 = vpop.permute.xlu0 %2564
      %2566 = vrot.lane.b32.xlu0 %v2517, 64
      %v2567 = vpop.permute.xlu0 %2566
      %2568 = vrot.lane.b32.xlu0 %v2518, 64
      %v2569 = vpop.permute.xlu0 %2568
      %2570 = vrot.lane.b32.xlu0 %v2520, 64
      %v2571 = vpop.permute.xlu0 %2570
      %2572 = vrot.lane.b32.xlu0 %v2521, 64
      %v2573 = vpop.permute.xlu0 %2572
      %2574 = vrot.lane.b32.xlu0 %v2523, 64
      %v2575 = vpop.permute.xlu0 %2574
      %2576 = vrot.lane.b32.xlu0 %v2524, 64
      %v2577 = vpop.permute.xlu0 %2576
      %2578 = vrot.lane.b32.xlu0 %v2526, 64
      %v2579 = vpop.permute.xlu0 %2578
      %2580 = vrot.lane.b32.xlu0 %v2527, 64
      %v2581 = vpop.permute.xlu0 %2580
      %2582 = vrot.lane.b32.xlu0 %v2529, 64
      %v2583 = vpop.permute.xlu0 %2582
      %2584 = vrot.lane.b32.xlu0 %v2530, 64
      %v2585 = vpop.permute.xlu0 %2584
      %2586 = vrot.lane.b32.xlu0 %v2532, 64
      %v2587 = vpop.permute.xlu0 %2586
      %2588 = vrot.lane.b32.xlu0 %v2533, 64
      %v2589 = vpop.permute.xlu0 %2588
      %2590 = vrot.lane.b32.xlu0 %v2535, 64
      %v2591 = vpop.permute.xlu0 %2590
      %2592 = vrot.lane.b32.xlu0 %v2536, 64
      %v2593 = vpop.permute.xlu0 %2592
      %2594 = vrot.lane.b32.xlu0 %v2538, 64
      %v2595 = vpop.permute.xlu0 %2594
      %2596 = vrot.lane.b32.xlu0 %v2539, 64
      %v2597 = vpop.permute.xlu0 %2596
      %2598 = vrot.lane.b32.xlu0 %v2541, 64
      %v2599 = vpop.permute.xlu0 %2598
      %2600 = vrot.lane.b32.xlu0 %v2542, 64
      %v2601 = vpop.permute.xlu0 %2600
      %2602 = vrot.lane.b32.xlu0 %v2544, 64
      %v2603 = vpop.permute.xlu0 %2602
      %2604 = vrot.lane.b32.xlu0 %v2545, 64
      %v2605 = vpop.permute.xlu0 %2604
      %2606 = vrot.lane.b32.xlu0 %v2547, 64
      %v2607 = vpop.permute.xlu0 %2606
      %2608 = vrot.lane.b32.xlu0 %v2548, 64
      %v2609 = vpop.permute.xlu0 %2608
      %2610 = vrot.lane.b32.xlu0 %v2550, 64
      %v2611 = vpop.permute.xlu0 %2610
      %2612 = vrot.lane.b32.xlu0 %v2551, 64
      %v2613 = vpop.permute.xlu0 %2612
      %2614 = vrot.lane.b32.xlu0 %v2553, 64
      %v2615 = vpop.permute.xlu0 %2614
      %2616 = vrot.lane.b32.xlu0 %v2554, 64
      %v2617 = vpop.permute.xlu0 %2616
      %2618 = vrot.lane.b32.xlu0 %v2556, 64
      %v2619 = vpop.permute.xlu0 %2618
      %2620 = vrot.lane.b32.xlu0 %v2557, 64
      %v2621 = vpop.permute.xlu0 %2620
      %2622 = vrot.lane.b32.xlu0 %v2559, 64
      %v2623 = vpop.permute.xlu0 %2622
      %2656 = vst.msk [vmem:[%s236] sm:$0xfe] %vm704, %v2561
      %2657 = vst.msk [vmem:[%s236 + $0x10] sm:$0xff] %vm227, %v2563
      %2658 = vst.msk [vmem:[%s236 + $0x20] sm:$0xfe] %vm704, %v2565
      %2659 = vst.msk [vmem:[%s236 + $0x30] sm:$0xff] %vm227, %v2567
      %2660 = vst.msk [vmem:[%s236 + $0x40] sm:$0xfe] %vm704, %v2569
      %2661 = vst.msk [vmem:[%s236 + $0x50] sm:$0xff] %vm227, %v2571
      %2662 = vst.msk [vmem:[%s236 + $0x60] sm:$0xfe] %vm704, %v2573
      %2663 = vst.msk [vmem:[%s236 + $0x70] sm:$0xff] %vm227, %v2575
      %2664 = vst.msk [vmem:[%s236 + $0x80] sm:$0xfe] %vm704, %v2577
      %2665 = vst.msk [vmem:[%s236 + $0x90] sm:$0xff] %vm227, %v2579
      %2666 = vst.msk [vmem:[%s236 + $0xa0] sm:$0xfe] %vm704, %v2581
      %2667 = vst.msk [vmem:[%s236 + $0xb0] sm:$0xff] %vm227, %v2583
      %2668 = vst.msk [vmem:[%s236 + $0xc0] sm:$0xfe] %vm704, %v2585
      %2669 = vst.msk [vmem:[%s236 + $0xd0] sm:$0xff] %vm227, %v2587
      %2670 = vst.msk [vmem:[%s236 + $0xe0] sm:$0xfe] %vm704, %v2589
      %2671 = vst.msk [vmem:[%s236 + $0xf0] sm:$0xff] %vm227, %v2591
      %2672 = vst.msk [vmem:[%s236 + $0x100] sm:$0xfe] %vm704, %v2593
      %2673 = vst.msk [vmem:[%s236 + $0x110] sm:$0xff] %vm227, %v2595
      %2674 = vst.msk [vmem:[%s236 + $0x120] sm:$0xfe] %vm704, %v2597
      %2675 = vst.msk [vmem:[%s236 + $0x130] sm:$0xff] %vm227, %v2599
      %2676 = vst.msk [vmem:[%s236 + $0x140] sm:$0xfe] %vm704, %v2601
      %2677 = vst.msk [vmem:[%s236 + $0x150] sm:$0xff] %vm227, %v2603
      %2678 = vst.msk [vmem:[%s236 + $0x160] sm:$0xfe] %vm704, %v2605
      %2679 = vst.msk [vmem:[%s236 + $0x170] sm:$0xff] %vm227, %v2607
      %2680 = vst.msk [vmem:[%s236 + $0x180] sm:$0xfe] %vm704, %v2609
      %2681 = vst.msk [vmem:[%s236 + $0x190] sm:$0xff] %vm227, %v2611
      %2682 = vst.msk [vmem:[%s236 + $0x1a0] sm:$0xfe] %vm704, %v2613
      %2683 = vst.msk [vmem:[%s236 + $0x1b0] sm:$0xff] %vm227, %v2615
      %2684 = vst.msk [vmem:[%s236 + $0x1c0] sm:$0xfe] %vm704, %v2617
      %2685 = vst.msk [vmem:[%s236 + $0x1d0] sm:$0xff] %vm227, %v2619
      %2686 = vst.msk [vmem:[%s236 + $0x1e0] sm:$0xfe] %vm704, %v2621
      %2687 = vst.msk [vmem:[%s236 + $0x1f0] sm:$0xff] %vm227, %v2623
      %v2688 = vld [vmem:[%s236] sm:$0xfe]
      %v2689 = vld [vmem:[%s236 + $0x10] sm:$0xff]
      %v2690 = vld [vmem:[%s236 + $0x20] sm:$0xfe]
      %v2691 = vld [vmem:[%s236 + $0x30] sm:$0xff]
      %v2692 = vld [vmem:[%s236 + $0x40] sm:$0xfe]
      %v2693 = vld [vmem:[%s236 + $0x50] sm:$0xff]
      %v2694 = vld [vmem:[%s236 + $0x60] sm:$0xfe]
      %v2695 = vld [vmem:[%s236 + $0x70] sm:$0xff]
      %v2696 = vld [vmem:[%s236 + $0x80] sm:$0xfe]
      %v2697 = vld [vmem:[%s236 + $0x90] sm:$0xff]
      %v2698 = vld [vmem:[%s236 + $0xa0] sm:$0xfe]
      %v2699 = vld [vmem:[%s236 + $0xb0] sm:$0xff]
      %v2700 = vld [vmem:[%s236 + $0xc0] sm:$0xfe]
      %v2701 = vld [vmem:[%s236 + $0xd0] sm:$0xff]
      %v2702 = vld [vmem:[%s236 + $0xe0] sm:$0xfe]
      %v2703 = vld [vmem:[%s236 + $0xf0] sm:$0xff]
      %v2704 = vld [vmem:[%s236 + $0x100] sm:$0xfe]
      %v2705 = vld [vmem:[%s236 + $0x110] sm:$0xff]
      %v2706 = vld [vmem:[%s236 + $0x120] sm:$0xfe]
      %v2707 = vld [vmem:[%s236 + $0x130] sm:$0xff]
      %v2708 = vld [vmem:[%s236 + $0x140] sm:$0xfe]
      %v2709 = vld [vmem:[%s236 + $0x150] sm:$0xff]
      %v2710 = vld [vmem:[%s236 + $0x160] sm:$0xfe]
      %v2711 = vld [vmem:[%s236 + $0x170] sm:$0xff]
      %v2712 = vld [vmem:[%s236 + $0x180] sm:$0xfe]
      %v2713 = vld [vmem:[%s236 + $0x190] sm:$0xff]
      %v2714 = vld [vmem:[%s236 + $0x1a0] sm:$0xfe]
      %v2715 = vld [vmem:[%s236 + $0x1b0] sm:$0xff]
      %v2716 = vld [vmem:[%s236 + $0x1c0] sm:$0xfe]
      %v2717 = vld [vmem:[%s236 + $0x1d0] sm:$0xff]
      %v2718 = vld [vmem:[%s236 + $0x1e0] sm:$0xfe]
      %v2719 = vld [vmem:[%s236 + $0x1f0] sm:$0xff]
      %v2752 = vrot.slane %v2688, 1
      %v2753 = vrot.slane %v2689, 1
      %v2754 = vsel %vm801, %v2752, %v2753
      %v2755 = vrot.slane %v2690, 1
      %v2756 = vrot.slane %v2691, 1
      %v2757 = vsel %vm801, %v2755, %v2756
      %v2758 = vrot.slane %v2692, 1
      %v2759 = vrot.slane %v2693, 1
      %v2760 = vsel %vm801, %v2758, %v2759
      %v2761 = vrot.slane %v2694, 1
      %v2762 = vrot.slane %v2695, 1
      %v2763 = vsel %vm801, %v2761, %v2762
      %v2764 = vrot.slane %v2696, 1
      %v2765 = vrot.slane %v2697, 1
      %v2766 = vsel %vm801, %v2764, %v2765
      %v2767 = vrot.slane %v2698, 1
      %v2768 = vrot.slane %v2699, 1
      %v2769 = vsel %vm801, %v2767, %v2768
      %v2770 = vrot.slane %v2700, 1
      %v2771 = vrot.slane %v2701, 1
      %v2772 = vsel %vm801, %v2770, %v2771
      %v2773 = vrot.slane %v2702, 1
      %v2774 = vrot.slane %v2703, 1
      %v2775 = vsel %vm801, %v2773, %v2774
      %v2776 = vrot.slane %v2704, 1
      %v2777 = vrot.slane %v2705, 1
      %v2778 = vsel %vm801, %v2776, %v2777
      %v2779 = vrot.slane %v2706, 1
      %v2780 = vrot.slane %v2707, 1
      %v2781 = vsel %vm801, %v2779, %v2780
      %v2782 = vrot.slane %v2708, 1
      %v2783 = vrot.slane %v2709, 1
      %v2784 = vsel %vm801, %v2782, %v2783
      %v2785 = vrot.slane %v2710, 1
      %v2786 = vrot.slane %v2711, 1
      %v2787 = vsel %vm801, %v2785, %v2786
      %v2788 = vrot.slane %v2712, 1
      %v2789 = vrot.slane %v2713, 1
      %v2790 = vsel %vm801, %v2788, %v2789
      %v2791 = vrot.slane %v2714, 1
      %v2792 = vrot.slane %v2715, 1
      %v2793 = vsel %vm801, %v2791, %v2792
      %v2794 = vrot.slane %v2716, 1
      %v2795 = vrot.slane %v2717, 1
      %v2796 = vsel %vm801, %v2794, %v2795
      %v2797 = vrot.slane %v2718, 1
      %v2798 = vrot.slane %v2719, 1
      %v2799 = vsel %vm801, %v2797, %v2798
      %2800 = vrot.lane.b32.xlu0 %v2754, 64
      %v2801 = vpop.permute.xlu0 %2800
      %2802 = vrot.lane.b32.xlu0 %v2753, 64
      %v2803 = vpop.permute.xlu0 %2802
      %2804 = vrot.lane.b32.xlu0 %v2757, 64
      %v2805 = vpop.permute.xlu0 %2804
      %2806 = vrot.lane.b32.xlu0 %v2756, 64
      %v2807 = vpop.permute.xlu0 %2806
      %2808 = vrot.lane.b32.xlu0 %v2760, 64
      %v2809 = vpop.permute.xlu0 %2808
      %2810 = vrot.lane.b32.xlu0 %v2759, 64
      %v2811 = vpop.permute.xlu0 %2810
      %2812 = vrot.lane.b32.xlu0 %v2763, 64
      %v2813 = vpop.permute.xlu0 %2812
      %2814 = vrot.lane.b32.xlu0 %v2762, 64
      %v2815 = vpop.permute.xlu0 %2814
      %2816 = vrot.lane.b32.xlu0 %v2766, 64
      %v2817 = vpop.permute.xlu0 %2816
      %2818 = vrot.lane.b32.xlu0 %v2765, 64
      %v2819 = vpop.permute.xlu0 %2818
      %2820 = vrot.lane.b32.xlu0 %v2769, 64
      %v2821 = vpop.permute.xlu0 %2820
      %2822 = vrot.lane.b32.xlu0 %v2768, 64
      %v2823 = vpop.permute.xlu0 %2822
      %2824 = vrot.lane.b32.xlu0 %v2772, 64
      %v2825 = vpop.permute.xlu0 %2824
      %2826 = vrot.lane.b32.xlu0 %v2771, 64
      %v2827 = vpop.permute.xlu0 %2826
      %2828 = vrot.lane.b32.xlu0 %v2775, 64
      %v2829 = vpop.permute.xlu0 %2828
      %2830 = vrot.lane.b32.xlu0 %v2774, 64
      %v2831 = vpop.permute.xlu0 %2830
      %2832 = vrot.lane.b32.xlu0 %v2778, 64
      %v2833 = vpop.permute.xlu0 %2832
      %2834 = vrot.lane.b32.xlu0 %v2777, 64
      %v2835 = vpop.permute.xlu0 %2834
      %2836 = vrot.lane.b32.xlu0 %v2781, 64
      %v2837 = vpop.permute.xlu0 %2836
      %2838 = vrot.lane.b32.xlu0 %v2780, 64
      %v2839 = vpop.permute.xlu0 %2838
      %2840 = vrot.lane.b32.xlu0 %v2784, 64
      %v2841 = vpop.permute.xlu0 %2840
      %2842 = vrot.lane.b32.xlu0 %v2783, 64
      %v2843 = vpop.permute.xlu0 %2842
      %2844 = vrot.lane.b32.xlu0 %v2787, 64
      %v2845 = vpop.permute.xlu0 %2844
      %2846 = vrot.lane.b32.xlu0 %v2786, 64
      %v2847 = vpop.permute.xlu0 %2846
      %2848 = vrot.lane.b32.xlu0 %v2790, 64
      %v2849 = vpop.permute.xlu0 %2848
      %2850 = vrot.lane.b32.xlu0 %v2789, 64
      %v2851 = vpop.permute.xlu0 %2850
      %2852 = vrot.lane.b32.xlu0 %v2793, 64
      %v2853 = vpop.permute.xlu0 %2852
      %2854 = vrot.lane.b32.xlu0 %v2792, 64
      %v2855 = vpop.permute.xlu0 %2854
      %2856 = vrot.lane.b32.xlu0 %v2796, 64
      %v2857 = vpop.permute.xlu0 %2856
      %2858 = vrot.lane.b32.xlu0 %v2795, 64
      %v2859 = vpop.permute.xlu0 %2858
      %2860 = vrot.lane.b32.xlu0 %v2799, 64
      %v2861 = vpop.permute.xlu0 %2860
      %2862 = vrot.lane.b32.xlu0 %v2798, 64
      %v2863 = vpop.permute.xlu0 %2862
      %2896 = vst.msk [vmem:[%s236 + $0x8] sm:$0xff] %vm227, %v2801
      %2897 = vst.msk [vmem:[%s236 + $0x18] sm:$0x7f] %vm947, %v2803
      %2898 = vst.msk [vmem:[%s236 + $0x28] sm:$0xff] %vm227, %v2805
      %2899 = vst.msk [vmem:[%s236 + $0x38] sm:$0x7f] %vm947, %v2807
      %2900 = vst.msk [vmem:[%s236 + $0x48] sm:$0xff] %vm227, %v2809
      %2901 = vst.msk [vmem:[%s236 + $0x58] sm:$0x7f] %vm947, %v2811
      %2902 = vst.msk [vmem:[%s236 + $0x68] sm:$0xff] %vm227, %v2813
      %2903 = vst.msk [vmem:[%s236 + $0x78] sm:$0x7f] %vm947, %v2815
      %2904 = vst.msk [vmem:[%s236 + $0x88] sm:$0xff] %vm227, %v2817
      %2905 = vst.msk [vmem:[%s236 + $0x98] sm:$0x7f] %vm947, %v2819
      %2906 = vst.msk [vmem:[%s236 + $0xa8] sm:$0xff] %vm227, %v2821
      %2907 = vst.msk [vmem:[%s236 + $0xb8] sm:$0x7f] %vm947, %v2823
      %2908 = vst.msk [vmem:[%s236 + $0xc8] sm:$0xff] %vm227, %v2825
      %2909 = vst.msk [vmem:[%s236 + $0xd8] sm:$0x7f] %vm947, %v2827
      %2910 = vst.msk [vmem:[%s236 + $0xe8] sm:$0xff] %vm227, %v2829
      %2911 = vst.msk [vmem:[%s236 + $0xf8] sm:$0x7f] %vm947, %v2831
      %2912 = vst.msk [vmem:[%s236 + $0x108] sm:$0xff] %vm227, %v2833
      %2913 = vst.msk [vmem:[%s236 + $0x118] sm:$0x7f] %vm947, %v2835
      %2914 = vst.msk [vmem:[%s236 + $0x128] sm:$0xff] %vm227, %v2837
      %2915 = vst.msk [vmem:[%s236 + $0x138] sm:$0x7f] %vm947, %v2839
      %2916 = vst.msk [vmem:[%s236 + $0x148] sm:$0xff] %vm227, %v2841
      %2917 = vst.msk [vmem:[%s236 + $0x158] sm:$0x7f] %vm947, %v2843
      %2918 = vst.msk [vmem:[%s236 + $0x168] sm:$0xff] %vm227, %v2845
      %2919 = vst.msk [vmem:[%s236 + $0x178] sm:$0x7f] %vm947, %v2847
      %2920 = vst.msk [vmem:[%s236 + $0x188] sm:$0xff] %vm227, %v2849
      %2921 = vst.msk [vmem:[%s236 + $0x198] sm:$0x7f] %vm947, %v2851
      %2922 = vst.msk [vmem:[%s236 + $0x1a8] sm:$0xff] %vm227, %v2853
      %2923 = vst.msk [vmem:[%s236 + $0x1b8] sm:$0x7f] %vm947, %v2855
      %2924 = vst.msk [vmem:[%s236 + $0x1c8] sm:$0xff] %vm227, %v2857
      %2925 = vst.msk [vmem:[%s236 + $0x1d8] sm:$0x7f] %vm947, %v2859
      %2926 = vst.msk [vmem:[%s236 + $0x1e8] sm:$0xff] %vm227, %v2861
      %2927 = vst.msk [vmem:[%s236 + $0x1f8] sm:$0x7f] %vm947, %v2863
      %v2928 = vld [vmem:[#allocation2] sm:$0xff]
      %v2929 = vld [vmem:[#allocation2 + $0x8] sm:$0xff]
      %v2930 = vld [vmem:[#allocation2 + $0x10] sm:$0xff]
      %v2931 = vld [vmem:[#allocation2 + $0x18] sm:$0xff]
      %v2932 = vld [vmem:[#allocation2 + $0x20] sm:$0xff]
      %v2933 = vld [vmem:[#allocation2 + $0x28] sm:$0xff]
      %v2934 = vld [vmem:[#allocation2 + $0x30] sm:$0xff]
      %v2935 = vld [vmem:[#allocation2 + $0x38] sm:$0xff]
      %v2936 = vld [vmem:[#allocation2 + $0x40] sm:$0xff]
      %v2937 = vld [vmem:[#allocation2 + $0x48] sm:$0xff]
      %v2938 = vld [vmem:[#allocation2 + $0x50] sm:$0xff]
      %v2939 = vld [vmem:[#allocation2 + $0x58] sm:$0xff]
      %v2940 = vld [vmem:[#allocation2 + $0x60] sm:$0xff]
      %v2941 = vld [vmem:[#allocation2 + $0x68] sm:$0xff]
      %v2942 = vld [vmem:[#allocation2 + $0x70] sm:$0xff]
      %v2943 = vld [vmem:[#allocation2 + $0x78] sm:$0xff]
      %v2944 = vld [vmem:[#allocation2 + $0x80] sm:$0xff]
      %v2945 = vld [vmem:[#allocation2 + $0x88] sm:$0xff]
      %v2946 = vld [vmem:[#allocation2 + $0x90] sm:$0xff]
      %v2947 = vld [vmem:[#allocation2 + $0x98] sm:$0xff]
      %v2948 = vld [vmem:[#allocation2 + $0xa0] sm:$0xff]
      %v2949 = vld [vmem:[#allocation2 + $0xa8] sm:$0xff]
      %v2950 = vld [vmem:[#allocation2 + $0xb0] sm:$0xff]
      %v2951 = vld [vmem:[#allocation2 + $0xb8] sm:$0xff]
      %v2952 = vld [vmem:[#allocation2 + $0xc0] sm:$0xff]
      %v2953 = vld [vmem:[#allocation2 + $0xc8] sm:$0xff]
      %v2954 = vld [vmem:[#allocation2 + $0xd0] sm:$0xff]
      %v2955 = vld [vmem:[#allocation2 + $0xd8] sm:$0xff]
      %v2956 = vld [vmem:[#allocation2 + $0xe0] sm:$0xff]
      %v2957 = vld [vmem:[#allocation2 + $0xe8] sm:$0xff]
      %v2958 = vld [vmem:[#allocation2 + $0xf0] sm:$0xff]
      %v2959 = vld [vmem:[#allocation2 + $0xf8] sm:$0xff]
      %v2960 = vld [vmem:[#allocation2 + $0x100] sm:$0xff]
      %v2961 = vld [vmem:[#allocation2 + $0x108] sm:$0xff]
      %v2962 = vld [vmem:[#allocation2 + $0x110] sm:$0xff]
      %v2963 = vld [vmem:[#allocation2 + $0x118] sm:$0xff]
      %v2964 = vld [vmem:[#allocation2 + $0x120] sm:$0xff]
      %v2965 = vld [vmem:[#allocation2 + $0x128] sm:$0xff]
      %v2966 = vld [vmem:[#allocation2 + $0x130] sm:$0xff]
      %v2967 = vld [vmem:[#allocation2 + $0x138] sm:$0xff]
      %v2968 = vld [vmem:[#allocation2 + $0x140] sm:$0xff]
      %v2969 = vld [vmem:[#allocation2 + $0x148] sm:$0xff]
      %v2970 = vld [vmem:[#allocation2 + $0x150] sm:$0xff]
      %v2971 = vld [vmem:[#allocation2 + $0x158] sm:$0xff]
      %v2972 = vld [vmem:[#allocation2 + $0x160] sm:$0xff]
      %v2973 = vld [vmem:[#allocation2 + $0x168] sm:$0xff]
      %v2974 = vld [vmem:[#allocation2 + $0x170] sm:$0xff]
      %v2975 = vld [vmem:[#allocation2 + $0x178] sm:$0xff]
      %v2976 = vld [vmem:[#allocation2 + $0x180] sm:$0xff]
      %v2977 = vld [vmem:[#allocation2 + $0x188] sm:$0xff]
      %v2978 = vld [vmem:[#allocation2 + $0x190] sm:$0xff]
      %v2979 = vld [vmem:[#allocation2 + $0x198] sm:$0xff]
      %v2980 = vld [vmem:[#allocation2 + $0x1a0] sm:$0xff]
      %v2981 = vld [vmem:[#allocation2 + $0x1a8] sm:$0xff]
      %v2982 = vld [vmem:[#allocation2 + $0x1b0] sm:$0xff]
      %v2983 = vld [vmem:[#allocation2 + $0x1b8] sm:$0xff]
      %v2984 = vld [vmem:[#allocation2 + $0x1c0] sm:$0xff]
      %v2985 = vld [vmem:[#allocation2 + $0x1c8] sm:$0xff]
      %v2986 = vld [vmem:[#allocation2 + $0x1d0] sm:$0xff]
      %v2987 = vld [vmem:[#allocation2 + $0x1d8] sm:$0xff]
      %v2988 = vld [vmem:[#allocation2 + $0x1e0] sm:$0xff]
      %v2989 = vld [vmem:[#allocation2 + $0x1e8] sm:$0xff]
      %v2990 = vld [vmem:[#allocation2 + $0x1f0] sm:$0xff]
      %v2991 = vld [vmem:[#allocation2 + $0x1f8] sm:$0xff]
      %v2992 = vpack.c.bf16 %v2930, %v2928
      %v2993 = vpack.c.bf16 %v2931, %v2929
      %v2994 = vpack.c.bf16 %v2934, %v2932
      %v2995 = vpack.c.bf16 %v2935, %v2933
      %v2996 = vpack.c.bf16 %v2938, %v2936
      %v2997 = vpack.c.bf16 %v2939, %v2937
      %v2998 = vpack.c.bf16 %v2942, %v2940
      %v2999 = vpack.c.bf16 %v2943, %v2941
      %v3000 = vpack.c.bf16 %v2946, %v2944
      %v3001 = vpack.c.bf16 %v2947, %v2945
      %v3002 = vpack.c.bf16 %v2950, %v2948
      %v3003 = vpack.c.bf16 %v2951, %v2949
      %v3004 = vpack.c.bf16 %v2954, %v2952
      %v3005 = vpack.c.bf16 %v2955, %v2953
      %v3006 = vpack.c.bf16 %v2958, %v2956
      %v3007 = vpack.c.bf16 %v2959, %v2957
      %v3008 = vpack.c.bf16 %v2962, %v2960
      %v3009 = vpack.c.bf16 %v2963, %v2961
      %v3010 = vpack.c.bf16 %v2966, %v2964
      %v3011 = vpack.c.bf16 %v2967, %v2965
      %v3012 = vpack.c.bf16 %v2970, %v2968
      %v3013 = vpack.c.bf16 %v2971, %v2969
      %v3014 = vpack.c.bf16 %v2974, %v2972
      %v3015 = vpack.c.bf16 %v2975, %v2973
      %v3016 = vpack.c.bf16 %v2978, %v2976
      %v3017 = vpack.c.bf16 %v2979, %v2977
      %v3018 = vpack.c.bf16 %v2982, %v2980
      %v3019 = vpack.c.bf16 %v2983, %v2981
      %v3020 = vpack.c.bf16 %v2986, %v2984
      %v3021 = vpack.c.bf16 %v2987, %v2985
      %v3022 = vpack.c.bf16 %v2990, %v2988
      %v3023 = vpack.c.bf16 %v2991, %v2989
      %v3024 = vld [vmem:[%s3] sm:$0xf]
      %v3025 = vld [vmem:[%s3 + $0x4] sm:$0xf]
      %v3026 = vld [vmem:[%s3 + $0x8] sm:$0xf]
      %v3027 = vld [vmem:[%s3 + $0xc] sm:$0xf]
      %v3028 = vld [vmem:[%s3 + $0x10] sm:$0xf]
      %v3029 = vld [vmem:[%s3 + $0x14] sm:$0xf]
      %v3030 = vld [vmem:[%s3 + $0x18] sm:$0xf]
      %v3031 = vld [vmem:[%s3 + $0x1c] sm:$0xf]
      %v3032 = vld [vmem:[%s3 + $0x20] sm:$0xf]
      %v3033 = vld [vmem:[%s3 + $0x24] sm:$0xf]
      %v3034 = vld [vmem:[%s3 + $0x28] sm:$0xf]
      %v3035 = vld [vmem:[%s3 + $0x2c] sm:$0xf]
      %v3036 = vld [vmem:[%s3 + $0x30] sm:$0xf]
      %v3037 = vld [vmem:[%s3 + $0x34] sm:$0xf]
      %v3038 = vld [vmem:[%s3 + $0x38] sm:$0xf]
      %v3039 = vld [vmem:[%s3 + $0x3c] sm:$0xf]
      %v3040 = vld [vmem:[%s3 + $0x40] sm:$0xf]
      %v3041 = vld [vmem:[%s3 + $0x44] sm:$0xf]
      %v3042 = vld [vmem:[%s3 + $0x48] sm:$0xf]
      %v3043 = vld [vmem:[%s3 + $0x4c] sm:$0xf]
      %v3044 = vld [vmem:[%s3 + $0x50] sm:$0xf]
      %v3045 = vld [vmem:[%s3 + $0x54] sm:$0xf]
      %v3046 = vld [vmem:[%s3 + $0x58] sm:$0xf]
      %v3047 = vld [vmem:[%s3 + $0x5c] sm:$0xf]
      %v3048 = vld [vmem:[%s236] sm:$0xff]
      %v3049 = vld [vmem:[%s236 + $0x8] sm:$0xff]
      %v3050 = vld [vmem:[%s236 + $0x10] sm:$0xff]
      %v3051 = vld [vmem:[%s236 + $0x18] sm:$0xff]
      %v3052 = vld [vmem:[%s236 + $0x20] sm:$0xff]
      %v3053 = vld [vmem:[%s236 + $0x28] sm:$0xff]
      %v3054 = vld [vmem:[%s236 + $0x30] sm:$0xff]
      %v3055 = vld [vmem:[%s236 + $0x38] sm:$0xff]
      %v3056 = vld [vmem:[%s236 + $0x40] sm:$0xff]
      %v3057 = vld [vmem:[%s236 + $0x48] sm:$0xff]
      %v3058 = vld [vmem:[%s236 + $0x50] sm:$0xff]
      %v3059 = vld [vmem:[%s236 + $0x58] sm:$0xff]
      %v3060 = vld [vmem:[%s236 + $0x60] sm:$0xff]
      %v3061 = vld [vmem:[%s236 + $0x68] sm:$0xff]
      %v3062 = vld [vmem:[%s236 + $0x70] sm:$0xff]
      %v3063 = vld [vmem:[%s236 + $0x78] sm:$0xff]
      %v3064 = vld [vmem:[%s236 + $0x80] sm:$0xff]
      %v3065 = vld [vmem:[%s236 + $0x88] sm:$0xff]
      %v3066 = vld [vmem:[%s236 + $0x90] sm:$0xff]
      %v3067 = vld [vmem:[%s236 + $0x98] sm:$0xff]
      %v3068 = vld [vmem:[%s236 + $0xa0] sm:$0xff]
      %v3069 = vld [vmem:[%s236 + $0xa8] sm:$0xff]
      %v3070 = vld [vmem:[%s236 + $0xb0] sm:$0xff]
      %v3071 = vld [vmem:[%s236 + $0xb8] sm:$0xff]
      %v3072 = vld [vmem:[%s236 + $0xc0] sm:$0xff]
      %v3073 = vld [vmem:[%s236 + $0xc8] sm:$0xff]
      %v3074 = vld [vmem:[%s236 + $0xd0] sm:$0xff]
      %v3075 = vld [vmem:[%s236 + $0xd8] sm:$0xff]
      %v3076 = vld [vmem:[%s236 + $0xe0] sm:$0xff]
      %v3077 = vld [vmem:[%s236 + $0xe8] sm:$0xff]
      %v3078 = vld [vmem:[%s236 + $0xf0] sm:$0xff]
      %v3079 = vld [vmem:[%s236 + $0xf8] sm:$0xff]
      %v3080 = vld [vmem:[%s236 + $0x100] sm:$0xff]
      %v3081 = vld [vmem:[%s236 + $0x108] sm:$0xff]
      %v3082 = vld [vmem:[%s236 + $0x110] sm:$0xff]
      %v3083 = vld [vmem:[%s236 + $0x118] sm:$0xff]
      %v3084 = vld [vmem:[%s236 + $0x120] sm:$0xff]
      %v3085 = vld [vmem:[%s236 + $0x128] sm:$0xff]
      %v3086 = vld [vmem:[%s236 + $0x130] sm:$0xff]
      %v3087 = vld [vmem:[%s236 + $0x138] sm:$0xff]
      %v3088 = vld [vmem:[%s236 + $0x140] sm:$0xff]
      %v3089 = vld [vmem:[%s236 + $0x148] sm:$0xff]
      %v3090 = vld [vmem:[%s236 + $0x150] sm:$0xff]
      %v3091 = vld [vmem:[%s236 + $0x158] sm:$0xff]
      %v3092 = vld [vmem:[%s236 + $0x160] sm:$0xff]
      %v3093 = vld [vmem:[%s236 + $0x168] sm:$0xff]
      %v3094 = vld [vmem:[%s236 + $0x170] sm:$0xff]
      %v3095 = vld [vmem:[%s236 + $0x178] sm:$0xff]
      %v3096 = vld [vmem:[%s236 + $0x180] sm:$0xff]
      %v3097 = vld [vmem:[%s236 + $0x188] sm:$0xff]
      %v3098 = vld [vmem:[%s236 + $0x190] sm:$0xff]
      %v3099 = vld [vmem:[%s236 + $0x198] sm:$0xff]
      %v3100 = vld [vmem:[%s236 + $0x1a0] sm:$0xff]
      %v3101 = vld [vmem:[%s236 + $0x1a8] sm:$0xff]
      %v3102 = vld [vmem:[%s236 + $0x1b0] sm:$0xff]
      %v3103 = vld [vmem:[%s236 + $0x1b8] sm:$0xff]
      %v3104 = vld [vmem:[%s236 + $0x1c0] sm:$0xff]
      %v3105 = vld [vmem:[%s236 + $0x1c8] sm:$0xff]
      %v3106 = vld [vmem:[%s236 + $0x1d0] sm:$0xff]
      %v3107 = vld [vmem:[%s236 + $0x1d8] sm:$0xff]
      %v3108 = vld [vmem:[%s236 + $0x1e0] sm:$0xff]
      %v3109 = vld [vmem:[%s236 + $0x1e8] sm:$0xff]
      %v3110 = vld [vmem:[%s236 + $0x1f0] sm:$0xff]
      %v3111 = vld [vmem:[%s236 + $0x1f8] sm:$0xff]
      %v3112 = vpack.c.bf16 %v3050, %v3048
      %v3113 = vpack.c.bf16 %v3051, %v3049
      %v3114 = vpack.c.bf16 %v3054, %v3052
      %v3115 = vpack.c.bf16 %v3055, %v3053
      %v3116 = vpack.c.bf16 %v3058, %v3056
      %v3117 = vpack.c.bf16 %v3059, %v3057
      %v3118 = vpack.c.bf16 %v3062, %v3060
      %v3119 = vpack.c.bf16 %v3063, %v3061
      %v3120 = vpack.c.bf16 %v3066, %v3064
      %v3121 = vpack.c.bf16 %v3067, %v3065
      %v3122 = vpack.c.bf16 %v3070, %v3068
      %v3123 = vpack.c.bf16 %v3071, %v3069
      %v3124 = vpack.c.bf16 %v3074, %v3072
      %v3125 = vpack.c.bf16 %v3075, %v3073
      %v3126 = vpack.c.bf16 %v3078, %v3076
      %v3127 = vpack.c.bf16 %v3079, %v3077
      %v3128 = vpack.c.bf16 %v3082, %v3080
      %v3129 = vpack.c.bf16 %v3083, %v3081
      %v3130 = vpack.c.bf16 %v3086, %v3084
      %v3131 = vpack.c.bf16 %v3087, %v3085
      %v3132 = vpack.c.bf16 %v3090, %v3088
      %v3133 = vpack.c.bf16 %v3091, %v3089
      %v3134 = vpack.c.bf16 %v3094, %v3092
      %v3135 = vpack.c.bf16 %v3095, %v3093
      %v3136 = vpack.c.bf16 %v3098, %v3096
      %v3137 = vpack.c.bf16 %v3099, %v3097
      %v3138 = vpack.c.bf16 %v3102, %v3100
      %v3139 = vpack.c.bf16 %v3103, %v3101
      %v3140 = vpack.c.bf16 %v3106, %v3104
      %v3141 = vpack.c.bf16 %v3107, %v3105
      %v3142 = vpack.c.bf16 %v3110, %v3108
      %v3143 = vpack.c.bf16 %v3111, %v3109
      %s3144 = scalar_lea.vmem %s3, 96
      %v3145 = vld [vmem:[%s3144] sm:$0xf]
      %v3146 = vld [vmem:[%s3144 + $0x4] sm:$0xf]
      %v3147 = vld [vmem:[%s3144 + $0x8] sm:$0xf]
      %v3148 = vld [vmem:[%s3144 + $0xc] sm:$0xf]
      %v3149 = vld [vmem:[%s3144 + $0x10] sm:$0xf]
      %v3150 = vld [vmem:[%s3144 + $0x14] sm:$0xf]
      %v3151 = vld [vmem:[%s3144 + $0x18] sm:$0xf]
      %v3152 = vld [vmem:[%s3144 + $0x1c] sm:$0xf]
      %v3153 = vld [vmem:[%s3144 + $0x20] sm:$0xf]
      %v3154 = vld [vmem:[%s3144 + $0x24] sm:$0xf]
      %v3155 = vld [vmem:[%s3144 + $0x28] sm:$0xf]
      %v3156 = vld [vmem:[%s3144 + $0x2c] sm:$0xf]
      %v3157 = vld [vmem:[%s3144 + $0x30] sm:$0xf]
      %v3158 = vld [vmem:[%s3144 + $0x34] sm:$0xf]
      %v3159 = vld [vmem:[%s3144 + $0x38] sm:$0xf]
      %v3160 = vld [vmem:[%s3144 + $0x3c] sm:$0xf]
      %v3161 = vld [vmem:[%s3144 + $0x40] sm:$0xf]
      %v3162 = vld [vmem:[%s3144 + $0x44] sm:$0xf]
      %v3163 = vld [vmem:[%s3144 + $0x48] sm:$0xf]
      %v3164 = vld [vmem:[%s3144 + $0x4c] sm:$0xf]
      %v3165 = vld [vmem:[%s3144 + $0x50] sm:$0xf]
      %v3166 = vld [vmem:[%s3144 + $0x54] sm:$0xf]
      %v3167 = vld [vmem:[%s3144 + $0x58] sm:$0xf]
      %v3168 = vld [vmem:[%s3144 + $0x5c] sm:$0xf]
      %v3193 = vunpack.c.l.b16 %v3145
      %v3194 = vunpack.c.l.b16 %v3146
      %v3195 = vunpack.c.l.b16 %v3147
      %v3196 = vunpack.c.l.b16 %v3148
      %v3197 = vunpack.c.l.b16 %v3149
      %v3198 = vunpack.c.l.b16 %v3150
      %v3199 = vunpack.c.l.b16 %v3151
      %v3200 = vunpack.c.l.b16 %v3152
      %v3201 = vunpack.c.l.b16 %v3153
      %v3202 = vunpack.c.l.b16 %v3154
      %v3203 = vunpack.c.l.b16 %v3155
      %v3204 = vunpack.c.l.b16 %v3156
      %v3205 = vunpack.c.l.b16 %v3157
      %v3206 = vunpack.c.l.b16 %v3158
      %v3207 = vunpack.c.l.b16 %v3159
      %v3208 = vunpack.c.l.b16 %v3160
      %v3209 = vunpack.c.l.b16 %v3161
      %v3210 = vunpack.c.l.b16 %v3162
      %v3211 = vunpack.c.l.b16 %v3163
      %v3212 = vunpack.c.l.b16 %v3164
      %v3213 = vunpack.c.l.b16 %v3165
      %v3214 = vunpack.c.l.b16 %v3166
      %v3215 = vunpack.c.l.b16 %v3167
      %v3216 = vunpack.c.l.b16 %v3168
      %v3217 = vpack.c.b16 %v3194, %v3193
      %v3218 = vpack.c.b16 %v3196, %v3195
      %v3219 = vpack.c.b16 %v3198, %v3197
      %v3220 = vpack.c.b16 %v3200, %v3199
      %v3221 = vpack.c.b16 %v3202, %v3201
      %v3222 = vpack.c.b16 %v3204, %v3203
      %v3223 = vpack.c.b16 %v3206, %v3205
      %v3224 = vpack.c.b16 %v3208, %v3207
      %v3225 = vpack.c.b16 %v3210, %v3209
      %v3226 = vpack.c.b16 %v3212, %v3211
      %v3227 = vpack.c.b16 %v3214, %v3213
      %v3228 = vpack.c.b16 %v3216, %v3215
      %v3242 = vsel %vm227, %v3113, 0
      %v3245 = vsel %vm227, %v3115, 0
      %v3248 = vsel %vm227, %v3117, 0
      %v3251 = vsel %vm227, %v3119, 0
      %v3254 = vsel %vm227, %v3121, 0
      %v3257 = vsel %vm227, %v3123, 0
      %v3260 = vsel %vm227, %v3125, 0
      %v3263 = vsel %vm227, %v3127, 0
      %v3266 = vsel %vm227, %v3129, 0
      %v3269 = vsel %vm227, %v3131, 0
      %v3272 = vsel %vm227, %v3133, 0
      %v3275 = vsel %vm227, %v3135, 0
      %v3278 = vsel %vm227, %v3137, 0
      %v3281 = vsel %vm227, %v3139, 0
      %v3284 = vsel %vm227, %v3141, 0
      %v3287 = vsel %vm227, %v3143, 0
      %3289 = vmatprep.subr.bf16.mxu0 0
      %3290 = vmatpush1.bf16.msra.mxu0 %v3217
      %3291 = vmatprep.subr.bf16.mxu0 0
      %3292 = vmatpush1.bf16.msra.mxu0 %v3218
      %3293 = vmatprep.subr.bf16.mxu0 0
      %3294 = vmatpush1.bf16.msra.mxu0 %v3219
      %3295 = vmatprep.subr.bf16.mxu0 0
      %3296 = vmatpush1.bf16.msra.mxu0 %v3220
      %3297 = vmatprep.subr.bf16.mxu0 0
      %3298 = vmatpush1.bf16.msra.mxu0 %v3221
      %3299 = vmatprep.subr.bf16.mxu0 0
      %3300 = vmatpush1.bf16.msra.mxu0 %v3222
      %3301 = vmatprep.subr.bf16.mxu0 0
      %3302 = vmatpush1.bf16.msra.mxu0 %v3223
      %3303 = vmatprep.subr.bf16.mxu0 0
      %3304 = vmatpush1.bf16.msra.mxu0 %v3224
      %3305 = vmatprep.subr.bf16.mxu0 0
      %3306 = vmatpush1.bf16.msra.mxu0 %v3225
      %3307 = vmatprep.subr.bf16.mxu0 0
      %3308 = vmatpush1.bf16.msra.mxu0 %v3226
      %3309 = vmatprep.subr.bf16.mxu0 0
      %3310 = vmatpush1.bf16.msra.mxu0 %v3227
      %3311 = vmatprep.subr.bf16.mxu0 0
      %3312 = vmatpush1.bf16.msra.mxu0 %v3228
      %3313 = vmatprep.subr.bf16.mxu0 0
      %3314 = vmatpush1.bf16.msra.mxu0 0
      %3315 = vmatprep.subr.bf16.mxu0 0
      %3316 = vmatpush1.bf16.msra.mxu0 0
      %3317 = vmatprep.subr.bf16.mxu0 0
      %3318 = vmatpush1.bf16.msra.mxu0 0
      %3319 = vmatprep.subr.bf16.mxu0 0
      %3320 = vmatpush1.bf16.msra.mxu0 0
      %3321 = vmatprep.mubr.bf16.mxu0 %v3242
      %3322 = vmatmul.mubr.bf16.gmra.mrb[0].mxu0 %v3112
      %v3323 = vpop.f32.mrb[0].mxu0
      %v3324 = vadd.f32 0.0, %v3323
      %v3325 = vpop.f32.mrb[0].mxu0
      %v3326 = vpop.f32.mrb[0].mxu0
      %v3327 = vadd.f32 0.0, %v3326
      %v3328 = vpop.f32.mrb[0].mxu0
      %3329 = vmatprep.mubr.bf16.mxu0 %v3245
      %3330 = vmatmul.mubr.bf16.gmra.mrb[0].mxu0 %v3114
      %v3331 = vpop.f32.mrb[0].mxu0
      %v3332 = vadd.f32 0.0, %v3331
      %v3333 = vpop.f32.mrb[0].mxu0
      %v3334 = vpop.f32.mrb[0].mxu0
      %v3335 = vadd.f32 0.0, %v3334
      %v3336 = vpop.f32.mrb[0].mxu0
      %3337 = vmatprep.mubr.bf16.mxu0 %v3248
      %3338 = vmatmul.mubr.bf16.gmra.mrb[0].mxu0 %v3116
      %v3339 = vpop.f32.mrb[0].mxu0
      %v3340 = vadd.f32 0.0, %v3339
      %v3341 = vpop.f32.mrb[0].mxu0
      %v3342 = vpop.f32.mrb[0].mxu0
      %v3343 = vadd.f32 0.0, %v3342
      %v3344 = vpop.f32.mrb[0].mxu0
      %3345 = vmatprep.mubr.bf16.mxu0 %v3251
      %3346 = vmatmul.mubr.bf16.gmra.mrb[0].mxu0 %v3118
      %v3347 = vpop.f32.mrb[0].mxu0
      %v3348 = vadd.f32 0.0, %v3347
      %v3349 = vpop.f32.mrb[0].mxu0
      %v3350 = vpop.f32.mrb[0].mxu0
      %v3351 = vadd.f32 0.0, %v3350
      %v3352 = vpop.f32.mrb[0].mxu0
      %3353 = vmatprep.mubr.bf16.mxu0 %v3254
      %3354 = vmatmul.mubr.bf16.gmra.mrb[0].mxu0 %v3120
      %v3355 = vpop.f32.mrb[0].mxu0
      %v3356 = vadd.f32 0.0, %v3355
      %v3357 = vpop.f32.mrb[0].mxu0
      %v3358 = vpop.f32.mrb[0].mxu0
      %v3359 = vadd.f32 0.0, %v3358
      %v3360 = vpop.f32.mrb[0].mxu0
      %3361 = vmatprep.mubr.bf16.mxu0 %v3257
      %3362 = vmatmul.mubr.bf16.gmra.mrb[0].mxu0 %v3122
      %v3363 = vpop.f32.mrb[0].mxu0
      %v3364 = vadd.f32 0.0, %v3363
      %v3365 = vpop.f32.mrb[0].mxu0
      %v3366 = vpop.f32.mrb[0].mxu0
      %v3367 = vadd.f32 0.0, %v3366
      %v3368 = vpop.f32.mrb[0].mxu0
      %3369 = vmatprep.mubr.bf16.mxu0 %v3260
      %3370 = vmatmul.mubr.bf16.gmra.mrb[0].mxu0 %v3124
      %v3371 = vpop.f32.mrb[0].mxu0
      %v3372 = vadd.f32 0.0, %v3371
      %v3373 = vpop.f32.mrb[0].mxu0
      %v3374 = vpop.f32.mrb[0].mxu0
      %v3375 = vadd.f32 0.0, %v3374
      %v3376 = vpop.f32.mrb[0].mxu0
      %3377 = vmatprep.mubr.bf16.mxu0 %v3263
      %3378 = vmatmul.mubr.bf16.gmra.mrb[0].mxu0 %v3126
      %v3379 = vpop.f32.mrb[0].mxu0
      %v3380 = vadd.f32 0.0, %v3379
      %v3381 = vpop.f32.mrb[0].mxu0
      %v3382 = vpop.f32.mrb[0].mxu0
      %v3383 = vadd.f32 0.0, %v3382
      %v3384 = vpop.f32.mrb[0].mxu0
      %3385 = vmatprep.mubr.bf16.mxu0 %v3266
      %3386 = vmatmul.mubr.bf16.gmra.mrb[0].mxu0 %v3128
      %v3387 = vpop.f32.mrb[0].mxu0
      %v3388 = vadd.f32 0.0, %v3387
      %v3389 = vpop.f32.mrb[0].mxu0
      %v3390 = vpop.f32.mrb[0].mxu0
      %v3391 = vadd.f32 0.0, %v3390
      %v3392 = vpop.f32.mrb[0].mxu0
      %3393 = vmatprep.mubr.bf16.mxu0 %v3269
      %3394 = vmatmul.mubr.bf16.gmra.mrb[0].mxu0 %v3130
      %v3395 = vpop.f32.mrb[0].mxu0
      %v3396 = vadd.f32 0.0, %v3395
      %v3397 = vpop.f32.mrb[0].mxu0
      %v3398 = vpop.f32.mrb[0].mxu0
      %v3399 = vadd.f32 0.0, %v3398
      %v3400 = vpop.f32.mrb[0].mxu0
      %3401 = vmatprep.mubr.bf16.mxu0 %v3272
      %3402 = vmatmul.mubr.bf16.gmra.mrb[0].mxu0 %v3132
      %v3403 = vpop.f32.mrb[0].mxu0
      %v3404 = vadd.f32 0.0, %v3403
      %v3405 = vpop.f32.mrb[0].mxu0
      %v3406 = vpop.f32.mrb[0].mxu0
      %v3407 = vadd.f32 0.0, %v3406
      %v3408 = vpop.f32.mrb[0].mxu0
      %3409 = vmatprep.mubr.bf16.mxu0 %v3275
      %3410 = vmatmul.mubr.bf16.gmra.mrb[0].mxu0 %v3134
      %v3411 = vpop.f32.mrb[0].mxu0
      %v3412 = vadd.f32 0.0, %v3411
      %v3413 = vpop.f32.mrb[0].mxu0
      %v3414 = vpop.f32.mrb[0].mxu0
      %v3415 = vadd.f32 0.0, %v3414
      %v3416 = vpop.f32.mrb[0].mxu0
      %3417 = vmatprep.mubr.bf16.mxu0 %v3278
      %3418 = vmatmul.mubr.bf16.gmra.mrb[0].mxu0 %v3136
      %v3419 = vpop.f32.mrb[0].mxu0
      %v3420 = vadd.f32 0.0, %v3419
      %v3421 = vpop.f32.mrb[0].mxu0
      %v3422 = vpop.f32.mrb[0].mxu0
      %v3423 = vadd.f32 0.0, %v3422
      %v3424 = vpop.f32.mrb[0].mxu0
      %3425 = vmatprep.mubr.bf16.mxu0 %v3281
      %3426 = vmatmul.mubr.bf16.gmra.mrb[0].mxu0 %v3138
      %v3427 = vpop.f32.mrb[0].mxu0
      %v3428 = vadd.f32 0.0, %v3427
      %v3429 = vpop.f32.mrb[0].mxu0
      %v3430 = vpop.f32.mrb[0].mxu0
      %v3431 = vadd.f32 0.0, %v3430
      %v3432 = vpop.f32.mrb[0].mxu0
      %3433 = vmatprep.mubr.bf16.mxu0 %v3284
      %3434 = vmatmul.mubr.bf16.gmra.mrb[0].mxu0 %v3140
      %v3435 = vpop.f32.mrb[0].mxu0
      %v3436 = vadd.f32 0.0, %v3435
      %v3437 = vpop.f32.mrb[0].mxu0
      %v3438 = vpop.f32.mrb[0].mxu0
      %v3439 = vadd.f32 0.0, %v3438
      %v3440 = vpop.f32.mrb[0].mxu0
      %3441 = vmatprep.mubr.bf16.mxu0 %v3287
      %3442 = vmatmul.mubr.bf16.gmra.mrb[0].mxu0 %v3142
      %v3443 = vpop.f32.mrb[0].mxu0
      %v3444 = vadd.f32 0.0, %v3443
      %v3445 = vpop.f32.mrb[0].mxu0
      %v3446 = vpop.f32.mrb[0].mxu0
      %v3447 = vadd.f32 0.0, %v3446
      %v3448 = vpop.f32.mrb[0].mxu0
      %3449 = vdwg.mxu0
      %v3474 = vunpack.c.l.b16 %v3024
      %v3475 = vunpack.c.l.b16 %v3025
      %v3476 = vunpack.c.l.b16 %v3026
      %v3477 = vunpack.c.l.b16 %v3027
      %v3478 = vunpack.c.l.b16 %v3028
      %v3479 = vunpack.c.l.b16 %v3029
      %v3480 = vunpack.c.l.b16 %v3030
      %v3481 = vunpack.c.l.b16 %v3031
      %v3482 = vunpack.c.l.b16 %v3032
      %v3483 = vunpack.c.l.b16 %v3033
      %v3484 = vunpack.c.l.b16 %v3034
      %v3485 = vunpack.c.l.b16 %v3035
      %v3486 = vunpack.c.l.b16 %v3036
      %v3487 = vunpack.c.l.b16 %v3037
      %v3488 = vunpack.c.l.b16 %v3038
      %v3489 = vunpack.c.l.b16 %v3039
      %v3490 = vunpack.c.l.b16 %v3040
      %v3491 = vunpack.c.l.b16 %v3041
      %v3492 = vunpack.c.l.b16 %v3042
      %v3493 = vunpack.c.l.b16 %v3043
      %v3494 = vunpack.c.l.b16 %v3044
      %v3495 = vunpack.c.l.b16 %v3045
      %v3496 = vunpack.c.l.b16 %v3046
      %v3497 = vunpack.c.l.b16 %v3047
      %v3498 = vpack.c.b16 %v3475, %v3474
      %v3499 = vpack.c.b16 %v3477, %v3476
      %v3500 = vpack.c.b16 %v3479, %v3478
      %v3501 = vpack.c.b16 %v3481, %v3480
      %v3502 = vpack.c.b16 %v3483, %v3482
      %v3503 = vpack.c.b16 %v3485, %v3484
      %v3504 = vpack.c.b16 %v3487, %v3486
      %v3505 = vpack.c.b16 %v3489, %v3488
      %v3506 = vpack.c.b16 %v3491, %v3490
      %v3507 = vpack.c.b16 %v3493, %v3492
      %v3508 = vpack.c.b16 %v3495, %v3494
      %v3509 = vpack.c.b16 %v3497, %v3496
      %v3523 = vsel %vm227, %v2993, 0
      %v3526 = vsel %vm227, %v2995, 0
      %v3529 = vsel %vm227, %v2997, 0
      %v3532 = vsel %vm227, %v2999, 0
      %v3535 = vsel %vm227, %v3001, 0
      %v3538 = vsel %vm227, %v3003, 0
      %v3541 = vsel %vm227, %v3005, 0
      %v3544 = vsel %vm227, %v3007, 0
      %v3547 = vsel %vm227, %v3009, 0
      %v3550 = vsel %vm227, %v3011, 0
      %v3553 = vsel %vm227, %v3013, 0
      %v3556 = vsel %vm227, %v3015, 0
      %v3559 = vsel %vm227, %v3017, 0
      %v3562 = vsel %vm227, %v3019, 0
      %v3565 = vsel %vm227, %v3021, 0
      %v3568 = vsel %vm227, %v3023, 0
      %3570 = vmatprep.subr.bf16.mxu0 0
      %3571 = vmatpush1.bf16.msra.mxu0 %v3498
      %3572 = vmatprep.subr.bf16.mxu0 0
      %3573 = vmatpush1.bf16.msra.mxu0 %v3499
      %3574 = vmatprep.subr.bf16.mxu0 0
      %3575 = vmatpush1.bf16.msra.mxu0 %v3500
      %3576 = vmatprep.subr.bf16.mxu0 0
      %3577 = vmatpush1.bf16.msra.mxu0 %v3501
      %3578 = vmatprep.subr.bf16.mxu0 0
      %3579 = vmatpush1.bf16.msra.mxu0 %v3502
      %3580 = vmatprep.subr.bf16.mxu0 0
      %3581 = vmatpush1.bf16.msra.mxu0 %v3503
      %3582 = vmatprep.subr.bf16.mxu0 0
      %3583 = vmatpush1.bf16.msra.mxu0 %v3504
      %3584 = vmatprep.subr.bf16.mxu0 0
      %3585 = vmatpush1.bf16.msra.mxu0 %v3505
      %3586 = vmatprep.subr.bf16.mxu0 0
      %3587 = vmatpush1.bf16.msra.mxu0 %v3506
      %3588 = vmatprep.subr.bf16.mxu0 0
      %3589 = vmatpush1.bf16.msra.mxu0 %v3507
      %3590 = vmatprep.subr.bf16.mxu0 0
      %3591 = vmatpush1.bf16.msra.mxu0 %v3508
      %3592 = vmatprep.subr.bf16.mxu0 0
      %3593 = vmatpush1.bf16.msra.mxu0 %v3509
      %3594 = vmatprep.subr.bf16.mxu0 0
      %3595 = vmatpush1.bf16.msra.mxu0 0
      %3596 = vmatprep.subr.bf16.mxu0 0
      %3597 = vmatpush1.bf16.msra.mxu0 0
      %3598 = vmatprep.subr.bf16.mxu0 0
      %3599 = vmatpush1.bf16.msra.mxu0 0
      %3600 = vmatprep.subr.bf16.mxu0 0
      %3601 = vmatpush1.bf16.msra.mxu0 0
      %3602 = vmatprep.mubr.bf16.mxu0 %v3523
      %3603 = vmatmul.mubr.bf16.gmra.mrb[0].mxu0 %v2992
      %v3604 = vpop.f32.mrb[0].mxu0
      %v3605 = vadd.f32 %v3324, %v3604
      %v3606 = vpop.f32.mrb[0].mxu0
      %v3607 = vpop.f32.mrb[0].mxu0
      %v3608 = vadd.f32 %v3327, %v3607
      %v3609 = vpop.f32.mrb[0].mxu0
      %3610 = vmatprep.mubr.bf16.mxu0 %v3526
      %3611 = vmatmul.mubr.bf16.gmra.mrb[0].mxu0 %v2994
      %v3612 = vpop.f32.mrb[0].mxu0
      %v3613 = vadd.f32 %v3332, %v3612
      %v3614 = vpop.f32.mrb[0].mxu0
      %v3615 = vpop.f32.mrb[0].mxu0
      %v3616 = vadd.f32 %v3335, %v3615
      %v3617 = vpop.f32.mrb[0].mxu0
      %3618 = vmatprep.mubr.bf16.mxu0 %v3529
      %3619 = vmatmul.mubr.bf16.gmra.mrb[0].mxu0 %v2996
      %v3620 = vpop.f32.mrb[0].mxu0
      %v3621 = vadd.f32 %v3340, %v3620
      %v3622 = vpop.f32.mrb[0].mxu0
      %v3623 = vpop.f32.mrb[0].mxu0
      %v3624 = vadd.f32 %v3343, %v3623
      %v3625 = vpop.f32.mrb[0].mxu0
      %3626 = vmatprep.mubr.bf16.mxu0 %v3532
      %3627 = vmatmul.mubr.bf16.gmra.mrb[0].mxu0 %v2998
      %v3628 = vpop.f32.mrb[0].mxu0
      %v3629 = vadd.f32 %v3348, %v3628
      %v3630 = vpop.f32.mrb[0].mxu0
      %v3631 = vpop.f32.mrb[0].mxu0
      %v3632 = vadd.f32 %v3351, %v3631
      %v3633 = vpop.f32.mrb[0].mxu0
      %3634 = vmatprep.mubr.bf16.mxu0 %v3535
      %3635 = vmatmul.mubr.bf16.gmra.mrb[0].mxu0 %v3000
      %v3636 = vpop.f32.mrb[0].mxu0
      %v3637 = vadd.f32 %v3356, %v3636
      %v3638 = vpop.f32.mrb[0].mxu0
      %v3639 = vpop.f32.mrb[0].mxu0
      %v3640 = vadd.f32 %v3359, %v3639
      %v3641 = vpop.f32.mrb[0].mxu0
      %3642 = vmatprep.mubr.bf16.mxu0 %v3538
      %3643 = vmatmul.mubr.bf16.gmra.mrb[0].mxu0 %v3002
      %v3644 = vpop.f32.mrb[0].mxu0
      %v3645 = vadd.f32 %v3364, %v3644
      %v3646 = vpop.f32.mrb[0].mxu0
      %v3647 = vpop.f32.mrb[0].mxu0
      %v3648 = vadd.f32 %v3367, %v3647
      %v3649 = vpop.f32.mrb[0].mxu0
      %3650 = vmatprep.mubr.bf16.mxu0 %v3541
      %3651 = vmatmul.mubr.bf16.gmra.mrb[0].mxu0 %v3004
      %v3652 = vpop.f32.mrb[0].mxu0
      %v3653 = vadd.f32 %v3372, %v3652
      %v3654 = vpop.f32.mrb[0].mxu0
      %v3655 = vpop.f32.mrb[0].mxu0
      %v3656 = vadd.f32 %v3375, %v3655
      %v3657 = vpop.f32.mrb[0].mxu0
      %3658 = vmatprep.mubr.bf16.mxu0 %v3544
      %3659 = vmatmul.mubr.bf16.gmra.mrb[0].mxu0 %v3006
      %v3660 = vpop.f32.mrb[0].mxu0
      %v3661 = vadd.f32 %v3380, %v3660
      %v3662 = vpop.f32.mrb[0].mxu0
      %v3663 = vpop.f32.mrb[0].mxu0
      %v3664 = vadd.f32 %v3383, %v3663
      %v3665 = vpop.f32.mrb[0].mxu0
      %3666 = vmatprep.mubr.bf16.mxu0 %v3547
      %3667 = vmatmul.mubr.bf16.gmra.mrb[0].mxu0 %v3008
      %v3668 = vpop.f32.mrb[0].mxu0
      %v3669 = vadd.f32 %v3388, %v3668
      %v3670 = vpop.f32.mrb[0].mxu0
      %v3671 = vpop.f32.mrb[0].mxu0
      %v3672 = vadd.f32 %v3391, %v3671
      %v3673 = vpop.f32.mrb[0].mxu0
      %3674 = vmatprep.mubr.bf16.mxu0 %v3550
      %3675 = vmatmul.mubr.bf16.gmra.mrb[0].mxu0 %v3010
      %v3676 = vpop.f32.mrb[0].mxu0
      %v3677 = vadd.f32 %v3396, %v3676
      %v3678 = vpop.f32.mrb[0].mxu0
      %v3679 = vpop.f32.mrb[0].mxu0
      %v3680 = vadd.f32 %v3399, %v3679
      %v3681 = vpop.f32.mrb[0].mxu0
      %3682 = vmatprep.mubr.bf16.mxu0 %v3553
      %3683 = vmatmul.mubr.bf16.gmra.mrb[0].mxu0 %v3012
      %v3684 = vpop.f32.mrb[0].mxu0
      %v3685 = vadd.f32 %v3404, %v3684
      %v3686 = vpop.f32.mrb[0].mxu0
      %v3687 = vpop.f32.mrb[0].mxu0
      %v3688 = vadd.f32 %v3407, %v3687
      %v3689 = vpop.f32.mrb[0].mxu0
      %3690 = vmatprep.mubr.bf16.mxu0 %v3556
      %3691 = vmatmul.mubr.bf16.gmra.mrb[0].mxu0 %v3014
      %v3692 = vpop.f32.mrb[0].mxu0
      %v3693 = vadd.f32 %v3412, %v3692
      %v3694 = vpop.f32.mrb[0].mxu0
      %v3695 = vpop.f32.mrb[0].mxu0
      %v3696 = vadd.f32 %v3415, %v3695
      %v3697 = vpop.f32.mrb[0].mxu0
      %3698 = vmatprep.mubr.bf16.mxu0 %v3559
      %3699 = vmatmul.mubr.bf16.gmra.mrb[0].mxu0 %v3016
      %v3700 = vpop.f32.mrb[0].mxu0
      %v3701 = vadd.f32 %v3420, %v3700
      %v3702 = vpop.f32.mrb[0].mxu0
      %v3703 = vpop.f32.mrb[0].mxu0
      %v3704 = vadd.f32 %v3423, %v3703
      %v3705 = vpop.f32.mrb[0].mxu0
      %3706 = vmatprep.mubr.bf16.mxu0 %v3562
      %3707 = vmatmul.mubr.bf16.gmra.mrb[0].mxu0 %v3018
      %v3708 = vpop.f32.mrb[0].mxu0
      %v3709 = vadd.f32 %v3428, %v3708
      %v3710 = vpop.f32.mrb[0].mxu0
      %v3711 = vpop.f32.mrb[0].mxu0
      %v3712 = vadd.f32 %v3431, %v3711
      %v3713 = vpop.f32.mrb[0].mxu0
      %3714 = vmatprep.mubr.bf16.mxu0 %v3565
      %3715 = vmatmul.mubr.bf16.gmra.mrb[0].mxu0 %v3020
      %v3716 = vpop.f32.mrb[0].mxu0
      %v3717 = vadd.f32 %v3436, %v3716
      %v3718 = vpop.f32.mrb[0].mxu0
      %v3719 = vpop.f32.mrb[0].mxu0
      %v3720 = vadd.f32 %v3439, %v3719
      %v3721 = vpop.f32.mrb[0].mxu0
      %3722 = vmatprep.mubr.bf16.mxu0 %v3568
      %3723 = vmatmul.mubr.bf16.gmra.mrb[0].mxu0 %v3022
      %v3724 = vpop.f32.mrb[0].mxu0
      %v3725 = vadd.f32 %v3444, %v3724
      %v3726 = vpop.f32.mrb[0].mxu0
      %v3727 = vpop.f32.mrb[0].mxu0
      %v3728 = vadd.f32 %v3447, %v3727
      %v3729 = vpop.f32.mrb[0].mxu0
      %3730 = vdwg.mxu0
      %v3731 = vld [vmem:[%s1782] sm:$0xff]
      %v3732 = vld [vmem:[%s1782 + $0x8] sm:$0xff]
      %v3733 = vld [vmem:[%s1782 + $0x10] sm:$0xff]
      %v3734 = vld [vmem:[%s1782 + $0x18] sm:$0xff]
      %v3735 = vld [vmem:[%s1782 + $0x20] sm:$0xff]
      %v3736 = vld [vmem:[%s1782 + $0x28] sm:$0xff]
      %v3737 = vld [vmem:[%s1782 + $0x30] sm:$0xff]
      %v3738 = vld [vmem:[%s1782 + $0x38] sm:$0xff]
      %v3739 = vld [vmem:[%s1782 + $0x40] sm:$0xff]
      %v3740 = vld [vmem:[%s1782 + $0x48] sm:$0xff]
      %v3741 = vld [vmem:[%s1782 + $0x50] sm:$0xff]
      %v3742 = vld [vmem:[%s1782 + $0x58] sm:$0xff]
      %v3743 = vld [vmem:[%s1782 + $0x60] sm:$0xff]
      %v3744 = vld [vmem:[%s1782 + $0x68] sm:$0xff]
      %v3745 = vld [vmem:[%s1782 + $0x70] sm:$0xff]
      %v3746 = vld [vmem:[%s1782 + $0x78] sm:$0xff]
      %v3747 = vld [vmem:[%s1782 + $0x80] sm:$0xff]
      %v3748 = vld [vmem:[%s1782 + $0x88] sm:$0xff]
      %v3749 = vld [vmem:[%s1782 + $0x90] sm:$0xff]
      %v3750 = vld [vmem:[%s1782 + $0x98] sm:$0xff]
      %v3751 = vld [vmem:[%s1782 + $0xa0] sm:$0xff]
      %v3752 = vld [vmem:[%s1782 + $0xa8] sm:$0xff]
      %v3753 = vld [vmem:[%s1782 + $0xb0] sm:$0xff]
      %v3754 = vld [vmem:[%s1782 + $0xb8] sm:$0xff]
      %v3755 = vld [vmem:[%s1782 + $0xc0] sm:$0xff]
      %v3756 = vld [vmem:[%s1782 + $0xc8] sm:$0xff]
      %v3757 = vld [vmem:[%s1782 + $0xd0] sm:$0xff]
      %v3758 = vld [vmem:[%s1782 + $0xd8] sm:$0xff]
      %v3759 = vld [vmem:[%s1782 + $0xe0] sm:$0xff]
      %v3760 = vld [vmem:[%s1782 + $0xe8] sm:$0xff]
      %v3761 = vld [vmem:[%s1782 + $0xf0] sm:$0xff]
      %v3762 = vld [vmem:[%s1782 + $0xf8] sm:$0xff]
      %v3763 = vld [vmem:[%s1782 + $0x100] sm:$0xff]
      %v3764 = vld [vmem:[%s1782 + $0x108] sm:$0xff]
      %v3765 = vld [vmem:[%s1782 + $0x110] sm:$0xff]
      %v3766 = vld [vmem:[%s1782 + $0x118] sm:$0xff]
      %v3767 = vld [vmem:[%s1782 + $0x120] sm:$0xff]
      %v3768 = vld [vmem:[%s1782 + $0x128] sm:$0xff]
      %v3769 = vld [vmem:[%s1782 + $0x130] sm:$0xff]
      %v3770 = vld [vmem:[%s1782 + $0x138] sm:$0xff]
      %v3771 = vld [vmem:[%s1782 + $0x140] sm:$0xff]
      %v3772 = vld [vmem:[%s1782 + $0x148] sm:$0xff]
      %v3773 = vld [vmem:[%s1782 + $0x150] sm:$0xff]
      %v3774 = vld [vmem:[%s1782 + $0x158] sm:$0xff]
      %v3775 = vld [vmem:[%s1782 + $0x160] sm:$0xff]
      %v3776 = vld [vmem:[%s1782 + $0x168] sm:$0xff]
      %v3777 = vld [vmem:[%s1782 + $0x170] sm:$0xff]
      %v3778 = vld [vmem:[%s1782 + $0x178] sm:$0xff]
      %v3779 = vld [vmem:[%s1782 + $0x180] sm:$0xff]
      %v3780 = vld [vmem:[%s1782 + $0x188] sm:$0xff]
      %v3781 = vld [vmem:[%s1782 + $0x190] sm:$0xff]
      %v3782 = vld [vmem:[%s1782 + $0x198] sm:$0xff]
      %v3783 = vld [vmem:[%s1782 + $0x1a0] sm:$0xff]
      %v3784 = vld [vmem:[%s1782 + $0x1a8] sm:$0xff]
      %v3785 = vld [vmem:[%s1782 + $0x1b0] sm:$0xff]
      %v3786 = vld [vmem:[%s1782 + $0x1b8] sm:$0xff]
      %v3787 = vld [vmem:[%s1782 + $0x1c0] sm:$0xff]
      %v3788 = vld [vmem:[%s1782 + $0x1c8] sm:$0xff]
      %v3789 = vld [vmem:[%s1782 + $0x1d0] sm:$0xff]
      %v3790 = vld [vmem:[%s1782 + $0x1d8] sm:$0xff]
      %v3791 = vld [vmem:[%s1782 + $0x1e0] sm:$0xff]
      %v3792 = vld [vmem:[%s1782 + $0x1e8] sm:$0xff]
      %v3793 = vld [vmem:[%s1782 + $0x1f0] sm:$0xff]
      %v3794 = vld [vmem:[%s1782 + $0x1f8] sm:$0xff]
      %v3795 = vpack.c.bf16 %v3733, %v3731
      %v3796 = vpack.c.bf16 %v3734, %v3732
      %v3797 = vpack.c.bf16 %v3737, %v3735
      %v3798 = vpack.c.bf16 %v3738, %v3736
      %v3799 = vpack.c.bf16 %v3741, %v3739
      %v3800 = vpack.c.bf16 %v3742, %v3740
      %v3801 = vpack.c.bf16 %v3745, %v3743
      %v3802 = vpack.c.bf16 %v3746, %v3744
      %v3803 = vpack.c.bf16 %v3749, %v3747
      %v3804 = vpack.c.bf16 %v3750, %v3748
      %v3805 = vpack.c.bf16 %v3753, %v3751
      %v3806 = vpack.c.bf16 %v3754, %v3752
      %v3807 = vpack.c.bf16 %v3757, %v3755
      %v3808 = vpack.c.bf16 %v3758, %v3756
      %v3809 = vpack.c.bf16 %v3761, %v3759
      %v3810 = vpack.c.bf16 %v3762, %v3760
      %v3811 = vpack.c.bf16 %v3765, %v3763
      %v3812 = vpack.c.bf16 %v3766, %v3764
      %v3813 = vpack.c.bf16 %v3769, %v3767
      %v3814 = vpack.c.bf16 %v3770, %v3768
      %v3815 = vpack.c.bf16 %v3773, %v3771
      %v3816 = vpack.c.bf16 %v3774, %v3772
      %v3817 = vpack.c.bf16 %v3777, %v3775
      %v3818 = vpack.c.bf16 %v3778, %v3776
      %v3819 = vpack.c.bf16 %v3781, %v3779
      %v3820 = vpack.c.bf16 %v3782, %v3780
      %v3821 = vpack.c.bf16 %v3785, %v3783
      %v3822 = vpack.c.bf16 %v3786, %v3784
      %v3823 = vpack.c.bf16 %v3789, %v3787
      %v3824 = vpack.c.bf16 %v3790, %v3788
      %v3825 = vpack.c.bf16 %v3793, %v3791
      %v3826 = vpack.c.bf16 %v3794, %v3792
      %s3827 = scalar_lea.vmem %s3, 192
      %v3828 = vld [vmem:[%s3827] sm:$0xf]
      %v3829 = vld [vmem:[%s3827 + $0x4] sm:$0xf]
      %v3830 = vld [vmem:[%s3827 + $0x8] sm:$0xf]
      %v3831 = vld [vmem:[%s3827 + $0xc] sm:$0xf]
      %v3832 = vld [vmem:[%s3827 + $0x10] sm:$0xf]
      %v3833 = vld [vmem:[%s3827 + $0x14] sm:$0xf]
      %v3834 = vld [vmem:[%s3827 + $0x18] sm:$0xf]
      %v3835 = vld [vmem:[%s3827 + $0x1c] sm:$0xf]
      %v3836 = vld [vmem:[%s3827 + $0x20] sm:$0xf]
      %v3837 = vld [vmem:[%s3827 + $0x24] sm:$0xf]
      %v3838 = vld [vmem:[%s3827 + $0x28] sm:$0xf]
      %v3839 = vld [vmem:[%s3827 + $0x2c] sm:$0xf]
      %v3840 = vld [vmem:[%s3827 + $0x30] sm:$0xf]
      %v3841 = vld [vmem:[%s3827 + $0x34] sm:$0xf]
      %v3842 = vld [vmem:[%s3827 + $0x38] sm:$0xf]
      %v3843 = vld [vmem:[%s3827 + $0x3c] sm:$0xf]
      %v3844 = vld [vmem:[%s3827 + $0x40] sm:$0xf]
      %v3845 = vld [vmem:[%s3827 + $0x44] sm:$0xf]
      %v3846 = vld [vmem:[%s3827 + $0x48] sm:$0xf]
      %v3847 = vld [vmem:[%s3827 + $0x4c] sm:$0xf]
      %v3848 = vld [vmem:[%s3827 + $0x50] sm:$0xf]
      %v3849 = vld [vmem:[%s3827 + $0x54] sm:$0xf]
      %v3850 = vld [vmem:[%s3827 + $0x58] sm:$0xf]
      %v3851 = vld [vmem:[%s3827 + $0x5c] sm:$0xf]
      %v3876 = vunpack.c.l.b16 %v3828
      %v3877 = vunpack.c.l.b16 %v3829
      %v3878 = vunpack.c.l.b16 %v3830
      %v3879 = vunpack.c.l.b16 %v3831
      %v3880 = vunpack.c.l.b16 %v3832
      %v3881 = vunpack.c.l.b16 %v3833
      %v3882 = vunpack.c.l.b16 %v3834
      %v3883 = vunpack.c.l.b16 %v3835
      %v3884 = vunpack.c.l.b16 %v3836
      %v3885 = vunpack.c.l.b16 %v3837
      %v3886 = vunpack.c.l.b16 %v3838
      %v3887 = vunpack.c.l.b16 %v3839
      %v3888 = vunpack.c.l.b16 %v3840
      %v3889 = vunpack.c.l.b16 %v3841
      %v3890 = vunpack.c.l.b16 %v3842
      %v3891 = vunpack.c.l.b16 %v3843
      %v3892 = vunpack.c.l.b16 %v3844
      %v3893 = vunpack.c.l.b16 %v3845
      %v3894 = vunpack.c.l.b16 %v3846
      %v3895 = vunpack.c.l.b16 %v3847
      %v3896 = vunpack.c.l.b16 %v3848
      %v3897 = vunpack.c.l.b16 %v3849
      %v3898 = vunpack.c.l.b16 %v3850
      %v3899 = vunpack.c.l.b16 %v3851
      %v3900 = vpack.c.b16 %v3877, %v3876
      %v3901 = vpack.c.b16 %v3879, %v3878
      %v3902 = vpack.c.b16 %v3881, %v3880
      %v3903 = vpack.c.b16 %v3883, %v3882
      %v3904 = vpack.c.b16 %v3885, %v3884
      %v3905 = vpack.c.b16 %v3887, %v3886
      %v3906 = vpack.c.b16 %v3889, %v3888
      %v3907 = vpack.c.b16 %v3891, %v3890
      %v3908 = vpack.c.b16 %v3893, %v3892
      %v3909 = vpack.c.b16 %v3895, %v3894
      %v3910 = vpack.c.b16 %v3897, %v3896
      %v3911 = vpack.c.b16 %v3899, %v3898
      %v3925 = vsel %vm227, %v3796, 0
      %v3928 = vsel %vm227, %v3798, 0
      %v3931 = vsel %vm227, %v3800, 0
      %v3934 = vsel %vm227, %v3802, 0
      %v3937 = vsel %vm227, %v3804, 0
      %v3940 = vsel %vm227, %v3806, 0
      %v3943 = vsel %vm227, %v3808, 0
      %v3946 = vsel %vm227, %v3810, 0
      %v3949 = vsel %vm227, %v3812, 0
      %v3952 = vsel %vm227, %v3814, 0
      %v3955 = vsel %vm227, %v3816, 0
      %v3958 = vsel %vm227, %v3818, 0
      %v3961 = vsel %vm227, %v3820, 0
      %v3964 = vsel %vm227, %v3822, 0
      %v3967 = vsel %vm227, %v3824, 0
      %v3970 = vsel %vm227, %v3826, 0
      %3972 = vmatprep.subr.bf16.mxu0 0
      %3973 = vmatpush1.bf16.msra.mxu0 %v3900
      %3974 = vmatprep.subr.bf16.mxu0 0
      %3975 = vmatpush1.bf16.msra.mxu0 %v3901
      %3976 = vmatprep.subr.bf16.mxu0 0
      %3977 = vmatpush1.bf16.msra.mxu0 %v3902
      %3978 = vmatprep.subr.bf16.mxu0 0
      %3979 = vmatpush1.bf16.msra.mxu0 %v3903
      %3980 = vmatprep.subr.bf16.mxu0 0
      %3981 = vmatpush1.bf16.msra.mxu0 %v3904
      %3982 = vmatprep.subr.bf16.mxu0 0
      %3983 = vmatpush1.bf16.msra.mxu0 %v3905
      %3984 = vmatprep.subr.bf16.mxu0 0
      %3985 = vmatpush1.bf16.msra.mxu0 %v3906
      %3986 = vmatprep.subr.bf16.mxu0 0
      %3987 = vmatpush1.bf16.msra.mxu0 %v3907
      %3988 = vmatprep.subr.bf16.mxu0 0
      %3989 = vmatpush1.bf16.msra.mxu0 %v3908
      %3990 = vmatprep.subr.bf16.mxu0 0
      %3991 = vmatpush1.bf16.msra.mxu0 %v3909
      %3992 = vmatprep.subr.bf16.mxu0 0
      %3993 = vmatpush1.bf16.msra.mxu0 %v3910
      %3994 = vmatprep.subr.bf16.mxu0 0
      %3995 = vmatpush1.bf16.msra.mxu0 %v3911
      %3996 = vmatprep.subr.bf16.mxu0 0
      %3997 = vmatpush1.bf16.msra.mxu0 0
      %3998 = vmatprep.subr.bf16.mxu0 0
      %3999 = vmatpush1.bf16.msra.mxu0 0
      %4000 = vmatprep.subr.bf16.mxu0 0
      %4001 = vmatpush1.bf16.msra.mxu0 0
      %4002 = vmatprep.subr.bf16.mxu0 0
      %4003 = vmatpush1.bf16.msra.mxu0 0
      %4004 = vmatprep.mubr.bf16.mxu0 %v3925
      %4005 = vmatmul.mubr.bf16.gmra.mrb[0].mxu0 %v3795
      %v4006 = vpop.f32.mrb[0].mxu0
      %v4007 = vadd.f32 0.0, %v4006
      %v4008 = vpop.f32.mrb[0].mxu0
      %v4009 = vpop.f32.mrb[0].mxu0
      %v4010 = vadd.f32 0.0, %v4009
      %v4011 = vpop.f32.mrb[0].mxu0
      %4012 = vmatprep.mubr.bf16.mxu0 %v3928
      %4013 = vmatmul.mubr.bf16.gmra.mrb[0].mxu0 %v3797
      %v4014 = vpop.f32.mrb[0].mxu0
      %v4015 = vadd.f32 0.0, %v4014
      %v4016 = vpop.f32.mrb[0].mxu0
      %v4017 = vpop.f32.mrb[0].mxu0
      %v4018 = vadd.f32 0.0, %v4017
      %v4019 = vpop.f32.mrb[0].mxu0
      %4020 = vmatprep.mubr.bf16.mxu0 %v3931
      %4021 = vmatmul.mubr.bf16.gmra.mrb[0].mxu0 %v3799
      %v4022 = vpop.f32.mrb[0].mxu0
      %v4023 = vadd.f32 0.0, %v4022
      %v4024 = vpop.f32.mrb[0].mxu0
      %v4025 = vpop.f32.mrb[0].mxu0
      %v4026 = vadd.f32 0.0, %v4025
      %v4027 = vpop.f32.mrb[0].mxu0
      %4028 = vmatprep.mubr.bf16.mxu0 %v3934
      %4029 = vmatmul.mubr.bf16.gmra.mrb[0].mxu0 %v3801
      %v4030 = vpop.f32.mrb[0].mxu0
      %v4031 = vadd.f32 0.0, %v4030
      %v4032 = vpop.f32.mrb[0].mxu0
      %v4033 = vpop.f32.mrb[0].mxu0
      %v4034 = vadd.f32 0.0, %v4033
      %v4035 = vpop.f32.mrb[0].mxu0
      %4036 = vmatprep.mubr.bf16.mxu0 %v3937
      %4037 = vmatmul.mubr.bf16.gmra.mrb[0].mxu0 %v3803
      %v4038 = vpop.f32.mrb[0].mxu0
      %v4039 = vadd.f32 0.0, %v4038
      %v4040 = vpop.f32.mrb[0].mxu0
      %v4041 = vpop.f32.mrb[0].mxu0
      %v4042 = vadd.f32 0.0, %v4041
      %v4043 = vpop.f32.mrb[0].mxu0
      %4044 = vmatprep.mubr.bf16.mxu0 %v3940
      %4045 = vmatmul.mubr.bf16.gmra.mrb[0].mxu0 %v3805
      %v4046 = vpop.f32.mrb[0].mxu0
      %v4047 = vadd.f32 0.0, %v4046
      %v4048 = vpop.f32.mrb[0].mxu0
      %v4049 = vpop.f32.mrb[0].mxu0
      %v4050 = vadd.f32 0.0, %v4049
      %v4051 = vpop.f32.mrb[0].mxu0
      %4052 = vmatprep.mubr.bf16.mxu0 %v3943
      %4053 = vmatmul.mubr.bf16.gmra.mrb[0].mxu0 %v3807
      %v4054 = vpop.f32.mrb[0].mxu0
      %v4055 = vadd.f32 0.0, %v4054
      %v4056 = vpop.f32.mrb[0].mxu0
      %v4057 = vpop.f32.mrb[0].mxu0
      %v4058 = vadd.f32 0.0, %v4057
      %v4059 = vpop.f32.mrb[0].mxu0
      %4060 = vmatprep.mubr.bf16.mxu0 %v3946
      %4061 = vmatmul.mubr.bf16.gmra.mrb[0].mxu0 %v3809
      %v4062 = vpop.f32.mrb[0].mxu0
      %v4063 = vadd.f32 0.0, %v4062
      %v4064 = vpop.f32.mrb[0].mxu0
      %v4065 = vpop.f32.mrb[0].mxu0
      %v4066 = vadd.f32 0.0, %v4065
      %v4067 = vpop.f32.mrb[0].mxu0
      %4068 = vmatprep.mubr.bf16.mxu0 %v3949
      %4069 = vmatmul.mubr.bf16.gmra.mrb[0].mxu0 %v3811
      %v4070 = vpop.f32.mrb[0].mxu0
      %v4071 = vadd.f32 0.0, %v4070
      %v4072 = vpop.f32.mrb[0].mxu0
      %v4073 = vpop.f32.mrb[0].mxu0
      %v4074 = vadd.f32 0.0, %v4073
      %v4075 = vpop.f32.mrb[0].mxu0
      %4076 = vmatprep.mubr.bf16.mxu0 %v3952
      %4077 = vmatmul.mubr.bf16.gmra.mrb[0].mxu0 %v3813
      %v4078 = vpop.f32.mrb[0].mxu0
      %v4079 = vadd.f32 0.0, %v4078
      %v4080 = vpop.f32.mrb[0].mxu0
      %v4081 = vpop.f32.mrb[0].mxu0
      %v4082 = vadd.f32 0.0, %v4081
      %v4083 = vpop.f32.mrb[0].mxu0
      %4084 = vmatprep.mubr.bf16.mxu0 %v3955
      %4085 = vmatmul.mubr.bf16.gmra.mrb[0].mxu0 %v3815
      %v4086 = vpop.f32.mrb[0].mxu0
      %v4087 = vadd.f32 0.0, %v4086
      %v4088 = vpop.f32.mrb[0].mxu0
      %v4089 = vpop.f32.mrb[0].mxu0
      %v4090 = vadd.f32 0.0, %v4089
      %v4091 = vpop.f32.mrb[0].mxu0
      %4092 = vmatprep.mubr.bf16.mxu0 %v3958
      %4093 = vmatmul.mubr.bf16.gmra.mrb[0].mxu0 %v3817
      %v4094 = vpop.f32.mrb[0].mxu0
      %v4095 = vadd.f32 0.0, %v4094
      %v4096 = vpop.f32.mrb[0].mxu0
      %v4097 = vpop.f32.mrb[0].mxu0
      %v4098 = vadd.f32 0.0, %v4097
      %v4099 = vpop.f32.mrb[0].mxu0
      %4100 = vmatprep.mubr.bf16.mxu0 %v3961
      %4101 = vmatmul.mubr.bf16.gmra.mrb[0].mxu0 %v3819
      %v4102 = vpop.f32.mrb[0].mxu0
      %v4103 = vadd.f32 0.0, %v4102
      %v4104 = vpop.f32.mrb[0].mxu0
      %v4105 = vpop.f32.mrb[0].mxu0
      %v4106 = vadd.f32 0.0, %v4105
      %v4107 = vpop.f32.mrb[0].mxu0
      %4108 = vmatprep.mubr.bf16.mxu0 %v3964
      %4109 = vmatmul.mubr.bf16.gmra.mrb[0].mxu0 %v3821
      %v4110 = vpop.f32.mrb[0].mxu0
      %v4111 = vadd.f32 0.0, %v4110
      %v4112 = vpop.f32.mrb[0].mxu0
      %v4113 = vpop.f32.mrb[0].mxu0
      %v4114 = vadd.f32 0.0, %v4113
      %v4115 = vpop.f32.mrb[0].mxu0
      %4116 = vmatprep.mubr.bf16.mxu0 %v3967
      %4117 = vmatmul.mubr.bf16.gmra.mrb[0].mxu0 %v3823
      %v4118 = vpop.f32.mrb[0].mxu0
      %v4119 = vadd.f32 0.0, %v4118
      %v4120 = vpop.f32.mrb[0].mxu0
      %v4121 = vpop.f32.mrb[0].mxu0
      %v4122 = vadd.f32 0.0, %v4121
      %v4123 = vpop.f32.mrb[0].mxu0
      %4124 = vmatprep.mubr.bf16.mxu0 %v3970
      %4125 = vmatmul.mubr.bf16.gmra.mrb[0].mxu0 %v3825
      %v4126 = vpop.f32.mrb[0].mxu0
      %v4127 = vadd.f32 0.0, %v4126
      %v4128 = vpop.f32.mrb[0].mxu0
      %v4129 = vpop.f32.mrb[0].mxu0
      %v4130 = vadd.f32 0.0, %v4129
      %v4131 = vpop.f32.mrb[0].mxu0
      %4132 = vdwg.mxu0
      %v4133 = vadd.f32 %v3605, %v4007
      %v4134 = vadd.f32 %v3608, %v4010
      %v4135 = vadd.f32 %v3613, %v4015
      %v4136 = vadd.f32 %v3616, %v4018
      %v4137 = vadd.f32 %v3621, %v4023
      %v4138 = vadd.f32 %v3624, %v4026
      %v4139 = vadd.f32 %v3629, %v4031
      %v4140 = vadd.f32 %v3632, %v4034
      %v4141 = vadd.f32 %v3637, %v4039
      %v4142 = vadd.f32 %v3640, %v4042
      %v4143 = vadd.f32 %v3645, %v4047
      %v4144 = vadd.f32 %v3648, %v4050
      %v4145 = vadd.f32 %v3653, %v4055
      %v4146 = vadd.f32 %v3656, %v4058
      %v4147 = vadd.f32 %v3661, %v4063
      %v4148 = vadd.f32 %v3664, %v4066
      %v4149 = vadd.f32 %v3669, %v4071
      %v4150 = vadd.f32 %v3672, %v4074
      %v4151 = vadd.f32 %v3677, %v4079
      %v4152 = vadd.f32 %v3680, %v4082
      %v4153 = vadd.f32 %v3685, %v4087
      %v4154 = vadd.f32 %v3688, %v4090
      %v4155 = vadd.f32 %v3693, %v4095
      %v4156 = vadd.f32 %v3696, %v4098
      %v4157 = vadd.f32 %v3701, %v4103
      %v4158 = vadd.f32 %v3704, %v4106
      %v4159 = vadd.f32 %v3709, %v4111
      %v4160 = vadd.f32 %v3712, %v4114
      %v4161 = vadd.f32 %v3717, %v4119
      %v4162 = vadd.f32 %v3720, %v4122
      %v4163 = vadd.f32 %v3725, %v4127
      %v4164 = vadd.f32 %v3728, %v4130
      %v4165 = vld [vmem:[%s4] sm:$0x1]
      %v4167 = vlaneseq
      %v4168 = vshrl.u32 %v4167, 7
      %v4169 = vsub.s32 0, %v4168
      %v4170 = vrot.slane %v4165, %v4169
      %v4172 = vadd.f32 %v4133, %v4170
      %v4173 = vadd.f32 %v4134, %v4170
      %v4174 = vadd.f32 %v4135, %v4170
      %v4175 = vadd.f32 %v4136, %v4170
      %v4176 = vadd.f32 %v4137, %v4170
      %v4177 = vadd.f32 %v4138, %v4170
      %v4178 = vadd.f32 %v4139, %v4170
      %v4179 = vadd.f32 %v4140, %v4170
      %v4180 = vadd.f32 %v4141, %v4170
      %v4181 = vadd.f32 %v4142, %v4170
      %v4182 = vadd.f32 %v4143, %v4170
      %v4183 = vadd.f32 %v4144, %v4170
      %v4184 = vadd.f32 %v4145, %v4170
      %v4185 = vadd.f32 %v4146, %v4170
      %v4186 = vadd.f32 %v4147, %v4170
      %v4187 = vadd.f32 %v4148, %v4170
      %v4188 = vadd.f32 %v4149, %v4170
      %v4189 = vadd.f32 %v4150, %v4170
      %v4190 = vadd.f32 %v4151, %v4170
      %v4191 = vadd.f32 %v4152, %v4170
      %v4192 = vadd.f32 %v4153, %v4170
      %v4193 = vadd.f32 %v4154, %v4170
      %v4194 = vadd.f32 %v4155, %v4170
      %v4195 = vadd.f32 %v4156, %v4170
      %v4196 = vadd.f32 %v4157, %v4170
      %v4197 = vadd.f32 %v4158, %v4170
      %v4198 = vadd.f32 %v4159, %v4170
      %v4199 = vadd.f32 %v4160, %v4170
      %v4200 = vadd.f32 %v4161, %v4170
      %v4201 = vadd.f32 %v4162, %v4170
      %v4202 = vadd.f32 %v4163, %v4170
      %v4203 = vadd.f32 %v4164, %v4170
      %v4204 = vld [vmem:[%s219] sm:$0xf]
      %v4205 = vld [vmem:[%s219 + $0x4] sm:$0xf]
      %v4206 = vld [vmem:[%s219 + $0x8] sm:$0xf]
      %v4207 = vld [vmem:[%s219 + $0xc] sm:$0xf]
      %v4208 = vld [vmem:[%s219 + $0x10] sm:$0xf]
      %v4209 = vld [vmem:[%s219 + $0x14] sm:$0xf]
      %v4210 = vld [vmem:[%s219 + $0x18] sm:$0xf]
      %v4211 = vld [vmem:[%s219 + $0x1c] sm:$0xf]
      %v4212 = vld [vmem:[%s219 + $0x20] sm:$0xf]
      %v4213 = vld [vmem:[%s219 + $0x24] sm:$0xf]
      %v4214 = vld [vmem:[%s219 + $0x28] sm:$0xf]
      %v4215 = vld [vmem:[%s219 + $0x2c] sm:$0xf]
      %v4216 = vld [vmem:[%s219 + $0x30] sm:$0xf]
      %v4217 = vld [vmem:[%s219 + $0x34] sm:$0xf]
      %v4218 = vld [vmem:[%s219 + $0x38] sm:$0xf]
      %v4219 = vld [vmem:[%s219 + $0x3c] sm:$0xf]
      %v4220 = vld [vmem:[%s219 + $0x40] sm:$0xf]
      %v4221 = vld [vmem:[%s219 + $0x44] sm:$0xf]
      %v4222 = vld [vmem:[%s219 + $0x48] sm:$0xf]
      %v4223 = vld [vmem:[%s219 + $0x4c] sm:$0xf]
      %v4224 = vld [vmem:[%s219 + $0x50] sm:$0xf]
      %v4225 = vld [vmem:[%s219 + $0x54] sm:$0xf]
      %v4226 = vld [vmem:[%s219 + $0x58] sm:$0xf]
      %v4227 = vld [vmem:[%s219 + $0x5c] sm:$0xf]
      %v4228 = vld [vmem:[%s219 + $0x60] sm:$0xf]
      %v4229 = vld [vmem:[%s219 + $0x64] sm:$0xf]
      %v4230 = vld [vmem:[%s219 + $0x68] sm:$0xf]
      %v4231 = vld [vmem:[%s219 + $0x6c] sm:$0xf]
      %v4232 = vld [vmem:[%s219 + $0x70] sm:$0xf]
      %v4233 = vld [vmem:[%s219 + $0x74] sm:$0xf]
      %v4234 = vld [vmem:[%s219 + $0x78] sm:$0xf]
      %v4235 = vld [vmem:[%s219 + $0x7c] sm:$0xf]
      %v4236 = vunpack.c.l.bf16 %v4204
      %v4237 = vunpack.c.l.bf16 %v4205
      %v4238 = vunpack.c.l.bf16 %v4206
      %v4239 = vunpack.c.l.bf16 %v4207
      %v4240 = vunpack.c.l.bf16 %v4208
      %v4241 = vunpack.c.l.bf16 %v4209
      %v4242 = vunpack.c.l.bf16 %v4210
      %v4243 = vunpack.c.l.bf16 %v4211
      %v4244 = vunpack.c.l.bf16 %v4212
      %v4245 = vunpack.c.l.bf16 %v4213
      %v4246 = vunpack.c.l.bf16 %v4214
      %v4247 = vunpack.c.l.bf16 %v4215
      %v4248 = vunpack.c.l.bf16 %v4216
      %v4249 = vunpack.c.l.bf16 %v4217
      %v4250 = vunpack.c.l.bf16 %v4218
      %v4251 = vunpack.c.l.bf16 %v4219
      %v4252 = vunpack.c.l.bf16 %v4220
      %v4253 = vunpack.c.l.bf16 %v4221
      %v4254 = vunpack.c.l.bf16 %v4222
      %v4255 = vunpack.c.l.bf16 %v4223
      %v4256 = vunpack.c.l.bf16 %v4224
      %v4257 = vunpack.c.l.bf16 %v4225
      %v4258 = vunpack.c.l.bf16 %v4226
      %v4259 = vunpack.c.l.bf16 %v4227
      %v4260 = vunpack.c.l.bf16 %v4228
      %v4261 = vunpack.c.l.bf16 %v4229
      %v4262 = vunpack.c.l.bf16 %v4230
      %v4263 = vunpack.c.l.bf16 %v4231
      %v4264 = vunpack.c.l.bf16 %v4232
      %v4265 = vunpack.c.l.bf16 %v4233
      %v4266 = vunpack.c.l.bf16 %v4234
      %v4267 = vunpack.c.l.bf16 %v4235
      %v4268 = vadd.f32 %v4172, %v4236
      %v4269 = vadd.f32 %v4173, %v4237
      %v4270 = vadd.f32 %v4174, %v4238
      %v4271 = vadd.f32 %v4175, %v4239
      %v4272 = vadd.f32 %v4176, %v4240
      %v4273 = vadd.f32 %v4177, %v4241
      %v4274 = vadd.f32 %v4178, %v4242
      %v4275 = vadd.f32 %v4179, %v4243
      %v4276 = vadd.f32 %v4180, %v4244
      %v4277 = vadd.f32 %v4181, %v4245
      %v4278 = vadd.f32 %v4182, %v4246
      %v4279 = vadd.f32 %v4183, %v4247
      %v4280 = vadd.f32 %v4184, %v4248
      %v4281 = vadd.f32 %v4185, %v4249
      %v4282 = vadd.f32 %v4186, %v4250
      %v4283 = vadd.f32 %v4187, %v4251
      %v4284 = vadd.f32 %v4188, %v4252
      %v4285 = vadd.f32 %v4189, %v4253
      %v4286 = vadd.f32 %v4190, %v4254
      %v4287 = vadd.f32 %v4191, %v4255
      %v4288 = vadd.f32 %v4192, %v4256
      %v4289 = vadd.f32 %v4193, %v4257
      %v4290 = vadd.f32 %v4194, %v4258
      %v4291 = vadd.f32 %v4195, %v4259
      %v4292 = vadd.f32 %v4196, %v4260
      %v4293 = vadd.f32 %v4197, %v4261
      %v4294 = vadd.f32 %v4198, %v4262
      %v4295 = vadd.f32 %v4199, %v4263
      %v4296 = vadd.f32 %v4200, %v4264
      %v4297 = vadd.f32 %v4201, %v4265
      %v4298 = vadd.f32 %v4202, %v4266
      %v4299 = vadd.f32 %v4203, %v4267
      %v4300 = vmax.f32 %v4268, 0.0
      %v4301 = vmax.f32 %v4269, 0.0
      %v4302 = vmax.f32 %v4270, 0.0
      %v4303 = vmax.f32 %v4271, 0.0
      %v4304 = vmax.f32 %v4272, 0.0
      %v4305 = vmax.f32 %v4273, 0.0
      %v4306 = vmax.f32 %v4274, 0.0
      %v4307 = vmax.f32 %v4275, 0.0
      %v4308 = vmax.f32 %v4276, 0.0
      %v4309 = vmax.f32 %v4277, 0.0
      %v4310 = vmax.f32 %v4278, 0.0
      %v4311 = vmax.f32 %v4279, 0.0
      %v4312 = vmax.f32 %v4280, 0.0
      %v4313 = vmax.f32 %v4281, 0.0
      %v4314 = vmax.f32 %v4282, 0.0
      %v4315 = vmax.f32 %v4283, 0.0
      %v4316 = vmax.f32 %v4284, 0.0
      %v4317 = vmax.f32 %v4285, 0.0
      %v4318 = vmax.f32 %v4286, 0.0
      %v4319 = vmax.f32 %v4287, 0.0
      %v4320 = vmax.f32 %v4288, 0.0
      %v4321 = vmax.f32 %v4289, 0.0
      %v4322 = vmax.f32 %v4290, 0.0
      %v4323 = vmax.f32 %v4291, 0.0
      %v4324 = vmax.f32 %v4292, 0.0
      %v4325 = vmax.f32 %v4293, 0.0
      %v4326 = vmax.f32 %v4294, 0.0
      %v4327 = vmax.f32 %v4295, 0.0
      %v4328 = vmax.f32 %v4296, 0.0
      %v4329 = vmax.f32 %v4297, 0.0
      %v4330 = vmax.f32 %v4298, 0.0
      %v4331 = vmax.f32 %v4299, 0.0
      %v4332 = vpack.c.bf16 %v4301, %v4300
      %v4333 = vpack.c.bf16 %v4303, %v4302
      %v4334 = vpack.c.bf16 %v4305, %v4304
      %v4335 = vpack.c.bf16 %v4307, %v4306
      %v4336 = vpack.c.bf16 %v4309, %v4308
      %v4337 = vpack.c.bf16 %v4311, %v4310
      %v4338 = vpack.c.bf16 %v4313, %v4312
      %v4339 = vpack.c.bf16 %v4315, %v4314
      %v4340 = vpack.c.bf16 %v4317, %v4316
      %v4341 = vpack.c.bf16 %v4319, %v4318
      %v4342 = vpack.c.bf16 %v4321, %v4320
      %v4343 = vpack.c.bf16 %v4323, %v4322
      %v4344 = vpack.c.bf16 %v4325, %v4324
      %v4345 = vpack.c.bf16 %v4327, %v4326
      %v4346 = vpack.c.bf16 %v4329, %v4328
      %v4347 = vpack.c.bf16 %v4331, %v4330
      %v4364 = vunpack.c.l.b16 %v4332
      %v4365 = vunpack.c.h.b16 %v4332
      %v4366 = vunpack.c.l.b16 %v4333
      %v4367 = vunpack.c.h.b16 %v4333
      %v4368 = vunpack.c.l.b16 %v4334
      %v4369 = vunpack.c.h.b16 %v4334
      %v4370 = vunpack.c.l.b16 %v4335
      %v4371 = vunpack.c.h.b16 %v4335
      %v4372 = vunpack.c.l.b16 %v4336
      %v4373 = vunpack.c.h.b16 %v4336
      %v4374 = vunpack.c.l.b16 %v4337
      %v4375 = vunpack.c.h.b16 %v4337
      %v4376 = vunpack.c.l.b16 %v4338
      %v4377 = vunpack.c.h.b16 %v4338
      %v4378 = vunpack.c.l.b16 %v4339
      %v4379 = vunpack.c.h.b16 %v4339
      %v4380 = vunpack.c.l.b16 %v4340
      %v4381 = vunpack.c.h.b16 %v4340
      %v4382 = vunpack.c.l.b16 %v4341
      %v4383 = vunpack.c.h.b16 %v4341
      %v4384 = vunpack.c.l.b16 %v4342
      %v4385 = vunpack.c.h.b16 %v4342
      %v4386 = vunpack.c.l.b16 %v4343
      %v4387 = vunpack.c.h.b16 %v4343
      %v4388 = vunpack.c.l.b16 %v4344
      %v4389 = vunpack.c.h.b16 %v4344
      %v4390 = vunpack.c.l.b16 %v4345
      %v4391 = vunpack.c.h.b16 %v4345
      %v4392 = vunpack.c.l.b16 %v4346
      %v4393 = vunpack.c.h.b16 %v4346
      %v4394 = vunpack.c.l.b16 %v4347
      %v4395 = vunpack.c.h.b16 %v4347
      %v4396 = vpack.c.b16 %v4364, %v4364
      %v4397 = vpack.c.b16 %v4365, %v4365
      %v4398 = vpack.c.b16 %v4366, %v4366
      %v4399 = vpack.c.b16 %v4367, %v4367
      %v4400 = vpack.c.b16 %v4368, %v4368
      %v4401 = vpack.c.b16 %v4369, %v4369
      %v4402 = vpack.c.b16 %v4370, %v4370
      %v4403 = vpack.c.b16 %v4371, %v4371
      %v4404 = vpack.c.b16 %v4372, %v4372
      %v4405 = vpack.c.b16 %v4373, %v4373
      %v4406 = vpack.c.b16 %v4374, %v4374
      %v4407 = vpack.c.b16 %v4375, %v4375
      %v4408 = vpack.c.b16 %v4376, %v4376
      %v4409 = vpack.c.b16 %v4377, %v4377
      %v4410 = vpack.c.b16 %v4378, %v4378
      %v4411 = vpack.c.b16 %v4379, %v4379
      %v4412 = vpack.c.b16 %v4380, %v4380
      %v4413 = vpack.c.b16 %v4381, %v4381
      %v4414 = vpack.c.b16 %v4382, %v4382
      %v4415 = vpack.c.b16 %v4383, %v4383
      %v4416 = vpack.c.b16 %v4384, %v4384
      %v4417 = vpack.c.b16 %v4385, %v4385
      %v4418 = vpack.c.b16 %v4386, %v4386
      %v4419 = vpack.c.b16 %v4387, %v4387
      %v4420 = vpack.c.b16 %v4388, %v4388
      %v4421 = vpack.c.b16 %v4389, %v4389
      %v4422 = vpack.c.b16 %v4390, %v4390
      %v4423 = vpack.c.b16 %v4391, %v4391
      %v4424 = vpack.c.b16 %v4392, %v4392
      %v4425 = vpack.c.b16 %v4393, %v4393
      %v4426 = vpack.c.b16 %v4394, %v4394
      %v4427 = vpack.c.b16 %v4395, %v4395
      %vm4460 = vcmask 519168
      %4461 = vst.msk [vmem:[%s224] sm:$0xf] %vm4460, %v4396
      %4462 = vst.msk [vmem:[%s224 + $0x4] sm:$0xf] %vm4460, %v4397
      %4463 = vst.msk [vmem:[%s224 + $0x8] sm:$0xf] %vm4460, %v4398
      %4464 = vst.msk [vmem:[%s224 + $0xc] sm:$0xf] %vm4460, %v4399
      %4465 = vst.msk [vmem:[%s224 + $0x10] sm:$0xf] %vm4460, %v4400
      %4466 = vst.msk [vmem:[%s224 + $0x14] sm:$0xf] %vm4460, %v4401
      %4467 = vst.msk [vmem:[%s224 + $0x18] sm:$0xf] %vm4460, %v4402
      %4468 = vst.msk [vmem:[%s224 + $0x1c] sm:$0xf] %vm4460, %v4403
      %4469 = vst.msk [vmem:[%s224 + $0x20] sm:$0xf] %vm4460, %v4404
      %4470 = vst.msk [vmem:[%s224 + $0x24] sm:$0xf] %vm4460, %v4405
      %4471 = vst.msk [vmem:[%s224 + $0x28] sm:$0xf] %vm4460, %v4406
      %4472 = vst.msk [vmem:[%s224 + $0x2c] sm:$0xf] %vm4460, %v4407
      %4473 = vst.msk [vmem:[%s224 + $0x30] sm:$0xf] %vm4460, %v4408
      %4474 = vst.msk [vmem:[%s224 + $0x34] sm:$0xf] %vm4460, %v4409
      %4475 = vst.msk [vmem:[%s224 + $0x38] sm:$0xf] %vm4460, %v4410
      %4476 = vst.msk [vmem:[%s224 + $0x3c] sm:$0xf] %vm4460, %v4411
      %4477 = vst.msk [vmem:[%s224 + $0x40] sm:$0xf] %vm4460, %v4412
      %4478 = vst.msk [vmem:[%s224 + $0x44] sm:$0xf] %vm4460, %v4413
      %4479 = vst.msk [vmem:[%s224 + $0x48] sm:$0xf] %vm4460, %v4414
      %4480 = vst.msk [vmem:[%s224 + $0x4c] sm:$0xf] %vm4460, %v4415
      %4481 = vst.msk [vmem:[%s224 + $0x50] sm:$0xf] %vm4460, %v4416
      %4482 = vst.msk [vmem:[%s224 + $0x54] sm:$0xf] %vm4460, %v4417
      %4483 = vst.msk [vmem:[%s224 + $0x58] sm:$0xf] %vm4460, %v4418
      %4484 = vst.msk [vmem:[%s224 + $0x5c] sm:$0xf] %vm4460, %v4419
      %4485 = vst.msk [vmem:[%s224 + $0x60] sm:$0xf] %vm4460, %v4420
      %4486 = vst.msk [vmem:[%s224 + $0x64] sm:$0xf] %vm4460, %v4421
      %4487 = vst.msk [vmem:[%s224 + $0x68] sm:$0xf] %vm4460, %v4422
      %4488 = vst.msk [vmem:[%s224 + $0x6c] sm:$0xf] %vm4460, %v4423
      %4489 = vst.msk [vmem:[%s224 + $0x70] sm:$0xf] %vm4460, %v4424
      %4490 = vst.msk [vmem:[%s224 + $0x74] sm:$0xf] %vm4460, %v4425
      %4491 = vst.msk [vmem:[%s224 + $0x78] sm:$0xf] %vm4460, %v4426
      %4492 = vst.msk [vmem:[%s224 + $0x7c] sm:$0xf] %vm4460, %v4427
      %p4493 = scmp.lt.s32.totalorder %s16, 1
      %s4494 = scalar_select %p4493, %s16, 1
      %s4495 = smul.addr %s4494, 32
      %s4496 = smul.addr %s4495, 4
      %s4497 = scalar_lea.vmem %s5, %s4496
      // Predicated region
      $region41: #{resnet18_extractor.6} parent=39 // pred_check
        %p4498 = pneg %p144
      $region42: #{resnet18_extractor.6} parent=39 // pred_check_branch
        %4500 = sbr.rel (%p4498) target = $region44
      $region43: #{resnet18_extractor.6} parent=39 // pred_region
        _
      $region44: #{resnet18_extractor.6} parent=39 // pred_fallthru
        _
    $region40: #{resnet18_extractor.6} parent=5 // pred_fallthru
      _
    %p4501 = scmp.le.s32.totalorder 2, %s11
    // Predicated region
    $region45: #{resnet18_extractor.6} parent=5 // pred_check
      %p4502 = pneg %p4501
    $region46: #{resnet18_extractor.6} parent=5 // pred_check_branch
      %4504 = sbr.rel (%p4502) target = $region48
    $region47: #{resnet18_extractor.6} parent=5 // pred_region
      %s4505 = ssub.s32 %s11, 2
      // Predicated region
      $region49: #{resnet18_extractor.6} parent=47 // pred_check
        %p4506 = pneg %p150
      $region50: #{resnet18_extractor.6} parent=47 // pred_check_branch
        %4508 = sbr.rel (%p4506) target = $region52
      $region51: #{resnet18_extractor.6} parent=47 // pred_region
        %p4509 = scmp.lt.s32.totalorder %s17, 1
        %s4510 = scalar_select %p4509, %s17, 1
        %s4511 = smul.addr %s4510, 32
        %s4512 = smul.addr %s4511, 4
        %s4513 = scalar_lea.vmem %s5, %s4512
      $region52: #{resnet18_extractor.6} parent=47 // pred_fallthru
        _
    $region48: #{resnet18_extractor.6} parent=5 // pred_fallthru
      _
  $region6: #{resnet18_extractor.6} parent=0 // loop_footer
    %s15 = sadd.s32 1, %s11
  $region7: #{resnet18_extractor.6} parent=0 // loop_footer_branch
    %10 = sbr.rel target = $region3
  $region8: #{resnet18_extractor.6} parent=0 // loop_exit
    _

// kernel: resnet18_extractor.9
$region0: #{resnet18_extractor.9}
  #allocation0 [shape = 'u32[]', space=smem, size = 0x4, offset = 0x4, fixed_abs, tag = 'smem constant byte address 0x4 - core index']
  #allocation1 [shape = 'u32[144,128]{1,0:T(1,128)}', space=vmem, size = 0x12000, scoped, tag = 'internal scratch']
  #allocation2 [shape = 'f32[1,10,8,384]{3,2,1,0:T(8,128)}', space=vmem, size = 0x1e000, scoped, tag = 'scratch operand']
  %s0 = inlined_call_operand.vmem [shape: bf16[2,8,8,128], index: 0, kind: input, shape index: {}]
  %s1 = inlined_call_operand.vmem [shape: bf16[3,384,128], index: 1, kind: input, shape index: {}]
  %s2 = inlined_call_operand.vmem [shape: f32[1,128], index: 2, kind: input, shape index: {}]
  %s3 = inlined_call_operand.vmem [shape: bf16[3,384,128], index: 3, kind: input, shape index: {}]
  %s4 = inlined_call_operand.vmem [shape: f32[1,128], index: 4, kind: input, shape index: {}]
  %s5 = inlined_call_operand.vmem [shape: bf16[2,64,128], index: 5, kind: output, shape index: {}]
  %s6 = sld [smem:[#allocation0]]
  $region53: #{resnet18_extractor.9} parent=0
    _
  %s8 = ssub.s32 1, %s6
  %s9 = scalar_select 0, %s8, %s6
  loop: start=0, step=1, limit=4
  $region2: #{resnet18_extractor.9} parent=0 // loop_pre_header
    _
  $region3: #{resnet18_extractor.9} parent=0 // loop_header
    %s11 = sphi 0, %s15
    %p12 = scmp.ge.s32.totalorder %s11, 4
    %s21 = sphi 0, %s23
    %s24 = sphi 0, %s21
    %s25 = sphi 0, %s24
    %s41 = sphi 0, %s25
    %s45 = sphi 0, %s45
    %s47 = sphi 0, %s45
    %s48 = sphi 0, %s47
    %s62 = sphi 0, %s48
    %s66 = sphi 0, %s66
    %s68 = sphi 0, %s66
    %s69 = sphi 0, %s68
    %s83 = sphi 0, %s69
    %s87 = sphi 0, %s87
    %s89 = sphi 0, %s87
    %s90 = sphi 0, %s89
    %s104 = sphi 0, %s90
    %s108 = sphi 0, %s108
    %s110 = sphi 0, %s108
    %s111 = sphi 0, %s110
    %s125 = sphi 0, %s111
    %s131 = sphi 0, %s133
    %s134 = sphi 0, %s131
    %s135 = sphi 0, %s134
    %s151 = sphi 0, %s135
  $region4: #{resnet18_extractor.9} parent=0 // loop_header_branch
    %14 = sbr.rel (%p12) target = $region8
  $region5: #{resnet18_extractor.9} parent=0 // loop_body
    %s16 = ssub.s32 %s11, 1
    %s17 = ssub.s32 %s11, 2
    %s18 = sadd.s32 %s11, 1
    %s19 = ssub.s32 %s11, %s18
    %p20 = scmp.eq.s32.totalorder %s19, 0
    %s22 = sadd.s32 %s21, 1
    %s23 = scalar_select %p20, %s21, %s22
    %p26 = pneg %p20
    %p27 = scmp.eq.s32.totalorder %s11, 1
    %p28 = por %p26, %p27
    %p29 = scmp.ne.s32.totalorder %s21, %s24
    %p30 = scmp.eq.s32.totalorder %s11, 0
    %p31 = por %p29, %p30
    %p32 = scmp.ne.s32.totalorder %s21, %s24
    %p33 = scmp.eq.s32.totalorder %s16, 1
    %p34 = por %p32, %p33
    %p35 = scmp.ne.s32.totalorder %s24, %s25
    %p36 = scmp.eq.s32.totalorder %s16, 0
    %p37 = por %p35, %p36
    %p38 = scmp.ne.s32.totalorder %s24, %s25
    %p39 = scmp.eq.s32.totalorder %s17, 1
    %p40 = por %p38, %p39
    %p42 = scmp.ne.s32.totalorder %s25, %s41
    %p43 = scmp.eq.s32.totalorder %s17, 0
    %p44 = por %p42, %p43
    %s46 = sadd.s32 %s45, 1
    %p49 = scmp.eq.s32.totalorder %s11, 1
    %p50 = scmp.ne.s32.totalorder %s45, %s47
    %p51 = scmp.eq.s32.totalorder %s11, 0
    %p52 = por %p50, %p51
    %p53 = scmp.ne.s32.totalorder %s45, %s47
    %p54 = scmp.eq.s32.totalorder %s16, 1
    %p55 = por %p53, %p54
    %p56 = scmp.ne.s32.totalorder %s47, %s48
    %p57 = scmp.eq.s32.totalorder %s16, 0
    %p58 = por %p56, %p57
    %p59 = scmp.ne.s32.totalorder %s47, %s48
    %p60 = scmp.eq.s32.totalorder %s17, 1
    %p61 = por %p59, %p60
    %p63 = scmp.ne.s32.totalorder %s48, %s62
    %p64 = scmp.eq.s32.totalorder %s17, 0
    %p65 = por %p63, %p64
    %s67 = sadd.s32 %s66, 1
    %p70 = scmp.eq.s32.totalorder %s11, 1
    %p71 = scmp.ne.s32.totalorder %s66, %s68
    %p72 = scmp.eq.s32.totalorder %s11, 0
    %p73 = por %p71, %p72
    %p74 = scmp.ne.s32.totalorder %s66, %s68
    %p75 = scmp.eq.s32.totalorder %s16, 1
    %p76 = por %p74, %p75
    %p77 = scmp.ne.s32.totalorder %s68, %s69
    %p78 = scmp.eq.s32.totalorder %s16, 0
    %p79 = por %p77, %p78
    %p80 = scmp.ne.s32.totalorder %s68, %s69
    %p81 = scmp.eq.s32.totalorder %s17, 1
    %p82 = por %p80, %p81
    %p84 = scmp.ne.s32.totalorder %s69, %s83
    %p85 = scmp.eq.s32.totalorder %s17, 0
    %p86 = por %p84, %p85
    %s88 = sadd.s32 %s87, 1
    %p91 = scmp.eq.s32.totalorder %s11, 1
    %p92 = scmp.ne.s32.totalorder %s87, %s89
    %p93 = scmp.eq.s32.totalorder %s11, 0
    %p94 = por %p92, %p93
    %p95 = scmp.ne.s32.totalorder %s87, %s89
    %p96 = scmp.eq.s32.totalorder %s16, 1
    %p97 = por %p95, %p96
    %p98 = scmp.ne.s32.totalorder %s89, %s90
    %p99 = scmp.eq.s32.totalorder %s16, 0
    %p100 = por %p98, %p99
    %p101 = scmp.ne.s32.totalorder %s89, %s90
    %p102 = scmp.eq.s32.totalorder %s17, 1
    %p103 = por %p101, %p102
    %p105 = scmp.ne.s32.totalorder %s90, %s104
    %p106 = scmp.eq.s32.totalorder %s17, 0
    %p107 = por %p105, %p106
    %s109 = sadd.s32 %s108, 1
    %p112 = scmp.eq.s32.totalorder %s11, 1
    %p113 = scmp.ne.s32.totalorder %s108, %s110
    %p114 = scmp.eq.s32.totalorder %s11, 0
    %p115 = por %p113, %p114
    %p116 = scmp.ne.s32.totalorder %s108, %s110
    %p117 = scmp.eq.s32.totalorder %s16, 1
    %p118 = por %p116, %p117
    %p119 = scmp.ne.s32.totalorder %s110, %s111
    %p120 = scmp.eq.s32.totalorder %s16, 0
    %p121 = por %p119, %p120
    %p122 = scmp.ne.s32.totalorder %s110, %s111
    %p123 = scmp.eq.s32.totalorder %s17, 1
    %p124 = por %p122, %p123
    %p126 = scmp.ne.s32.totalorder %s111, %s125
    %p127 = scmp.eq.s32.totalorder %s17, 0
    %p128 = por %p126, %p127
    %s129 = ssub.s32 %s11, %s18
    %p130 = scmp.eq.s32.totalorder %s129, 0
    %s132 = sadd.s32 %s131, 1
    %s133 = scalar_select %p130, %s131, %s132
    %p136 = pneg %p130
    %p137 = scmp.eq.s32.totalorder %s11, 1
    %p138 = por %p136, %p137
    %p139 = scmp.ne.s32.totalorder %s131, %s134
    %p140 = scmp.eq.s32.totalorder %s11, 0
    %p141 = por %p139, %p140
    %p142 = scmp.ne.s32.totalorder %s131, %s134
    %p143 = scmp.eq.s32.totalorder %s16, 1
    %p144 = por %p142, %p143
    %p145 = scmp.ne.s32.totalorder %s134, %s135
    %p146 = scmp.eq.s32.totalorder %s16, 0
    %p147 = por %p145, %p146
    %p148 = scmp.ne.s32.totalorder %s134, %s135
    %p149 = scmp.eq.s32.totalorder %s17, 1
    %p150 = por %p148, %p149
    %p152 = scmp.ne.s32.totalorder %s135, %s151
    %p153 = scmp.eq.s32.totalorder %s17, 0
    %p154 = por %p152, %p153
    %p155 = scmp.le.s32.totalorder 1, %s11
    %p156 = scmp.lt.s32.totalorder %s11, 3
    %p157 = pnand %p155, %p156
    %p158 = pneg %p157
    // Predicated region
    $region9: #{resnet18_extractor.9} parent=5 // pred_check
      _
    $region10: #{resnet18_extractor.9} parent=5 // pred_check_branch
      %160 = sbr.rel (%p157) target = $region12
    $region11: #{resnet18_extractor.9} parent=5 // pred_region
      %s161 = ssub.s32 %s11, 1
      // Predicated region
      $region13: #{resnet18_extractor.9} parent=11 // pred_check
        %p162 = pneg %p58
      $region14: #{resnet18_extractor.9} parent=11 // pred_check_branch
        %164 = sbr.rel (%p162) target = $region16
      $region15: #{resnet18_extractor.9} parent=11 // pred_region
        _
      $region16: #{resnet18_extractor.9} parent=11 // pred_fallthru
        _
      // Predicated region
      $region17: #{resnet18_extractor.9} parent=11 // pred_check
        %p165 = pneg %p79
      $region18: #{resnet18_extractor.9} parent=11 // pred_check_branch
        %167 = sbr.rel (%p165) target = $region20
      $region19: #{resnet18_extractor.9} parent=11 // pred_region
        _
      $region20: #{resnet18_extractor.9} parent=11 // pred_fallthru
        _
      // Predicated region
      $region21: #{resnet18_extractor.9} parent=11 // pred_check
        %p168 = pneg %p100
      $region22: #{resnet18_extractor.9} parent=11 // pred_check_branch
        %170 = sbr.rel (%p168) target = $region24
      $region23: #{resnet18_extractor.9} parent=11 // pred_region
        _
      $region24: #{resnet18_extractor.9} parent=11 // pred_fallthru
        _
      // Predicated region
      $region25: #{resnet18_extractor.9} parent=11 // pred_check
        %p171 = pneg %p121
      $region26: #{resnet18_extractor.9} parent=11 // pred_check_branch
        %173 = sbr.rel (%p171) target = $region28
      $region27: #{resnet18_extractor.9} parent=11 // pred_region
        _
      $region28: #{resnet18_extractor.9} parent=11 // pred_fallthru
        _
    $region12: #{resnet18_extractor.9} parent=5 // pred_fallthru
      _
    %p174 = scmp.lt.s32.totalorder %s11, 2
    // Predicated region
    $region29: #{resnet18_extractor.9} parent=5 // pred_check
      %p175 = pneg %p174
    $region30: #{resnet18_extractor.9} parent=5 // pred_check_branch
      %177 = sbr.rel (%p175) target = $region32
    $region31: #{resnet18_extractor.9} parent=5 // pred_region
      // Predicated region
      $region33: #{resnet18_extractor.9} parent=31 // pred_check
        %p178 = pneg %p31
      $region34: #{resnet18_extractor.9} parent=31 // pred_check_branch
        %180 = sbr.rel (%p178) target = $region36
      $region35: #{resnet18_extractor.9} parent=31 // pred_region
        %p181 = scmp.lt.s32.totalorder %s11, 1
        %s182 = scalar_select %p181, %s11, 1
        %s183 = smul.addr %s182, 8
        %s184 = smul.addr %s183, 4
        %s185 = scalar_lea.vmem %s0, %s184
      $region36: #{resnet18_extractor.9} parent=31 // pred_fallthru
        _
    $region32: #{resnet18_extractor.9} parent=5 // pred_fallthru
      _
    %p186 = scmp.le.s32.totalorder 1, %s11
    %p187 = scmp.lt.s32.totalorder %s11, 3
    %p188 = pnand %p186, %p187
    %p189 = pneg %p188
    // Predicated region
    $region37: #{resnet18_extractor.9} parent=5 // pred_check
      _
    $region38: #{resnet18_extractor.9} parent=5 // pred_check_branch
      %191 = sbr.rel (%p188) target = $region40
    $region39: #{resnet18_extractor.9} parent=5 // pred_region
      %s192 = ssub.s32 %s11, 1
      %p193 = scmp.lt.s32.totalorder %s16, 1
      %s194 = scalar_select %p193, %s16, 1
      %s195 = smul.addr %s194, 8
      %s196 = smul.addr %s195, 4
      %s197 = scalar_lea.vmem %s0, %s196
      %p198 = pneg %p37
      %p199 = pneg %p34
      %p200 = pneg %p58
      %p201 = pneg %p55
      %p202 = pneg %p79
      %p203 = pneg %p76
      %p204 = pneg %p100
      %p205 = pneg %p97
      %p206 = pneg %p121
      %p207 = pneg %p118
      %p208 = pneg %p147
      %p209 = pneg %p144
      %p210 = scmp.lt.s32.totalorder %s16, 1
      %s211 = scalar_select %p210, %s16, 1
      %s212 = smul.addr %s211, 8
      %s213 = smul.addr %s212, 4
      %s214 = scalar_lea.vmem %s5, %s213
      %p215 = scmp.lt.s32.totalorder %s16, 1
      %s216 = scalar_select %p215, %s16, 1
      %s217 = smul.addr %s216, 8
      %s218 = smul.addr %s217, 4
      %s219 = scalar_lea.vmem %s0, %s218
      %p220 = scmp.lt.s32.totalorder %s16, 1
      %s221 = scalar_select %p220, %s16, 1
      %s222 = smul.addr %s221, 8
      %s223 = smul.addr %s222, 4
      %s224 = scalar_lea.vmem %s5, %s223
      %226 = vst [vmem:[#allocation2] sm:$0xff] 0.0
      %227 = vst [vmem:[#allocation2 + $0x8] sm:$0xff] 0.0
      %228 = vst [vmem:[#allocation2 + $0x10] sm:$0xff] 0.0
      %s229 = scalar_lea.vmem [#allocation2], 216
      %230 = vst [vmem:[%s229] sm:$0xff] 0.0
      %231 = vst [vmem:[%s229 + $0x8] sm:$0xff] 0.0
      %232 = vst [vmem:[%s229 + $0x10] sm:$0xff] 0.0
      %s233 = scalar_lea.vmem [#allocation2], 24
      %234 = vst [vmem:[%s233] sm:$0x1] 0.0
      %235 = vst [vmem:[%s233 + $0x18] sm:$0x1] 0.0
      %236 = vst [vmem:[%s233 + $0x30] sm:$0x1] 0.0
      %237 = vst [vmem:[%s233 + $0x48] sm:$0x1] 0.0
      %238 = vst [vmem:[%s233 + $0x60] sm:$0x1] 0.0
      %239 = vst [vmem:[%s233 + $0x78] sm:$0x1] 0.0
      %240 = vst [vmem:[%s233 + $0x90] sm:$0x1] 0.0
      %241 = vst [vmem:[%s233 + $0xa8] sm:$0x1] 0.0
      %242 = vst [vmem:[%s233 + $0x17] sm:$0x1] 0.0
      %243 = vst [vmem:[%s233 + $0x2f] sm:$0x1] 0.0
      %244 = vst [vmem:[%s233 + $0x47] sm:$0x1] 0.0
      %245 = vst [vmem:[%s233 + $0x5f] sm:$0x1] 0.0
      %246 = vst [vmem:[%s233 + $0x77] sm:$0x1] 0.0
      %247 = vst [vmem:[%s233 + $0x8f] sm:$0x1] 0.0
      %248 = vst [vmem:[%s233 + $0xa7] sm:$0x1] 0.0
      %249 = vst [vmem:[%s233 + $0xbf] sm:$0x1] 0.0
      %v250 = vld [vmem:[%s219] sm:$0xf]
      %v251 = vld [vmem:[%s219 + $0x4] sm:$0xf]
      %v252 = vld [vmem:[%s219 + $0x8] sm:$0xf]
      %v253 = vld [vmem:[%s219 + $0xc] sm:$0xf]
      %v254 = vld [vmem:[%s219 + $0x10] sm:$0xf]
      %v255 = vld [vmem:[%s219 + $0x14] sm:$0xf]
      %v256 = vld [vmem:[%s219 + $0x18] sm:$0xf]
      %v257 = vld [vmem:[%s219 + $0x1c] sm:$0xf]
      %v258 = vunpack.c.l.bf16 %v250
      %v259 = vunpack.c.l.bf16 %v251
      %v260 = vunpack.c.l.bf16 %v252
      %v261 = vunpack.c.l.bf16 %v253
      %v262 = vunpack.c.l.bf16 %v254
      %v263 = vunpack.c.l.bf16 %v255
      %v264 = vunpack.c.l.bf16 %v256
      %v265 = vunpack.c.l.bf16 %v257
      %266 = vst [vmem:[%s233 + $0x8] sm:$0xff] %v258
      %267 = vst [vmem:[%s233 + $0x20] sm:$0xff] %v259
      %268 = vst [vmem:[%s233 + $0x38] sm:$0xff] %v260
      %269 = vst [vmem:[%s233 + $0x50] sm:$0xff] %v261
      %270 = vst [vmem:[%s233 + $0x68] sm:$0xff] %v262
      %271 = vst [vmem:[%s233 + $0x80] sm:$0xff] %v263
      %272 = vst [vmem:[%s233 + $0x98] sm:$0xff] %v264
      %273 = vst [vmem:[%s233 + $0xb0] sm:$0xff] %v265
      %v274 = vld [vmem:[%s233 + $0x8] sm:$0x7f]
      %v275 = vld [vmem:[%s233 + $0x20] sm:$0x7f]
      %v276 = vld [vmem:[%s233 + $0x38] sm:$0x7f]
      %v277 = vld [vmem:[%s233 + $0x50] sm:$0x7f]
      %v278 = vld [vmem:[%s233 + $0x68] sm:$0x7f]
      %v279 = vld [vmem:[%s233 + $0x80] sm:$0x7f]
      %v280 = vld [vmem:[%s233 + $0x98] sm:$0x7f]
      %v281 = vld [vmem:[%s233 + $0xb0] sm:$0x7f]
      %v290 = vrot.slane %v274, 7
      %v291 = vrot.slane %v275, 7
      %v292 = vrot.slane %v276, 7
      %v293 = vrot.slane %v277, 7
      %v294 = vrot.slane %v278, 7
      %v295 = vrot.slane %v279, 7
      %v296 = vrot.slane %v280, 7
      %v297 = vrot.slane %v281, 7
      %306 = vst [vmem:[%s233] sm:$0xfe] %v290
      %307 = vst [vmem:[%s233 + $0x18] sm:$0xfe] %v291
      %308 = vst [vmem:[%s233 + $0x30] sm:$0xfe] %v292
      %309 = vst [vmem:[%s233 + $0x48] sm:$0xfe] %v293
      %310 = vst [vmem:[%s233 + $0x60] sm:$0xfe] %v294
      %311 = vst [vmem:[%s233 + $0x78] sm:$0xfe] %v295
      %312 = vst [vmem:[%s233 + $0x90] sm:$0xfe] %v296
      %313 = vst [vmem:[%s233 + $0xa8] sm:$0xfe] %v297
      %v314 = vld [vmem:[%s233 + $0x8] sm:$0xfe]
      %v315 = vld [vmem:[%s233 + $0x20] sm:$0xfe]
      %v316 = vld [vmem:[%s233 + $0x38] sm:$0xfe]
      %v317 = vld [vmem:[%s233 + $0x50] sm:$0xfe]
      %v318 = vld [vmem:[%s233 + $0x68] sm:$0xfe]
      %v319 = vld [vmem:[%s233 + $0x80] sm:$0xfe]
      %v320 = vld [vmem:[%s233 + $0x98] sm:$0xfe]
      %v321 = vld [vmem:[%s233 + $0xb0] sm:$0xfe]
      %v330 = vrot.slane %v314, 1
      %v331 = vrot.slane %v315, 1
      %v332 = vrot.slane %v316, 1
      %v333 = vrot.slane %v317, 1
      %v334 = vrot.slane %v318, 1
      %v335 = vrot.slane %v319, 1
      %v336 = vrot.slane %v320, 1
      %v337 = vrot.slane %v321, 1
      %346 = vst [vmem:[%s233 + $0x10] sm:$0x7f] %v330
      %347 = vst [vmem:[%s233 + $0x28] sm:$0x7f] %v331
      %348 = vst [vmem:[%s233 + $0x40] sm:$0x7f] %v332
      %349 = vst [vmem:[%s233 + $0x58] sm:$0x7f] %v333
      %350 = vst [vmem:[%s233 + $0x70] sm:$0x7f] %v334
      %351 = vst [vmem:[%s233 + $0x88] sm:$0x7f] %v335
      %352 = vst [vmem:[%s233 + $0xa0] sm:$0x7f] %v336
      %353 = vst [vmem:[%s233 + $0xb8] sm:$0x7f] %v337
      %v354 = vld [vmem:[#allocation2] sm:$0xff]
      %v355 = vld [vmem:[#allocation2 + $0x8] sm:$0xff]
      %v356 = vld [vmem:[#allocation2 + $0x10] sm:$0xff]
      %v357 = vld [vmem:[#allocation2 + $0x18] sm:$0xff]
      %v358 = vld [vmem:[#allocation2 + $0x20] sm:$0xff]
      %v359 = vld [vmem:[#allocation2 + $0x28] sm:$0xff]
      %v360 = vld [vmem:[#allocation2 + $0x30] sm:$0xff]
      %v361 = vld [vmem:[#allocation2 + $0x38] sm:$0xff]
      %v362 = vld [vmem:[#allocation2 + $0x40] sm:$0xff]
      %v363 = vld [vmem:[#allocation2 + $0x48] sm:$0xff]
      %v364 = vld [vmem:[#allocation2 + $0x50] sm:$0xff]
      %v365 = vld [vmem:[#allocation2 + $0x58] sm:$0xff]
      %v366 = vld [vmem:[#allocation2 + $0x60] sm:$0xff]
      %v367 = vld [vmem:[#allocation2 + $0x68] sm:$0xff]
      %v368 = vld [vmem:[#allocation2 + $0x70] sm:$0xff]
      %v369 = vld [vmem:[#allocation2 + $0x78] sm:$0xff]
      %v370 = vld [vmem:[#allocation2 + $0x80] sm:$0xff]
      %v371 = vld [vmem:[#allocation2 + $0x88] sm:$0xff]
      %v372 = vld [vmem:[#allocation2 + $0x90] sm:$0xff]
      %v373 = vld [vmem:[#allocation2 + $0x98] sm:$0xff]
      %v374 = vld [vmem:[#allocation2 + $0xa0] sm:$0xff]
      %v375 = vld [vmem:[#allocation2 + $0xa8] sm:$0xff]
      %v376 = vld [vmem:[#allocation2 + $0xb0] sm:$0xff]
      %v377 = vld [vmem:[#allocation2 + $0xb8] sm:$0xff]
      %v378 = vpack.c.bf16 %v357, %v354
      %v379 = vpack.c.bf16 %v358, %v355
      %v380 = vpack.c.bf16 %v359, %v356
      %v381 = vpack.c.bf16 %v363, %v360
      %v382 = vpack.c.bf16 %v364, %v361
      %v383 = vpack.c.bf16 %v365, %v362
      %v384 = vpack.c.bf16 %v369, %v366
      %v385 = vpack.c.bf16 %v370, %v367
      %v386 = vpack.c.bf16 %v371, %v368
      %v387 = vpack.c.bf16 %v375, %v372
      %v388 = vpack.c.bf16 %v376, %v373
      %v389 = vpack.c.bf16 %v377, %v374
      %v390 = vld [vmem:[%s1] sm:$0xf]
      %v391 = vld [vmem:[%s1 + $0x4] sm:$0xf]
      %v392 = vld [vmem:[%s1 + $0x8] sm:$0xf]
      %v393 = vld [vmem:[%s1 + $0xc] sm:$0xf]
      %v394 = vld [vmem:[%s1 + $0x10] sm:$0xf]
      %v395 = vld [vmem:[%s1 + $0x14] sm:$0xf]
      %v396 = vld [vmem:[%s1 + $0x18] sm:$0xf]
      %v397 = vld [vmem:[%s1 + $0x1c] sm:$0xf]
      %v398 = vld [vmem:[%s1 + $0x20] sm:$0xf]
      %v399 = vld [vmem:[%s1 + $0x24] sm:$0xf]
      %v400 = vld [vmem:[%s1 + $0x28] sm:$0xf]
      %v401 = vld [vmem:[%s1 + $0x2c] sm:$0xf]
      %v402 = vld [vmem:[%s1 + $0x30] sm:$0xf]
      %v403 = vld [vmem:[%s1 + $0x34] sm:$0xf]
      %v404 = vld [vmem:[%s1 + $0x38] sm:$0xf]
      %v405 = vld [vmem:[%s1 + $0x3c] sm:$0xf]
      %v406 = vld [vmem:[%s1 + $0x40] sm:$0xf]
      %v407 = vld [vmem:[%s1 + $0x44] sm:$0xf]
      %v408 = vld [vmem:[%s1 + $0x48] sm:$0xf]
      %v409 = vld [vmem:[%s1 + $0x4c] sm:$0xf]
      %v410 = vld [vmem:[%s1 + $0x50] sm:$0xf]
      %v411 = vld [vmem:[%s1 + $0x54] sm:$0xf]
      %v412 = vld [vmem:[%s1 + $0x58] sm:$0xf]
      %v413 = vld [vmem:[%s1 + $0x5c] sm:$0xf]
      %v414 = vld [vmem:[%s1 + $0x60] sm:$0xf]
      %v415 = vld [vmem:[%s1 + $0x64] sm:$0xf]
      %v416 = vld [vmem:[%s1 + $0x68] sm:$0xf]
      %v417 = vld [vmem:[%s1 + $0x6c] sm:$0xf]
      %v418 = vld [vmem:[%s1 + $0x70] sm:$0xf]
      %v419 = vld [vmem:[%s1 + $0x74] sm:$0xf]
      %v420 = vld [vmem:[%s1 + $0x78] sm:$0xf]
      %v421 = vld [vmem:[%s1 + $0x7c] sm:$0xf]
      %v422 = vld [vmem:[%s1 + $0x80] sm:$0xf]
      %v423 = vld [vmem:[%s1 + $0x84] sm:$0xf]
      %v424 = vld [vmem:[%s1 + $0x88] sm:$0xf]
      %v425 = vld [vmem:[%s1 + $0x8c] sm:$0xf]
      %v426 = vld [vmem:[%s1 + $0x90] sm:$0xf]
      %v427 = vld [vmem:[%s1 + $0x94] sm:$0xf]
      %v428 = vld [vmem:[%s1 + $0x98] sm:$0xf]
      %v429 = vld [vmem:[%s1 + $0x9c] sm:$0xf]
      %v430 = vld [vmem:[%s1 + $0xa0] sm:$0xf]
      %v431 = vld [vmem:[%s1 + $0xa4] sm:$0xf]
      %v432 = vld [vmem:[%s1 + $0xa8] sm:$0xf]
      %v433 = vld [vmem:[%s1 + $0xac] sm:$0xf]
      %v434 = vld [vmem:[%s1 + $0xb0] sm:$0xf]
      %v435 = vld [vmem:[%s1 + $0xb4] sm:$0xf]
      %v436 = vld [vmem:[%s1 + $0xb8] sm:$0xf]
      %v437 = vld [vmem:[%s1 + $0xbc] sm:$0xf]
      %v438 = vld [vmem:[%s233] sm:$0xff]
      %v439 = vld [vmem:[%s233 + $0x8] sm:$0xff]
      %v440 = vld [vmem:[%s233 + $0x10] sm:$0xff]
      %v441 = vld [vmem:[%s233 + $0x18] sm:$0xff]
      %v442 = vld [vmem:[%s233 + $0x20] sm:$0xff]
      %v443 = vld [vmem:[%s233 + $0x28] sm:$0xff]
      %v444 = vld [vmem:[%s233 + $0x30] sm:$0xff]
      %v445 = vld [vmem:[%s233 + $0x38] sm:$0xff]
      %v446 = vld [vmem:[%s233 + $0x40] sm:$0xff]
      %v447 = vld [vmem:[%s233 + $0x48] sm:$0xff]
      %v448 = vld [vmem:[%s233 + $0x50] sm:$0xff]
      %v449 = vld [vmem:[%s233 + $0x58] sm:$0xff]
      %v450 = vld [vmem:[%s233 + $0x60] sm:$0xff]
      %v451 = vld [vmem:[%s233 + $0x68] sm:$0xff]
      %v452 = vld [vmem:[%s233 + $0x70] sm:$0xff]
      %v453 = vld [vmem:[%s233 + $0x78] sm:$0xff]
      %v454 = vld [vmem:[%s233 + $0x80] sm:$0xff]
      %v455 = vld [vmem:[%s233 + $0x88] sm:$0xff]
      %v456 = vld [vmem:[%s233 + $0x90] sm:$0xff]
      %v457 = vld [vmem:[%s233 + $0x98] sm:$0xff]
      %v458 = vld [vmem:[%s233 + $0xa0] sm:$0xff]
      %v459 = vld [vmem:[%s233 + $0xa8] sm:$0xff]
      %v460 = vld [vmem:[%s233 + $0xb0] sm:$0xff]
      %v461 = vld [vmem:[%s233 + $0xb8] sm:$0xff]
      %v462 = vpack.c.bf16 %v441, %v438
      %v463 = vpack.c.bf16 %v442, %v439
      %v464 = vpack.c.bf16 %v443, %v440
      %v465 = vpack.c.bf16 %v447, %v444
      %v466 = vpack.c.bf16 %v448, %v445
      %v467 = vpack.c.bf16 %v449, %v446
      %v468 = vpack.c.bf16 %v453, %v450
      %v469 = vpack.c.bf16 %v454, %v451
      %v470 = vpack.c.bf16 %v455, %v452
      %v471 = vpack.c.bf16 %v459, %v456
      %v472 = vpack.c.bf16 %v460, %v457
      %v473 = vpack.c.bf16 %v461, %v458
      %s474 = scalar_lea.vmem %s1, 192
      %v475 = vld [vmem:[%s474] sm:$0xf]
      %v476 = vld [vmem:[%s474 + $0x4] sm:$0xf]
      %v477 = vld [vmem:[%s474 + $0x8] sm:$0xf]
      %v478 = vld [vmem:[%s474 + $0xc] sm:$0xf]
      %v479 = vld [vmem:[%s474 + $0x10] sm:$0xf]
      %v480 = vld [vmem:[%s474 + $0x14] sm:$0xf]
      %v481 = vld [vmem:[%s474 + $0x18] sm:$0xf]
      %v482 = vld [vmem:[%s474 + $0x1c] sm:$0xf]
      %v483 = vld [vmem:[%s474 + $0x20] sm:$0xf]
      %v484 = vld [vmem:[%s474 + $0x24] sm:$0xf]
      %v485 = vld [vmem:[%s474 + $0x28] sm:$0xf]
      %v486 = vld [vmem:[%s474 + $0x2c] sm:$0xf]
      %v487 = vld [vmem:[%s474 + $0x30] sm:$0xf]
      %v488 = vld [vmem:[%s474 + $0x34] sm:$0xf]
      %v489 = vld [vmem:[%s474 + $0x38] sm:$0xf]
      %v490 = vld [vmem:[%s474 + $0x3c] sm:$0xf]
      %v491 = vld [vmem:[%s474 + $0x40] sm:$0xf]
      %v492 = vld [vmem:[%s474 + $0x44] sm:$0xf]
      %v493 = vld [vmem:[%s474 + $0x48] sm:$0xf]
      %v494 = vld [vmem:[%s474 + $0x4c] sm:$0xf]
      %v495 = vld [vmem:[%s474 + $0x50] sm:$0xf]
      %v496 = vld [vmem:[%s474 + $0x54] sm:$0xf]
      %v497 = vld [vmem:[%s474 + $0x58] sm:$0xf]
      %v498 = vld [vmem:[%s474 + $0x5c] sm:$0xf]
      %v499 = vld [vmem:[%s474 + $0x60] sm:$0xf]
      %v500 = vld [vmem:[%s474 + $0x64] sm:$0xf]
      %v501 = vld [vmem:[%s474 + $0x68] sm:$0xf]
      %v502 = vld [vmem:[%s474 + $0x6c] sm:$0xf]
      %v503 = vld [vmem:[%s474 + $0x70] sm:$0xf]
      %v504 = vld [vmem:[%s474 + $0x74] sm:$0xf]
      %v505 = vld [vmem:[%s474 + $0x78] sm:$0xf]
      %v506 = vld [vmem:[%s474 + $0x7c] sm:$0xf]
      %v507 = vld [vmem:[%s474 + $0x80] sm:$0xf]
      %v508 = vld [vmem:[%s474 + $0x84] sm:$0xf]
      %v509 = vld [vmem:[%s474 + $0x88] sm:$0xf]
      %v510 = vld [vmem:[%s474 + $0x8c] sm:$0xf]
      %v511 = vld [vmem:[%s474 + $0x90] sm:$0xf]
      %v512 = vld [vmem:[%s474 + $0x94] sm:$0xf]
      %v513 = vld [vmem:[%s474 + $0x98] sm:$0xf]
      %v514 = vld [vmem:[%s474 + $0x9c] sm:$0xf]
      %v515 = vld [vmem:[%s474 + $0xa0] sm:$0xf]
      %v516 = vld [vmem:[%s474 + $0xa4] sm:$0xf]
      %v517 = vld [vmem:[%s474 + $0xa8] sm:$0xf]
      %v518 = vld [vmem:[%s474 + $0xac] sm:$0xf]
      %v519 = vld [vmem:[%s474 + $0xb0] sm:$0xf]
      %v520 = vld [vmem:[%s474 + $0xb4] sm:$0xf]
      %v521 = vld [vmem:[%s474 + $0xb8] sm:$0xf]
      %v522 = vld [vmem:[%s474 + $0xbc] sm:$0xf]
      %v571 = vunpack.c.l.b16 %v475
      %v572 = vunpack.c.l.b16 %v476
      %v573 = vunpack.c.l.b16 %v477
      %v574 = vunpack.c.l.b16 %v478
      %v575 = vunpack.c.l.b16 %v479
      %v576 = vunpack.c.l.b16 %v480
      %v577 = vunpack.c.l.b16 %v481
      %v578 = vunpack.c.l.b16 %v482
      %v579 = vunpack.c.l.b16 %v483
      %v580 = vunpack.c.l.b16 %v484
      %v581 = vunpack.c.l.b16 %v485
      %v582 = vunpack.c.l.b16 %v486
      %v583 = vunpack.c.l.b16 %v487
      %v584 = vunpack.c.l.b16 %v488
      %v585 = vunpack.c.l.b16 %v489
      %v586 = vunpack.c.l.b16 %v490
      %v587 = vunpack.c.l.b16 %v491
      %v588 = vunpack.c.l.b16 %v492
      %v589 = vunpack.c.l.b16 %v493
      %v590 = vunpack.c.l.b16 %v494
      %v591 = vunpack.c.l.b16 %v495
      %v592 = vunpack.c.l.b16 %v496
      %v593 = vunpack.c.l.b16 %v497
      %v594 = vunpack.c.l.b16 %v498
      %v595 = vunpack.c.l.b16 %v499
      %v596 = vunpack.c.l.b16 %v500
      %v597 = vunpack.c.l.b16 %v501
      %v598 = vunpack.c.l.b16 %v502
      %v599 = vunpack.c.l.b16 %v503
      %v600 = vunpack.c.l.b16 %v504
      %v601 = vunpack.c.l.b16 %v505
      %v602 = vunpack.c.l.b16 %v506
      %v603 = vunpack.c.l.b16 %v507
      %v604 = vunpack.c.l.b16 %v508
      %v605 = vunpack.c.l.b16 %v509
      %v606 = vunpack.c.l.b16 %v510
      %v607 = vunpack.c.l.b16 %v511
      %v608 = vunpack.c.l.b16 %v512
      %v609 = vunpack.c.l.b16 %v513
      %v610 = vunpack.c.l.b16 %v514
      %v611 = vunpack.c.l.b16 %v515
      %v612 = vunpack.c.l.b16 %v516
      %v613 = vunpack.c.l.b16 %v517
      %v614 = vunpack.c.l.b16 %v518
      %v615 = vunpack.c.l.b16 %v519
      %v616 = vunpack.c.l.b16 %v520
      %v617 = vunpack.c.l.b16 %v521
      %v618 = vunpack.c.l.b16 %v522
      %v619 = vpack.c.b16 %v572, %v571
      %v620 = vpack.c.b16 %v574, %v573
      %v621 = vpack.c.b16 %v576, %v575
      %v622 = vpack.c.b16 %v578, %v577
      %v623 = vpack.c.b16 %v580, %v579
      %v624 = vpack.c.b16 %v582, %v581
      %v625 = vpack.c.b16 %v584, %v583
      %v626 = vpack.c.b16 %v586, %v585
      %v627 = vpack.c.b16 %v588, %v587
      %v628 = vpack.c.b16 %v590, %v589
      %v629 = vpack.c.b16 %v592, %v591
      %v630 = vpack.c.b16 %v594, %v593
      %v631 = vpack.c.b16 %v596, %v595
      %v632 = vpack.c.b16 %v598, %v597
      %v633 = vpack.c.b16 %v600, %v599
      %v634 = vpack.c.b16 %v602, %v601
      %v635 = vpack.c.b16 %v604, %v603
      %v636 = vpack.c.b16 %v606, %v605
      %v637 = vpack.c.b16 %v608, %v607
      %v638 = vpack.c.b16 %v610, %v609
      %v639 = vpack.c.b16 %v612, %v611
      %v640 = vpack.c.b16 %v614, %v613
      %v641 = vpack.c.b16 %v616, %v615
      %v642 = vpack.c.b16 %v618, %v617
      %667 = vmatprep.subr.bf16.mxu0 0
      %668 = vmatpush1.bf16.msra.mxu0 %v619
      %669 = vmatprep.subr.bf16.mxu0 0
      %670 = vmatpush1.bf16.msra.mxu0 %v620
      %671 = vmatprep.subr.bf16.mxu0 0
      %672 = vmatpush1.bf16.msra.mxu0 %v621
      %673 = vmatprep.subr.bf16.mxu0 0
      %674 = vmatpush1.bf16.msra.mxu0 %v622
      %675 = vmatprep.subr.bf16.mxu0 0
      %676 = vmatpush1.bf16.msra.mxu0 %v623
      %677 = vmatprep.subr.bf16.mxu0 0
      %678 = vmatpush1.bf16.msra.mxu0 %v624
      %679 = vmatprep.subr.bf16.mxu0 0
      %680 = vmatpush1.bf16.msra.mxu0 %v625
      %681 = vmatprep.subr.bf16.mxu0 0
      %682 = vmatpush1.bf16.msra.mxu0 %v626
      %683 = vmatprep.subr.bf16.mxu0 0
      %684 = vmatpush1.bf16.msra.mxu0 %v627
      %685 = vmatprep.subr.bf16.mxu0 0
      %686 = vmatpush1.bf16.msra.mxu0 %v628
      %687 = vmatprep.subr.bf16.mxu0 0
      %688 = vmatpush1.bf16.msra.mxu0 %v629
      %689 = vmatprep.subr.bf16.mxu0 0
      %690 = vmatpush1.bf16.msra.mxu0 %v630
      %691 = vmatprep.subr.bf16.mxu0 0
      %692 = vmatpush1.bf16.msra.mxu0 %v631
      %693 = vmatprep.subr.bf16.mxu0 0
      %694 = vmatpush1.bf16.msra.mxu0 %v632
      %695 = vmatprep.subr.bf16.mxu0 0
      %696 = vmatpush1.bf16.msra.mxu0 %v633
      %697 = vmatprep.subr.bf16.mxu0 0
      %698 = vmatpush1.bf16.msra.mxu0 %v634
      %699 = vmatprep.mubr.bf16.mxu0 %v463
      %700 = vmatmul.mubr.bf16.gmra.mrb[0].mxu0 %v462
      %v701 = vpop.f32.mrb[0].mxu0
      %v702 = vadd.f32 0.0, %v701
      %v703 = vpop.f32.mrb[0].mxu0
      %v704 = vpop.f32.mrb[0].mxu0
      %v705 = vadd.f32 0.0, %v704
      %v706 = vpop.f32.mrb[0].mxu0
      %707 = vmatprep.mubr.bf16.mxu0 %v466
      %708 = vmatmul.mubr.bf16.gmra.mrb[0].mxu0 %v465
      %v709 = vpop.f32.mrb[0].mxu0
      %v710 = vadd.f32 0.0, %v709
      %v711 = vpop.f32.mrb[0].mxu0
      %v712 = vpop.f32.mrb[0].mxu0
      %v713 = vadd.f32 0.0, %v712
      %v714 = vpop.f32.mrb[0].mxu0
      %715 = vmatprep.mubr.bf16.mxu0 %v469
      %716 = vmatmul.mubr.bf16.gmra.mrb[0].mxu0 %v468
      %v717 = vpop.f32.mrb[0].mxu0
      %v718 = vadd.f32 0.0, %v717
      %v719 = vpop.f32.mrb[0].mxu0
      %v720 = vpop.f32.mrb[0].mxu0
      %v721 = vadd.f32 0.0, %v720
      %v722 = vpop.f32.mrb[0].mxu0
      %723 = vmatprep.mubr.bf16.mxu0 %v472
      %724 = vmatmul.mubr.bf16.gmra.mrb[0].mxu0 %v471
      %v725 = vpop.f32.mrb[0].mxu0
      %v726 = vadd.f32 0.0, %v725
      %v727 = vpop.f32.mrb[0].mxu0
      %v728 = vpop.f32.mrb[0].mxu0
      %v729 = vadd.f32 0.0, %v728
      %v730 = vpop.f32.mrb[0].mxu0
      %731 = vdwg.mxu0
      %732 = vmatprep.subr.bf16.mxu0 0
      %733 = vmatpush1.bf16.msra.mxu0 %v635
      %734 = vmatprep.subr.bf16.mxu0 0
      %735 = vmatpush1.bf16.msra.mxu0 %v636
      %736 = vmatprep.subr.bf16.mxu0 0
      %737 = vmatpush1.bf16.msra.mxu0 %v637
      %738 = vmatprep.subr.bf16.mxu0 0
      %739 = vmatpush1.bf16.msra.mxu0 %v638
      %740 = vmatprep.subr.bf16.mxu0 0
      %741 = vmatpush1.bf16.msra.mxu0 %v639
      %742 = vmatprep.subr.bf16.mxu0 0
      %743 = vmatpush1.bf16.msra.mxu0 %v640
      %744 = vmatprep.subr.bf16.mxu0 0
      %745 = vmatpush1.bf16.msra.mxu0 %v641
      %746 = vmatprep.subr.bf16.mxu0 0
      %747 = vmatpush1.bf16.msra.mxu0 %v642
      %748 = vmatprep.subr.bf16.mxu0 0
      %749 = vmatpush1.bf16.msra.mxu0 0
      %750 = vmatprep.subr.bf16.mxu0 0
      %751 = vmatpush1.bf16.msra.mxu0 0
      %752 = vmatprep.subr.bf16.mxu0 0
      %753 = vmatpush1.bf16.msra.mxu0 0
      %754 = vmatprep.subr.bf16.mxu0 0
      %755 = vmatpush1.bf16.msra.mxu0 0
      %756 = vmatprep.subr.bf16.mxu0 0
      %757 = vmatpush1.bf16.msra.mxu0 0
      %758 = vmatprep.subr.bf16.mxu0 0
      %759 = vmatpush1.bf16.msra.mxu0 0
      %760 = vmatprep.subr.bf16.mxu0 0
      %761 = vmatpush1.bf16.msra.mxu0 0
      %762 = vmatprep.subr.bf16.mxu0 0
      %763 = vmatpush1.bf16.msra.mxu0 0
      %764 = vmatprep.mubr.bf16.mxu0 0
      %765 = vmatmul.mubr.bf16.gmra.mrb[0].mxu0 %v464
      %v766 = vpop.f32.mrb[0].mxu0
      %v767 = vadd.f32 %v702, %v766
      %v768 = vpop.f32.mrb[0].mxu0
      %v769 = vpop.f32.mrb[0].mxu0
      %v770 = vadd.f32 %v705, %v769
      %v771 = vpop.f32.mrb[0].mxu0
      %772 = vmatprep.mubr.bf16.mxu0 0
      %773 = vmatmul.mubr.bf16.gmra.mrb[0].mxu0 %v467
      %v774 = vpop.f32.mrb[0].mxu0
      %v775 = vadd.f32 %v710, %v774
      %v776 = vpop.f32.mrb[0].mxu0
      %v777 = vpop.f32.mrb[0].mxu0
      %v778 = vadd.f32 %v713, %v777
      %v779 = vpop.f32.mrb[0].mxu0
      %780 = vmatprep.mubr.bf16.mxu0 0
      %781 = vmatmul.mubr.bf16.gmra.mrb[0].mxu0 %v470
      %v782 = vpop.f32.mrb[0].mxu0
      %v783 = vadd.f32 %v718, %v782
      %v784 = vpop.f32.mrb[0].mxu0
      %v785 = vpop.f32.mrb[0].mxu0
      %v786 = vadd.f32 %v721, %v785
      %v787 = vpop.f32.mrb[0].mxu0
      %788 = vmatprep.mubr.bf16.mxu0 0
      %789 = vmatmul.mubr.bf16.gmra.mrb[0].mxu0 %v473
      %v790 = vpop.f32.mrb[0].mxu0
      %v791 = vadd.f32 %v726, %v790
      %v792 = vpop.f32.mrb[0].mxu0
      %v793 = vpop.f32.mrb[0].mxu0
      %v794 = vadd.f32 %v729, %v793
      %v795 = vpop.f32.mrb[0].mxu0
      %796 = vdwg.mxu0
      %v845 = vunpack.c.l.b16 %v390
      %v846 = vunpack.c.l.b16 %v391
      %v847 = vunpack.c.l.b16 %v392
      %v848 = vunpack.c.l.b16 %v393
      %v849 = vunpack.c.l.b16 %v394
      %v850 = vunpack.c.l.b16 %v395
      %v851 = vunpack.c.l.b16 %v396
      %v852 = vunpack.c.l.b16 %v397
      %v853 = vunpack.c.l.b16 %v398
      %v854 = vunpack.c.l.b16 %v399
      %v855 = vunpack.c.l.b16 %v400
      %v856 = vunpack.c.l.b16 %v401
      %v857 = vunpack.c.l.b16 %v402
      %v858 = vunpack.c.l.b16 %v403
      %v859 = vunpack.c.l.b16 %v404
      %v860 = vunpack.c.l.b16 %v405
      %v861 = vunpack.c.l.b16 %v406
      %v862 = vunpack.c.l.b16 %v407
      %v863 = vunpack.c.l.b16 %v408
      %v864 = vunpack.c.l.b16 %v409
      %v865 = vunpack.c.l.b16 %v410
      %v866 = vunpack.c.l.b16 %v411
      %v867 = vunpack.c.l.b16 %v412
      %v868 = vunpack.c.l.b16 %v413
      %v869 = vunpack.c.l.b16 %v414
      %v870 = vunpack.c.l.b16 %v415
      %v871 = vunpack.c.l.b16 %v416
      %v872 = vunpack.c.l.b16 %v417
      %v873 = vunpack.c.l.b16 %v418
      %v874 = vunpack.c.l.b16 %v419
      %v875 = vunpack.c.l.b16 %v420
      %v876 = vunpack.c.l.b16 %v421
      %v877 = vunpack.c.l.b16 %v422
      %v878 = vunpack.c.l.b16 %v423
      %v879 = vunpack.c.l.b16 %v424
      %v880 = vunpack.c.l.b16 %v425
      %v881 = vunpack.c.l.b16 %v426
      %v882 = vunpack.c.l.b16 %v427
      %v883 = vunpack.c.l.b16 %v428
      %v884 = vunpack.c.l.b16 %v429
      %v885 = vunpack.c.l.b16 %v430
      %v886 = vunpack.c.l.b16 %v431
      %v887 = vunpack.c.l.b16 %v432
      %v888 = vunpack.c.l.b16 %v433
      %v889 = vunpack.c.l.b16 %v434
      %v890 = vunpack.c.l.b16 %v435
      %v891 = vunpack.c.l.b16 %v436
      %v892 = vunpack.c.l.b16 %v437
      %v893 = vpack.c.b16 %v846, %v845
      %v894 = vpack.c.b16 %v848, %v847
      %v895 = vpack.c.b16 %v850, %v849
      %v896 = vpack.c.b16 %v852, %v851
      %v897 = vpack.c.b16 %v854, %v853
      %v898 = vpack.c.b16 %v856, %v855
      %v899 = vpack.c.b16 %v858, %v857
      %v900 = vpack.c.b16 %v860, %v859
      %v901 = vpack.c.b16 %v862, %v861
      %v902 = vpack.c.b16 %v864, %v863
      %v903 = vpack.c.b16 %v866, %v865
      %v904 = vpack.c.b16 %v868, %v867
      %v905 = vpack.c.b16 %v870, %v869
      %v906 = vpack.c.b16 %v872, %v871
      %v907 = vpack.c.b16 %v874, %v873
      %v908 = vpack.c.b16 %v876, %v875
      %v909 = vpack.c.b16 %v878, %v877
      %v910 = vpack.c.b16 %v880, %v879
      %v911 = vpack.c.b16 %v882, %v881
      %v912 = vpack.c.b16 %v884, %v883
      %v913 = vpack.c.b16 %v886, %v885
      %v914 = vpack.c.b16 %v888, %v887
      %v915 = vpack.c.b16 %v890, %v889
      %v916 = vpack.c.b16 %v892, %v891
      %941 = vmatprep.subr.bf16.mxu0 0
      %942 = vmatpush1.bf16.msra.mxu0 %v893
      %943 = vmatprep.subr.bf16.mxu0 0
      %944 = vmatpush1.bf16.msra.mxu0 %v894
      %945 = vmatprep.subr.bf16.mxu0 0
      %946 = vmatpush1.bf16.msra.mxu0 %v895
      %947 = vmatprep.subr.bf16.mxu0 0
      %948 = vmatpush1.bf16.msra.mxu0 %v896
      %949 = vmatprep.subr.bf16.mxu0 0
      %950 = vmatpush1.bf16.msra.mxu0 %v897
      %951 = vmatprep.subr.bf16.mxu0 0
      %952 = vmatpush1.bf16.msra.mxu0 %v898
      %953 = vmatprep.subr.bf16.mxu0 0
      %954 = vmatpush1.bf16.msra.mxu0 %v899
      %955 = vmatprep.subr.bf16.mxu0 0
      %956 = vmatpush1.bf16.msra.mxu0 %v900
      %957 = vmatprep.subr.bf16.mxu0 0
      %958 = vmatpush1.bf16.msra.mxu0 %v901
      %959 = vmatprep.subr.bf16.mxu0 0
      %960 = vmatpush1.bf16.msra.mxu0 %v902
      %961 = vmatprep.subr.bf16.mxu0 0
      %962 = vmatpush1.bf16.msra.mxu0 %v903
      %963 = vmatprep.subr.bf16.mxu0 0
      %964 = vmatpush1.bf16.msra.mxu0 %v904
      %965 = vmatprep.subr.bf16.mxu0 0
      %966 = vmatpush1.bf16.msra.mxu0 %v905
      %967 = vmatprep.subr.bf16.mxu0 0
      %968 = vmatpush1.bf16.msra.mxu0 %v906
      %969 = vmatprep.subr.bf16.mxu0 0
      %970 = vmatpush1.bf16.msra.mxu0 %v907
      %971 = vmatprep.subr.bf16.mxu0 0
      %972 = vmatpush1.bf16.msra.mxu0 %v908
      %973 = vmatprep.mubr.bf16.mxu0 %v379
      %974 = vmatmul.mubr.bf16.gmra.mrb[0].mxu0 %v378
      %v975 = vpop.f32.mrb[0].mxu0
      %v976 = vadd.f32 %v767, %v975
      %v977 = vpop.f32.mrb[0].mxu0
      %v978 = vpop.f32.mrb[0].mxu0
      %v979 = vadd.f32 %v770, %v978
      %v980 = vpop.f32.mrb[0].mxu0
      %981 = vmatprep.mubr.bf16.mxu0 %v382
      %982 = vmatmul.mubr.bf16.gmra.mrb[0].mxu0 %v381
      %v983 = vpop.f32.mrb[0].mxu0
      %v984 = vadd.f32 %v775, %v983
      %v985 = vpop.f32.mrb[0].mxu0
      %v986 = vpop.f32.mrb[0].mxu0
      %v987 = vadd.f32 %v778, %v986
      %v988 = vpop.f32.mrb[0].mxu0
      %989 = vmatprep.mubr.bf16.mxu0 %v385
      %990 = vmatmul.mubr.bf16.gmra.mrb[0].mxu0 %v384
      %v991 = vpop.f32.mrb[0].mxu0
      %v992 = vadd.f32 %v783, %v991
      %v993 = vpop.f32.mrb[0].mxu0
      %v994 = vpop.f32.mrb[0].mxu0
      %v995 = vadd.f32 %v786, %v994
      %v996 = vpop.f32.mrb[0].mxu0
      %997 = vmatprep.mubr.bf16.mxu0 %v388
      %998 = vmatmul.mubr.bf16.gmra.mrb[0].mxu0 %v387
      %v999 = vpop.f32.mrb[0].mxu0
      %v1000 = vadd.f32 %v791, %v999
      %v1001 = vpop.f32.mrb[0].mxu0
      %v1002 = vpop.f32.mrb[0].mxu0
      %v1003 = vadd.f32 %v794, %v1002
      %v1004 = vpop.f32.mrb[0].mxu0
      %1005 = vdwg.mxu0
      %1006 = vmatprep.subr.bf16.mxu0 0
      %1007 = vmatpush1.bf16.msra.mxu0 %v909
      %1008 = vmatprep.subr.bf16.mxu0 0
      %1009 = vmatpush1.bf16.msra.mxu0 %v910
      %1010 = vmatprep.subr.bf16.mxu0 0
      %1011 = vmatpush1.bf16.msra.mxu0 %v911
      %1012 = vmatprep.subr.bf16.mxu0 0
      %1013 = vmatpush1.bf16.msra.mxu0 %v912
      %1014 = vmatprep.subr.bf16.mxu0 0
      %1015 = vmatpush1.bf16.msra.mxu0 %v913
      %1016 = vmatprep.subr.bf16.mxu0 0
      %1017 = vmatpush1.bf16.msra.mxu0 %v914
      %1018 = vmatprep.subr.bf16.mxu0 0
      %1019 = vmatpush1.bf16.msra.mxu0 %v915
      %1020 = vmatprep.subr.bf16.mxu0 0
      %1021 = vmatpush1.bf16.msra.mxu0 %v916
      %1022 = vmatprep.subr.bf16.mxu0 0
      %1023 = vmatpush1.bf16.msra.mxu0 0
      %1024 = vmatprep.subr.bf16.mxu0 0
      %1025 = vmatpush1.bf16.msra.mxu0 0
      %1026 = vmatprep.subr.bf16.mxu0 0
      %1027 = vmatpush1.bf16.msra.mxu0 0
      %1028 = vmatprep.subr.bf16.mxu0 0
      %1029 = vmatpush1.bf16.msra.mxu0 0
      %1030 = vmatprep.subr.bf16.mxu0 0
      %1031 = vmatpush1.bf16.msra.mxu0 0
      %1032 = vmatprep.subr.bf16.mxu0 0
      %1033 = vmatpush1.bf16.msra.mxu0 0
      %1034 = vmatprep.subr.bf16.mxu0 0
      %1035 = vmatpush1.bf16.msra.mxu0 0
      %1036 = vmatprep.subr.bf16.mxu0 0
      %1037 = vmatpush1.bf16.msra.mxu0 0
      %1038 = vmatprep.mubr.bf16.mxu0 0
      %1039 = vmatmul.mubr.bf16.gmra.mrb[0].mxu0 %v380
      %v1040 = vpop.f32.mrb[0].mxu0
      %v1041 = vadd.f32 %v976, %v1040
      %v1042 = vpop.f32.mrb[0].mxu0
      %v1043 = vpop.f32.mrb[0].mxu0
      %v1044 = vadd.f32 %v979, %v1043
      %v1045 = vpop.f32.mrb[0].mxu0
      %1046 = vmatprep.mubr.bf16.mxu0 0
      %1047 = vmatmul.mubr.bf16.gmra.mrb[0].mxu0 %v383
      %v1048 = vpop.f32.mrb[0].mxu0
      %v1049 = vadd.f32 %v984, %v1048
      %v1050 = vpop.f32.mrb[0].mxu0
      %v1051 = vpop.f32.mrb[0].mxu0
      %v1052 = vadd.f32 %v987, %v1051
      %v1053 = vpop.f32.mrb[0].mxu0
      %1054 = vmatprep.mubr.bf16.mxu0 0
      %1055 = vmatmul.mubr.bf16.gmra.mrb[0].mxu0 %v386
      %v1056 = vpop.f32.mrb[0].mxu0
      %v1057 = vadd.f32 %v992, %v1056
      %v1058 = vpop.f32.mrb[0].mxu0
      %v1059 = vpop.f32.mrb[0].mxu0
      %v1060 = vadd.f32 %v995, %v1059
      %v1061 = vpop.f32.mrb[0].mxu0
      %1062 = vmatprep.mubr.bf16.mxu0 0
      %1063 = vmatmul.mubr.bf16.gmra.mrb[0].mxu0 %v389
      %v1064 = vpop.f32.mrb[0].mxu0
      %v1065 = vadd.f32 %v1000, %v1064
      %v1066 = vpop.f32.mrb[0].mxu0
      %v1067 = vpop.f32.mrb[0].mxu0
      %v1068 = vadd.f32 %v1003, %v1067
      %v1069 = vpop.f32.mrb[0].mxu0
      %1070 = vdwg.mxu0
      %s1071 = scalar_lea.vmem [#allocation2], 48
      %v1072 = vld [vmem:[%s1071] sm:$0xff]
      %v1073 = vld [vmem:[%s1071 + $0x8] sm:$0xff]
      %v1074 = vld [vmem:[%s1071 + $0x10] sm:$0xff]
      %v1075 = vld [vmem:[%s1071 + $0x18] sm:$0xff]
      %v1076 = vld [vmem:[%s1071 + $0x20] sm:$0xff]
      %v1077 = vld [vmem:[%s1071 + $0x28] sm:$0xff]
      %v1078 = vld [vmem:[%s1071 + $0x30] sm:$0xff]
      %v1079 = vld [vmem:[%s1071 + $0x38] sm:$0xff]
      %v1080 = vld [vmem:[%s1071 + $0x40] sm:$0xff]
      %v1081 = vld [vmem:[%s1071 + $0x48] sm:$0xff]
      %v1082 = vld [vmem:[%s1071 + $0x50] sm:$0xff]
      %v1083 = vld [vmem:[%s1071 + $0x58] sm:$0xff]
      %v1084 = vld [vmem:[%s1071 + $0x60] sm:$0xff]
      %v1085 = vld [vmem:[%s1071 + $0x68] sm:$0xff]
      %v1086 = vld [vmem:[%s1071 + $0x70] sm:$0xff]
      %v1087 = vld [vmem:[%s1071 + $0x78] sm:$0xff]
      %v1088 = vld [vmem:[%s1071 + $0x80] sm:$0xff]
      %v1089 = vld [vmem:[%s1071 + $0x88] sm:$0xff]
      %v1090 = vld [vmem:[%s1071 + $0x90] sm:$0xff]
      %v1091 = vld [vmem:[%s1071 + $0x98] sm:$0xff]
      %v1092 = vld [vmem:[%s1071 + $0xa0] sm:$0xff]
      %v1093 = vld [vmem:[%s1071 + $0xa8] sm:$0xff]
      %v1094 = vld [vmem:[%s1071 + $0xb0] sm:$0xff]
      %v1095 = vld [vmem:[%s1071 + $0xb8] sm:$0xff]
      %v1096 = vpack.c.bf16 %v1075, %v1072
      %v1097 = vpack.c.bf16 %v1076, %v1073
      %v1098 = vpack.c.bf16 %v1077, %v1074
      %v1099 = vpack.c.bf16 %v1081, %v1078
      %v1100 = vpack.c.bf16 %v1082, %v1079
      %v1101 = vpack.c.bf16 %v1083, %v1080
      %v1102 = vpack.c.bf16 %v1087, %v1084
      %v1103 = vpack.c.bf16 %v1088, %v1085
      %v1104 = vpack.c.bf16 %v1089, %v1086
      %v1105 = vpack.c.bf16 %v1093, %v1090
      %v1106 = vpack.c.bf16 %v1094, %v1091
      %v1107 = vpack.c.bf16 %v1095, %v1092
      %s1108 = scalar_lea.vmem %s1, 384
      %v1109 = vld [vmem:[%s1108] sm:$0xf]
      %v1110 = vld [vmem:[%s1108 + $0x4] sm:$0xf]
      %v1111 = vld [vmem:[%s1108 + $0x8] sm:$0xf]
      %v1112 = vld [vmem:[%s1108 + $0xc] sm:$0xf]
      %v1113 = vld [vmem:[%s1108 + $0x10] sm:$0xf]
      %v1114 = vld [vmem:[%s1108 + $0x14] sm:$0xf]
      %v1115 = vld [vmem:[%s1108 + $0x18] sm:$0xf]
      %v1116 = vld [vmem:[%s1108 + $0x1c] sm:$0xf]
      %v1117 = vld [vmem:[%s1108 + $0x20] sm:$0xf]
      %v1118 = vld [vmem:[%s1108 + $0x24] sm:$0xf]
      %v1119 = vld [vmem:[%s1108 + $0x28] sm:$0xf]
      %v1120 = vld [vmem:[%s1108 + $0x2c] sm:$0xf]
      %v1121 = vld [vmem:[%s1108 + $0x30] sm:$0xf]
      %v1122 = vld [vmem:[%s1108 + $0x34] sm:$0xf]
      %v1123 = vld [vmem:[%s1108 + $0x38] sm:$0xf]
      %v1124 = vld [vmem:[%s1108 + $0x3c] sm:$0xf]
      %v1125 = vld [vmem:[%s1108 + $0x40] sm:$0xf]
      %v1126 = vld [vmem:[%s1108 + $0x44] sm:$0xf]
      %v1127 = vld [vmem:[%s1108 + $0x48] sm:$0xf]
      %v1128 = vld [vmem:[%s1108 + $0x4c] sm:$0xf]
      %v1129 = vld [vmem:[%s1108 + $0x50] sm:$0xf]
      %v1130 = vld [vmem:[%s1108 + $0x54] sm:$0xf]
      %v1131 = vld [vmem:[%s1108 + $0x58] sm:$0xf]
      %v1132 = vld [vmem:[%s1108 + $0x5c] sm:$0xf]
      %v1133 = vld [vmem:[%s1108 + $0x60] sm:$0xf]
      %v1134 = vld [vmem:[%s1108 + $0x64] sm:$0xf]
      %v1135 = vld [vmem:[%s1108 + $0x68] sm:$0xf]
      %v1136 = vld [vmem:[%s1108 + $0x6c] sm:$0xf]
      %v1137 = vld [vmem:[%s1108 + $0x70] sm:$0xf]
      %v1138 = vld [vmem:[%s1108 + $0x74] sm:$0xf]
      %v1139 = vld [vmem:[%s1108 + $0x78] sm:$0xf]
      %v1140 = vld [vmem:[%s1108 + $0x7c] sm:$0xf]
      %v1141 = vld [vmem:[%s1108 + $0x80] sm:$0xf]
      %v1142 = vld [vmem:[%s1108 + $0x84] sm:$0xf]
      %v1143 = vld [vmem:[%s1108 + $0x88] sm:$0xf]
      %v1144 = vld [vmem:[%s1108 + $0x8c] sm:$0xf]
      %v1145 = vld [vmem:[%s1108 + $0x90] sm:$0xf]
      %v1146 = vld [vmem:[%s1108 + $0x94] sm:$0xf]
      %v1147 = vld [vmem:[%s1108 + $0x98] sm:$0xf]
      %v1148 = vld [vmem:[%s1108 + $0x9c] sm:$0xf]
      %v1149 = vld [vmem:[%s1108 + $0xa0] sm:$0xf]
      %v1150 = vld [vmem:[%s1108 + $0xa4] sm:$0xf]
      %v1151 = vld [vmem:[%s1108 + $0xa8] sm:$0xf]
      %v1152 = vld [vmem:[%s1108 + $0xac] sm:$0xf]
      %v1153 = vld [vmem:[%s1108 + $0xb0] sm:$0xf]
      %v1154 = vld [vmem:[%s1108 + $0xb4] sm:$0xf]
      %v1155 = vld [vmem:[%s1108 + $0xb8] sm:$0xf]
      %v1156 = vld [vmem:[%s1108 + $0xbc] sm:$0xf]
      %v1205 = vunpack.c.l.b16 %v1109
      %v1206 = vunpack.c.l.b16 %v1110
      %v1207 = vunpack.c.l.b16 %v1111
      %v1208 = vunpack.c.l.b16 %v1112
      %v1209 = vunpack.c.l.b16 %v1113
      %v1210 = vunpack.c.l.b16 %v1114
      %v1211 = vunpack.c.l.b16 %v1115
      %v1212 = vunpack.c.l.b16 %v1116
      %v1213 = vunpack.c.l.b16 %v1117
      %v1214 = vunpack.c.l.b16 %v1118
      %v1215 = vunpack.c.l.b16 %v1119
      %v1216 = vunpack.c.l.b16 %v1120
      %v1217 = vunpack.c.l.b16 %v1121
      %v1218 = vunpack.c.l.b16 %v1122
      %v1219 = vunpack.c.l.b16 %v1123
      %v1220 = vunpack.c.l.b16 %v1124
      %v1221 = vunpack.c.l.b16 %v1125
      %v1222 = vunpack.c.l.b16 %v1126
      %v1223 = vunpack.c.l.b16 %v1127
      %v1224 = vunpack.c.l.b16 %v1128
      %v1225 = vunpack.c.l.b16 %v1129
      %v1226 = vunpack.c.l.b16 %v1130
      %v1227 = vunpack.c.l.b16 %v1131
      %v1228 = vunpack.c.l.b16 %v1132
      %v1229 = vunpack.c.l.b16 %v1133
      %v1230 = vunpack.c.l.b16 %v1134
      %v1231 = vunpack.c.l.b16 %v1135
      %v1232 = vunpack.c.l.b16 %v1136
      %v1233 = vunpack.c.l.b16 %v1137
      %v1234 = vunpack.c.l.b16 %v1138
      %v1235 = vunpack.c.l.b16 %v1139
      %v1236 = vunpack.c.l.b16 %v1140
      %v1237 = vunpack.c.l.b16 %v1141
      %v1238 = vunpack.c.l.b16 %v1142
      %v1239 = vunpack.c.l.b16 %v1143
      %v1240 = vunpack.c.l.b16 %v1144
      %v1241 = vunpack.c.l.b16 %v1145
      %v1242 = vunpack.c.l.b16 %v1146
      %v1243 = vunpack.c.l.b16 %v1147
      %v1244 = vunpack.c.l.b16 %v1148
      %v1245 = vunpack.c.l.b16 %v1149
      %v1246 = vunpack.c.l.b16 %v1150
      %v1247 = vunpack.c.l.b16 %v1151
      %v1248 = vunpack.c.l.b16 %v1152
      %v1249 = vunpack.c.l.b16 %v1153
      %v1250 = vunpack.c.l.b16 %v1154
      %v1251 = vunpack.c.l.b16 %v1155
      %v1252 = vunpack.c.l.b16 %v1156
      %v1253 = vpack.c.b16 %v1206, %v1205
      %v1254 = vpack.c.b16 %v1208, %v1207
      %v1255 = vpack.c.b16 %v1210, %v1209
      %v1256 = vpack.c.b16 %v1212, %v1211
      %v1257 = vpack.c.b16 %v1214, %v1213
      %v1258 = vpack.c.b16 %v1216, %v1215
      %v1259 = vpack.c.b16 %v1218, %v1217
      %v1260 = vpack.c.b16 %v1220, %v1219
      %v1261 = vpack.c.b16 %v1222, %v1221
      %v1262 = vpack.c.b16 %v1224, %v1223
      %v1263 = vpack.c.b16 %v1226, %v1225
      %v1264 = vpack.c.b16 %v1228, %v1227
      %v1265 = vpack.c.b16 %v1230, %v1229
      %v1266 = vpack.c.b16 %v1232, %v1231
      %v1267 = vpack.c.b16 %v1234, %v1233
      %v1268 = vpack.c.b16 %v1236, %v1235
      %v1269 = vpack.c.b16 %v1238, %v1237
      %v1270 = vpack.c.b16 %v1240, %v1239
      %v1271 = vpack.c.b16 %v1242, %v1241
      %v1272 = vpack.c.b16 %v1244, %v1243
      %v1273 = vpack.c.b16 %v1246, %v1245
      %v1274 = vpack.c.b16 %v1248, %v1247
      %v1275 = vpack.c.b16 %v1250, %v1249
      %v1276 = vpack.c.b16 %v1252, %v1251
      %1301 = vmatprep.subr.bf16.mxu0 0
      %1302 = vmatpush1.bf16.msra.mxu0 %v1253
      %1303 = vmatprep.subr.bf16.mxu0 0
      %1304 = vmatpush1.bf16.msra.mxu0 %v1254
      %1305 = vmatprep.subr.bf16.mxu0 0
      %1306 = vmatpush1.bf16.msra.mxu0 %v1255
      %1307 = vmatprep.subr.bf16.mxu0 0
      %1308 = vmatpush1.bf16.msra.mxu0 %v1256
      %1309 = vmatprep.subr.bf16.mxu0 0
      %1310 = vmatpush1.bf16.msra.mxu0 %v1257
      %1311 = vmatprep.subr.bf16.mxu0 0
      %1312 = vmatpush1.bf16.msra.mxu0 %v1258
      %1313 = vmatprep.subr.bf16.mxu0 0
      %1314 = vmatpush1.bf16.msra.mxu0 %v1259
      %1315 = vmatprep.subr.bf16.mxu0 0
      %1316 = vmatpush1.bf16.msra.mxu0 %v1260
      %1317 = vmatprep.subr.bf16.mxu0 0
      %1318 = vmatpush1.bf16.msra.mxu0 %v1261
      %1319 = vmatprep.subr.bf16.mxu0 0
      %1320 = vmatpush1.bf16.msra.mxu0 %v1262
      %1321 = vmatprep.subr.bf16.mxu0 0
      %1322 = vmatpush1.bf16.msra.mxu0 %v1263
      %1323 = vmatprep.subr.bf16.mxu0 0
      %1324 = vmatpush1.bf16.msra.mxu0 %v1264
      %1325 = vmatprep.subr.bf16.mxu0 0
      %1326 = vmatpush1.bf16.msra.mxu0 %v1265
      %1327 = vmatprep.subr.bf16.mxu0 0
      %1328 = vmatpush1.bf16.msra.mxu0 %v1266
      %1329 = vmatprep.subr.bf16.mxu0 0
      %1330 = vmatpush1.bf16.msra.mxu0 %v1267
      %1331 = vmatprep.subr.bf16.mxu0 0
      %1332 = vmatpush1.bf16.msra.mxu0 %v1268
      %1333 = vmatprep.mubr.bf16.mxu0 %v1097
      %1334 = vmatmul.mubr.bf16.gmra.mrb[0].mxu0 %v1096
      %v1335 = vpop.f32.mrb[0].mxu0
      %v1336 = vadd.f32 0.0, %v1335
      %v1337 = vpop.f32.mrb[0].mxu0
      %v1338 = vpop.f32.mrb[0].mxu0
      %v1339 = vadd.f32 0.0, %v1338
      %v1340 = vpop.f32.mrb[0].mxu0
      %1341 = vmatprep.mubr.bf16.mxu0 %v1100
      %1342 = vmatmul.mubr.bf16.gmra.mrb[0].mxu0 %v1099
      %v1343 = vpop.f32.mrb[0].mxu0
      %v1344 = vadd.f32 0.0, %v1343
      %v1345 = vpop.f32.mrb[0].mxu0
      %v1346 = vpop.f32.mrb[0].mxu0
      %v1347 = vadd.f32 0.0, %v1346
      %v1348 = vpop.f32.mrb[0].mxu0
      %1349 = vmatprep.mubr.bf16.mxu0 %v1103
      %1350 = vmatmul.mubr.bf16.gmra.mrb[0].mxu0 %v1102
      %v1351 = vpop.f32.mrb[0].mxu0
      %v1352 = vadd.f32 0.0, %v1351
      %v1353 = vpop.f32.mrb[0].mxu0
      %v1354 = vpop.f32.mrb[0].mxu0
      %v1355 = vadd.f32 0.0, %v1354
      %v1356 = vpop.f32.mrb[0].mxu0
      %1357 = vmatprep.mubr.bf16.mxu0 %v1106
      %1358 = vmatmul.mubr.bf16.gmra.mrb[0].mxu0 %v1105
      %v1359 = vpop.f32.mrb[0].mxu0
      %v1360 = vadd.f32 0.0, %v1359
      %v1361 = vpop.f32.mrb[0].mxu0
      %v1362 = vpop.f32.mrb[0].mxu0
      %v1363 = vadd.f32 0.0, %v1362
      %v1364 = vpop.f32.mrb[0].mxu0
      %1365 = vdwg.mxu0
      %1366 = vmatprep.subr.bf16.mxu0 0
      %1367 = vmatpush1.bf16.msra.mxu0 %v1269
      %1368 = vmatprep.subr.bf16.mxu0 0
      %1369 = vmatpush1.bf16.msra.mxu0 %v1270
      %1370 = vmatprep.subr.bf16.mxu0 0
      %1371 = vmatpush1.bf16.msra.mxu0 %v1271
      %1372 = vmatprep.subr.bf16.mxu0 0
      %1373 = vmatpush1.bf16.msra.mxu0 %v1272
      %1374 = vmatprep.subr.bf16.mxu0 0
      %1375 = vmatpush1.bf16.msra.mxu0 %v1273
      %1376 = vmatprep.subr.bf16.mxu0 0
      %1377 = vmatpush1.bf16.msra.mxu0 %v1274
      %1378 = vmatprep.subr.bf16.mxu0 0
      %1379 = vmatpush1.bf16.msra.mxu0 %v1275
      %1380 = vmatprep.subr.bf16.mxu0 0
      %1381 = vmatpush1.bf16.msra.mxu0 %v1276
      %1382 = vmatprep.subr.bf16.mxu0 0
      %1383 = vmatpush1.bf16.msra.mxu0 0
      %1384 = vmatprep.subr.bf16.mxu0 0
      %1385 = vmatpush1.bf16.msra.mxu0 0
      %1386 = vmatprep.subr.bf16.mxu0 0
      %1387 = vmatpush1.bf16.msra.mxu0 0
      %1388 = vmatprep.subr.bf16.mxu0 0
      %1389 = vmatpush1.bf16.msra.mxu0 0
      %1390 = vmatprep.subr.bf16.mxu0 0
      %1391 = vmatpush1.bf16.msra.mxu0 0
      %1392 = vmatprep.subr.bf16.mxu0 0
      %1393 = vmatpush1.bf16.msra.mxu0 0
      %1394 = vmatprep.subr.bf16.mxu0 0
      %1395 = vmatpush1.bf16.msra.mxu0 0
      %1396 = vmatprep.subr.bf16.mxu0 0
      %1397 = vmatpush1.bf16.msra.mxu0 0
      %1398 = vmatprep.mubr.bf16.mxu0 0
      %1399 = vmatmul.mubr.bf16.gmra.mrb[0].mxu0 %v1098
      %v1400 = vpop.f32.mrb[0].mxu0
      %v1401 = vadd.f32 %v1336, %v1400
      %v1402 = vpop.f32.mrb[0].mxu0
      %v1403 = vpop.f32.mrb[0].mxu0
      %v1404 = vadd.f32 %v1339, %v1403
      %v1405 = vpop.f32.mrb[0].mxu0
      %1406 = vmatprep.mubr.bf16.mxu0 0
      %1407 = vmatmul.mubr.bf16.gmra.mrb[0].mxu0 %v1101
      %v1408 = vpop.f32.mrb[0].mxu0
      %v1409 = vadd.f32 %v1344, %v1408
      %v1410 = vpop.f32.mrb[0].mxu0
      %v1411 = vpop.f32.mrb[0].mxu0
      %v1412 = vadd.f32 %v1347, %v1411
      %v1413 = vpop.f32.mrb[0].mxu0
      %1414 = vmatprep.mubr.bf16.mxu0 0
      %1415 = vmatmul.mubr.bf16.gmra.mrb[0].mxu0 %v1104
      %v1416 = vpop.f32.mrb[0].mxu0
      %v1417 = vadd.f32 %v1352, %v1416
      %v1418 = vpop.f32.mrb[0].mxu0
      %v1419 = vpop.f32.mrb[0].mxu0
      %v1420 = vadd.f32 %v1355, %v1419
      %v1421 = vpop.f32.mrb[0].mxu0
      %1422 = vmatprep.mubr.bf16.mxu0 0
      %1423 = vmatmul.mubr.bf16.gmra.mrb[0].mxu0 %v1107
      %v1424 = vpop.f32.mrb[0].mxu0
      %v1425 = vadd.f32 %v1360, %v1424
      %v1426 = vpop.f32.mrb[0].mxu0
      %v1427 = vpop.f32.mrb[0].mxu0
      %v1428 = vadd.f32 %v1363, %v1427
      %v1429 = vpop.f32.mrb[0].mxu0
      %1430 = vdwg.mxu0
      %v1431 = vadd.f32 %v1041, %v1401
      %v1432 = vadd.f32 %v1044, %v1404
      %v1433 = vadd.f32 %v1049, %v1409
      %v1434 = vadd.f32 %v1052, %v1412
      %v1435 = vadd.f32 %v1057, %v1417
      %v1436 = vadd.f32 %v1060, %v1420
      %v1437 = vadd.f32 %v1065, %v1425
      %v1438 = vadd.f32 %v1068, %v1428
      %v1439 = vld [vmem:[%s2] sm:$0x1]
      %v1441 = vlaneseq
      %v1442 = vshrl.u32 %v1441, 7
      %v1443 = vsub.s32 0, %v1442
      %v1444 = vrot.slane %v1439, %v1443
      %v1446 = vadd.f32 %v1431, %v1444
      %v1447 = vadd.f32 %v1432, %v1444
      %v1448 = vadd.f32 %v1433, %v1444
      %v1449 = vadd.f32 %v1434, %v1444
      %v1450 = vadd.f32 %v1435, %v1444
      %v1451 = vadd.f32 %v1436, %v1444
      %v1452 = vadd.f32 %v1437, %v1444
      %v1453 = vadd.f32 %v1438, %v1444
      %v1454 = vmax.f32 %v1446, 0.0
      %v1455 = vmax.f32 %v1447, 0.0
      %v1456 = vmax.f32 %v1448, 0.0
      %v1457 = vmax.f32 %v1449, 0.0
      %v1458 = vmax.f32 %v1450, 0.0
      %v1459 = vmax.f32 %v1451, 0.0
      %v1460 = vmax.f32 %v1452, 0.0
      %v1461 = vmax.f32 %v1453, 0.0
      %1462 = vst [vmem:[%s233 + $0x8] sm:$0xff] %v1454
      %1463 = vst [vmem:[%s233 + $0x20] sm:$0xff] %v1455
      %1464 = vst [vmem:[%s233 + $0x38] sm:$0xff] %v1456
      %1465 = vst [vmem:[%s233 + $0x50] sm:$0xff] %v1457
      %1466 = vst [vmem:[%s233 + $0x68] sm:$0xff] %v1458
      %1467 = vst [vmem:[%s233 + $0x80] sm:$0xff] %v1459
      %1468 = vst [vmem:[%s233 + $0x98] sm:$0xff] %v1460
      %1469 = vst [vmem:[%s233 + $0xb0] sm:$0xff] %v1461
      %v1470 = vld [vmem:[%s233 + $0x8] sm:$0x7f]
      %v1471 = vld [vmem:[%s233 + $0x20] sm:$0x7f]
      %v1472 = vld [vmem:[%s233 + $0x38] sm:$0x7f]
      %v1473 = vld [vmem:[%s233 + $0x50] sm:$0x7f]
      %v1474 = vld [vmem:[%s233 + $0x68] sm:$0x7f]
      %v1475 = vld [vmem:[%s233 + $0x80] sm:$0x7f]
      %v1476 = vld [vmem:[%s233 + $0x98] sm:$0x7f]
      %v1477 = vld [vmem:[%s233 + $0xb0] sm:$0x7f]
      %v1486 = vrot.slane %v1470, 7
      %v1487 = vrot.slane %v1471, 7
      %v1488 = vrot.slane %v1472, 7
      %v1489 = vrot.slane %v1473, 7
      %v1490 = vrot.slane %v1474, 7
      %v1491 = vrot.slane %v1475, 7
      %v1492 = vrot.slane %v1476, 7
      %v1493 = vrot.slane %v1477, 7
      %1502 = vst [vmem:[%s233] sm:$0xfe] %v1486
      %1503 = vst [vmem:[%s233 + $0x18] sm:$0xfe] %v1487
      %1504 = vst [vmem:[%s233 + $0x30] sm:$0xfe] %v1488
      %1505 = vst [vmem:[%s233 + $0x48] sm:$0xfe] %v1489
      %1506 = vst [vmem:[%s233 + $0x60] sm:$0xfe] %v1490
      %1507 = vst [vmem:[%s233 + $0x78] sm:$0xfe] %v1491
      %1508 = vst [vmem:[%s233 + $0x90] sm:$0xfe] %v1492
      %1509 = vst [vmem:[%s233 + $0xa8] sm:$0xfe] %v1493
      %v1510 = vld [vmem:[%s233 + $0x8] sm:$0xfe]
      %v1511 = vld [vmem:[%s233 + $0x20] sm:$0xfe]
      %v1512 = vld [vmem:[%s233 + $0x38] sm:$0xfe]
      %v1513 = vld [vmem:[%s233 + $0x50] sm:$0xfe]
      %v1514 = vld [vmem:[%s233 + $0x68] sm:$0xfe]
      %v1515 = vld [vmem:[%s233 + $0x80] sm:$0xfe]
      %v1516 = vld [vmem:[%s233 + $0x98] sm:$0xfe]
      %v1517 = vld [vmem:[%s233 + $0xb0] sm:$0xfe]
      %v1526 = vrot.slane %v1510, 1
      %v1527 = vrot.slane %v1511, 1
      %v1528 = vrot.slane %v1512, 1
      %v1529 = vrot.slane %v1513, 1
      %v1530 = vrot.slane %v1514, 1
      %v1531 = vrot.slane %v1515, 1
      %v1532 = vrot.slane %v1516, 1
      %v1533 = vrot.slane %v1517, 1
      %1542 = vst [vmem:[%s233 + $0x10] sm:$0x7f] %v1526
      %1543 = vst [vmem:[%s233 + $0x28] sm:$0x7f] %v1527
      %1544 = vst [vmem:[%s233 + $0x40] sm:$0x7f] %v1528
      %1545 = vst [vmem:[%s233 + $0x58] sm:$0x7f] %v1529
      %1546 = vst [vmem:[%s233 + $0x70] sm:$0x7f] %v1530
      %1547 = vst [vmem:[%s233 + $0x88] sm:$0x7f] %v1531
      %1548 = vst [vmem:[%s233 + $0xa0] sm:$0x7f] %v1532
      %1549 = vst [vmem:[%s233 + $0xb8] sm:$0x7f] %v1533
      %v1550 = vld [vmem:[#allocation2] sm:$0xff]
      %v1551 = vld [vmem:[#allocation2 + $0x8] sm:$0xff]
      %v1552 = vld [vmem:[#allocation2 + $0x10] sm:$0xff]
      %v1553 = vld [vmem:[#allocation2 + $0x18] sm:$0xff]
      %v1554 = vld [vmem:[#allocation2 + $0x20] sm:$0xff]
      %v1555 = vld [vmem:[#allocation2 + $0x28] sm:$0xff]
      %v1556 = vld [vmem:[#allocation2 + $0x30] sm:$0xff]
      %v1557 = vld [vmem:[#allocation2 + $0x38] sm:$0xff]
      %v1558 = vld [vmem:[#allocation2 + $0x40] sm:$0xff]
      %v1559 = vld [vmem:[#allocation2 + $0x48] sm:$0xff]
      %v1560 = vld [vmem:[#allocation2 + $0x50] sm:$0xff]
      %v1561 = vld [vmem:[#allocation2 + $0x58] sm:$0xff]
      %v1562 = vld [vmem:[#allocation2 + $0x60] sm:$0xff]
      %v1563 = vld [vmem:[#allocation2 + $0x68] sm:$0xff]
      %v1564 = vld [vmem:[#allocation2 + $0x70] sm:$0xff]
      %v1565 = vld [vmem:[#allocation2 + $0x78] sm:$0xff]
      %v1566 = vld [vmem:[#allocation2 + $0x80] sm:$0xff]
      %v1567 = vld [vmem:[#allocation2 + $0x88] sm:$0xff]
      %v1568 = vld [vmem:[#allocation2 + $0x90] sm:$0xff]
      %v1569 = vld [vmem:[#allocation2 + $0x98] sm:$0xff]
      %v1570 = vld [vmem:[#allocation2 + $0xa0] sm:$0xff]
      %v1571 = vld [vmem:[#allocation2 + $0xa8] sm:$0xff]
      %v1572 = vld [vmem:[#allocation2 + $0xb0] sm:$0xff]
      %v1573 = vld [vmem:[#allocation2 + $0xb8] sm:$0xff]
      %v1574 = vpack.c.bf16 %v1553, %v1550
      %v1575 = vpack.c.bf16 %v1554, %v1551
      %v1576 = vpack.c.bf16 %v1555, %v1552
      %v1577 = vpack.c.bf16 %v1559, %v1556
      %v1578 = vpack.c.bf16 %v1560, %v1557
      %v1579 = vpack.c.bf16 %v1561, %v1558
      %v1580 = vpack.c.bf16 %v1565, %v1562
      %v1581 = vpack.c.bf16 %v1566, %v1563
      %v1582 = vpack.c.bf16 %v1567, %v1564
      %v1583 = vpack.c.bf16 %v1571, %v1568
      %v1584 = vpack.c.bf16 %v1572, %v1569
      %v1585 = vpack.c.bf16 %v1573, %v1570
      %v1586 = vld [vmem:[%s3] sm:$0xf]
      %v1587 = vld [vmem:[%s3 + $0x4] sm:$0xf]
      %v1588 = vld [vmem:[%s3 + $0x8] sm:$0xf]
      %v1589 = vld [vmem:[%s3 + $0xc] sm:$0xf]
      %v1590 = vld [vmem:[%s3 + $0x10] sm:$0xf]
      %v1591 = vld [vmem:[%s3 + $0x14] sm:$0xf]
      %v1592 = vld [vmem:[%s3 + $0x18] sm:$0xf]
      %v1593 = vld [vmem:[%s3 + $0x1c] sm:$0xf]
      %v1594 = vld [vmem:[%s3 + $0x20] sm:$0xf]
      %v1595 = vld [vmem:[%s3 + $0x24] sm:$0xf]
      %v1596 = vld [vmem:[%s3 + $0x28] sm:$0xf]
      %v1597 = vld [vmem:[%s3 + $0x2c] sm:$0xf]
      %v1598 = vld [vmem:[%s3 + $0x30] sm:$0xf]
      %v1599 = vld [vmem:[%s3 + $0x34] sm:$0xf]
      %v1600 = vld [vmem:[%s3 + $0x38] sm:$0xf]
      %v1601 = vld [vmem:[%s3 + $0x3c] sm:$0xf]
      %v1602 = vld [vmem:[%s3 + $0x40] sm:$0xf]
      %v1603 = vld [vmem:[%s3 + $0x44] sm:$0xf]
      %v1604 = vld [vmem:[%s3 + $0x48] sm:$0xf]
      %v1605 = vld [vmem:[%s3 + $0x4c] sm:$0xf]
      %v1606 = vld [vmem:[%s3 + $0x50] sm:$0xf]
      %v1607 = vld [vmem:[%s3 + $0x54] sm:$0xf]
      %v1608 = vld [vmem:[%s3 + $0x58] sm:$0xf]
      %v1609 = vld [vmem:[%s3 + $0x5c] sm:$0xf]
      %v1610 = vld [vmem:[%s3 + $0x60] sm:$0xf]
      %v1611 = vld [vmem:[%s3 + $0x64] sm:$0xf]
      %v1612 = vld [vmem:[%s3 + $0x68] sm:$0xf]
      %v1613 = vld [vmem:[%s3 + $0x6c] sm:$0xf]
      %v1614 = vld [vmem:[%s3 + $0x70] sm:$0xf]
      %v1615 = vld [vmem:[%s3 + $0x74] sm:$0xf]
      %v1616 = vld [vmem:[%s3 + $0x78] sm:$0xf]
      %v1617 = vld [vmem:[%s3 + $0x7c] sm:$0xf]
      %v1618 = vld [vmem:[%s3 + $0x80] sm:$0xf]
      %v1619 = vld [vmem:[%s3 + $0x84] sm:$0xf]
      %v1620 = vld [vmem:[%s3 + $0x88] sm:$0xf]
      %v1621 = vld [vmem:[%s3 + $0x8c] sm:$0xf]
      %v1622 = vld [vmem:[%s3 + $0x90] sm:$0xf]
      %v1623 = vld [vmem:[%s3 + $0x94] sm:$0xf]
      %v1624 = vld [vmem:[%s3 + $0x98] sm:$0xf]
      %v1625 = vld [vmem:[%s3 + $0x9c] sm:$0xf]
      %v1626 = vld [vmem:[%s3 + $0xa0] sm:$0xf]
      %v1627 = vld [vmem:[%s3 + $0xa4] sm:$0xf]
      %v1628 = vld [vmem:[%s3 + $0xa8] sm:$0xf]
      %v1629 = vld [vmem:[%s3 + $0xac] sm:$0xf]
      %v1630 = vld [vmem:[%s3 + $0xb0] sm:$0xf]
      %v1631 = vld [vmem:[%s3 + $0xb4] sm:$0xf]
      %v1632 = vld [vmem:[%s3 + $0xb8] sm:$0xf]
      %v1633 = vld [vmem:[%s3 + $0xbc] sm:$0xf]
      %v1634 = vld [vmem:[%s233] sm:$0xff]
      %v1635 = vld [vmem:[%s233 + $0x8] sm:$0xff]
      %v1636 = vld [vmem:[%s233 + $0x10] sm:$0xff]
      %v1637 = vld [vmem:[%s233 + $0x18] sm:$0xff]
      %v1638 = vld [vmem:[%s233 + $0x20] sm:$0xff]
      %v1639 = vld [vmem:[%s233 + $0x28] sm:$0xff]
      %v1640 = vld [vmem:[%s233 + $0x30] sm:$0xff]
      %v1641 = vld [vmem:[%s233 + $0x38] sm:$0xff]
      %v1642 = vld [vmem:[%s233 + $0x40] sm:$0xff]
      %v1643 = vld [vmem:[%s233 + $0x48] sm:$0xff]
      %v1644 = vld [vmem:[%s233 + $0x50] sm:$0xff]
      %v1645 = vld [vmem:[%s233 + $0x58] sm:$0xff]
      %v1646 = vld [vmem:[%s233 + $0x60] sm:$0xff]
      %v1647 = vld [vmem:[%s233 + $0x68] sm:$0xff]
      %v1648 = vld [vmem:[%s233 + $0x70] sm:$0xff]
      %v1649 = vld [vmem:[%s233 + $0x78] sm:$0xff]
      %v1650 = vld [vmem:[%s233 + $0x80] sm:$0xff]
      %v1651 = vld [vmem:[%s233 + $0x88] sm:$0xff]
      %v1652 = vld [vmem:[%s233 + $0x90] sm:$0xff]
      %v1653 = vld [vmem:[%s233 + $0x98] sm:$0xff]
      %v1654 = vld [vmem:[%s233 + $0xa0] sm:$0xff]
      %v1655 = vld [vmem:[%s233 + $0xa8] sm:$0xff]
      %v1656 = vld [vmem:[%s233 + $0xb0] sm:$0xff]
      %v1657 = vld [vmem:[%s233 + $0xb8] sm:$0xff]
      %v1658 = vpack.c.bf16 %v1637, %v1634
      %v1659 = vpack.c.bf16 %v1638, %v1635
      %v1660 = vpack.c.bf16 %v1639, %v1636
      %v1661 = vpack.c.bf16 %v1643, %v1640
      %v1662 = vpack.c.bf16 %v1644, %v1641
      %v1663 = vpack.c.bf16 %v1645, %v1642
      %v1664 = vpack.c.bf16 %v1649, %v1646
      %v1665 = vpack.c.bf16 %v1650, %v1647
      %v1666 = vpack.c.bf16 %v1651, %v1648
      %v1667 = vpack.c.bf16 %v1655, %v1652
      %v1668 = vpack.c.bf16 %v1656, %v1653
      %v1669 = vpack.c.bf16 %v1657, %v1654
      %s1670 = scalar_lea.vmem %s3, 192
      %v1671 = vld [vmem:[%s1670] sm:$0xf]
      %v1672 = vld [vmem:[%s1670 + $0x4] sm:$0xf]
      %v1673 = vld [vmem:[%s1670 + $0x8] sm:$0xf]
      %v1674 = vld [vmem:[%s1670 + $0xc] sm:$0xf]
      %v1675 = vld [vmem:[%s1670 + $0x10] sm:$0xf]
      %v1676 = vld [vmem:[%s1670 + $0x14] sm:$0xf]
      %v1677 = vld [vmem:[%s1670 + $0x18] sm:$0xf]
      %v1678 = vld [vmem:[%s1670 + $0x1c] sm:$0xf]
      %v1679 = vld [vmem:[%s1670 + $0x20] sm:$0xf]
      %v1680 = vld [vmem:[%s1670 + $0x24] sm:$0xf]
      %v1681 = vld [vmem:[%s1670 + $0x28] sm:$0xf]
      %v1682 = vld [vmem:[%s1670 + $0x2c] sm:$0xf]
      %v1683 = vld [vmem:[%s1670 + $0x30] sm:$0xf]
      %v1684 = vld [vmem:[%s1670 + $0x34] sm:$0xf]
      %v1685 = vld [vmem:[%s1670 + $0x38] sm:$0xf]
      %v1686 = vld [vmem:[%s1670 + $0x3c] sm:$0xf]
      %v1687 = vld [vmem:[%s1670 + $0x40] sm:$0xf]
      %v1688 = vld [vmem:[%s1670 + $0x44] sm:$0xf]
      %v1689 = vld [vmem:[%s1670 + $0x48] sm:$0xf]
      %v1690 = vld [vmem:[%s1670 + $0x4c] sm:$0xf]
      %v1691 = vld [vmem:[%s1670 + $0x50] sm:$0xf]
      %v1692 = vld [vmem:[%s1670 + $0x54] sm:$0xf]
      %v1693 = vld [vmem:[%s1670 + $0x58] sm:$0xf]
      %v1694 = vld [vmem:[%s1670 + $0x5c] sm:$0xf]
      %v1695 = vld [vmem:[%s1670 + $0x60] sm:$0xf]
      %v1696 = vld [vmem:[%s1670 + $0x64] sm:$0xf]
      %v1697 = vld [vmem:[%s1670 + $0x68] sm:$0xf]
      %v1698 = vld [vmem:[%s1670 + $0x6c] sm:$0xf]
      %v1699 = vld [vmem:[%s1670 + $0x70] sm:$0xf]
      %v1700 = vld [vmem:[%s1670 + $0x74] sm:$0xf]
      %v1701 = vld [vmem:[%s1670 + $0x78] sm:$0xf]
      %v1702 = vld [vmem:[%s1670 + $0x7c] sm:$0xf]
      %v1703 = vld [vmem:[%s1670 + $0x80] sm:$0xf]
      %v1704 = vld [vmem:[%s1670 + $0x84] sm:$0xf]
      %v1705 = vld [vmem:[%s1670 + $0x88] sm:$0xf]
      %v1706 = vld [vmem:[%s1670 + $0x8c] sm:$0xf]
      %v1707 = vld [vmem:[%s1670 + $0x90] sm:$0xf]
      %v1708 = vld [vmem:[%s1670 + $0x94] sm:$0xf]
      %v1709 = vld [vmem:[%s1670 + $0x98] sm:$0xf]
      %v1710 = vld [vmem:[%s1670 + $0x9c] sm:$0xf]
      %v1711 = vld [vmem:[%s1670 + $0xa0] sm:$0xf]
      %v1712 = vld [vmem:[%s1670 + $0xa4] sm:$0xf]
      %v1713 = vld [vmem:[%s1670 + $0xa8] sm:$0xf]
      %v1714 = vld [vmem:[%s1670 + $0xac] sm:$0xf]
      %v1715 = vld [vmem:[%s1670 + $0xb0] sm:$0xf]
      %v1716 = vld [vmem:[%s1670 + $0xb4] sm:$0xf]
      %v1717 = vld [vmem:[%s1670 + $0xb8] sm:$0xf]
      %v1718 = vld [vmem:[%s1670 + $0xbc] sm:$0xf]
      %v1767 = vunpack.c.l.b16 %v1671
      %v1768 = vunpack.c.l.b16 %v1672
      %v1769 = vunpack.c.l.b16 %v1673
      %v1770 = vunpack.c.l.b16 %v1674
      %v1771 = vunpack.c.l.b16 %v1675
      %v1772 = vunpack.c.l.b16 %v1676
      %v1773 = vunpack.c.l.b16 %v1677
      %v1774 = vunpack.c.l.b16 %v1678
      %v1775 = vunpack.c.l.b16 %v1679
      %v1776 = vunpack.c.l.b16 %v1680
      %v1777 = vunpack.c.l.b16 %v1681
      %v1778 = vunpack.c.l.b16 %v1682
      %v1779 = vunpack.c.l.b16 %v1683
      %v1780 = vunpack.c.l.b16 %v1684
      %v1781 = vunpack.c.l.b16 %v1685
      %v1782 = vunpack.c.l.b16 %v1686
      %v1783 = vunpack.c.l.b16 %v1687
      %v1784 = vunpack.c.l.b16 %v1688
      %v1785 = vunpack.c.l.b16 %v1689
      %v1786 = vunpack.c.l.b16 %v1690
      %v1787 = vunpack.c.l.b16 %v1691
      %v1788 = vunpack.c.l.b16 %v1692
      %v1789 = vunpack.c.l.b16 %v1693
      %v1790 = vunpack.c.l.b16 %v1694
      %v1791 = vunpack.c.l.b16 %v1695
      %v1792 = vunpack.c.l.b16 %v1696
      %v1793 = vunpack.c.l.b16 %v1697
      %v1794 = vunpack.c.l.b16 %v1698
      %v1795 = vunpack.c.l.b16 %v1699
      %v1796 = vunpack.c.l.b16 %v1700
      %v1797 = vunpack.c.l.b16 %v1701
      %v1798 = vunpack.c.l.b16 %v1702
      %v1799 = vunpack.c.l.b16 %v1703
      %v1800 = vunpack.c.l.b16 %v1704
      %v1801 = vunpack.c.l.b16 %v1705
      %v1802 = vunpack.c.l.b16 %v1706
      %v1803 = vunpack.c.l.b16 %v1707
      %v1804 = vunpack.c.l.b16 %v1708
      %v1805 = vunpack.c.l.b16 %v1709
      %v1806 = vunpack.c.l.b16 %v1710
      %v1807 = vunpack.c.l.b16 %v1711
      %v1808 = vunpack.c.l.b16 %v1712
      %v1809 = vunpack.c.l.b16 %v1713
      %v1810 = vunpack.c.l.b16 %v1714
      %v1811 = vunpack.c.l.b16 %v1715
      %v1812 = vunpack.c.l.b16 %v1716
      %v1813 = vunpack.c.l.b16 %v1717
      %v1814 = vunpack.c.l.b16 %v1718
      %v1815 = vpack.c.b16 %v1768, %v1767
      %v1816 = vpack.c.b16 %v1770, %v1769
      %v1817 = vpack.c.b16 %v1772, %v1771
      %v1818 = vpack.c.b16 %v1774, %v1773
      %v1819 = vpack.c.b16 %v1776, %v1775
      %v1820 = vpack.c.b16 %v1778, %v1777
      %v1821 = vpack.c.b16 %v1780, %v1779
      %v1822 = vpack.c.b16 %v1782, %v1781
      %v1823 = vpack.c.b16 %v1784, %v1783
      %v1824 = vpack.c.b16 %v1786, %v1785
      %v1825 = vpack.c.b16 %v1788, %v1787
      %v1826 = vpack.c.b16 %v1790, %v1789
      %v1827 = vpack.c.b16 %v1792, %v1791
      %v1828 = vpack.c.b16 %v1794, %v1793
      %v1829 = vpack.c.b16 %v1796, %v1795
      %v1830 = vpack.c.b16 %v1798, %v1797
      %v1831 = vpack.c.b16 %v1800, %v1799
      %v1832 = vpack.c.b16 %v1802, %v1801
      %v1833 = vpack.c.b16 %v1804, %v1803
      %v1834 = vpack.c.b16 %v1806, %v1805
      %v1835 = vpack.c.b16 %v1808, %v1807
      %v1836 = vpack.c.b16 %v1810, %v1809
      %v1837 = vpack.c.b16 %v1812, %v1811
      %v1838 = vpack.c.b16 %v1814, %v1813
      %1863 = vmatprep.subr.bf16.mxu0 0
      %1864 = vmatpush1.bf16.msra.mxu0 %v1815
      %1865 = vmatprep.subr.bf16.mxu0 0
      %1866 = vmatpush1.bf16.msra.mxu0 %v1816
      %1867 = vmatprep.subr.bf16.mxu0 0
      %1868 = vmatpush1.bf16.msra.mxu0 %v1817
      %1869 = vmatprep.subr.bf16.mxu0 0
      %1870 = vmatpush1.bf16.msra.mxu0 %v1818
      %1871 = vmatprep.subr.bf16.mxu0 0
      %1872 = vmatpush1.bf16.msra.mxu0 %v1819
      %1873 = vmatprep.subr.bf16.mxu0 0
      %1874 = vmatpush1.bf16.msra.mxu0 %v1820
      %1875 = vmatprep.subr.bf16.mxu0 0
      %1876 = vmatpush1.bf16.msra.mxu0 %v1821
      %1877 = vmatprep.subr.bf16.mxu0 0
      %1878 = vmatpush1.bf16.msra.mxu0 %v1822
      %1879 = vmatprep.subr.bf16.mxu0 0
      %1880 = vmatpush1.bf16.msra.mxu0 %v1823
      %1881 = vmatprep.subr.bf16.mxu0 0
      %1882 = vmatpush1.bf16.msra.mxu0 %v1824
      %1883 = vmatprep.subr.bf16.mxu0 0
      %1884 = vmatpush1.bf16.msra.mxu0 %v1825
      %1885 = vmatprep.subr.bf16.mxu0 0
      %1886 = vmatpush1.bf16.msra.mxu0 %v1826
      %1887 = vmatprep.subr.bf16.mxu0 0
      %1888 = vmatpush1.bf16.msra.mxu0 %v1827
      %1889 = vmatprep.subr.bf16.mxu0 0
      %1890 = vmatpush1.bf16.msra.mxu0 %v1828
      %1891 = vmatprep.subr.bf16.mxu0 0
      %1892 = vmatpush1.bf16.msra.mxu0 %v1829
      %1893 = vmatprep.subr.bf16.mxu0 0
      %1894 = vmatpush1.bf16.msra.mxu0 %v1830
      %1895 = vmatprep.mubr.bf16.mxu0 %v1659
      %1896 = vmatmul.mubr.bf16.gmra.mrb[0].mxu0 %v1658
      %v1897 = vpop.f32.mrb[0].mxu0
      %v1898 = vadd.f32 0.0, %v1897
      %v1899 = vpop.f32.mrb[0].mxu0
      %v1900 = vpop.f32.mrb[0].mxu0
      %v1901 = vadd.f32 0.0, %v1900
      %v1902 = vpop.f32.mrb[0].mxu0
      %1903 = vmatprep.mubr.bf16.mxu0 %v1662
      %1904 = vmatmul.mubr.bf16.gmra.mrb[0].mxu0 %v1661
      %v1905 = vpop.f32.mrb[0].mxu0
      %v1906 = vadd.f32 0.0, %v1905
      %v1907 = vpop.f32.mrb[0].mxu0
      %v1908 = vpop.f32.mrb[0].mxu0
      %v1909 = vadd.f32 0.0, %v1908
      %v1910 = vpop.f32.mrb[0].mxu0
      %1911 = vmatprep.mubr.bf16.mxu0 %v1665
      %1912 = vmatmul.mubr.bf16.gmra.mrb[0].mxu0 %v1664
      %v1913 = vpop.f32.mrb[0].mxu0
      %v1914 = vadd.f32 0.0, %v1913
      %v1915 = vpop.f32.mrb[0].mxu0
      %v1916 = vpop.f32.mrb[0].mxu0
      %v1917 = vadd.f32 0.0, %v1916
      %v1918 = vpop.f32.mrb[0].mxu0
      %1919 = vmatprep.mubr.bf16.mxu0 %v1668
      %1920 = vmatmul.mubr.bf16.gmra.mrb[0].mxu0 %v1667
      %v1921 = vpop.f32.mrb[0].mxu0
      %v1922 = vadd.f32 0.0, %v1921
      %v1923 = vpop.f32.mrb[0].mxu0
      %v1924 = vpop.f32.mrb[0].mxu0
      %v1925 = vadd.f32 0.0, %v1924
      %v1926 = vpop.f32.mrb[0].mxu0
      %1927 = vdwg.mxu0
      %1928 = vmatprep.subr.bf16.mxu0 0
      %1929 = vmatpush1.bf16.msra.mxu0 %v1831
      %1930 = vmatprep.subr.bf16.mxu0 0
      %1931 = vmatpush1.bf16.msra.mxu0 %v1832
      %1932 = vmatprep.subr.bf16.mxu0 0
      %1933 = vmatpush1.bf16.msra.mxu0 %v1833
      %1934 = vmatprep.subr.bf16.mxu0 0
      %1935 = vmatpush1.bf16.msra.mxu0 %v1834
      %1936 = vmatprep.subr.bf16.mxu0 0
      %1937 = vmatpush1.bf16.msra.mxu0 %v1835
      %1938 = vmatprep.subr.bf16.mxu0 0
      %1939 = vmatpush1.bf16.msra.mxu0 %v1836
      %1940 = vmatprep.subr.bf16.mxu0 0
      %1941 = vmatpush1.bf16.msra.mxu0 %v1837
      %1942 = vmatprep.subr.bf16.mxu0 0
      %1943 = vmatpush1.bf16.msra.mxu0 %v1838
      %1944 = vmatprep.subr.bf16.mxu0 0
      %1945 = vmatpush1.bf16.msra.mxu0 0
      %1946 = vmatprep.subr.bf16.mxu0 0
      %1947 = vmatpush1.bf16.msra.mxu0 0
      %1948 = vmatprep.subr.bf16.mxu0 0
      %1949 = vmatpush1.bf16.msra.mxu0 0
      %1950 = vmatprep.subr.bf16.mxu0 0
      %1951 = vmatpush1.bf16.msra.mxu0 0
      %1952 = vmatprep.subr.bf16.mxu0 0
      %1953 = vmatpush1.bf16.msra.mxu0 0
      %1954 = vmatprep.subr.bf16.mxu0 0
      %1955 = vmatpush1.bf16.msra.mxu0 0
      %1956 = vmatprep.subr.bf16.mxu0 0
      %1957 = vmatpush1.bf16.msra.mxu0 0
      %1958 = vmatprep.subr.bf16.mxu0 0
      %1959 = vmatpush1.bf16.msra.mxu0 0
      %1960 = vmatprep.mubr.bf16.mxu0 0
      %1961 = vmatmul.mubr.bf16.gmra.mrb[0].mxu0 %v1660
      %v1962 = vpop.f32.mrb[0].mxu0
      %v1963 = vadd.f32 %v1898, %v1962
      %v1964 = vpop.f32.mrb[0].mxu0
      %v1965 = vpop.f32.mrb[0].mxu0
      %v1966 = vadd.f32 %v1901, %v1965
      %v1967 = vpop.f32.mrb[0].mxu0
      %1968 = vmatprep.mubr.bf16.mxu0 0
      %1969 = vmatmul.mubr.bf16.gmra.mrb[0].mxu0 %v1663
      %v1970 = vpop.f32.mrb[0].mxu0
      %v1971 = vadd.f32 %v1906, %v1970
      %v1972 = vpop.f32.mrb[0].mxu0
      %v1973 = vpop.f32.mrb[0].mxu0
      %v1974 = vadd.f32 %v1909, %v1973
      %v1975 = vpop.f32.mrb[0].mxu0
      %1976 = vmatprep.mubr.bf16.mxu0 0
      %1977 = vmatmul.mubr.bf16.gmra.mrb[0].mxu0 %v1666
      %v1978 = vpop.f32.mrb[0].mxu0
      %v1979 = vadd.f32 %v1914, %v1978
      %v1980 = vpop.f32.mrb[0].mxu0
      %v1981 = vpop.f32.mrb[0].mxu0
      %v1982 = vadd.f32 %v1917, %v1981
      %v1983 = vpop.f32.mrb[0].mxu0
      %1984 = vmatprep.mubr.bf16.mxu0 0
      %1985 = vmatmul.mubr.bf16.gmra.mrb[0].mxu0 %v1669
      %v1986 = vpop.f32.mrb[0].mxu0
      %v1987 = vadd.f32 %v1922, %v1986
      %v1988 = vpop.f32.mrb[0].mxu0
      %v1989 = vpop.f32.mrb[0].mxu0
      %v1990 = vadd.f32 %v1925, %v1989
      %v1991 = vpop.f32.mrb[0].mxu0
      %1992 = vdwg.mxu0
      %v2041 = vunpack.c.l.b16 %v1586
      %v2042 = vunpack.c.l.b16 %v1587
      %v2043 = vunpack.c.l.b16 %v1588
      %v2044 = vunpack.c.l.b16 %v1589
      %v2045 = vunpack.c.l.b16 %v1590
      %v2046 = vunpack.c.l.b16 %v1591
      %v2047 = vunpack.c.l.b16 %v1592
      %v2048 = vunpack.c.l.b16 %v1593
      %v2049 = vunpack.c.l.b16 %v1594
      %v2050 = vunpack.c.l.b16 %v1595
      %v2051 = vunpack.c.l.b16 %v1596
      %v2052 = vunpack.c.l.b16 %v1597
      %v2053 = vunpack.c.l.b16 %v1598
      %v2054 = vunpack.c.l.b16 %v1599
      %v2055 = vunpack.c.l.b16 %v1600
      %v2056 = vunpack.c.l.b16 %v1601
      %v2057 = vunpack.c.l.b16 %v1602
      %v2058 = vunpack.c.l.b16 %v1603
      %v2059 = vunpack.c.l.b16 %v1604
      %v2060 = vunpack.c.l.b16 %v1605
      %v2061 = vunpack.c.l.b16 %v1606
      %v2062 = vunpack.c.l.b16 %v1607
      %v2063 = vunpack.c.l.b16 %v1608
      %v2064 = vunpack.c.l.b16 %v1609
      %v2065 = vunpack.c.l.b16 %v1610
      %v2066 = vunpack.c.l.b16 %v1611
      %v2067 = vunpack.c.l.b16 %v1612
      %v2068 = vunpack.c.l.b16 %v1613
      %v2069 = vunpack.c.l.b16 %v1614
      %v2070 = vunpack.c.l.b16 %v1615
      %v2071 = vunpack.c.l.b16 %v1616
      %v2072 = vunpack.c.l.b16 %v1617
      %v2073 = vunpack.c.l.b16 %v1618
      %v2074 = vunpack.c.l.b16 %v1619
      %v2075 = vunpack.c.l.b16 %v1620
      %v2076 = vunpack.c.l.b16 %v1621
      %v2077 = vunpack.c.l.b16 %v1622
      %v2078 = vunpack.c.l.b16 %v1623
      %v2079 = vunpack.c.l.b16 %v1624
      %v2080 = vunpack.c.l.b16 %v1625
      %v2081 = vunpack.c.l.b16 %v1626
      %v2082 = vunpack.c.l.b16 %v1627
      %v2083 = vunpack.c.l.b16 %v1628
      %v2084 = vunpack.c.l.b16 %v1629
      %v2085 = vunpack.c.l.b16 %v1630
      %v2086 = vunpack.c.l.b16 %v1631
      %v2087 = vunpack.c.l.b16 %v1632
      %v2088 = vunpack.c.l.b16 %v1633
      %v2089 = vpack.c.b16 %v2042, %v2041
      %v2090 = vpack.c.b16 %v2044, %v2043
      %v2091 = vpack.c.b16 %v2046, %v2045
      %v2092 = vpack.c.b16 %v2048, %v2047
      %v2093 = vpack.c.b16 %v2050, %v2049
      %v2094 = vpack.c.b16 %v2052, %v2051
      %v2095 = vpack.c.b16 %v2054, %v2053
      %v2096 = vpack.c.b16 %v2056, %v2055
      %v2097 = vpack.c.b16 %v2058, %v2057
      %v2098 = vpack.c.b16 %v2060, %v2059
      %v2099 = vpack.c.b16 %v2062, %v2061
      %v2100 = vpack.c.b16 %v2064, %v2063
      %v2101 = vpack.c.b16 %v2066, %v2065
      %v2102 = vpack.c.b16 %v2068, %v2067
      %v2103 = vpack.c.b16 %v2070, %v2069
      %v2104 = vpack.c.b16 %v2072, %v2071
      %v2105 = vpack.c.b16 %v2074, %v2073
      %v2106 = vpack.c.b16 %v2076, %v2075
      %v2107 = vpack.c.b16 %v2078, %v2077
      %v2108 = vpack.c.b16 %v2080, %v2079
      %v2109 = vpack.c.b16 %v2082, %v2081
      %v2110 = vpack.c.b16 %v2084, %v2083
      %v2111 = vpack.c.b16 %v2086, %v2085
      %v2112 = vpack.c.b16 %v2088, %v2087
      %2137 = vmatprep.subr.bf16.mxu0 0
      %2138 = vmatpush1.bf16.msra.mxu0 %v2089
      %2139 = vmatprep.subr.bf16.mxu0 0
      %2140 = vmatpush1.bf16.msra.mxu0 %v2090
      %2141 = vmatprep.subr.bf16.mxu0 0
      %2142 = vmatpush1.bf16.msra.mxu0 %v2091
      %2143 = vmatprep.subr.bf16.mxu0 0
      %2144 = vmatpush1.bf16.msra.mxu0 %v2092
      %2145 = vmatprep.subr.bf16.mxu0 0
      %2146 = vmatpush1.bf16.msra.mxu0 %v2093
      %2147 = vmatprep.subr.bf16.mxu0 0
      %2148 = vmatpush1.bf16.msra.mxu0 %v2094
      %2149 = vmatprep.subr.bf16.mxu0 0
      %2150 = vmatpush1.bf16.msra.mxu0 %v2095
      %2151 = vmatprep.subr.bf16.mxu0 0
      %2152 = vmatpush1.bf16.msra.mxu0 %v2096
      %2153 = vmatprep.subr.bf16.mxu0 0
      %2154 = vmatpush1.bf16.msra.mxu0 %v2097
      %2155 = vmatprep.subr.bf16.mxu0 0
      %2156 = vmatpush1.bf16.msra.mxu0 %v2098
      %2157 = vmatprep.subr.bf16.mxu0 0
      %2158 = vmatpush1.bf16.msra.mxu0 %v2099
      %2159 = vmatprep.subr.bf16.mxu0 0
      %2160 = vmatpush1.bf16.msra.mxu0 %v2100
      %2161 = vmatprep.subr.bf16.mxu0 0
      %2162 = vmatpush1.bf16.msra.mxu0 %v2101
      %2163 = vmatprep.subr.bf16.mxu0 0
      %2164 = vmatpush1.bf16.msra.mxu0 %v2102
      %2165 = vmatprep.subr.bf16.mxu0 0
      %2166 = vmatpush1.bf16.msra.mxu0 %v2103
      %2167 = vmatprep.subr.bf16.mxu0 0
      %2168 = vmatpush1.bf16.msra.mxu0 %v2104
      %2169 = vmatprep.mubr.bf16.mxu0 %v1575
      %2170 = vmatmul.mubr.bf16.gmra.mrb[0].mxu0 %v1574
      %v2171 = vpop.f32.mrb[0].mxu0
      %v2172 = vadd.f32 %v1963, %v2171
      %v2173 = vpop.f32.mrb[0].mxu0
      %v2174 = vpop.f32.mrb[0].mxu0
      %v2175 = vadd.f32 %v1966, %v2174
      %v2176 = vpop.f32.mrb[0].mxu0
      %2177 = vmatprep.mubr.bf16.mxu0 %v1578
      %2178 = vmatmul.mubr.bf16.gmra.mrb[0].mxu0 %v1577
      %v2179 = vpop.f32.mrb[0].mxu0
      %v2180 = vadd.f32 %v1971, %v2179
      %v2181 = vpop.f32.mrb[0].mxu0
      %v2182 = vpop.f32.mrb[0].mxu0
      %v2183 = vadd.f32 %v1974, %v2182
      %v2184 = vpop.f32.mrb[0].mxu0
      %2185 = vmatprep.mubr.bf16.mxu0 %v1581
      %2186 = vmatmul.mubr.bf16.gmra.mrb[0].mxu0 %v1580
      %v2187 = vpop.f32.mrb[0].mxu0
      %v2188 = vadd.f32 %v1979, %v2187
      %v2189 = vpop.f32.mrb[0].mxu0
      %v2190 = vpop.f32.mrb[0].mxu0
      %v2191 = vadd.f32 %v1982, %v2190
      %v2192 = vpop.f32.mrb[0].mxu0
      %2193 = vmatprep.mubr.bf16.mxu0 %v1584
      %2194 = vmatmul.mubr.bf16.gmra.mrb[0].mxu0 %v1583
      %v2195 = vpop.f32.mrb[0].mxu0
      %v2196 = vadd.f32 %v1987, %v2195
      %v2197 = vpop.f32.mrb[0].mxu0
      %v2198 = vpop.f32.mrb[0].mxu0
      %v2199 = vadd.f32 %v1990, %v2198
      %v2200 = vpop.f32.mrb[0].mxu0
      %2201 = vdwg.mxu0
      %2202 = vmatprep.subr.bf16.mxu0 0
      %2203 = vmatpush1.bf16.msra.mxu0 %v2105
      %2204 = vmatprep.subr.bf16.mxu0 0
      %2205 = vmatpush1.bf16.msra.mxu0 %v2106
      %2206 = vmatprep.subr.bf16.mxu0 0
      %2207 = vmatpush1.bf16.msra.mxu0 %v2107
      %2208 = vmatprep.subr.bf16.mxu0 0
      %2209 = vmatpush1.bf16.msra.mxu0 %v2108
      %2210 = vmatprep.subr.bf16.mxu0 0
      %2211 = vmatpush1.bf16.msra.mxu0 %v2109
      %2212 = vmatprep.subr.bf16.mxu0 0
      %2213 = vmatpush1.bf16.msra.mxu0 %v2110
      %2214 = vmatprep.subr.bf16.mxu0 0
      %2215 = vmatpush1.bf16.msra.mxu0 %v2111
      %2216 = vmatprep.subr.bf16.mxu0 0
      %2217 = vmatpush1.bf16.msra.mxu0 %v2112
      %2218 = vmatprep.subr.bf16.mxu0 0
      %2219 = vmatpush1.bf16.msra.mxu0 0
      %2220 = vmatprep.subr.bf16.mxu0 0
      %2221 = vmatpush1.bf16.msra.mxu0 0
      %2222 = vmatprep.subr.bf16.mxu0 0
      %2223 = vmatpush1.bf16.msra.mxu0 0
      %2224 = vmatprep.subr.bf16.mxu0 0
      %2225 = vmatpush1.bf16.msra.mxu0 0
      %2226 = vmatprep.subr.bf16.mxu0 0
      %2227 = vmatpush1.bf16.msra.mxu0 0
      %2228 = vmatprep.subr.bf16.mxu0 0
      %2229 = vmatpush1.bf16.msra.mxu0 0
      %2230 = vmatprep.subr.bf16.mxu0 0
      %2231 = vmatpush1.bf16.msra.mxu0 0
      %2232 = vmatprep.subr.bf16.mxu0 0
      %2233 = vmatpush1.bf16.msra.mxu0 0
      %2234 = vmatprep.mubr.bf16.mxu0 0
      %2235 = vmatmul.mubr.bf16.gmra.mrb[0].mxu0 %v1576
      %v2236 = vpop.f32.mrb[0].mxu0
      %v2237 = vadd.f32 %v2172, %v2236
      %v2238 = vpop.f32.mrb[0].mxu0
      %v2239 = vpop.f32.mrb[0].mxu0
      %v2240 = vadd.f32 %v2175, %v2239
      %v2241 = vpop.f32.mrb[0].mxu0
      %2242 = vmatprep.mubr.bf16.mxu0 0
      %2243 = vmatmul.mubr.bf16.gmra.mrb[0].mxu0 %v1579
      %v2244 = vpop.f32.mrb[0].mxu0
      %v2245 = vadd.f32 %v2180, %v2244
      %v2246 = vpop.f32.mrb[0].mxu0
      %v2247 = vpop.f32.mrb[0].mxu0
      %v2248 = vadd.f32 %v2183, %v2247
      %v2249 = vpop.f32.mrb[0].mxu0
      %2250 = vmatprep.mubr.bf16.mxu0 0
      %2251 = vmatmul.mubr.bf16.gmra.mrb[0].mxu0 %v1582
      %v2252 = vpop.f32.mrb[0].mxu0
      %v2253 = vadd.f32 %v2188, %v2252
      %v2254 = vpop.f32.mrb[0].mxu0
      %v2255 = vpop.f32.mrb[0].mxu0
      %v2256 = vadd.f32 %v2191, %v2255
      %v2257 = vpop.f32.mrb[0].mxu0
      %2258 = vmatprep.mubr.bf16.mxu0 0
      %2259 = vmatmul.mubr.bf16.gmra.mrb[0].mxu0 %v1585
      %v2260 = vpop.f32.mrb[0].mxu0
      %v2261 = vadd.f32 %v2196, %v2260
      %v2262 = vpop.f32.mrb[0].mxu0
      %v2263 = vpop.f32.mrb[0].mxu0
      %v2264 = vadd.f32 %v2199, %v2263
      %v2265 = vpop.f32.mrb[0].mxu0
      %2266 = vdwg.mxu0
      %v2267 = vld [vmem:[%s1071] sm:$0xff]
      %v2268 = vld [vmem:[%s1071 + $0x8] sm:$0xff]
      %v2269 = vld [vmem:[%s1071 + $0x10] sm:$0xff]
      %v2270 = vld [vmem:[%s1071 + $0x18] sm:$0xff]
      %v2271 = vld [vmem:[%s1071 + $0x20] sm:$0xff]
      %v2272 = vld [vmem:[%s1071 + $0x28] sm:$0xff]
      %v2273 = vld [vmem:[%s1071 + $0x30] sm:$0xff]
      %v2274 = vld [vmem:[%s1071 + $0x38] sm:$0xff]
      %v2275 = vld [vmem:[%s1071 + $0x40] sm:$0xff]
      %v2276 = vld [vmem:[%s1071 + $0x48] sm:$0xff]
      %v2277 = vld [vmem:[%s1071 + $0x50] sm:$0xff]
      %v2278 = vld [vmem:[%s1071 + $0x58] sm:$0xff]
      %v2279 = vld [vmem:[%s1071 + $0x60] sm:$0xff]
      %v2280 = vld [vmem:[%s1071 + $0x68] sm:$0xff]
      %v2281 = vld [vmem:[%s1071 + $0x70] sm:$0xff]
      %v2282 = vld [vmem:[%s1071 + $0x78] sm:$0xff]
      %v2283 = vld [vmem:[%s1071 + $0x80] sm:$0xff]
      %v2284 = vld [vmem:[%s1071 + $0x88] sm:$0xff]
      %v2285 = vld [vmem:[%s1071 + $0x90] sm:$0xff]
      %v2286 = vld [vmem:[%s1071 + $0x98] sm:$0xff]
      %v2287 = vld [vmem:[%s1071 + $0xa0] sm:$0xff]
      %v2288 = vld [vmem:[%s1071 + $0xa8] sm:$0xff]
      %v2289 = vld [vmem:[%s1071 + $0xb0] sm:$0xff]
      %v2290 = vld [vmem:[%s1071 + $0xb8] sm:$0xff]
      %v2291 = vpack.c.bf16 %v2270, %v2267
      %v2292 = vpack.c.bf16 %v2271, %v2268
      %v2293 = vpack.c.bf16 %v2272, %v2269
      %v2294 = vpack.c.bf16 %v2276, %v2273
      %v2295 = vpack.c.bf16 %v2277, %v2274
      %v2296 = vpack.c.bf16 %v2278, %v2275
      %v2297 = vpack.c.bf16 %v2282, %v2279
      %v2298 = vpack.c.bf16 %v2283, %v2280
      %v2299 = vpack.c.bf16 %v2284, %v2281
      %v2300 = vpack.c.bf16 %v2288, %v2285
      %v2301 = vpack.c.bf16 %v2289, %v2286
      %v2302 = vpack.c.bf16 %v2290, %v2287
      %s2303 = scalar_lea.vmem %s3, 384
      %v2304 = vld [vmem:[%s2303] sm:$0xf]
      %v2305 = vld [vmem:[%s2303 + $0x4] sm:$0xf]
      %v2306 = vld [vmem:[%s2303 + $0x8] sm:$0xf]
      %v2307 = vld [vmem:[%s2303 + $0xc] sm:$0xf]
      %v2308 = vld [vmem:[%s2303 + $0x10] sm:$0xf]
      %v2309 = vld [vmem:[%s2303 + $0x14] sm:$0xf]
      %v2310 = vld [vmem:[%s2303 + $0x18] sm:$0xf]
      %v2311 = vld [vmem:[%s2303 + $0x1c] sm:$0xf]
      %v2312 = vld [vmem:[%s2303 + $0x20] sm:$0xf]
      %v2313 = vld [vmem:[%s2303 + $0x24] sm:$0xf]
      %v2314 = vld [vmem:[%s2303 + $0x28] sm:$0xf]
      %v2315 = vld [vmem:[%s2303 + $0x2c] sm:$0xf]
      %v2316 = vld [vmem:[%s2303 + $0x30] sm:$0xf]
      %v2317 = vld [vmem:[%s2303 + $0x34] sm:$0xf]
      %v2318 = vld [vmem:[%s2303 + $0x38] sm:$0xf]
      %v2319 = vld [vmem:[%s2303 + $0x3c] sm:$0xf]
      %v2320 = vld [vmem:[%s2303 + $0x40] sm:$0xf]
      %v2321 = vld [vmem:[%s2303 + $0x44] sm:$0xf]
      %v2322 = vld [vmem:[%s2303 + $0x48] sm:$0xf]
      %v2323 = vld [vmem:[%s2303 + $0x4c] sm:$0xf]
      %v2324 = vld [vmem:[%s2303 + $0x50] sm:$0xf]
      %v2325 = vld [vmem:[%s2303 + $0x54] sm:$0xf]
      %v2326 = vld [vmem:[%s2303 + $0x58] sm:$0xf]
      %v2327 = vld [vmem:[%s2303 + $0x5c] sm:$0xf]
      %v2328 = vld [vmem:[%s2303 + $0x60] sm:$0xf]
      %v2329 = vld [vmem:[%s2303 + $0x64] sm:$0xf]
      %v2330 = vld [vmem:[%s2303 + $0x68] sm:$0xf]
      %v2331 = vld [vmem:[%s2303 + $0x6c] sm:$0xf]
      %v2332 = vld [vmem:[%s2303 + $0x70] sm:$0xf]
      %v2333 = vld [vmem:[%s2303 + $0x74] sm:$0xf]
      %v2334 = vld [vmem:[%s2303 + $0x78] sm:$0xf]
      %v2335 = vld [vmem:[%s2303 + $0x7c] sm:$0xf]
      %v2336 = vld [vmem:[%s2303 + $0x80] sm:$0xf]
      %v2337 = vld [vmem:[%s2303 + $0x84] sm:$0xf]
      %v2338 = vld [vmem:[%s2303 + $0x88] sm:$0xf]
      %v2339 = vld [vmem:[%s2303 + $0x8c] sm:$0xf]
      %v2340 = vld [vmem:[%s2303 + $0x90] sm:$0xf]
      %v2341 = vld [vmem:[%s2303 + $0x94] sm:$0xf]
      %v2342 = vld [vmem:[%s2303 + $0x98] sm:$0xf]
      %v2343 = vld [vmem:[%s2303 + $0x9c] sm:$0xf]
      %v2344 = vld [vmem:[%s2303 + $0xa0] sm:$0xf]
      %v2345 = vld [vmem:[%s2303 + $0xa4] sm:$0xf]
      %v2346 = vld [vmem:[%s2303 + $0xa8] sm:$0xf]
      %v2347 = vld [vmem:[%s2303 + $0xac] sm:$0xf]
      %v2348 = vld [vmem:[%s2303 + $0xb0] sm:$0xf]
      %v2349 = vld [vmem:[%s2303 + $0xb4] sm:$0xf]
      %v2350 = vld [vmem:[%s2303 + $0xb8] sm:$0xf]
      %v2351 = vld [vmem:[%s2303 + $0xbc] sm:$0xf]
      %v2400 = vunpack.c.l.b16 %v2304
      %v2401 = vunpack.c.l.b16 %v2305
      %v2402 = vunpack.c.l.b16 %v2306
      %v2403 = vunpack.c.l.b16 %v2307
      %v2404 = vunpack.c.l.b16 %v2308
      %v2405 = vunpack.c.l.b16 %v2309
      %v2406 = vunpack.c.l.b16 %v2310
      %v2407 = vunpack.c.l.b16 %v2311
      %v2408 = vunpack.c.l.b16 %v2312
      %v2409 = vunpack.c.l.b16 %v2313
      %v2410 = vunpack.c.l.b16 %v2314
      %v2411 = vunpack.c.l.b16 %v2315
      %v2412 = vunpack.c.l.b16 %v2316
      %v2413 = vunpack.c.l.b16 %v2317
      %v2414 = vunpack.c.l.b16 %v2318
      %v2415 = vunpack.c.l.b16 %v2319
      %v2416 = vunpack.c.l.b16 %v2320
      %v2417 = vunpack.c.l.b16 %v2321
      %v2418 = vunpack.c.l.b16 %v2322
      %v2419 = vunpack.c.l.b16 %v2323
      %v2420 = vunpack.c.l.b16 %v2324
      %v2421 = vunpack.c.l.b16 %v2325
      %v2422 = vunpack.c.l.b16 %v2326
      %v2423 = vunpack.c.l.b16 %v2327
      %v2424 = vunpack.c.l.b16 %v2328
      %v2425 = vunpack.c.l.b16 %v2329
      %v2426 = vunpack.c.l.b16 %v2330
      %v2427 = vunpack.c.l.b16 %v2331
      %v2428 = vunpack.c.l.b16 %v2332
      %v2429 = vunpack.c.l.b16 %v2333
      %v2430 = vunpack.c.l.b16 %v2334
      %v2431 = vunpack.c.l.b16 %v2335
      %v2432 = vunpack.c.l.b16 %v2336
      %v2433 = vunpack.c.l.b16 %v2337
      %v2434 = vunpack.c.l.b16 %v2338
      %v2435 = vunpack.c.l.b16 %v2339
      %v2436 = vunpack.c.l.b16 %v2340
      %v2437 = vunpack.c.l.b16 %v2341
      %v2438 = vunpack.c.l.b16 %v2342
      %v2439 = vunpack.c.l.b16 %v2343
      %v2440 = vunpack.c.l.b16 %v2344
      %v2441 = vunpack.c.l.b16 %v2345
      %v2442 = vunpack.c.l.b16 %v2346
      %v2443 = vunpack.c.l.b16 %v2347
      %v2444 = vunpack.c.l.b16 %v2348
      %v2445 = vunpack.c.l.b16 %v2349
      %v2446 = vunpack.c.l.b16 %v2350
      %v2447 = vunpack.c.l.b16 %v2351
      %v2448 = vpack.c.b16 %v2401, %v2400
      %v2449 = vpack.c.b16 %v2403, %v2402
      %v2450 = vpack.c.b16 %v2405, %v2404
      %v2451 = vpack.c.b16 %v2407, %v2406
      %v2452 = vpack.c.b16 %v2409, %v2408
      %v2453 = vpack.c.b16 %v2411, %v2410
      %v2454 = vpack.c.b16 %v2413, %v2412
      %v2455 = vpack.c.b16 %v2415, %v2414
      %v2456 = vpack.c.b16 %v2417, %v2416
      %v2457 = vpack.c.b16 %v2419, %v2418
      %v2458 = vpack.c.b16 %v2421, %v2420
      %v2459 = vpack.c.b16 %v2423, %v2422
      %v2460 = vpack.c.b16 %v2425, %v2424
      %v2461 = vpack.c.b16 %v2427, %v2426
      %v2462 = vpack.c.b16 %v2429, %v2428
      %v2463 = vpack.c.b16 %v2431, %v2430
      %v2464 = vpack.c.b16 %v2433, %v2432
      %v2465 = vpack.c.b16 %v2435, %v2434
      %v2466 = vpack.c.b16 %v2437, %v2436
      %v2467 = vpack.c.b16 %v2439, %v2438
      %v2468 = vpack.c.b16 %v2441, %v2440
      %v2469 = vpack.c.b16 %v2443, %v2442
      %v2470 = vpack.c.b16 %v2445, %v2444
      %v2471 = vpack.c.b16 %v2447, %v2446
      %2496 = vmatprep.subr.bf16.mxu0 0
      %2497 = vmatpush1.bf16.msra.mxu0 %v2448
      %2498 = vmatprep.subr.bf16.mxu0 0
      %2499 = vmatpush1.bf16.msra.mxu0 %v2449
      %2500 = vmatprep.subr.bf16.mxu0 0
      %2501 = vmatpush1.bf16.msra.mxu0 %v2450
      %2502 = vmatprep.subr.bf16.mxu0 0
      %2503 = vmatpush1.bf16.msra.mxu0 %v2451
      %2504 = vmatprep.subr.bf16.mxu0 0
      %2505 = vmatpush1.bf16.msra.mxu0 %v2452
      %2506 = vmatprep.subr.bf16.mxu0 0
      %2507 = vmatpush1.bf16.msra.mxu0 %v2453
      %2508 = vmatprep.subr.bf16.mxu0 0
      %2509 = vmatpush1.bf16.msra.mxu0 %v2454
      %2510 = vmatprep.subr.bf16.mxu0 0
      %2511 = vmatpush1.bf16.msra.mxu0 %v2455
      %2512 = vmatprep.subr.bf16.mxu0 0
      %2513 = vmatpush1.bf16.msra.mxu0 %v2456
      %2514 = vmatprep.subr.bf16.mxu0 0
      %2515 = vmatpush1.bf16.msra.mxu0 %v2457
      %2516 = vmatprep.subr.bf16.mxu0 0
      %2517 = vmatpush1.bf16.msra.mxu0 %v2458
      %2518 = vmatprep.subr.bf16.mxu0 0
      %2519 = vmatpush1.bf16.msra.mxu0 %v2459
      %2520 = vmatprep.subr.bf16.mxu0 0
      %2521 = vmatpush1.bf16.msra.mxu0 %v2460
      %2522 = vmatprep.subr.bf16.mxu0 0
      %2523 = vmatpush1.bf16.msra.mxu0 %v2461
      %2524 = vmatprep.subr.bf16.mxu0 0
      %2525 = vmatpush1.bf16.msra.mxu0 %v2462
      %2526 = vmatprep.subr.bf16.mxu0 0
      %2527 = vmatpush1.bf16.msra.mxu0 %v2463
      %2528 = vmatprep.mubr.bf16.mxu0 %v2292
      %2529 = vmatmul.mubr.bf16.gmra.mrb[0].mxu0 %v2291
      %v2530 = vpop.f32.mrb[0].mxu0
      %v2531 = vadd.f32 0.0, %v2530
      %v2532 = vpop.f32.mrb[0].mxu0
      %v2533 = vpop.f32.mrb[0].mxu0
      %v2534 = vadd.f32 0.0, %v2533
      %v2535 = vpop.f32.mrb[0].mxu0
      %2536 = vmatprep.mubr.bf16.mxu0 %v2295
      %2537 = vmatmul.mubr.bf16.gmra.mrb[0].mxu0 %v2294
      %v2538 = vpop.f32.mrb[0].mxu0
      %v2539 = vadd.f32 0.0, %v2538
      %v2540 = vpop.f32.mrb[0].mxu0
      %v2541 = vpop.f32.mrb[0].mxu0
      %v2542 = vadd.f32 0.0, %v2541
      %v2543 = vpop.f32.mrb[0].mxu0
      %2544 = vmatprep.mubr.bf16.mxu0 %v2298
      %2545 = vmatmul.mubr.bf16.gmra.mrb[0].mxu0 %v2297
      %v2546 = vpop.f32.mrb[0].mxu0
      %v2547 = vadd.f32 0.0, %v2546
      %v2548 = vpop.f32.mrb[0].mxu0
      %v2549 = vpop.f32.mrb[0].mxu0
      %v2550 = vadd.f32 0.0, %v2549
      %v2551 = vpop.f32.mrb[0].mxu0
      %2552 = vmatprep.mubr.bf16.mxu0 %v2301
      %2553 = vmatmul.mubr.bf16.gmra.mrb[0].mxu0 %v2300
      %v2554 = vpop.f32.mrb[0].mxu0
      %v2555 = vadd.f32 0.0, %v2554
      %v2556 = vpop.f32.mrb[0].mxu0
      %v2557 = vpop.f32.mrb[0].mxu0
      %v2558 = vadd.f32 0.0, %v2557
      %v2559 = vpop.f32.mrb[0].mxu0
      %2560 = vdwg.mxu0
      %2561 = vmatprep.subr.bf16.mxu0 0
      %2562 = vmatpush1.bf16.msra.mxu0 %v2464
      %2563 = vmatprep.subr.bf16.mxu0 0
      %2564 = vmatpush1.bf16.msra.mxu0 %v2465
      %2565 = vmatprep.subr.bf16.mxu0 0
      %2566 = vmatpush1.bf16.msra.mxu0 %v2466
      %2567 = vmatprep.subr.bf16.mxu0 0
      %2568 = vmatpush1.bf16.msra.mxu0 %v2467
      %2569 = vmatprep.subr.bf16.mxu0 0
      %2570 = vmatpush1.bf16.msra.mxu0 %v2468
      %2571 = vmatprep.subr.bf16.mxu0 0
      %2572 = vmatpush1.bf16.msra.mxu0 %v2469
      %2573 = vmatprep.subr.bf16.mxu0 0
      %2574 = vmatpush1.bf16.msra.mxu0 %v2470
      %2575 = vmatprep.subr.bf16.mxu0 0
      %2576 = vmatpush1.bf16.msra.mxu0 %v2471
      %2577 = vmatprep.subr.bf16.mxu0 0
      %2578 = vmatpush1.bf16.msra.mxu0 0
      %2579 = vmatprep.subr.bf16.mxu0 0
      %2580 = vmatpush1.bf16.msra.mxu0 0
      %2581 = vmatprep.subr.bf16.mxu0 0
      %2582 = vmatpush1.bf16.msra.mxu0 0
      %2583 = vmatprep.subr.bf16.mxu0 0
      %2584 = vmatpush1.bf16.msra.mxu0 0
      %2585 = vmatprep.subr.bf16.mxu0 0
      %2586 = vmatpush1.bf16.msra.mxu0 0
      %2587 = vmatprep.subr.bf16.mxu0 0
      %2588 = vmatpush1.bf16.msra.mxu0 0
      %2589 = vmatprep.subr.bf16.mxu0 0
      %2590 = vmatpush1.bf16.msra.mxu0 0
      %2591 = vmatprep.subr.bf16.mxu0 0
      %2592 = vmatpush1.bf16.msra.mxu0 0
      %2593 = vmatprep.mubr.bf16.mxu0 0
      %2594 = vmatmul.mubr.bf16.gmra.mrb[0].mxu0 %v2293
      %v2595 = vpop.f32.mrb[0].mxu0
      %v2596 = vadd.f32 %v2531, %v2595
      %v2597 = vpop.f32.mrb[0].mxu0
      %v2598 = vpop.f32.mrb[0].mxu0
      %v2599 = vadd.f32 %v2534, %v2598
      %v2600 = vpop.f32.mrb[0].mxu0
      %2601 = vmatprep.mubr.bf16.mxu0 0
      %2602 = vmatmul.mubr.bf16.gmra.mrb[0].mxu0 %v2296
      %v2603 = vpop.f32.mrb[0].mxu0
      %v2604 = vadd.f32 %v2539, %v2603
      %v2605 = vpop.f32.mrb[0].mxu0
      %v2606 = vpop.f32.mrb[0].mxu0
      %v2607 = vadd.f32 %v2542, %v2606
      %v2608 = vpop.f32.mrb[0].mxu0
      %2609 = vmatprep.mubr.bf16.mxu0 0
      %2610 = vmatmul.mubr.bf16.gmra.mrb[0].mxu0 %v2299
      %v2611 = vpop.f32.mrb[0].mxu0
      %v2612 = vadd.f32 %v2547, %v2611
      %v2613 = vpop.f32.mrb[0].mxu0
      %v2614 = vpop.f32.mrb[0].mxu0
      %v2615 = vadd.f32 %v2550, %v2614
      %v2616 = vpop.f32.mrb[0].mxu0
      %2617 = vmatprep.mubr.bf16.mxu0 0
      %2618 = vmatmul.mubr.bf16.gmra.mrb[0].mxu0 %v2302
      %v2619 = vpop.f32.mrb[0].mxu0
      %v2620 = vadd.f32 %v2555, %v2619
      %v2621 = vpop.f32.mrb[0].mxu0
      %v2622 = vpop.f32.mrb[0].mxu0
      %v2623 = vadd.f32 %v2558, %v2622
      %v2624 = vpop.f32.mrb[0].mxu0
      %2625 = vdwg.mxu0
      %v2626 = vadd.f32 %v2237, %v2596
      %v2627 = vadd.f32 %v2240, %v2599
      %v2628 = vadd.f32 %v2245, %v2604
      %v2629 = vadd.f32 %v2248, %v2607
      %v2630 = vadd.f32 %v2253, %v2612
      %v2631 = vadd.f32 %v2256, %v2615
      %v2632 = vadd.f32 %v2261, %v2620
      %v2633 = vadd.f32 %v2264, %v2623
      %v2634 = vld [vmem:[%s4] sm:$0x1]
      %v2636 = vlaneseq
      %v2637 = vshrl.u32 %v2636, 7
      %v2638 = vsub.s32 0, %v2637
      %v2639 = vrot.slane %v2634, %v2638
      %v2641 = vadd.f32 %v2626, %v2639
      %v2642 = vadd.f32 %v2627, %v2639
      %v2643 = vadd.f32 %v2628, %v2639
      %v2644 = vadd.f32 %v2629, %v2639
      %v2645 = vadd.f32 %v2630, %v2639
      %v2646 = vadd.f32 %v2631, %v2639
      %v2647 = vadd.f32 %v2632, %v2639
      %v2648 = vadd.f32 %v2633, %v2639
      %v2649 = vld [vmem:[%s219] sm:$0xf]
      %v2650 = vld [vmem:[%s219 + $0x4] sm:$0xf]
      %v2651 = vld [vmem:[%s219 + $0x8] sm:$0xf]
      %v2652 = vld [vmem:[%s219 + $0xc] sm:$0xf]
      %v2653 = vld [vmem:[%s219 + $0x10] sm:$0xf]
      %v2654 = vld [vmem:[%s219 + $0x14] sm:$0xf]
      %v2655 = vld [vmem:[%s219 + $0x18] sm:$0xf]
      %v2656 = vld [vmem:[%s219 + $0x1c] sm:$0xf]
      %v2657 = vunpack.c.l.bf16 %v2649
      %v2658 = vunpack.c.l.bf16 %v2650
      %v2659 = vunpack.c.l.bf16 %v2651
      %v2660 = vunpack.c.l.bf16 %v2652
      %v2661 = vunpack.c.l.bf16 %v2653
      %v2662 = vunpack.c.l.bf16 %v2654
      %v2663 = vunpack.c.l.bf16 %v2655
      %v2664 = vunpack.c.l.bf16 %v2656
      %v2665 = vadd.f32 %v2641, %v2657
      %v2666 = vadd.f32 %v2642, %v2658
      %v2667 = vadd.f32 %v2643, %v2659
      %v2668 = vadd.f32 %v2644, %v2660
      %v2669 = vadd.f32 %v2645, %v2661
      %v2670 = vadd.f32 %v2646, %v2662
      %v2671 = vadd.f32 %v2647, %v2663
      %v2672 = vadd.f32 %v2648, %v2664
      %v2673 = vmax.f32 %v2665, 0.0
      %v2674 = vmax.f32 %v2666, 0.0
      %v2675 = vmax.f32 %v2667, 0.0
      %v2676 = vmax.f32 %v2668, 0.0
      %v2677 = vmax.f32 %v2669, 0.0
      %v2678 = vmax.f32 %v2670, 0.0
      %v2679 = vmax.f32 %v2671, 0.0
      %v2680 = vmax.f32 %v2672, 0.0
      %v2681 = vpack.c.bf16 %v2674, %v2673
      %v2682 = vpack.c.bf16 %v2676, %v2675
      %v2683 = vpack.c.bf16 %v2678, %v2677
      %v2684 = vpack.c.bf16 %v2680, %v2679
      %v2689 = vunpack.c.l.b16 %v2681
      %v2690 = vunpack.c.h.b16 %v2681
      %v2691 = vunpack.c.l.b16 %v2682
      %v2692 = vunpack.c.h.b16 %v2682
      %v2693 = vunpack.c.l.b16 %v2683
      %v2694 = vunpack.c.h.b16 %v2683
      %v2695 = vunpack.c.l.b16 %v2684
      %v2696 = vunpack.c.h.b16 %v2684
      %v2697 = vpack.c.b16 %v2689, %v2689
      %v2698 = vpack.c.b16 %v2690, %v2690
      %v2699 = vpack.c.b16 %v2691, %v2691
      %v2700 = vpack.c.b16 %v2692, %v2692
      %v2701 = vpack.c.b16 %v2693, %v2693
      %v2702 = vpack.c.b16 %v2694, %v2694
      %v2703 = vpack.c.b16 %v2695, %v2695
      %v2704 = vpack.c.b16 %v2696, %v2696
      %2713 = vst [vmem:[%s224] sm:$0xf] %v2697
      %2714 = vst [vmem:[%s224 + $0x4] sm:$0xf] %v2698
      %2715 = vst [vmem:[%s224 + $0x8] sm:$0xf] %v2699
      %2716 = vst [vmem:[%s224 + $0xc] sm:$0xf] %v2700
      %2717 = vst [vmem:[%s224 + $0x10] sm:$0xf] %v2701
      %2718 = vst [vmem:[%s224 + $0x14] sm:$0xf] %v2702
      %2719 = vst [vmem:[%s224 + $0x18] sm:$0xf] %v2703
      %2720 = vst [vmem:[%s224 + $0x1c] sm:$0xf] %v2704
      %p2721 = scmp.lt.s32.totalorder %s16, 1
      %s2722 = scalar_select %p2721, %s16, 1
      %s2723 = smul.addr %s2722, 8
      %s2724 = smul.addr %s2723, 4
      %s2725 = scalar_lea.vmem %s5, %s2724
      // Predicated region
      $region41: #{resnet18_extractor.9} parent=39 // pred_check
        %p2726 = pneg %p144
      $region42: #{resnet18_extractor.9} parent=39 // pred_check_branch
        %2728 = sbr.rel (%p2726) target = $region44
      $region43: #{resnet18_extractor.9} parent=39 // pred_region
        _
      $region44: #{resnet18_extractor.9} parent=39 // pred_fallthru
        _
    $region40: #{resnet18_extractor.9} parent=5 // pred_fallthru
      _
    %p2729 = scmp.le.s32.totalorder 2, %s11
    // Predicated region
    $region45: #{resnet18_extractor.9} parent=5 // pred_check
      %p2730 = pneg %p2729
    $region46: #{resnet18_extractor.9} parent=5 // pred_check_branch
      %2732 = sbr.rel (%p2730) target = $region48
    $region47: #{resnet18_extractor.9} parent=5 // pred_region
      %s2733 = ssub.s32 %s11, 2
      // Predicated region
      $region49: #{resnet18_extractor.9} parent=47 // pred_check
        %p2734 = pneg %p150
      $region50: #{resnet18_extractor.9} parent=47 // pred_check_branch
        %2736 = sbr.rel (%p2734) target = $region52
      $region51: #{resnet18_extractor.9} parent=47 // pred_region
        %p2737 = scmp.lt.s32.totalorder %s17, 1
        %s2738 = scalar_select %p2737, %s17, 1
        %s2739 = smul.addr %s2738, 8
        %s2740 = smul.addr %s2739, 4
        %s2741 = scalar_lea.vmem %s5, %s2740
      $region52: #{resnet18_extractor.9} parent=47 // pred_fallthru
        _
    $region48: #{resnet18_extractor.9} parent=5 // pred_fallthru
      _
  $region6: #{resnet18_extractor.9} parent=0 // loop_footer
    %s15 = sadd.s32 1, %s11
  $region7: #{resnet18_extractor.9} parent=0 // loop_footer_branch
    %10 = sbr.rel target = $region3
  $region8: #{resnet18_extractor.9} parent=0 // loop_exit
    _

</llo_original>
